<compile_context>
chip_gen: v6e
topology: v6e:2x2x1
jax: 0.10.0
libtpu: 0.0.40
codegen_flags: <defaults>
</compile_context>

<pallas_src>
import functools

import jax
import jax.numpy as jnp
from jax.experimental import pallas as pl
from jax.experimental.pallas import tpu as pltpu

# Module hyper-parameters (defaults of MinMaxRay_NetCEE).
D = 8
W = 256
INPUT_CH = 3
OUTPUT_CH = 3
SKIPS = (4,)


def _elu(v):
    # F.elu with alpha=1:  v if v > 0 else exp(v) - 1   (clamp arg of exp).
    # exp(v)-1 (not expm1) is kept because it is guaranteed to lower in
    # Mosaic; the accuracy delta is far below the bf16 matmul error anyway.
    return jnp.where(v > 0.0, v, jnp.exp(jnp.minimum(v, 0.0)) - 1.0)


def _minmax_ray_kernel(x_ref, w03_ref, b0_ref, wmid_ref, bmid_ref,
                       wout_ref, bout_ref, o_ref):
    """One row-tile of pixels through the full backbone MLP + output conv."""
    x = x_ref[...]                                            # (TM, 3) bf16

    # Fused K=3 matmul: columns [0, W) are layer-0, [W, 2W) the skip-x part.
    xw = jnp.dot(x, w03_ref[...], preferred_element_type=jnp.float32)
    h = _elu(xw[:, :W] + b0_ref[...])                         # (TM, W) f32
    skip_x = xw[:, W:]                                        # (TM, W) f32

    # Layers 1 .. D-1 (module indices 1..7), statically unrolled.
    for j in range(D - 1):
        pre = jnp.dot(h.astype(jnp.bfloat16), wmid_ref[j],
                      preferred_element_type=jnp.float32)
        pre = pre + bmid_ref[pl.ds(j, 1), :]                  # (1, W) bias row
        if j == SKIPS[0]:
            # Module layer (j+1) == 5 consumes cat([x, h]); add the x part.
            pre = pre + skip_x
        h = _elu(pre)

    # Output 1x1 conv: (W -> OUTPUT_CH)
    out = jnp.dot(h.astype(jnp.bfloat16), wout_ref[...],
                  preferred_element_type=jnp.float32) + bout_ref[...]
    o_ref[...] = out.astype(o_ref.dtype)


def init_params(key):
    """Deterministic synthetic parameters (transposed: (in_ch, out_ch))."""
    def init_layer(k, in_ch, out_ch):
        k1, k2 = jax.random.split(k)
        wt = jax.random.normal(k1, (in_ch, out_ch), jnp.float32) / jnp.sqrt(
            jnp.asarray(in_ch, jnp.float32))
        b = jax.random.normal(k2, (out_ch,), jnp.float32) * 0.01
        return wt, b

    keys = jax.random.split(key, D + 1)
    backbone = []
    for i in range(D):
        if i == 0:
            in_ch = INPUT_CH
        elif (i - 1) in SKIPS:          # layer right after the skip concat
            in_ch = W + INPUT_CH
        else:
            in_ch = W
        backbone.append(init_layer(keys[i], in_ch, W))
    out_layer = init_layer(keys[D], W, OUTPUT_CH)
    return {"backbone": backbone, "out": out_layer}


def reference_forward(x_nchw, epi_nchw, params):
    """Plain-JAX f32 replica of the PyTorch forward (for validation)."""
    del epi_nchw  # fc_epi branch never affects the output
    N, C, H, Wsp = x_nchw.shape
    x_rows = jnp.transpose(x_nchw, (0, 2, 3, 1)).reshape(N * H * Wsp, C)
    h = x_rows
    for i in range(D):
        wt, b = params["backbone"][i]
        h = _elu(h @ wt + b[None, :])
        if i in SKIPS:
            h = jnp.concatenate([x_rows, h], axis=-1)
    wt, b = params["out"]
    out_rows = h @ wt + b[None, :]
    return jnp.transpose(out_rows.reshape(N, H, Wsp, OUTPUT_CH), (0, 3, 1, 2))


@functools.partial(jax.jit, static_argnames=("tile_m",))
def minmax_ray_netcee_forward(x_nchw, epi_nchw, params, *, tile_m=512):
    """Pallas forward.

    tile_m tuning: multiple of 128 on v5e, 256 on v6e/v7x; 512 is a good
    default (~0.5 MiB of f32 activations per live temp).  On v7x pick tile_m
    so that (N*H*W)/tile_m >= 2 to keep both TensorCores busy via the
    'parallel' grid axis.  Rows are zero-padded to a tile multiple.
    """
    del epi_nchw  # dead branch (see TODO above)
    N, C, H, Wsp = x_nchw.shape
    assert C == INPUT_CH
    M = N * H * Wsp
    M_pad = pl.cdiv(M, tile_m) * tile_m

    # Flatten NCHW -> (M, C) rows; bf16 operands for the MXU.
    x_rows = jnp.transpose(x_nchw, (0, 2, 3, 1)).reshape(M, C)
    x_rows = x_rows.astype(jnp.bfloat16)
    if M_pad != M:
        x_rows = jnp.pad(x_rows, ((0, M_pad - M), (0, 0)))

    # Pack parameters for the kernel.
    w0, b0 = params["backbone"][0]                       # (3, 256), (256,)
    wmid_list, bmid_list, w5x = [], [], None
    for i in range(1, D):
        wt, b = params["backbone"][i]
        if (i - 1) in SKIPS:
            # cat order is [x, h]: rows 0..INPUT_CH-1 multiply x, rest multiply h.
            w5x = wt[:INPUT_CH]                          # (3, 256)
            wt = wt[INPUT_CH:]                           # (256, 256)
        wmid_list.append(wt)
        bmid_list.append(b)
    w03 = jnp.concatenate([w0, w5x], axis=1).astype(jnp.bfloat16)   # (3, 512)
    wmid = jnp.stack(wmid_list, axis=0).astype(jnp.bfloat16)        # (7, 256, 256)
    bmid = jnp.stack(bmid_list, axis=0)                             # (7, 256) f32
    wout, bout = params["out"]                                      # (256, 3), (3,)
    wout_bf = wout.astype(jnp.bfloat16)

    out_rows = pl.pallas_call(
        _minmax_ray_kernel,
        out_shape=jax.ShapeDtypeStruct((M_pad, OUTPUT_CH), jnp.float32),
        grid=(M_pad // tile_m,),
        in_specs=[
            pl.BlockSpec((tile_m, INPUT_CH), lambda i: (i, 0)),       # x rows
            pl.BlockSpec((INPUT_CH, 2 * W), lambda i: (0, 0)),        # [w0 | w5x]
            pl.BlockSpec((1, W), lambda i: (0, 0)),                   # b0
            pl.BlockSpec((D - 1, W, W), lambda i: (0, 0, 0)),         # wmid
            pl.BlockSpec((D - 1, W), lambda i: (0, 0)),               # bmid
            pl.BlockSpec((W, OUTPUT_CH), lambda i: (0, 0)),           # wout
            pl.BlockSpec((1, OUTPUT_CH), lambda i: (0, 0)),           # bout
        ],
        out_specs=pl.BlockSpec((tile_m, OUTPUT_CH), lambda i: (i, 0)),
        compiler_params=pltpu.CompilerParams(
            dimension_semantics=("parallel",)),
    )(x_rows, w03, b0.reshape(1, W), wmid, bmid, wout_bf,
      bout.reshape(1, OUTPUT_CH))

    out_rows = out_rows[:M]
    return jnp.transpose(out_rows.reshape(N, H, Wsp, OUTPUT_CH), (0, 3, 1, 2))


if __name__ == "__main__":
    key = jax.random.PRNGKey(0)
    k_param, k_x, k_epi = jax.random.split(key, 3)

    params = init_params(k_param)

    # Small NCHW inputs:  batch=2, channels=3 (input_ch), spatial 8x8.
    x = jax.random.normal(k_x, (2, INPUT_CH, 8, 8), jnp.float32)
    epi = jax.random.normal(k_epi, (2, INPUT_CH, 8, 8), jnp.float32)

    out = minmax_ray_netcee_forward(x, epi, params)
    out = jax.block_until_ready(out)

    ref = jax.block_until_ready(reference_forward(x, epi, params))
    assert out.shape == (2, OUTPUT_CH, 8, 8), out.shape
    # bf16 matmul operands (f32 accumulation) vs. the pure-f32 reference:
    # loosen the tolerance accordingly.
    assert jnp.allclose(out, ref, rtol=5e-2, atol=5e-2), (
        float(jnp.max(jnp.abs(out - ref))))

    print("KERNEL_OK")
</pallas_src>

<mosaic_0001>
module attributes {stable_mosaic.version = 11 : i64} {
  func.func @_minmax_ray_kernel(%arg0: i32, %arg1: memref<512x3xbf16, #tpu.memory_space<vmem>>, %arg2: memref<3x512xbf16, #tpu.memory_space<vmem>>, %arg3: memref<1x256xf32, #tpu.memory_space<vmem>>, %arg4: memref<7x256x256xbf16, #tpu.memory_space<vmem>>, %arg5: memref<7x256xf32, #tpu.memory_space<vmem>>, %arg6: memref<256x3xbf16, #tpu.memory_space<vmem>>, %arg7: memref<1x3xf32, #tpu.memory_space<vmem>>, %arg8: memref<512x3xf32, #tpu.memory_space<vmem>>) attributes {dimension_semantics = [#tpu.dimension_semantics<parallel>], iteration_bounds = array<i64: 1>, scalar_prefetch = 0 : i64, scratch_operands = 0 : i64, tpu.core_type = #tpu.core_type<tc>, window_params = [{transform_indices = @transform_0, window_bounds = array<i64: 512, 3>}, {pipeline_mode = #tpu.pipeline_mode<synchronous>, transform_indices = @transform_1, window_bounds = array<i64: 3, 512>}, {pipeline_mode = #tpu.pipeline_mode<synchronous>, transform_indices = @transform_2, window_bounds = array<i64: 1, 256>}, {pipeline_mode = #tpu.pipeline_mode<synchronous>, transform_indices = @transform_3, window_bounds = array<i64: 7, 256, 256>}, {pipeline_mode = #tpu.pipeline_mode<synchronous>, transform_indices = @transform_4, window_bounds = array<i64: 7, 256>}, {pipeline_mode = #tpu.pipeline_mode<synchronous>, transform_indices = @transform_5, window_bounds = array<i64: 256, 3>}, {pipeline_mode = #tpu.pipeline_mode<synchronous>, transform_indices = @transform_6, window_bounds = array<i64: 1, 3>}, {transform_indices = @transform_7, window_bounds = array<i64: 512, 3>}]} {
    %c0 = arith.constant 0 : index
    %c0_0 = arith.constant 0 : index
    %0 = vector.load %arg1[%c0, %c0_0] : memref<512x3xbf16, #tpu.memory_space<vmem>>, vector<512x3xbf16>
    %c0_1 = arith.constant 0 : index
    %c0_2 = arith.constant 0 : index
    %1 = vector.load %arg2[%c0_1, %c0_2] : memref<3x512xbf16, #tpu.memory_space<vmem>>, vector<3x512xbf16>
    %cst = arith.constant dense<0.000000e+00> : vector<512x512xf32>
    %2 = tpu.matmul %0, %1, %cst {dimension_numbers = #tpu.dot_dimension_numbers<[1], [0], [0], [1], [0, 0, 1, 1], [], []>} : vector<512x3xbf16>, vector<3x512xbf16>, vector<512x512xf32> -> vector<512x512xf32>
    %3 = vector.extract_strided_slice %2 {offsets = [0, 0], sizes = [512, 256], strides = [1, 1]} : vector<512x512xf32> to vector<512x256xf32>
    %c0_3 = arith.constant 0 : index
    %c0_4 = arith.constant 0 : index
    %4 = vector.load %arg3[%c0_3, %c0_4] : memref<1x256xf32, #tpu.memory_space<vmem>>, vector<1x256xf32>
    %5 = vector.broadcast %4 : vector<1x256xf32> to vector<512x256xf32>
    %6 = arith.addf %3, %5 : vector<512x256xf32>
    %cst_5 = arith.constant 0.000000e+00 : f32
    %7 = vector.broadcast %cst_5 : f32 to vector<512x256xf32>
    %8 = arith.cmpf ogt, %6, %7 : vector<512x256xf32>
    %cst_6 = arith.constant 0.000000e+00 : f32
    %9 = vector.broadcast %cst_6 : f32 to vector<512x256xf32>
    %10 = arith.minimumf %6, %9 : vector<512x256xf32>
    %11 = math.exp %10 : vector<512x256xf32>
    %cst_7 = arith.constant 1.000000e+00 : f32
    %12 = vector.broadcast %cst_7 : f32 to vector<512x256xf32>
    %13 = arith.subf %11, %12 : vector<512x256xf32>
    %14 = arith.select %8, %6, %13 : vector<512x256xi1>, vector<512x256xf32>
    %15 = vector.extract_strided_slice %2 {offsets = [0, 256], sizes = [512, 256], strides = [1, 1]} : vector<512x512xf32> to vector<512x256xf32>
    %16 = arith.truncf %14 : vector<512x256xf32> to vector<512x256xbf16>
    %c0_8 = arith.constant 0 : index
    %c0_9 = arith.constant 0 : index
    %c0_10 = arith.constant 0 : index
    %17 = vector.load %arg4[%c0_8, %c0_9, %c0_10] : memref<7x256x256xbf16, #tpu.memory_space<vmem>>, vector<1x256x256xbf16>
    %18 = vector.shape_cast %17 : vector<1x256x256xbf16> to vector<256x256xbf16>
    %cst_11 = arith.constant dense<0.000000e+00> : vector<512x256xf32>
    %19 = tpu.matmul %16, %18, %cst_11 {dimension_numbers = #tpu.dot_dimension_numbers<[1], [0], [0], [1], [0, 0, 1, 1], [], []>} : vector<512x256xbf16>, vector<256x256xbf16>, vector<512x256xf32> -> vector<512x256xf32>
    %c0_12 = arith.constant 0 : index
    %c0_13 = arith.constant 0 : index
    %20 = vector.load %arg5[%c0_12, %c0_13] : memref<7x256xf32, #tpu.memory_space<vmem>>, vector<1x256xf32>
    %21 = vector.broadcast %20 : vector<1x256xf32> to vector<512x256xf32>
    %22 = arith.addf %19, %21 : vector<512x256xf32>
    %cst_14 = arith.constant 0.000000e+00 : f32
    %23 = vector.broadcast %cst_14 : f32 to vector<512x256xf32>
    %24 = arith.cmpf ogt, %22, %23 : vector<512x256xf32>
    %cst_15 = arith.constant 0.000000e+00 : f32
    %25 = vector.broadcast %cst_15 : f32 to vector<512x256xf32>
    %26 = arith.minimumf %22, %25 : vector<512x256xf32>
    %27 = math.exp %26 : vector<512x256xf32>
    %cst_16 = arith.constant 1.000000e+00 : f32
    %28 = vector.broadcast %cst_16 : f32 to vector<512x256xf32>
    %29 = arith.subf %27, %28 : vector<512x256xf32>
    %30 = arith.select %24, %22, %29 : vector<512x256xi1>, vector<512x256xf32>
    %31 = arith.truncf %30 : vector<512x256xf32> to vector<512x256xbf16>
    %c1 = arith.constant 1 : index
    %c0_17 = arith.constant 0 : index
    %c0_18 = arith.constant 0 : index
    %32 = vector.load %arg4[%c1, %c0_17, %c0_18] : memref<7x256x256xbf16, #tpu.memory_space<vmem>>, vector<1x256x256xbf16>
    %33 = vector.shape_cast %32 : vector<1x256x256xbf16> to vector<256x256xbf16>
    %cst_19 = arith.constant dense<0.000000e+00> : vector<512x256xf32>
    %34 = tpu.matmul %31, %33, %cst_19 {dimension_numbers = #tpu.dot_dimension_numbers<[1], [0], [0], [1], [0, 0, 1, 1], [], []>} : vector<512x256xbf16>, vector<256x256xbf16>, vector<512x256xf32> -> vector<512x256xf32>
    %c1_20 = arith.constant 1 : index
    %c0_21 = arith.constant 0 : index
    %35 = vector.load %arg5[%c1_20, %c0_21] : memref<7x256xf32, #tpu.memory_space<vmem>>, vector<1x256xf32>
    %36 = vector.broadcast %35 : vector<1x256xf32> to vector<512x256xf32>
    %37 = arith.addf %34, %36 : vector<512x256xf32>
    %cst_22 = arith.constant 0.000000e+00 : f32
    %38 = vector.broadcast %cst_22 : f32 to vector<512x256xf32>
    %39 = arith.cmpf ogt, %37, %38 : vector<512x256xf32>
    %cst_23 = arith.constant 0.000000e+00 : f32
    %40 = vector.broadcast %cst_23 : f32 to vector<512x256xf32>
    %41 = arith.minimumf %37, %40 : vector<512x256xf32>
    %42 = math.exp %41 : vector<512x256xf32>
    %cst_24 = arith.constant 1.000000e+00 : f32
    %43 = vector.broadcast %cst_24 : f32 to vector<512x256xf32>
    %44 = arith.subf %42, %43 : vector<512x256xf32>
    %45 = arith.select %39, %37, %44 : vector<512x256xi1>, vector<512x256xf32>
    %46 = arith.truncf %45 : vector<512x256xf32> to vector<512x256xbf16>
    %c2 = arith.constant 2 : index
    %c0_25 = arith.constant 0 : index
    %c0_26 = arith.constant 0 : index
    %47 = vector.load %arg4[%c2, %c0_25, %c0_26] : memref<7x256x256xbf16, #tpu.memory_space<vmem>>, vector<1x256x256xbf16>
    %48 = vector.shape_cast %47 : vector<1x256x256xbf16> to vector<256x256xbf16>
    %cst_27 = arith.constant dense<0.000000e+00> : vector<512x256xf32>
    %49 = tpu.matmul %46, %48, %cst_27 {dimension_numbers = #tpu.dot_dimension_numbers<[1], [0], [0], [1], [0, 0, 1, 1], [], []>} : vector<512x256xbf16>, vector<256x256xbf16>, vector<512x256xf32> -> vector<512x256xf32>
    %c2_28 = arith.constant 2 : index
    %c0_29 = arith.constant 0 : index
    %50 = vector.load %arg5[%c2_28, %c0_29] : memref<7x256xf32, #tpu.memory_space<vmem>>, vector<1x256xf32>
    %51 = vector.broadcast %50 : vector<1x256xf32> to vector<512x256xf32>
    %52 = arith.addf %49, %51 : vector<512x256xf32>
    %cst_30 = arith.constant 0.000000e+00 : f32
    %53 = vector.broadcast %cst_30 : f32 to vector<512x256xf32>
    %54 = arith.cmpf ogt, %52, %53 : vector<512x256xf32>
    %cst_31 = arith.constant 0.000000e+00 : f32
    %55 = vector.broadcast %cst_31 : f32 to vector<512x256xf32>
    %56 = arith.minimumf %52, %55 : vector<512x256xf32>
    %57 = math.exp %56 : vector<512x256xf32>
    %cst_32 = arith.constant 1.000000e+00 : f32
    %58 = vector.broadcast %cst_32 : f32 to vector<512x256xf32>
    %59 = arith.subf %57, %58 : vector<512x256xf32>
    %60 = arith.select %54, %52, %59 : vector<512x256xi1>, vector<512x256xf32>
    %61 = arith.truncf %60 : vector<512x256xf32> to vector<512x256xbf16>
    %c3 = arith.constant 3 : index
    %c0_33 = arith.constant 0 : index
    %c0_34 = arith.constant 0 : index
    %62 = vector.load %arg4[%c3, %c0_33, %c0_34] : memref<7x256x256xbf16, #tpu.memory_space<vmem>>, vector<1x256x256xbf16>
    %63 = vector.shape_cast %62 : vector<1x256x256xbf16> to vector<256x256xbf16>
    %cst_35 = arith.constant dense<0.000000e+00> : vector<512x256xf32>
    %64 = tpu.matmul %61, %63, %cst_35 {dimension_numbers = #tpu.dot_dimension_numbers<[1], [0], [0], [1], [0, 0, 1, 1], [], []>} : vector<512x256xbf16>, vector<256x256xbf16>, vector<512x256xf32> -> vector<512x256xf32>
    %c3_36 = arith.constant 3 : index
    %c0_37 = arith.constant 0 : index
    %65 = vector.load %arg5[%c3_36, %c0_37] : memref<7x256xf32, #tpu.memory_space<vmem>>, vector<1x256xf32>
    %66 = vector.broadcast %65 : vector<1x256xf32> to vector<512x256xf32>
    %67 = arith.addf %64, %66 : vector<512x256xf32>
    %cst_38 = arith.constant 0.000000e+00 : f32
    %68 = vector.broadcast %cst_38 : f32 to vector<512x256xf32>
    %69 = arith.cmpf ogt, %67, %68 : vector<512x256xf32>
    %cst_39 = arith.constant 0.000000e+00 : f32
    %70 = vector.broadcast %cst_39 : f32 to vector<512x256xf32>
    %71 = arith.minimumf %67, %70 : vector<512x256xf32>
    %72 = math.exp %71 : vector<512x256xf32>
    %cst_40 = arith.constant 1.000000e+00 : f32
    %73 = vector.broadcast %cst_40 : f32 to vector<512x256xf32>
    %74 = arith.subf %72, %73 : vector<512x256xf32>
    %75 = arith.select %69, %67, %74 : vector<512x256xi1>, vector<512x256xf32>
    %76 = arith.truncf %75 : vector<512x256xf32> to vector<512x256xbf16>
    %c4 = arith.constant 4 : index
    %c0_41 = arith.constant 0 : index
    %c0_42 = arith.constant 0 : index
    %77 = vector.load %arg4[%c4, %c0_41, %c0_42] : memref<7x256x256xbf16, #tpu.memory_space<vmem>>, vector<1x256x256xbf16>
    %78 = vector.shape_cast %77 : vector<1x256x256xbf16> to vector<256x256xbf16>
    %cst_43 = arith.constant dense<0.000000e+00> : vector<512x256xf32>
    %79 = tpu.matmul %76, %78, %cst_43 {dimension_numbers = #tpu.dot_dimension_numbers<[1], [0], [0], [1], [0, 0, 1, 1], [], []>} : vector<512x256xbf16>, vector<256x256xbf16>, vector<512x256xf32> -> vector<512x256xf32>
    %c4_44 = arith.constant 4 : index
    %c0_45 = arith.constant 0 : index
    %80 = vector.load %arg5[%c4_44, %c0_45] : memref<7x256xf32, #tpu.memory_space<vmem>>, vector<1x256xf32>
    %81 = vector.broadcast %80 : vector<1x256xf32> to vector<512x256xf32>
    %82 = arith.addf %79, %81 : vector<512x256xf32>
    %83 = arith.addf %82, %15 : vector<512x256xf32>
    %cst_46 = arith.constant 0.000000e+00 : f32
    %84 = vector.broadcast %cst_46 : f32 to vector<512x256xf32>
    %85 = arith.cmpf ogt, %83, %84 : vector<512x256xf32>
    %cst_47 = arith.constant 0.000000e+00 : f32
    %86 = vector.broadcast %cst_47 : f32 to vector<512x256xf32>
    %87 = arith.minimumf %83, %86 : vector<512x256xf32>
    %88 = math.exp %87 : vector<512x256xf32>
    %cst_48 = arith.constant 1.000000e+00 : f32
    %89 = vector.broadcast %cst_48 : f32 to vector<512x256xf32>
    %90 = arith.subf %88, %89 : vector<512x256xf32>
    %91 = arith.select %85, %83, %90 : vector<512x256xi1>, vector<512x256xf32>
    %92 = arith.truncf %91 : vector<512x256xf32> to vector<512x256xbf16>
    %c5 = arith.constant 5 : index
    %c0_49 = arith.constant 0 : index
    %c0_50 = arith.constant 0 : index
    %93 = vector.load %arg4[%c5, %c0_49, %c0_50] : memref<7x256x256xbf16, #tpu.memory_space<vmem>>, vector<1x256x256xbf16>
    %94 = vector.shape_cast %93 : vector<1x256x256xbf16> to vector<256x256xbf16>
    %cst_51 = arith.constant dense<0.000000e+00> : vector<512x256xf32>
    %95 = tpu.matmul %92, %94, %cst_51 {dimension_numbers = #tpu.dot_dimension_numbers<[1], [0], [0], [1], [0, 0, 1, 1], [], []>} : vector<512x256xbf16>, vector<256x256xbf16>, vector<512x256xf32> -> vector<512x256xf32>
    %c5_52 = arith.constant 5 : index
    %c0_53 = arith.constant 0 : index
    %96 = vector.load %arg5[%c5_52, %c0_53] : memref<7x256xf32, #tpu.memory_space<vmem>>, vector<1x256xf32>
    %97 = vector.broadcast %96 : vector<1x256xf32> to vector<512x256xf32>
    %98 = arith.addf %95, %97 : vector<512x256xf32>
    %cst_54 = arith.constant 0.000000e+00 : f32
    %99 = vector.broadcast %cst_54 : f32 to vector<512x256xf32>
    %100 = arith.cmpf ogt, %98, %99 : vector<512x256xf32>
    %cst_55 = arith.constant 0.000000e+00 : f32
    %101 = vector.broadcast %cst_55 : f32 to vector<512x256xf32>
    %102 = arith.minimumf %98, %101 : vector<512x256xf32>
    %103 = math.exp %102 : vector<512x256xf32>
    %cst_56 = arith.constant 1.000000e+00 : f32
    %104 = vector.broadcast %cst_56 : f32 to vector<512x256xf32>
    %105 = arith.subf %103, %104 : vector<512x256xf32>
    %106 = arith.select %100, %98, %105 : vector<512x256xi1>, vector<512x256xf32>
    %107 = arith.truncf %106 : vector<512x256xf32> to vector<512x256xbf16>
    %c6 = arith.constant 6 : index
    %c0_57 = arith.constant 0 : index
    %c0_58 = arith.constant 0 : index
    %108 = vector.load %arg4[%c6, %c0_57, %c0_58] : memref<7x256x256xbf16, #tpu.memory_space<vmem>>, vector<1x256x256xbf16>
    %109 = vector.shape_cast %108 : vector<1x256x256xbf16> to vector<256x256xbf16>
    %cst_59 = arith.constant dense<0.000000e+00> : vector<512x256xf32>
    %110 = tpu.matmul %107, %109, %cst_59 {dimension_numbers = #tpu.dot_dimension_numbers<[1], [0], [0], [1], [0, 0, 1, 1], [], []>} : vector<512x256xbf16>, vector<256x256xbf16>, vector<512x256xf32> -> vector<512x256xf32>
    %c6_60 = arith.constant 6 : index
    %c0_61 = arith.constant 0 : index
    %111 = vector.load %arg5[%c6_60, %c0_61] : memref<7x256xf32, #tpu.memory_space<vmem>>, vector<1x256xf32>
    %112 = vector.broadcast %111 : vector<1x256xf32> to vector<512x256xf32>
    %113 = arith.addf %110, %112 : vector<512x256xf32>
    %cst_62 = arith.constant 0.000000e+00 : f32
    %114 = vector.broadcast %cst_62 : f32 to vector<512x256xf32>
    %115 = arith.cmpf ogt, %113, %114 : vector<512x256xf32>
    %cst_63 = arith.constant 0.000000e+00 : f32
    %116 = vector.broadcast %cst_63 : f32 to vector<512x256xf32>
    %117 = arith.minimumf %113, %116 : vector<512x256xf32>
    %118 = math.exp %117 : vector<512x256xf32>
    %cst_64 = arith.constant 1.000000e+00 : f32
    %119 = vector.broadcast %cst_64 : f32 to vector<512x256xf32>
    %120 = arith.subf %118, %119 : vector<512x256xf32>
    %121 = arith.select %115, %113, %120 : vector<512x256xi1>, vector<512x256xf32>
    %122 = arith.truncf %121 : vector<512x256xf32> to vector<512x256xbf16>
    %c0_65 = arith.constant 0 : index
    %c0_66 = arith.constant 0 : index
    %123 = vector.load %arg6[%c0_65, %c0_66] : memref<256x3xbf16, #tpu.memory_space<vmem>>, vector<256x3xbf16>
    %cst_67 = arith.constant dense<0.000000e+00> : vector<512x3xf32>
    %124 = tpu.matmul %122, %123, %cst_67 {dimension_numbers = #tpu.dot_dimension_numbers<[1], [0], [0], [1], [0, 0, 1, 1], [], []>} : vector<512x256xbf16>, vector<256x3xbf16>, vector<512x3xf32> -> vector<512x3xf32>
    %c0_68 = arith.constant 0 : index
    %c0_69 = arith.constant 0 : index
    %125 = vector.load %arg7[%c0_68, %c0_69] : memref<1x3xf32, #tpu.memory_space<vmem>>, vector<1x3xf32>
    %126 = vector.broadcast %125 : vector<1x3xf32> to vector<512x3xf32>
    %127 = arith.addf %124, %126 : vector<512x3xf32>
    %c0_70 = arith.constant 0 : index
    %c0_71 = arith.constant 0 : index
    %128 = vector.load %arg8[%c0_70, %c0_71] : memref<512x3xf32, #tpu.memory_space<vmem>>, vector<512x3xf32>
    tpu.vector_store %arg8[%c0_70, %c0_71], %127 {strides = array<i32>} : memref<512x3xf32, #tpu.memory_space<vmem>>, vector<512x3xf32>,
    return
  }
  func.func @transform_0(%arg0: i32) -> (i32, i32) {
    %c0_i32 = arith.constant 0 : i32
    %c0_i32_0 = arith.constant 0 : i32
    return %arg0, %c0_i32 : i32, i32
  }
  func.func @transform_1(%arg0: i32) -> (i32, i32) {
    %c0_i32 = arith.constant 0 : i32
    %c0_i32_0 = arith.constant 0 : i32
    %c0_i32_1 = arith.constant 0 : i32
    return %c0_i32, %c0_i32_0 : i32, i32
  }
  func.func @transform_2(%arg0: i32) -> (i32, i32) {
    %c0_i32 = arith.constant 0 : i32
    %c0_i32_0 = arith.constant 0 : i32
    %c0_i32_1 = arith.constant 0 : i32
    return %c0_i32, %c0_i32_0 : i32, i32
  }
  func.func @transform_3(%arg0: i32) -> (i32, i32, i32) {
    %c0_i32 = arith.constant 0 : i32
    %c0_i32_0 = arith.constant 0 : i32
    %c0_i32_1 = arith.constant 0 : i32
    %c0_i32_2 = arith.constant 0 : i32
    return %c0_i32, %c0_i32_0, %c0_i32_1 : i32, i32, i32
  }
  func.func @transform_4(%arg0: i32) -> (i32, i32) {
    %c0_i32 = arith.constant 0 : i32
    %c0_i32_0 = arith.constant 0 : i32
    %c0_i32_1 = arith.constant 0 : i32
    return %c0_i32, %c0_i32_0 : i32, i32
  }
  func.func @transform_5(%arg0: i32) -> (i32, i32) {
    %c0_i32 = arith.constant 0 : i32
    %c0_i32_0 = arith.constant 0 : i32
    %c0_i32_1 = arith.constant 0 : i32
    return %c0_i32, %c0_i32_0 : i32, i32
  }
  func.func @transform_6(%arg0: i32) -> (i32, i32) {
    %c0_i32 = arith.constant 0 : i32
    %c0_i32_0 = arith.constant 0 : i32
    %c0_i32_1 = arith.constant 0 : i32
    return %c0_i32, %c0_i32_0 : i32, i32
  }
  func.func @transform_7(%arg0: i32) -> (i32, i32) {
    %c0_i32 = arith.constant 0 : i32
    %c0_i32_0 = arith.constant 0 : i32
    return %arg0, %c0_i32 : i32, i32
  }
}

</mosaic_0001>

<llo_original>
// kernel: minmax_ray_netcee_forward.1
$region0: #{minmax_ray_netcee_forward.1}
  #allocation0 [shape = 'u32[]', space=smem, size = 0x4, offset = 0x4, fixed_abs, tag = 'smem constant byte address 0x4 - core index']
  #allocation1 [shape = 'u32[144,128]{1,0:T(1,128)}', space=vmem, size = 0x12000, scoped, tag = 'internal scratch']
  %s0 = inlined_call_operand.vmem [shape: bf16[512,3], index: 0, kind: input, shape index: {}]
  %s1 = inlined_call_operand.vmem [shape: bf16[3,512], index: 1, kind: input, shape index: {}]
  %s2 = inlined_call_operand.vmem [shape: f32[1,256], index: 2, kind: input, shape index: {}]
  %s3 = inlined_call_operand.vmem [shape: bf16[7,256,256], index: 3, kind: input, shape index: {}]
  %s4 = inlined_call_operand.vmem [shape: f32[7,256], index: 4, kind: input, shape index: {}]
  %s5 = inlined_call_operand.vmem [shape: bf16[256,3], index: 5, kind: input, shape index: {}]
  %s6 = inlined_call_operand.vmem [shape: f32[1,3], index: 6, kind: input, shape index: {}]
  %s7 = inlined_call_operand.vmem [shape: f32[512,3], index: 7, kind: output, shape index: {}]
  %s8 = sld [smem:[#allocation0]]
  $region38: #{minmax_ray_netcee_forward.1} parent=0
    _
  %s10 = ssub.s32 1, %s8
  %s11 = scalar_select 0, %s10, %s8
  // Predicated region
  $region2: #{minmax_ray_netcee_forward.1} parent=0 // pred_check
    _
  $region3: #{minmax_ray_netcee_forward.1} parent=0 // pred_check_branch
    %13 = sbr.rel (0) target = $region5
  $region4: #{minmax_ray_netcee_forward.1} parent=0 // pred_region
    _
  $region5: #{minmax_ray_netcee_forward.1} parent=0 // pred_fallthru
    _
  // Predicated region
  $region6: #{minmax_ray_netcee_forward.1} parent=0 // pred_check
    _
  $region7: #{minmax_ray_netcee_forward.1} parent=0 // pred_check_branch
    %15 = sbr.rel (0) target = $region9
  $region8: #{minmax_ray_netcee_forward.1} parent=0 // pred_region
    _
  $region9: #{minmax_ray_netcee_forward.1} parent=0 // pred_fallthru
    _
  // Predicated region
  $region10: #{minmax_ray_netcee_forward.1} parent=0 // pred_check
    _
  $region11: #{minmax_ray_netcee_forward.1} parent=0 // pred_check_branch
    %17 = sbr.rel (0) target = $region13
  $region12: #{minmax_ray_netcee_forward.1} parent=0 // pred_region
    _
  $region13: #{minmax_ray_netcee_forward.1} parent=0 // pred_fallthru
    _
  // Predicated region
  $region14: #{minmax_ray_netcee_forward.1} parent=0 // pred_check
    _
  $region15: #{minmax_ray_netcee_forward.1} parent=0 // pred_check_branch
    %19 = sbr.rel (0) target = $region17
  $region16: #{minmax_ray_netcee_forward.1} parent=0 // pred_region
    _
  $region17: #{minmax_ray_netcee_forward.1} parent=0 // pred_fallthru
    _
  // Predicated region
  $region18: #{minmax_ray_netcee_forward.1} parent=0 // pred_check
    _
  $region19: #{minmax_ray_netcee_forward.1} parent=0 // pred_check_branch
    %21 = sbr.rel (0) target = $region21
  $region20: #{minmax_ray_netcee_forward.1} parent=0 // pred_region
    _
  $region21: #{minmax_ray_netcee_forward.1} parent=0 // pred_fallthru
    _
  // Predicated region
  $region22: #{minmax_ray_netcee_forward.1} parent=0 // pred_check
    _
  $region23: #{minmax_ray_netcee_forward.1} parent=0 // pred_check_branch
    %23 = sbr.rel (0) target = $region25
  $region24: #{minmax_ray_netcee_forward.1} parent=0 // pred_region
    _
  $region25: #{minmax_ray_netcee_forward.1} parent=0 // pred_fallthru
    _
  // Predicated region
  $region26: #{minmax_ray_netcee_forward.1} parent=0 // pred_check
    _
  $region27: #{minmax_ray_netcee_forward.1} parent=0 // pred_check_branch
    %25 = sbr.rel (0) target = $region29
  $region28: #{minmax_ray_netcee_forward.1} parent=0 // pred_region
    _
  $region29: #{minmax_ray_netcee_forward.1} parent=0 // pred_fallthru
    _
  %v27 = vld [vmem:[%s0] sm:$0xf]
  %v28 = vld [vmem:[%s0 + $0x4] sm:$0xf]
  %v29 = vld [vmem:[%s0 + $0x8] sm:$0xf]
  %v30 = vld [vmem:[%s0 + $0xc] sm:$0xf]
  %v31 = vld [vmem:[%s0 + $0x10] sm:$0xf]
  %v32 = vld [vmem:[%s0 + $0x14] sm:$0xf]
  %v33 = vld [vmem:[%s0 + $0x18] sm:$0xf]
  %v34 = vld [vmem:[%s0 + $0x1c] sm:$0xf]
  %v35 = vld [vmem:[%s0 + $0x20] sm:$0xf]
  %v36 = vld [vmem:[%s0 + $0x24] sm:$0xf]
  %v37 = vld [vmem:[%s0 + $0x28] sm:$0xf]
  %v38 = vld [vmem:[%s0 + $0x2c] sm:$0xf]
  %v39 = vld [vmem:[%s0 + $0x30] sm:$0xf]
  %v40 = vld [vmem:[%s0 + $0x34] sm:$0xf]
  %v41 = vld [vmem:[%s0 + $0x38] sm:$0xf]
  %v42 = vld [vmem:[%s0 + $0x3c] sm:$0xf]
  %v43 = vld [vmem:[%s0 + $0x40] sm:$0xf]
  %v44 = vld [vmem:[%s0 + $0x44] sm:$0xf]
  %v45 = vld [vmem:[%s0 + $0x48] sm:$0xf]
  %v46 = vld [vmem:[%s0 + $0x4c] sm:$0xf]
  %v47 = vld [vmem:[%s0 + $0x50] sm:$0xf]
  %v48 = vld [vmem:[%s0 + $0x54] sm:$0xf]
  %v49 = vld [vmem:[%s0 + $0x58] sm:$0xf]
  %v50 = vld [vmem:[%s0 + $0x5c] sm:$0xf]
  %v51 = vld [vmem:[%s0 + $0x60] sm:$0xf]
  %v52 = vld [vmem:[%s0 + $0x64] sm:$0xf]
  %v53 = vld [vmem:[%s0 + $0x68] sm:$0xf]
  %v54 = vld [vmem:[%s0 + $0x6c] sm:$0xf]
  %v55 = vld [vmem:[%s0 + $0x70] sm:$0xf]
  %v56 = vld [vmem:[%s0 + $0x74] sm:$0xf]
  %v57 = vld [vmem:[%s0 + $0x78] sm:$0xf]
  %v58 = vld [vmem:[%s0 + $0x7c] sm:$0xf]
  %v59 = vld [vmem:[%s0 + $0x80] sm:$0xf]
  %v60 = vld [vmem:[%s0 + $0x84] sm:$0xf]
  %v61 = vld [vmem:[%s0 + $0x88] sm:$0xf]
  %v62 = vld [vmem:[%s0 + $0x8c] sm:$0xf]
  %v63 = vld [vmem:[%s0 + $0x90] sm:$0xf]
  %v64 = vld [vmem:[%s0 + $0x94] sm:$0xf]
  %v65 = vld [vmem:[%s0 + $0x98] sm:$0xf]
  %v66 = vld [vmem:[%s0 + $0x9c] sm:$0xf]
  %v67 = vld [vmem:[%s0 + $0xa0] sm:$0xf]
  %v68 = vld [vmem:[%s0 + $0xa4] sm:$0xf]
  %v69 = vld [vmem:[%s0 + $0xa8] sm:$0xf]
  %v70 = vld [vmem:[%s0 + $0xac] sm:$0xf]
  %v71 = vld [vmem:[%s0 + $0xb0] sm:$0xf]
  %v72 = vld [vmem:[%s0 + $0xb4] sm:$0xf]
  %v73 = vld [vmem:[%s0 + $0xb8] sm:$0xf]
  %v74 = vld [vmem:[%s0 + $0xbc] sm:$0xf]
  %v75 = vld [vmem:[%s0 + $0xc0] sm:$0xf]
  %v76 = vld [vmem:[%s0 + $0xc4] sm:$0xf]
  %v77 = vld [vmem:[%s0 + $0xc8] sm:$0xf]
  %v78 = vld [vmem:[%s0 + $0xcc] sm:$0xf]
  %v79 = vld [vmem:[%s0 + $0xd0] sm:$0xf]
  %v80 = vld [vmem:[%s0 + $0xd4] sm:$0xf]
  %v81 = vld [vmem:[%s0 + $0xd8] sm:$0xf]
  %v82 = vld [vmem:[%s0 + $0xdc] sm:$0xf]
  %v83 = vld [vmem:[%s0 + $0xe0] sm:$0xf]
  %v84 = vld [vmem:[%s0 + $0xe4] sm:$0xf]
  %v85 = vld [vmem:[%s0 + $0xe8] sm:$0xf]
  %v86 = vld [vmem:[%s0 + $0xec] sm:$0xf]
  %v87 = vld [vmem:[%s0 + $0xf0] sm:$0xf]
  %v88 = vld [vmem:[%s0 + $0xf4] sm:$0xf]
  %v89 = vld [vmem:[%s0 + $0xf8] sm:$0xf]
  %v90 = vld [vmem:[%s0 + $0xfc] sm:$0xf]
  %v91 = vld [vmem:[%s1] sm:$0xff]
  %v156 = vunpack.c.l.b16 %v27
  %v157 = vunpack.c.l.b16 %v28
  %v158 = vunpack.c.l.b16 %v29
  %v159 = vunpack.c.l.b16 %v30
  %v160 = vunpack.c.l.b16 %v31
  %v161 = vunpack.c.l.b16 %v32
  %v162 = vunpack.c.l.b16 %v33
  %v163 = vunpack.c.l.b16 %v34
  %v164 = vunpack.c.l.b16 %v35
  %v165 = vunpack.c.l.b16 %v36
  %v166 = vunpack.c.l.b16 %v37
  %v167 = vunpack.c.l.b16 %v38
  %v168 = vunpack.c.l.b16 %v39
  %v169 = vunpack.c.l.b16 %v40
  %v170 = vunpack.c.l.b16 %v41
  %v171 = vunpack.c.l.b16 %v42
  %v172 = vunpack.c.l.b16 %v43
  %v173 = vunpack.c.l.b16 %v44
  %v174 = vunpack.c.l.b16 %v45
  %v175 = vunpack.c.l.b16 %v46
  %v176 = vunpack.c.l.b16 %v47
  %v177 = vunpack.c.l.b16 %v48
  %v178 = vunpack.c.l.b16 %v49
  %v179 = vunpack.c.l.b16 %v50
  %v180 = vunpack.c.l.b16 %v51
  %v181 = vunpack.c.l.b16 %v52
  %v182 = vunpack.c.l.b16 %v53
  %v183 = vunpack.c.l.b16 %v54
  %v184 = vunpack.c.l.b16 %v55
  %v185 = vunpack.c.l.b16 %v56
  %v186 = vunpack.c.l.b16 %v57
  %v187 = vunpack.c.l.b16 %v58
  %v188 = vunpack.c.l.b16 %v59
  %v189 = vunpack.c.l.b16 %v60
  %v190 = vunpack.c.l.b16 %v61
  %v191 = vunpack.c.l.b16 %v62
  %v192 = vunpack.c.l.b16 %v63
  %v193 = vunpack.c.l.b16 %v64
  %v194 = vunpack.c.l.b16 %v65
  %v195 = vunpack.c.l.b16 %v66
  %v196 = vunpack.c.l.b16 %v67
  %v197 = vunpack.c.l.b16 %v68
  %v198 = vunpack.c.l.b16 %v69
  %v199 = vunpack.c.l.b16 %v70
  %v200 = vunpack.c.l.b16 %v71
  %v201 = vunpack.c.l.b16 %v72
  %v202 = vunpack.c.l.b16 %v73
  %v203 = vunpack.c.l.b16 %v74
  %v204 = vunpack.c.l.b16 %v75
  %v205 = vunpack.c.l.b16 %v76
  %v206 = vunpack.c.l.b16 %v77
  %v207 = vunpack.c.l.b16 %v78
  %v208 = vunpack.c.l.b16 %v79
  %v209 = vunpack.c.l.b16 %v80
  %v210 = vunpack.c.l.b16 %v81
  %v211 = vunpack.c.l.b16 %v82
  %v212 = vunpack.c.l.b16 %v83
  %v213 = vunpack.c.l.b16 %v84
  %v214 = vunpack.c.l.b16 %v85
  %v215 = vunpack.c.l.b16 %v86
  %v216 = vunpack.c.l.b16 %v87
  %v217 = vunpack.c.l.b16 %v88
  %v218 = vunpack.c.l.b16 %v89
  %v219 = vunpack.c.l.b16 %v90
  %v220 = vpack.c.b16 %v157, %v156
  %v221 = vpack.c.b16 %v159, %v158
  %v222 = vpack.c.b16 %v161, %v160
  %v223 = vpack.c.b16 %v163, %v162
  %v224 = vpack.c.b16 %v165, %v164
  %v225 = vpack.c.b16 %v167, %v166
  %v226 = vpack.c.b16 %v169, %v168
  %v227 = vpack.c.b16 %v171, %v170
  %v228 = vpack.c.b16 %v173, %v172
  %v229 = vpack.c.b16 %v175, %v174
  %v230 = vpack.c.b16 %v177, %v176
  %v231 = vpack.c.b16 %v179, %v178
  %v232 = vpack.c.b16 %v181, %v180
  %v233 = vpack.c.b16 %v183, %v182
  %v234 = vpack.c.b16 %v185, %v184
  %v235 = vpack.c.b16 %v187, %v186
  %v236 = vpack.c.b16 %v189, %v188
  %v237 = vpack.c.b16 %v191, %v190
  %v238 = vpack.c.b16 %v193, %v192
  %v239 = vpack.c.b16 %v195, %v194
  %v240 = vpack.c.b16 %v197, %v196
  %v241 = vpack.c.b16 %v199, %v198
  %v242 = vpack.c.b16 %v201, %v200
  %v243 = vpack.c.b16 %v203, %v202
  %v244 = vpack.c.b16 %v205, %v204
  %v245 = vpack.c.b16 %v207, %v206
  %v246 = vpack.c.b16 %v209, %v208
  %v247 = vpack.c.b16 %v211, %v210
  %v248 = vpack.c.b16 %v213, %v212
  %v249 = vpack.c.b16 %v215, %v214
  %v250 = vpack.c.b16 %v217, %v216
  %v251 = vpack.c.b16 %v219, %v218
  %v253 = vcombine.high %v91, %v91
  %v255 = vunpack.c.l.s4 1983009808
  %v256 = vunpack.c.0.s8 %v255
  %v257 = vlaneseq
  %v258 = vshrl.u32 %v257, 7
  %v259 = vsub.s32 %v256, %v258
  %v260 = vrot.slane %v91, %v259
  %v262 = vunpack.c.l.s4 1983009808
  %v263 = vunpack.c.0.s8 %v262
  %v264 = vlaneseq
  %v265 = vshrl.u32 %v264, 7
  %v266 = vsub.s32 %v263, %v265
  %v267 = vrot.slane %v253, %v266
  %v268 = vcombine.high %v260, %v260
  %v269 = vcombine.high %v267, %v267
  %vm270 = vcmask 23552
  %v272 = vsel %vm270, %v220, 0
  %v275 = vsel %vm270, %v221, 0
  %v278 = vsel %vm270, %v222, 0
  %v281 = vsel %vm270, %v223, 0
  %v284 = vsel %vm270, %v224, 0
  %v287 = vsel %vm270, %v225, 0
  %v290 = vsel %vm270, %v226, 0
  %v293 = vsel %vm270, %v227, 0
  %v296 = vsel %vm270, %v228, 0
  %v299 = vsel %vm270, %v229, 0
  %v302 = vsel %vm270, %v230, 0
  %v305 = vsel %vm270, %v231, 0
  %v308 = vsel %vm270, %v232, 0
  %v311 = vsel %vm270, %v233, 0
  %v314 = vsel %vm270, %v234, 0
  %v317 = vsel %vm270, %v235, 0
  %v320 = vsel %vm270, %v236, 0
  %v323 = vsel %vm270, %v237, 0
  %v326 = vsel %vm270, %v238, 0
  %v329 = vsel %vm270, %v239, 0
  %v332 = vsel %vm270, %v240, 0
  %v335 = vsel %vm270, %v241, 0
  %v338 = vsel %vm270, %v242, 0
  %v341 = vsel %vm270, %v243, 0
  %v344 = vsel %vm270, %v244, 0
  %v347 = vsel %vm270, %v245, 0
  %v350 = vsel %vm270, %v246, 0
  %v353 = vsel %vm270, %v247, 0
  %v356 = vsel %vm270, %v248, 0
  %v359 = vsel %vm270, %v249, 0
  %v362 = vsel %vm270, %v250, 0
  %v365 = vsel %vm270, %v251, 0
  %vm367 = vcmask 1040384
  %vm368 = vcmask 1041408
  %v369 = vsel %vm367, 4294967295, 65535
  %v370 = vsel %vm368, %v369, 0
  %v372 = vand.u32 %v260, %v370
  %v375 = vand.u32 %v268, %v370
  %v378 = vand.u32 %v267, %v370
  %v381 = vand.u32 %v269, %v370
  %383 = vmatprep.subr.bf16.mxu0 0
  %384 = vmatpush1.bf16.msra.mxu0 0
  %385 = vmatprep.subr.bf16.mxu0 0
  %386 = vmatpush1.bf16.msra.mxu0 0
  %387 = vmatprep.subr.bf16.mxu0 0
  %388 = vmatpush1.bf16.msra.mxu0 0
  %389 = vmatprep.subr.bf16.mxu0 0
  %390 = vmatpush1.bf16.msra.mxu0 0
  %391 = vmatprep.subr.bf16.mxu0 0
  %392 = vmatpush1.bf16.msra.mxu0 0
  %393 = vmatprep.subr.bf16.mxu0 0
  %394 = vmatpush1.bf16.msra.mxu0 0
  %395 = vmatprep.subr.bf16.mxu0 0
  %396 = vmatpush1.bf16.msra.mxu0 0
  %397 = vmatprep.subr.bf16.mxu0 %v375
  %398 = vmatpush1.bf16.msra.mxu0 %v372
  %399 = vmatprep.subr.bf16.mxu0 0
  %400 = vmatpush2.bf16.msra.mxu0 0
  %401 = vmatprep.subr.bf16.mxu0 0
  %402 = vmatpush2.bf16.msra.mxu0 0
  %403 = vmatprep.subr.bf16.mxu0 0
  %404 = vmatpush2.bf16.msra.mxu0 0
  %405 = vmatprep.subr.bf16.mxu0 0
  %406 = vmatpush2.bf16.msra.mxu0 0
  %407 = vmatprep.subr.bf16.mxu0 0
  %408 = vmatpush2.bf16.msra.mxu0 0
  %409 = vmatprep.subr.bf16.mxu0 0
  %410 = vmatpush2.bf16.msra.mxu0 0
  %411 = vmatprep.subr.bf16.mxu0 0
  %412 = vmatpush2.bf16.msra.mxu0 0
  %413 = vmatprep.subr.bf16.mxu0 0
  %414 = vmatpush2.bf16.msra.mxu0 0
  %415 = vmatprep.mubr.bf16.mxu0 0
  %416 = vmatmul.mubr.bf16.gmra.mxu0 %v272
  %v417 = vpop.f32.mrf.mxu0
  %v418 = vadd.f32 0.0, %v417
  %v419 = vpop.f32.mrf.mxu0
  %v420 = vadd.f32 0.0, %v419
  %v421 = vpop.f32.mrf.mxu0
  %v422 = vadd.f32 0.0, %v421
  %v423 = vpop.f32.mrf.mxu0
  %v424 = vadd.f32 0.0, %v423
  %425 = vmatprep.mubr.bf16.mxu0 0
  %426 = vmatmul.mubr.bf16.gmra.mxu0 %v275
  %v427 = vpop.f32.mrf.mxu0
  %v428 = vadd.f32 0.0, %v427
  %v429 = vpop.f32.mrf.mxu0
  %v430 = vadd.f32 0.0, %v429
  %v431 = vpop.f32.mrf.mxu0
  %v432 = vadd.f32 0.0, %v431
  %v433 = vpop.f32.mrf.mxu0
  %v434 = vadd.f32 0.0, %v433
  %435 = vmatprep.mubr.bf16.mxu0 0
  %436 = vmatmul.mubr.bf16.gmra.mxu0 %v278
  %v437 = vpop.f32.mrf.mxu0
  %v438 = vadd.f32 0.0, %v437
  %v439 = vpop.f32.mrf.mxu0
  %v440 = vadd.f32 0.0, %v439
  %v441 = vpop.f32.mrf.mxu0
  %v442 = vadd.f32 0.0, %v441
  %v443 = vpop.f32.mrf.mxu0
  %v444 = vadd.f32 0.0, %v443
  %445 = vmatprep.mubr.bf16.mxu0 0
  %446 = vmatmul.mubr.bf16.gmra.mxu0 %v281
  %v447 = vpop.f32.mrf.mxu0
  %v448 = vadd.f32 0.0, %v447
  %v449 = vpop.f32.mrf.mxu0
  %v450 = vadd.f32 0.0, %v449
  %v451 = vpop.f32.mrf.mxu0
  %v452 = vadd.f32 0.0, %v451
  %v453 = vpop.f32.mrf.mxu0
  %v454 = vadd.f32 0.0, %v453
  %455 = vmatprep.mubr.bf16.mxu0 0
  %456 = vmatmul.mubr.bf16.gmra.mxu0 %v284
  %v457 = vpop.f32.mrf.mxu0
  %v458 = vadd.f32 0.0, %v457
  %v459 = vpop.f32.mrf.mxu0
  %v460 = vadd.f32 0.0, %v459
  %v461 = vpop.f32.mrf.mxu0
  %v462 = vadd.f32 0.0, %v461
  %v463 = vpop.f32.mrf.mxu0
  %v464 = vadd.f32 0.0, %v463
  %465 = vmatprep.mubr.bf16.mxu0 0
  %466 = vmatmul.mubr.bf16.gmra.mxu0 %v287
  %v467 = vpop.f32.mrf.mxu0
  %v468 = vadd.f32 0.0, %v467
  %v469 = vpop.f32.mrf.mxu0
  %v470 = vadd.f32 0.0, %v469
  %v471 = vpop.f32.mrf.mxu0
  %v472 = vadd.f32 0.0, %v471
  %v473 = vpop.f32.mrf.mxu0
  %v474 = vadd.f32 0.0, %v473
  %475 = vmatprep.mubr.bf16.mxu0 0
  %476 = vmatmul.mubr.bf16.gmra.mxu0 %v290
  %v477 = vpop.f32.mrf.mxu0
  %v478 = vadd.f32 0.0, %v477
  %v479 = vpop.f32.mrf.mxu0
  %v480 = vadd.f32 0.0, %v479
  %v481 = vpop.f32.mrf.mxu0
  %v482 = vadd.f32 0.0, %v481
  %v483 = vpop.f32.mrf.mxu0
  %v484 = vadd.f32 0.0, %v483
  %485 = vmatprep.mubr.bf16.mxu0 0
  %486 = vmatmul.mubr.bf16.gmra.mxu0 %v293
  %v487 = vpop.f32.mrf.mxu0
  %v488 = vadd.f32 0.0, %v487
  %v489 = vpop.f32.mrf.mxu0
  %v490 = vadd.f32 0.0, %v489
  %v491 = vpop.f32.mrf.mxu0
  %v492 = vadd.f32 0.0, %v491
  %v493 = vpop.f32.mrf.mxu0
  %v494 = vadd.f32 0.0, %v493
  %495 = vmatprep.mubr.bf16.mxu0 0
  %496 = vmatmul.mubr.bf16.gmra.mxu0 %v296
  %v497 = vpop.f32.mrf.mxu0
  %v498 = vadd.f32 0.0, %v497
  %v499 = vpop.f32.mrf.mxu0
  %v500 = vadd.f32 0.0, %v499
  %v501 = vpop.f32.mrf.mxu0
  %v502 = vadd.f32 0.0, %v501
  %v503 = vpop.f32.mrf.mxu0
  %v504 = vadd.f32 0.0, %v503
  %505 = vmatprep.mubr.bf16.mxu0 0
  %506 = vmatmul.mubr.bf16.gmra.mxu0 %v299
  %v507 = vpop.f32.mrf.mxu0
  %v508 = vadd.f32 0.0, %v507
  %v509 = vpop.f32.mrf.mxu0
  %v510 = vadd.f32 0.0, %v509
  %v511 = vpop.f32.mrf.mxu0
  %v512 = vadd.f32 0.0, %v511
  %v513 = vpop.f32.mrf.mxu0
  %v514 = vadd.f32 0.0, %v513
  %515 = vmatprep.mubr.bf16.mxu0 0
  %516 = vmatmul.mubr.bf16.gmra.mxu0 %v302
  %v517 = vpop.f32.mrf.mxu0
  %v518 = vadd.f32 0.0, %v517
  %v519 = vpop.f32.mrf.mxu0
  %v520 = vadd.f32 0.0, %v519
  %v521 = vpop.f32.mrf.mxu0
  %v522 = vadd.f32 0.0, %v521
  %v523 = vpop.f32.mrf.mxu0
  %v524 = vadd.f32 0.0, %v523
  %525 = vmatprep.mubr.bf16.mxu0 0
  %526 = vmatmul.mubr.bf16.gmra.mxu0 %v305
  %v527 = vpop.f32.mrf.mxu0
  %v528 = vadd.f32 0.0, %v527
  %v529 = vpop.f32.mrf.mxu0
  %v530 = vadd.f32 0.0, %v529
  %v531 = vpop.f32.mrf.mxu0
  %v532 = vadd.f32 0.0, %v531
  %v533 = vpop.f32.mrf.mxu0
  %v534 = vadd.f32 0.0, %v533
  %535 = vmatprep.mubr.bf16.mxu0 0
  %536 = vmatmul.mubr.bf16.gmra.mxu0 %v308
  %v537 = vpop.f32.mrf.mxu0
  %v538 = vadd.f32 0.0, %v537
  %v539 = vpop.f32.mrf.mxu0
  %v540 = vadd.f32 0.0, %v539
  %v541 = vpop.f32.mrf.mxu0
  %v542 = vadd.f32 0.0, %v541
  %v543 = vpop.f32.mrf.mxu0
  %v544 = vadd.f32 0.0, %v543
  %545 = vmatprep.mubr.bf16.mxu0 0
  %546 = vmatmul.mubr.bf16.gmra.mxu0 %v311
  %v547 = vpop.f32.mrf.mxu0
  %v548 = vadd.f32 0.0, %v547
  %v549 = vpop.f32.mrf.mxu0
  %v550 = vadd.f32 0.0, %v549
  %v551 = vpop.f32.mrf.mxu0
  %v552 = vadd.f32 0.0, %v551
  %v553 = vpop.f32.mrf.mxu0
  %v554 = vadd.f32 0.0, %v553
  %555 = vmatprep.mubr.bf16.mxu0 0
  %556 = vmatmul.mubr.bf16.gmra.mxu0 %v314
  %v557 = vpop.f32.mrf.mxu0
  %v558 = vadd.f32 0.0, %v557
  %v559 = vpop.f32.mrf.mxu0
  %v560 = vadd.f32 0.0, %v559
  %v561 = vpop.f32.mrf.mxu0
  %v562 = vadd.f32 0.0, %v561
  %v563 = vpop.f32.mrf.mxu0
  %v564 = vadd.f32 0.0, %v563
  %565 = vmatprep.mubr.bf16.mxu0 0
  %566 = vmatmul.mubr.bf16.gmra.mxu0 %v317
  %v567 = vpop.f32.mrf.mxu0
  %v568 = vadd.f32 0.0, %v567
  %v569 = vpop.f32.mrf.mxu0
  %v570 = vadd.f32 0.0, %v569
  %v571 = vpop.f32.mrf.mxu0
  %v572 = vadd.f32 0.0, %v571
  %v573 = vpop.f32.mrf.mxu0
  %v574 = vadd.f32 0.0, %v573
  %575 = vmatprep.mubr.bf16.mxu0 0
  %576 = vmatmul.mubr.bf16.gmra.mxu0 %v320
  %v577 = vpop.f32.mrf.mxu0
  %v578 = vadd.f32 0.0, %v577
  %v579 = vpop.f32.mrf.mxu0
  %v580 = vadd.f32 0.0, %v579
  %v581 = vpop.f32.mrf.mxu0
  %v582 = vadd.f32 0.0, %v581
  %v583 = vpop.f32.mrf.mxu0
  %v584 = vadd.f32 0.0, %v583
  %585 = vmatprep.mubr.bf16.mxu0 0
  %586 = vmatmul.mubr.bf16.gmra.mxu0 %v323
  %v587 = vpop.f32.mrf.mxu0
  %v588 = vadd.f32 0.0, %v587
  %v589 = vpop.f32.mrf.mxu0
  %v590 = vadd.f32 0.0, %v589
  %v591 = vpop.f32.mrf.mxu0
  %v592 = vadd.f32 0.0, %v591
  %v593 = vpop.f32.mrf.mxu0
  %v594 = vadd.f32 0.0, %v593
  %595 = vmatprep.mubr.bf16.mxu0 0
  %596 = vmatmul.mubr.bf16.gmra.mxu0 %v326
  %v597 = vpop.f32.mrf.mxu0
  %v598 = vadd.f32 0.0, %v597
  %v599 = vpop.f32.mrf.mxu0
  %v600 = vadd.f32 0.0, %v599
  %v601 = vpop.f32.mrf.mxu0
  %v602 = vadd.f32 0.0, %v601
  %v603 = vpop.f32.mrf.mxu0
  %v604 = vadd.f32 0.0, %v603
  %605 = vmatprep.mubr.bf16.mxu0 0
  %606 = vmatmul.mubr.bf16.gmra.mxu0 %v329
  %v607 = vpop.f32.mrf.mxu0
  %v608 = vadd.f32 0.0, %v607
  %v609 = vpop.f32.mrf.mxu0
  %v610 = vadd.f32 0.0, %v609
  %v611 = vpop.f32.mrf.mxu0
  %v612 = vadd.f32 0.0, %v611
  %v613 = vpop.f32.mrf.mxu0
  %v614 = vadd.f32 0.0, %v613
  %615 = vmatprep.mubr.bf16.mxu0 0
  %616 = vmatmul.mubr.bf16.gmra.mxu0 %v332
  %v617 = vpop.f32.mrf.mxu0
  %v618 = vadd.f32 0.0, %v617
  %v619 = vpop.f32.mrf.mxu0
  %v620 = vadd.f32 0.0, %v619
  %v621 = vpop.f32.mrf.mxu0
  %v622 = vadd.f32 0.0, %v621
  %v623 = vpop.f32.mrf.mxu0
  %v624 = vadd.f32 0.0, %v623
  %625 = vmatprep.mubr.bf16.mxu0 0
  %626 = vmatmul.mubr.bf16.gmra.mxu0 %v335
  %v627 = vpop.f32.mrf.mxu0
  %v628 = vadd.f32 0.0, %v627
  %v629 = vpop.f32.mrf.mxu0
  %v630 = vadd.f32 0.0, %v629
  %v631 = vpop.f32.mrf.mxu0
  %v632 = vadd.f32 0.0, %v631
  %v633 = vpop.f32.mrf.mxu0
  %v634 = vadd.f32 0.0, %v633
  %635 = vmatprep.mubr.bf16.mxu0 0
  %636 = vmatmul.mubr.bf16.gmra.mxu0 %v338
  %v637 = vpop.f32.mrf.mxu0
  %v638 = vadd.f32 0.0, %v637
  %v639 = vpop.f32.mrf.mxu0
  %v640 = vadd.f32 0.0, %v639
  %v641 = vpop.f32.mrf.mxu0
  %v642 = vadd.f32 0.0, %v641
  %v643 = vpop.f32.mrf.mxu0
  %v644 = vadd.f32 0.0, %v643
  %645 = vmatprep.mubr.bf16.mxu0 0
  %646 = vmatmul.mubr.bf16.gmra.mxu0 %v341
  %v647 = vpop.f32.mrf.mxu0
  %v648 = vadd.f32 0.0, %v647
  %v649 = vpop.f32.mrf.mxu0
  %v650 = vadd.f32 0.0, %v649
  %v651 = vpop.f32.mrf.mxu0
  %v652 = vadd.f32 0.0, %v651
  %v653 = vpop.f32.mrf.mxu0
  %v654 = vadd.f32 0.0, %v653
  %655 = vmatprep.mubr.bf16.mxu0 0
  %656 = vmatmul.mubr.bf16.gmra.mxu0 %v344
  %v657 = vpop.f32.mrf.mxu0
  %v658 = vadd.f32 0.0, %v657
  %v659 = vpop.f32.mrf.mxu0
  %v660 = vadd.f32 0.0, %v659
  %v661 = vpop.f32.mrf.mxu0
  %v662 = vadd.f32 0.0, %v661
  %v663 = vpop.f32.mrf.mxu0
  %v664 = vadd.f32 0.0, %v663
  %665 = vmatprep.mubr.bf16.mxu0 0
  %666 = vmatmul.mubr.bf16.gmra.mxu0 %v347
  %v667 = vpop.f32.mrf.mxu0
  %v668 = vadd.f32 0.0, %v667
  %v669 = vpop.f32.mrf.mxu0
  %v670 = vadd.f32 0.0, %v669
  %v671 = vpop.f32.mrf.mxu0
  %v672 = vadd.f32 0.0, %v671
  %v673 = vpop.f32.mrf.mxu0
  %v674 = vadd.f32 0.0, %v673
  %675 = vmatprep.mubr.bf16.mxu0 0
  %676 = vmatmul.mubr.bf16.gmra.mxu0 %v350
  %v677 = vpop.f32.mrf.mxu0
  %v678 = vadd.f32 0.0, %v677
  %v679 = vpop.f32.mrf.mxu0
  %v680 = vadd.f32 0.0, %v679
  %v681 = vpop.f32.mrf.mxu0
  %v682 = vadd.f32 0.0, %v681
  %v683 = vpop.f32.mrf.mxu0
  %v684 = vadd.f32 0.0, %v683
  %685 = vmatprep.mubr.bf16.mxu0 0
  %686 = vmatmul.mubr.bf16.gmra.mxu0 %v353
  %v687 = vpop.f32.mrf.mxu0
  %v688 = vadd.f32 0.0, %v687
  %v689 = vpop.f32.mrf.mxu0
  %v690 = vadd.f32 0.0, %v689
  %v691 = vpop.f32.mrf.mxu0
  %v692 = vadd.f32 0.0, %v691
  %v693 = vpop.f32.mrf.mxu0
  %v694 = vadd.f32 0.0, %v693
  %695 = vmatprep.mubr.bf16.mxu0 0
  %696 = vmatmul.mubr.bf16.gmra.mxu0 %v356
  %v697 = vpop.f32.mrf.mxu0
  %v698 = vadd.f32 0.0, %v697
  %v699 = vpop.f32.mrf.mxu0
  %v700 = vadd.f32 0.0, %v699
  %v701 = vpop.f32.mrf.mxu0
  %v702 = vadd.f32 0.0, %v701
  %v703 = vpop.f32.mrf.mxu0
  %v704 = vadd.f32 0.0, %v703
  %705 = vmatprep.mubr.bf16.mxu0 0
  %706 = vmatmul.mubr.bf16.gmra.mxu0 %v359
  %v707 = vpop.f32.mrf.mxu0
  %v708 = vadd.f32 0.0, %v707
  %v709 = vpop.f32.mrf.mxu0
  %v710 = vadd.f32 0.0, %v709
  %v711 = vpop.f32.mrf.mxu0
  %v712 = vadd.f32 0.0, %v711
  %v713 = vpop.f32.mrf.mxu0
  %v714 = vadd.f32 0.0, %v713
  %715 = vmatprep.mubr.bf16.mxu0 0
  %716 = vmatmul.mubr.bf16.gmra.mxu0 %v362
  %v717 = vpop.f32.mrf.mxu0
  %v718 = vadd.f32 0.0, %v717
  %v719 = vpop.f32.mrf.mxu0
  %v720 = vadd.f32 0.0, %v719
  %v721 = vpop.f32.mrf.mxu0
  %v722 = vadd.f32 0.0, %v721
  %v723 = vpop.f32.mrf.mxu0
  %v724 = vadd.f32 0.0, %v723
  %725 = vmatprep.mubr.bf16.mxu0 0
  %726 = vmatmul.mubr.bf16.gmra.mxu0 %v365
  %v727 = vpop.f32.mrf.mxu0
  %v728 = vadd.f32 0.0, %v727
  %v729 = vpop.f32.mrf.mxu0
  %v730 = vadd.f32 0.0, %v729
  %v731 = vpop.f32.mrf.mxu0
  %v732 = vadd.f32 0.0, %v731
  %v733 = vpop.f32.mrf.mxu0
  %v734 = vadd.f32 0.0, %v733
  %735 = vdwg.mxu0
  %736 = vmatprep.subr.bf16.mxu0 0
  %737 = vmatpush1.bf16.msra.mxu0 0
  %738 = vmatprep.subr.bf16.mxu0 0
  %739 = vmatpush1.bf16.msra.mxu0 0
  %740 = vmatprep.subr.bf16.mxu0 0
  %741 = vmatpush1.bf16.msra.mxu0 0
  %742 = vmatprep.subr.bf16.mxu0 0
  %743 = vmatpush1.bf16.msra.mxu0 0
  %744 = vmatprep.subr.bf16.mxu0 0
  %745 = vmatpush1.bf16.msra.mxu0 0
  %746 = vmatprep.subr.bf16.mxu0 0
  %747 = vmatpush1.bf16.msra.mxu0 0
  %748 = vmatprep.subr.bf16.mxu0 0
  %749 = vmatpush1.bf16.msra.mxu0 0
  %750 = vmatprep.subr.bf16.mxu0 %v381
  %751 = vmatpush1.bf16.msra.mxu0 %v378
  %752 = vmatprep.subr.bf16.mxu0 0
  %753 = vmatpush2.bf16.msra.mxu0 0
  %754 = vmatprep.subr.bf16.mxu0 0
  %755 = vmatpush2.bf16.msra.mxu0 0
  %756 = vmatprep.subr.bf16.mxu0 0
  %757 = vmatpush2.bf16.msra.mxu0 0
  %758 = vmatprep.subr.bf16.mxu0 0
  %759 = vmatpush2.bf16.msra.mxu0 0
  %760 = vmatprep.subr.bf16.mxu0 0
  %761 = vmatpush2.bf16.msra.mxu0 0
  %762 = vmatprep.subr.bf16.mxu0 0
  %763 = vmatpush2.bf16.msra.mxu0 0
  %764 = vmatprep.subr.bf16.mxu0 0
  %765 = vmatpush2.bf16.msra.mxu0 0
  %766 = vmatprep.subr.bf16.mxu0 0
  %767 = vmatpush2.bf16.msra.mxu0 0
  %768 = vmatprep.mubr.bf16.mxu0 0
  %769 = vmatmul.mubr.bf16.gmra.mxu0 %v272
  %v770 = vpop.f32.mrf.mxu0
  %v771 = vadd.f32 0.0, %v770
  %v772 = vpop.f32.mrf.mxu0
  %v773 = vadd.f32 0.0, %v772
  %v774 = vpop.f32.mrf.mxu0
  %v775 = vadd.f32 0.0, %v774
  %v776 = vpop.f32.mrf.mxu0
  %v777 = vadd.f32 0.0, %v776
  %778 = vmatprep.mubr.bf16.mxu0 0
  %779 = vmatmul.mubr.bf16.gmra.mxu0 %v275
  %v780 = vpop.f32.mrf.mxu0
  %v781 = vadd.f32 0.0, %v780
  %v782 = vpop.f32.mrf.mxu0
  %v783 = vadd.f32 0.0, %v782
  %v784 = vpop.f32.mrf.mxu0
  %v785 = vadd.f32 0.0, %v784
  %v786 = vpop.f32.mrf.mxu0
  %v787 = vadd.f32 0.0, %v786
  %788 = vmatprep.mubr.bf16.mxu0 0
  %789 = vmatmul.mubr.bf16.gmra.mxu0 %v278
  %v790 = vpop.f32.mrf.mxu0
  %v791 = vadd.f32 0.0, %v790
  %v792 = vpop.f32.mrf.mxu0
  %v793 = vadd.f32 0.0, %v792
  %v794 = vpop.f32.mrf.mxu0
  %v795 = vadd.f32 0.0, %v794
  %v796 = vpop.f32.mrf.mxu0
  %v797 = vadd.f32 0.0, %v796
  %798 = vmatprep.mubr.bf16.mxu0 0
  %799 = vmatmul.mubr.bf16.gmra.mxu0 %v281
  %v800 = vpop.f32.mrf.mxu0
  %v801 = vadd.f32 0.0, %v800
  %v802 = vpop.f32.mrf.mxu0
  %v803 = vadd.f32 0.0, %v802
  %v804 = vpop.f32.mrf.mxu0
  %v805 = vadd.f32 0.0, %v804
  %v806 = vpop.f32.mrf.mxu0
  %v807 = vadd.f32 0.0, %v806
  %808 = vmatprep.mubr.bf16.mxu0 0
  %809 = vmatmul.mubr.bf16.gmra.mxu0 %v284
  %v810 = vpop.f32.mrf.mxu0
  %v811 = vadd.f32 0.0, %v810
  %v812 = vpop.f32.mrf.mxu0
  %v813 = vadd.f32 0.0, %v812
  %v814 = vpop.f32.mrf.mxu0
  %v815 = vadd.f32 0.0, %v814
  %v816 = vpop.f32.mrf.mxu0
  %v817 = vadd.f32 0.0, %v816
  %818 = vmatprep.mubr.bf16.mxu0 0
  %819 = vmatmul.mubr.bf16.gmra.mxu0 %v287
  %v820 = vpop.f32.mrf.mxu0
  %v821 = vadd.f32 0.0, %v820
  %v822 = vpop.f32.mrf.mxu0
  %v823 = vadd.f32 0.0, %v822
  %v824 = vpop.f32.mrf.mxu0
  %v825 = vadd.f32 0.0, %v824
  %v826 = vpop.f32.mrf.mxu0
  %v827 = vadd.f32 0.0, %v826
  %828 = vmatprep.mubr.bf16.mxu0 0
  %829 = vmatmul.mubr.bf16.gmra.mxu0 %v290
  %v830 = vpop.f32.mrf.mxu0
  %v831 = vadd.f32 0.0, %v830
  %v832 = vpop.f32.mrf.mxu0
  %v833 = vadd.f32 0.0, %v832
  %v834 = vpop.f32.mrf.mxu0
  %v835 = vadd.f32 0.0, %v834
  %v836 = vpop.f32.mrf.mxu0
  %v837 = vadd.f32 0.0, %v836
  %838 = vmatprep.mubr.bf16.mxu0 0
  %839 = vmatmul.mubr.bf16.gmra.mxu0 %v293
  %v840 = vpop.f32.mrf.mxu0
  %v841 = vadd.f32 0.0, %v840
  %v842 = vpop.f32.mrf.mxu0
  %v843 = vadd.f32 0.0, %v842
  %v844 = vpop.f32.mrf.mxu0
  %v845 = vadd.f32 0.0, %v844
  %v846 = vpop.f32.mrf.mxu0
  %v847 = vadd.f32 0.0, %v846
  %848 = vmatprep.mubr.bf16.mxu0 0
  %849 = vmatmul.mubr.bf16.gmra.mxu0 %v296
  %v850 = vpop.f32.mrf.mxu0
  %v851 = vadd.f32 0.0, %v850
  %v852 = vpop.f32.mrf.mxu0
  %v853 = vadd.f32 0.0, %v852
  %v854 = vpop.f32.mrf.mxu0
  %v855 = vadd.f32 0.0, %v854
  %v856 = vpop.f32.mrf.mxu0
  %v857 = vadd.f32 0.0, %v856
  %858 = vmatprep.mubr.bf16.mxu0 0
  %859 = vmatmul.mubr.bf16.gmra.mxu0 %v299
  %v860 = vpop.f32.mrf.mxu0
  %v861 = vadd.f32 0.0, %v860
  %v862 = vpop.f32.mrf.mxu0
  %v863 = vadd.f32 0.0, %v862
  %v864 = vpop.f32.mrf.mxu0
  %v865 = vadd.f32 0.0, %v864
  %v866 = vpop.f32.mrf.mxu0
  %v867 = vadd.f32 0.0, %v866
  %868 = vmatprep.mubr.bf16.mxu0 0
  %869 = vmatmul.mubr.bf16.gmra.mxu0 %v302
  %v870 = vpop.f32.mrf.mxu0
  %v871 = vadd.f32 0.0, %v870
  %v872 = vpop.f32.mrf.mxu0
  %v873 = vadd.f32 0.0, %v872
  %v874 = vpop.f32.mrf.mxu0
  %v875 = vadd.f32 0.0, %v874
  %v876 = vpop.f32.mrf.mxu0
  %v877 = vadd.f32 0.0, %v876
  %878 = vmatprep.mubr.bf16.mxu0 0
  %879 = vmatmul.mubr.bf16.gmra.mxu0 %v305
  %v880 = vpop.f32.mrf.mxu0
  %v881 = vadd.f32 0.0, %v880
  %v882 = vpop.f32.mrf.mxu0
  %v883 = vadd.f32 0.0, %v882
  %v884 = vpop.f32.mrf.mxu0
  %v885 = vadd.f32 0.0, %v884
  %v886 = vpop.f32.mrf.mxu0
  %v887 = vadd.f32 0.0, %v886
  %888 = vmatprep.mubr.bf16.mxu0 0
  %889 = vmatmul.mubr.bf16.gmra.mxu0 %v308
  %v890 = vpop.f32.mrf.mxu0
  %v891 = vadd.f32 0.0, %v890
  %v892 = vpop.f32.mrf.mxu0
  %v893 = vadd.f32 0.0, %v892
  %v894 = vpop.f32.mrf.mxu0
  %v895 = vadd.f32 0.0, %v894
  %v896 = vpop.f32.mrf.mxu0
  %v897 = vadd.f32 0.0, %v896
  %898 = vmatprep.mubr.bf16.mxu0 0
  %899 = vmatmul.mubr.bf16.gmra.mxu0 %v311
  %v900 = vpop.f32.mrf.mxu0
  %v901 = vadd.f32 0.0, %v900
  %v902 = vpop.f32.mrf.mxu0
  %v903 = vadd.f32 0.0, %v902
  %v904 = vpop.f32.mrf.mxu0
  %v905 = vadd.f32 0.0, %v904
  %v906 = vpop.f32.mrf.mxu0
  %v907 = vadd.f32 0.0, %v906
  %908 = vmatprep.mubr.bf16.mxu0 0
  %909 = vmatmul.mubr.bf16.gmra.mxu0 %v314
  %v910 = vpop.f32.mrf.mxu0
  %v911 = vadd.f32 0.0, %v910
  %v912 = vpop.f32.mrf.mxu0
  %v913 = vadd.f32 0.0, %v912
  %v914 = vpop.f32.mrf.mxu0
  %v915 = vadd.f32 0.0, %v914
  %v916 = vpop.f32.mrf.mxu0
  %v917 = vadd.f32 0.0, %v916
  %918 = vmatprep.mubr.bf16.mxu0 0
  %919 = vmatmul.mubr.bf16.gmra.mxu0 %v317
  %v920 = vpop.f32.mrf.mxu0
  %v921 = vadd.f32 0.0, %v920
  %v922 = vpop.f32.mrf.mxu0
  %v923 = vadd.f32 0.0, %v922
  %v924 = vpop.f32.mrf.mxu0
  %v925 = vadd.f32 0.0, %v924
  %v926 = vpop.f32.mrf.mxu0
  %v927 = vadd.f32 0.0, %v926
  %928 = vmatprep.mubr.bf16.mxu0 0
  %929 = vmatmul.mubr.bf16.gmra.mxu0 %v320
  %v930 = vpop.f32.mrf.mxu0
  %v931 = vadd.f32 0.0, %v930
  %v932 = vpop.f32.mrf.mxu0
  %v933 = vadd.f32 0.0, %v932
  %v934 = vpop.f32.mrf.mxu0
  %v935 = vadd.f32 0.0, %v934
  %v936 = vpop.f32.mrf.mxu0
  %v937 = vadd.f32 0.0, %v936
  %938 = vmatprep.mubr.bf16.mxu0 0
  %939 = vmatmul.mubr.bf16.gmra.mxu0 %v323
  %v940 = vpop.f32.mrf.mxu0
  %v941 = vadd.f32 0.0, %v940
  %v942 = vpop.f32.mrf.mxu0
  %v943 = vadd.f32 0.0, %v942
  %v944 = vpop.f32.mrf.mxu0
  %v945 = vadd.f32 0.0, %v944
  %v946 = vpop.f32.mrf.mxu0
  %v947 = vadd.f32 0.0, %v946
  %948 = vmatprep.mubr.bf16.mxu0 0
  %949 = vmatmul.mubr.bf16.gmra.mxu0 %v326
  %v950 = vpop.f32.mrf.mxu0
  %v951 = vadd.f32 0.0, %v950
  %v952 = vpop.f32.mrf.mxu0
  %v953 = vadd.f32 0.0, %v952
  %v954 = vpop.f32.mrf.mxu0
  %v955 = vadd.f32 0.0, %v954
  %v956 = vpop.f32.mrf.mxu0
  %v957 = vadd.f32 0.0, %v956
  %958 = vmatprep.mubr.bf16.mxu0 0
  %959 = vmatmul.mubr.bf16.gmra.mxu0 %v329
  %v960 = vpop.f32.mrf.mxu0
  %v961 = vadd.f32 0.0, %v960
  %v962 = vpop.f32.mrf.mxu0
  %v963 = vadd.f32 0.0, %v962
  %v964 = vpop.f32.mrf.mxu0
  %v965 = vadd.f32 0.0, %v964
  %v966 = vpop.f32.mrf.mxu0
  %v967 = vadd.f32 0.0, %v966
  %968 = vmatprep.mubr.bf16.mxu0 0
  %969 = vmatmul.mubr.bf16.gmra.mxu0 %v332
  %v970 = vpop.f32.mrf.mxu0
  %v971 = vadd.f32 0.0, %v970
  %v972 = vpop.f32.mrf.mxu0
  %v973 = vadd.f32 0.0, %v972
  %v974 = vpop.f32.mrf.mxu0
  %v975 = vadd.f32 0.0, %v974
  %v976 = vpop.f32.mrf.mxu0
  %v977 = vadd.f32 0.0, %v976
  %978 = vmatprep.mubr.bf16.mxu0 0
  %979 = vmatmul.mubr.bf16.gmra.mxu0 %v335
  %v980 = vpop.f32.mrf.mxu0
  %v981 = vadd.f32 0.0, %v980
  %v982 = vpop.f32.mrf.mxu0
  %v983 = vadd.f32 0.0, %v982
  %v984 = vpop.f32.mrf.mxu0
  %v985 = vadd.f32 0.0, %v984
  %v986 = vpop.f32.mrf.mxu0
  %v987 = vadd.f32 0.0, %v986
  %988 = vmatprep.mubr.bf16.mxu0 0
  %989 = vmatmul.mubr.bf16.gmra.mxu0 %v338
  %v990 = vpop.f32.mrf.mxu0
  %v991 = vadd.f32 0.0, %v990
  %v992 = vpop.f32.mrf.mxu0
  %v993 = vadd.f32 0.0, %v992
  %v994 = vpop.f32.mrf.mxu0
  %v995 = vadd.f32 0.0, %v994
  %v996 = vpop.f32.mrf.mxu0
  %v997 = vadd.f32 0.0, %v996
  %998 = vmatprep.mubr.bf16.mxu0 0
  %999 = vmatmul.mubr.bf16.gmra.mxu0 %v341
  %v1000 = vpop.f32.mrf.mxu0
  %v1001 = vadd.f32 0.0, %v1000
  %v1002 = vpop.f32.mrf.mxu0
  %v1003 = vadd.f32 0.0, %v1002
  %v1004 = vpop.f32.mrf.mxu0
  %v1005 = vadd.f32 0.0, %v1004
  %v1006 = vpop.f32.mrf.mxu0
  %v1007 = vadd.f32 0.0, %v1006
  %1008 = vmatprep.mubr.bf16.mxu0 0
  %1009 = vmatmul.mubr.bf16.gmra.mxu0 %v344
  %v1010 = vpop.f32.mrf.mxu0
  %v1011 = vadd.f32 0.0, %v1010
  %v1012 = vpop.f32.mrf.mxu0
  %v1013 = vadd.f32 0.0, %v1012
  %v1014 = vpop.f32.mrf.mxu0
  %v1015 = vadd.f32 0.0, %v1014
  %v1016 = vpop.f32.mrf.mxu0
  %v1017 = vadd.f32 0.0, %v1016
  %1018 = vmatprep.mubr.bf16.mxu0 0
  %1019 = vmatmul.mubr.bf16.gmra.mxu0 %v347
  %v1020 = vpop.f32.mrf.mxu0
  %v1021 = vadd.f32 0.0, %v1020
  %v1022 = vpop.f32.mrf.mxu0
  %v1023 = vadd.f32 0.0, %v1022
  %v1024 = vpop.f32.mrf.mxu0
  %v1025 = vadd.f32 0.0, %v1024
  %v1026 = vpop.f32.mrf.mxu0
  %v1027 = vadd.f32 0.0, %v1026
  %1028 = vmatprep.mubr.bf16.mxu0 0
  %1029 = vmatmul.mubr.bf16.gmra.mxu0 %v350
  %v1030 = vpop.f32.mrf.mxu0
  %v1031 = vadd.f32 0.0, %v1030
  %v1032 = vpop.f32.mrf.mxu0
  %v1033 = vadd.f32 0.0, %v1032
  %v1034 = vpop.f32.mrf.mxu0
  %v1035 = vadd.f32 0.0, %v1034
  %v1036 = vpop.f32.mrf.mxu0
  %v1037 = vadd.f32 0.0, %v1036
  %1038 = vmatprep.mubr.bf16.mxu0 0
  %1039 = vmatmul.mubr.bf16.gmra.mxu0 %v353
  %v1040 = vpop.f32.mrf.mxu0
  %v1041 = vadd.f32 0.0, %v1040
  %v1042 = vpop.f32.mrf.mxu0
  %v1043 = vadd.f32 0.0, %v1042
  %v1044 = vpop.f32.mrf.mxu0
  %v1045 = vadd.f32 0.0, %v1044
  %v1046 = vpop.f32.mrf.mxu0
  %v1047 = vadd.f32 0.0, %v1046
  %1048 = vmatprep.mubr.bf16.mxu0 0
  %1049 = vmatmul.mubr.bf16.gmra.mxu0 %v356
  %v1050 = vpop.f32.mrf.mxu0
  %v1051 = vadd.f32 0.0, %v1050
  %v1052 = vpop.f32.mrf.mxu0
  %v1053 = vadd.f32 0.0, %v1052
  %v1054 = vpop.f32.mrf.mxu0
  %v1055 = vadd.f32 0.0, %v1054
  %v1056 = vpop.f32.mrf.mxu0
  %v1057 = vadd.f32 0.0, %v1056
  %1058 = vmatprep.mubr.bf16.mxu0 0
  %1059 = vmatmul.mubr.bf16.gmra.mxu0 %v359
  %v1060 = vpop.f32.mrf.mxu0
  %v1061 = vadd.f32 0.0, %v1060
  %v1062 = vpop.f32.mrf.mxu0
  %v1063 = vadd.f32 0.0, %v1062
  %v1064 = vpop.f32.mrf.mxu0
  %v1065 = vadd.f32 0.0, %v1064
  %v1066 = vpop.f32.mrf.mxu0
  %v1067 = vadd.f32 0.0, %v1066
  %1068 = vmatprep.mubr.bf16.mxu0 0
  %1069 = vmatmul.mubr.bf16.gmra.mxu0 %v362
  %v1070 = vpop.f32.mrf.mxu0
  %v1071 = vadd.f32 0.0, %v1070
  %v1072 = vpop.f32.mrf.mxu0
  %v1073 = vadd.f32 0.0, %v1072
  %v1074 = vpop.f32.mrf.mxu0
  %v1075 = vadd.f32 0.0, %v1074
  %v1076 = vpop.f32.mrf.mxu0
  %v1077 = vadd.f32 0.0, %v1076
  %1078 = vmatprep.mubr.bf16.mxu0 0
  %1079 = vmatmul.mubr.bf16.gmra.mxu0 %v365
  %v1080 = vpop.f32.mrf.mxu0
  %v1081 = vadd.f32 0.0, %v1080
  %v1082 = vpop.f32.mrf.mxu0
  %v1083 = vadd.f32 0.0, %v1082
  %v1084 = vpop.f32.mrf.mxu0
  %v1085 = vadd.f32 0.0, %v1084
  %v1086 = vpop.f32.mrf.mxu0
  %v1087 = vadd.f32 0.0, %v1086
  %1088 = vdwg.mxu0
  %v1089 = vld [vmem:[%s2] sm:$0x3]
  %v1091 = vlaneseq
  %v1092 = vshrl.u32 %v1091, 7
  %v1093 = vsub.s32 0, %v1092
  %v1094 = vrot.slane %v1089, %v1093
  %v1095 = vlaneseq
  %v1096 = vshrl.u32 %v1095, 7
  %v1097 = vsub.s32 1, %v1096
  %v1098 = vrot.slane %v1089, %v1097
  %v1101 = vadd.f32 %v418, %v1094
  %v1102 = vadd.f32 %v420, %v1098
  %v1103 = vadd.f32 %v422, %v1094
  %v1104 = vadd.f32 %v424, %v1098
  %v1105 = vadd.f32 %v428, %v1094
  %v1106 = vadd.f32 %v430, %v1098
  %v1107 = vadd.f32 %v432, %v1094
  %v1108 = vadd.f32 %v434, %v1098
  %v1109 = vadd.f32 %v438, %v1094
  %v1110 = vadd.f32 %v440, %v1098
  %v1111 = vadd.f32 %v442, %v1094
  %v1112 = vadd.f32 %v444, %v1098
  %v1113 = vadd.f32 %v448, %v1094
  %v1114 = vadd.f32 %v450, %v1098
  %v1115 = vadd.f32 %v452, %v1094
  %v1116 = vadd.f32 %v454, %v1098
  %v1117 = vadd.f32 %v458, %v1094
  %v1118 = vadd.f32 %v460, %v1098
  %v1119 = vadd.f32 %v462, %v1094
  %v1120 = vadd.f32 %v464, %v1098
  %v1121 = vadd.f32 %v468, %v1094
  %v1122 = vadd.f32 %v470, %v1098
  %v1123 = vadd.f32 %v472, %v1094
  %v1124 = vadd.f32 %v474, %v1098
  %v1125 = vadd.f32 %v478, %v1094
  %v1126 = vadd.f32 %v480, %v1098
  %v1127 = vadd.f32 %v482, %v1094
  %v1128 = vadd.f32 %v484, %v1098
  %v1129 = vadd.f32 %v488, %v1094
  %v1130 = vadd.f32 %v490, %v1098
  %v1131 = vadd.f32 %v492, %v1094
  %v1132 = vadd.f32 %v494, %v1098
  %v1133 = vadd.f32 %v498, %v1094
  %v1134 = vadd.f32 %v500, %v1098
  %v1135 = vadd.f32 %v502, %v1094
  %v1136 = vadd.f32 %v504, %v1098
  %v1137 = vadd.f32 %v508, %v1094
  %v1138 = vadd.f32 %v510, %v1098
  %v1139 = vadd.f32 %v512, %v1094
  %v1140 = vadd.f32 %v514, %v1098
  %v1141 = vadd.f32 %v518, %v1094
  %v1142 = vadd.f32 %v520, %v1098
  %v1143 = vadd.f32 %v522, %v1094
  %v1144 = vadd.f32 %v524, %v1098
  %v1145 = vadd.f32 %v528, %v1094
  %v1146 = vadd.f32 %v530, %v1098
  %v1147 = vadd.f32 %v532, %v1094
  %v1148 = vadd.f32 %v534, %v1098
  %v1149 = vadd.f32 %v538, %v1094
  %v1150 = vadd.f32 %v540, %v1098
  %v1151 = vadd.f32 %v542, %v1094
  %v1152 = vadd.f32 %v544, %v1098
  %v1153 = vadd.f32 %v548, %v1094
  %v1154 = vadd.f32 %v550, %v1098
  %v1155 = vadd.f32 %v552, %v1094
  %v1156 = vadd.f32 %v554, %v1098
  %v1157 = vadd.f32 %v558, %v1094
  %v1158 = vadd.f32 %v560, %v1098
  %v1159 = vadd.f32 %v562, %v1094
  %v1160 = vadd.f32 %v564, %v1098
  %v1161 = vadd.f32 %v568, %v1094
  %v1162 = vadd.f32 %v570, %v1098
  %v1163 = vadd.f32 %v572, %v1094
  %v1164 = vadd.f32 %v574, %v1098
  %v1165 = vadd.f32 %v578, %v1094
  %v1166 = vadd.f32 %v580, %v1098
  %v1167 = vadd.f32 %v582, %v1094
  %v1168 = vadd.f32 %v584, %v1098
  %v1169 = vadd.f32 %v588, %v1094
  %v1170 = vadd.f32 %v590, %v1098
  %v1171 = vadd.f32 %v592, %v1094
  %v1172 = vadd.f32 %v594, %v1098
  %v1173 = vadd.f32 %v598, %v1094
  %v1174 = vadd.f32 %v600, %v1098
  %v1175 = vadd.f32 %v602, %v1094
  %v1176 = vadd.f32 %v604, %v1098
  %v1177 = vadd.f32 %v608, %v1094
  %v1178 = vadd.f32 %v610, %v1098
  %v1179 = vadd.f32 %v612, %v1094
  %v1180 = vadd.f32 %v614, %v1098
  %v1181 = vadd.f32 %v618, %v1094
  %v1182 = vadd.f32 %v620, %v1098
  %v1183 = vadd.f32 %v622, %v1094
  %v1184 = vadd.f32 %v624, %v1098
  %v1185 = vadd.f32 %v628, %v1094
  %v1186 = vadd.f32 %v630, %v1098
  %v1187 = vadd.f32 %v632, %v1094
  %v1188 = vadd.f32 %v634, %v1098
  %v1189 = vadd.f32 %v638, %v1094
  %v1190 = vadd.f32 %v640, %v1098
  %v1191 = vadd.f32 %v642, %v1094
  %v1192 = vadd.f32 %v644, %v1098
  %v1193 = vadd.f32 %v648, %v1094
  %v1194 = vadd.f32 %v650, %v1098
  %v1195 = vadd.f32 %v652, %v1094
  %v1196 = vadd.f32 %v654, %v1098
  %v1197 = vadd.f32 %v658, %v1094
  %v1198 = vadd.f32 %v660, %v1098
  %v1199 = vadd.f32 %v662, %v1094
  %v1200 = vadd.f32 %v664, %v1098
  %v1201 = vadd.f32 %v668, %v1094
  %v1202 = vadd.f32 %v670, %v1098
  %v1203 = vadd.f32 %v672, %v1094
  %v1204 = vadd.f32 %v674, %v1098
  %v1205 = vadd.f32 %v678, %v1094
  %v1206 = vadd.f32 %v680, %v1098
  %v1207 = vadd.f32 %v682, %v1094
  %v1208 = vadd.f32 %v684, %v1098
  %v1209 = vadd.f32 %v688, %v1094
  %v1210 = vadd.f32 %v690, %v1098
  %v1211 = vadd.f32 %v692, %v1094
  %v1212 = vadd.f32 %v694, %v1098
  %v1213 = vadd.f32 %v698, %v1094
  %v1214 = vadd.f32 %v700, %v1098
  %v1215 = vadd.f32 %v702, %v1094
  %v1216 = vadd.f32 %v704, %v1098
  %v1217 = vadd.f32 %v708, %v1094
  %v1218 = vadd.f32 %v710, %v1098
  %v1219 = vadd.f32 %v712, %v1094
  %v1220 = vadd.f32 %v714, %v1098
  %v1221 = vadd.f32 %v718, %v1094
  %v1222 = vadd.f32 %v720, %v1098
  %v1223 = vadd.f32 %v722, %v1094
  %v1224 = vadd.f32 %v724, %v1098
  %v1225 = vadd.f32 %v728, %v1094
  %v1226 = vadd.f32 %v730, %v1098
  %v1227 = vadd.f32 %v732, %v1094
  %v1228 = vadd.f32 %v734, %v1098
  %vm1229 = vcmp.gt.f32.partialorder %v1101, 0.0
  %vm1230 = vcmp.gt.f32.partialorder %v1102, 0.0
  %vm1231 = vcmp.gt.f32.partialorder %v1103, 0.0
  %vm1232 = vcmp.gt.f32.partialorder %v1104, 0.0
  %vm1233 = vcmp.gt.f32.partialorder %v1105, 0.0
  %vm1234 = vcmp.gt.f32.partialorder %v1106, 0.0
  %vm1235 = vcmp.gt.f32.partialorder %v1107, 0.0
  %vm1236 = vcmp.gt.f32.partialorder %v1108, 0.0
  %vm1237 = vcmp.gt.f32.partialorder %v1109, 0.0
  %vm1238 = vcmp.gt.f32.partialorder %v1110, 0.0
  %vm1239 = vcmp.gt.f32.partialorder %v1111, 0.0
  %vm1240 = vcmp.gt.f32.partialorder %v1112, 0.0
  %vm1241 = vcmp.gt.f32.partialorder %v1113, 0.0
  %vm1242 = vcmp.gt.f32.partialorder %v1114, 0.0
  %vm1243 = vcmp.gt.f32.partialorder %v1115, 0.0
  %vm1244 = vcmp.gt.f32.partialorder %v1116, 0.0
  %vm1245 = vcmp.gt.f32.partialorder %v1117, 0.0
  %vm1246 = vcmp.gt.f32.partialorder %v1118, 0.0
  %vm1247 = vcmp.gt.f32.partialorder %v1119, 0.0
  %vm1248 = vcmp.gt.f32.partialorder %v1120, 0.0
  %vm1249 = vcmp.gt.f32.partialorder %v1121, 0.0
  %vm1250 = vcmp.gt.f32.partialorder %v1122, 0.0
  %vm1251 = vcmp.gt.f32.partialorder %v1123, 0.0
  %vm1252 = vcmp.gt.f32.partialorder %v1124, 0.0
  %vm1253 = vcmp.gt.f32.partialorder %v1125, 0.0
  %vm1254 = vcmp.gt.f32.partialorder %v1126, 0.0
  %vm1255 = vcmp.gt.f32.partialorder %v1127, 0.0
  %vm1256 = vcmp.gt.f32.partialorder %v1128, 0.0
  %vm1257 = vcmp.gt.f32.partialorder %v1129, 0.0
  %vm1258 = vcmp.gt.f32.partialorder %v1130, 0.0
  %vm1259 = vcmp.gt.f32.partialorder %v1131, 0.0
  %vm1260 = vcmp.gt.f32.partialorder %v1132, 0.0
  %vm1261 = vcmp.gt.f32.partialorder %v1133, 0.0
  %vm1262 = vcmp.gt.f32.partialorder %v1134, 0.0
  %vm1263 = vcmp.gt.f32.partialorder %v1135, 0.0
  %vm1264 = vcmp.gt.f32.partialorder %v1136, 0.0
  %vm1265 = vcmp.gt.f32.partialorder %v1137, 0.0
  %vm1266 = vcmp.gt.f32.partialorder %v1138, 0.0
  %vm1267 = vcmp.gt.f32.partialorder %v1139, 0.0
  %vm1268 = vcmp.gt.f32.partialorder %v1140, 0.0
  %vm1269 = vcmp.gt.f32.partialorder %v1141, 0.0
  %vm1270 = vcmp.gt.f32.partialorder %v1142, 0.0
  %vm1271 = vcmp.gt.f32.partialorder %v1143, 0.0
  %vm1272 = vcmp.gt.f32.partialorder %v1144, 0.0
  %vm1273 = vcmp.gt.f32.partialorder %v1145, 0.0
  %vm1274 = vcmp.gt.f32.partialorder %v1146, 0.0
  %vm1275 = vcmp.gt.f32.partialorder %v1147, 0.0
  %vm1276 = vcmp.gt.f32.partialorder %v1148, 0.0
  %vm1277 = vcmp.gt.f32.partialorder %v1149, 0.0
  %vm1278 = vcmp.gt.f32.partialorder %v1150, 0.0
  %vm1279 = vcmp.gt.f32.partialorder %v1151, 0.0
  %vm1280 = vcmp.gt.f32.partialorder %v1152, 0.0
  %vm1281 = vcmp.gt.f32.partialorder %v1153, 0.0
  %vm1282 = vcmp.gt.f32.partialorder %v1154, 0.0
  %vm1283 = vcmp.gt.f32.partialorder %v1155, 0.0
  %vm1284 = vcmp.gt.f32.partialorder %v1156, 0.0
  %vm1285 = vcmp.gt.f32.partialorder %v1157, 0.0
  %vm1286 = vcmp.gt.f32.partialorder %v1158, 0.0
  %vm1287 = vcmp.gt.f32.partialorder %v1159, 0.0
  %vm1288 = vcmp.gt.f32.partialorder %v1160, 0.0
  %vm1289 = vcmp.gt.f32.partialorder %v1161, 0.0
  %vm1290 = vcmp.gt.f32.partialorder %v1162, 0.0
  %vm1291 = vcmp.gt.f32.partialorder %v1163, 0.0
  %vm1292 = vcmp.gt.f32.partialorder %v1164, 0.0
  %vm1293 = vcmp.gt.f32.partialorder %v1165, 0.0
  %vm1294 = vcmp.gt.f32.partialorder %v1166, 0.0
  %vm1295 = vcmp.gt.f32.partialorder %v1167, 0.0
  %vm1296 = vcmp.gt.f32.partialorder %v1168, 0.0
  %vm1297 = vcmp.gt.f32.partialorder %v1169, 0.0
  %vm1298 = vcmp.gt.f32.partialorder %v1170, 0.0
  %vm1299 = vcmp.gt.f32.partialorder %v1171, 0.0
  %vm1300 = vcmp.gt.f32.partialorder %v1172, 0.0
  %vm1301 = vcmp.gt.f32.partialorder %v1173, 0.0
  %vm1302 = vcmp.gt.f32.partialorder %v1174, 0.0
  %vm1303 = vcmp.gt.f32.partialorder %v1175, 0.0
  %vm1304 = vcmp.gt.f32.partialorder %v1176, 0.0
  %vm1305 = vcmp.gt.f32.partialorder %v1177, 0.0
  %vm1306 = vcmp.gt.f32.partialorder %v1178, 0.0
  %vm1307 = vcmp.gt.f32.partialorder %v1179, 0.0
  %vm1308 = vcmp.gt.f32.partialorder %v1180, 0.0
  %vm1309 = vcmp.gt.f32.partialorder %v1181, 0.0
  %vm1310 = vcmp.gt.f32.partialorder %v1182, 0.0
  %vm1311 = vcmp.gt.f32.partialorder %v1183, 0.0
  %vm1312 = vcmp.gt.f32.partialorder %v1184, 0.0
  %vm1313 = vcmp.gt.f32.partialorder %v1185, 0.0
  %vm1314 = vcmp.gt.f32.partialorder %v1186, 0.0
  %vm1315 = vcmp.gt.f32.partialorder %v1187, 0.0
  %vm1316 = vcmp.gt.f32.partialorder %v1188, 0.0
  %vm1317 = vcmp.gt.f32.partialorder %v1189, 0.0
  %vm1318 = vcmp.gt.f32.partialorder %v1190, 0.0
  %vm1319 = vcmp.gt.f32.partialorder %v1191, 0.0
  %vm1320 = vcmp.gt.f32.partialorder %v1192, 0.0
  %vm1321 = vcmp.gt.f32.partialorder %v1193, 0.0
  %vm1322 = vcmp.gt.f32.partialorder %v1194, 0.0
  %vm1323 = vcmp.gt.f32.partialorder %v1195, 0.0
  %vm1324 = vcmp.gt.f32.partialorder %v1196, 0.0
  %vm1325 = vcmp.gt.f32.partialorder %v1197, 0.0
  %vm1326 = vcmp.gt.f32.partialorder %v1198, 0.0
  %vm1327 = vcmp.gt.f32.partialorder %v1199, 0.0
  %vm1328 = vcmp.gt.f32.partialorder %v1200, 0.0
  %vm1329 = vcmp.gt.f32.partialorder %v1201, 0.0
  %vm1330 = vcmp.gt.f32.partialorder %v1202, 0.0
  %vm1331 = vcmp.gt.f32.partialorder %v1203, 0.0
  %vm1332 = vcmp.gt.f32.partialorder %v1204, 0.0
  %vm1333 = vcmp.gt.f32.partialorder %v1205, 0.0
  %vm1334 = vcmp.gt.f32.partialorder %v1206, 0.0
  %vm1335 = vcmp.gt.f32.partialorder %v1207, 0.0
  %vm1336 = vcmp.gt.f32.partialorder %v1208, 0.0
  %vm1337 = vcmp.gt.f32.partialorder %v1209, 0.0
  %vm1338 = vcmp.gt.f32.partialorder %v1210, 0.0
  %vm1339 = vcmp.gt.f32.partialorder %v1211, 0.0
  %vm1340 = vcmp.gt.f32.partialorder %v1212, 0.0
  %vm1341 = vcmp.gt.f32.partialorder %v1213, 0.0
  %vm1342 = vcmp.gt.f32.partialorder %v1214, 0.0
  %vm1343 = vcmp.gt.f32.partialorder %v1215, 0.0
  %vm1344 = vcmp.gt.f32.partialorder %v1216, 0.0
  %vm1345 = vcmp.gt.f32.partialorder %v1217, 0.0
  %vm1346 = vcmp.gt.f32.partialorder %v1218, 0.0
  %vm1347 = vcmp.gt.f32.partialorder %v1219, 0.0
  %vm1348 = vcmp.gt.f32.partialorder %v1220, 0.0
  %vm1349 = vcmp.gt.f32.partialorder %v1221, 0.0
  %vm1350 = vcmp.gt.f32.partialorder %v1222, 0.0
  %vm1351 = vcmp.gt.f32.partialorder %v1223, 0.0
  %vm1352 = vcmp.gt.f32.partialorder %v1224, 0.0
  %vm1353 = vcmp.gt.f32.partialorder %v1225, 0.0
  %vm1354 = vcmp.gt.f32.partialorder %v1226, 0.0
  %vm1355 = vcmp.gt.f32.partialorder %v1227, 0.0
  %vm1356 = vcmp.gt.f32.partialorder %v1228, 0.0
  %v1357 = vmin.f32 %v1101, 0.0
  %v1358 = vmin.f32 %v1102, 0.0
  %v1359 = vmin.f32 %v1103, 0.0
  %v1360 = vmin.f32 %v1104, 0.0
  %v1361 = vmin.f32 %v1105, 0.0
  %v1362 = vmin.f32 %v1106, 0.0
  %v1363 = vmin.f32 %v1107, 0.0
  %v1364 = vmin.f32 %v1108, 0.0
  %v1365 = vmin.f32 %v1109, 0.0
  %v1366 = vmin.f32 %v1110, 0.0
  %v1367 = vmin.f32 %v1111, 0.0
  %v1368 = vmin.f32 %v1112, 0.0
  %v1369 = vmin.f32 %v1113, 0.0
  %v1370 = vmin.f32 %v1114, 0.0
  %v1371 = vmin.f32 %v1115, 0.0
  %v1372 = vmin.f32 %v1116, 0.0
  %v1373 = vmin.f32 %v1117, 0.0
  %v1374 = vmin.f32 %v1118, 0.0
  %v1375 = vmin.f32 %v1119, 0.0
  %v1376 = vmin.f32 %v1120, 0.0
  %v1377 = vmin.f32 %v1121, 0.0
  %v1378 = vmin.f32 %v1122, 0.0
  %v1379 = vmin.f32 %v1123, 0.0
  %v1380 = vmin.f32 %v1124, 0.0
  %v1381 = vmin.f32 %v1125, 0.0
  %v1382 = vmin.f32 %v1126, 0.0
  %v1383 = vmin.f32 %v1127, 0.0
  %v1384 = vmin.f32 %v1128, 0.0
  %v1385 = vmin.f32 %v1129, 0.0
  %v1386 = vmin.f32 %v1130, 0.0
  %v1387 = vmin.f32 %v1131, 0.0
  %v1388 = vmin.f32 %v1132, 0.0
  %v1389 = vmin.f32 %v1133, 0.0
  %v1390 = vmin.f32 %v1134, 0.0
  %v1391 = vmin.f32 %v1135, 0.0
  %v1392 = vmin.f32 %v1136, 0.0
  %v1393 = vmin.f32 %v1137, 0.0
  %v1394 = vmin.f32 %v1138, 0.0
  %v1395 = vmin.f32 %v1139, 0.0
  %v1396 = vmin.f32 %v1140, 0.0
  %v1397 = vmin.f32 %v1141, 0.0
  %v1398 = vmin.f32 %v1142, 0.0
  %v1399 = vmin.f32 %v1143, 0.0
  %v1400 = vmin.f32 %v1144, 0.0
  %v1401 = vmin.f32 %v1145, 0.0
  %v1402 = vmin.f32 %v1146, 0.0
  %v1403 = vmin.f32 %v1147, 0.0
  %v1404 = vmin.f32 %v1148, 0.0
  %v1405 = vmin.f32 %v1149, 0.0
  %v1406 = vmin.f32 %v1150, 0.0
  %v1407 = vmin.f32 %v1151, 0.0
  %v1408 = vmin.f32 %v1152, 0.0
  %v1409 = vmin.f32 %v1153, 0.0
  %v1410 = vmin.f32 %v1154, 0.0
  %v1411 = vmin.f32 %v1155, 0.0
  %v1412 = vmin.f32 %v1156, 0.0
  %v1413 = vmin.f32 %v1157, 0.0
  %v1414 = vmin.f32 %v1158, 0.0
  %v1415 = vmin.f32 %v1159, 0.0
  %v1416 = vmin.f32 %v1160, 0.0
  %v1417 = vmin.f32 %v1161, 0.0
  %v1418 = vmin.f32 %v1162, 0.0
  %v1419 = vmin.f32 %v1163, 0.0
  %v1420 = vmin.f32 %v1164, 0.0
  %v1421 = vmin.f32 %v1165, 0.0
  %v1422 = vmin.f32 %v1166, 0.0
  %v1423 = vmin.f32 %v1167, 0.0
  %v1424 = vmin.f32 %v1168, 0.0
  %v1425 = vmin.f32 %v1169, 0.0
  %v1426 = vmin.f32 %v1170, 0.0
  %v1427 = vmin.f32 %v1171, 0.0
  %v1428 = vmin.f32 %v1172, 0.0
  %v1429 = vmin.f32 %v1173, 0.0
  %v1430 = vmin.f32 %v1174, 0.0
  %v1431 = vmin.f32 %v1175, 0.0
  %v1432 = vmin.f32 %v1176, 0.0
  %v1433 = vmin.f32 %v1177, 0.0
  %v1434 = vmin.f32 %v1178, 0.0
  %v1435 = vmin.f32 %v1179, 0.0
  %v1436 = vmin.f32 %v1180, 0.0
  %v1437 = vmin.f32 %v1181, 0.0
  %v1438 = vmin.f32 %v1182, 0.0
  %v1439 = vmin.f32 %v1183, 0.0
  %v1440 = vmin.f32 %v1184, 0.0
  %v1441 = vmin.f32 %v1185, 0.0
  %v1442 = vmin.f32 %v1186, 0.0
  %v1443 = vmin.f32 %v1187, 0.0
  %v1444 = vmin.f32 %v1188, 0.0
  %v1445 = vmin.f32 %v1189, 0.0
  %v1446 = vmin.f32 %v1190, 0.0
  %v1447 = vmin.f32 %v1191, 0.0
  %v1448 = vmin.f32 %v1192, 0.0
  %v1449 = vmin.f32 %v1193, 0.0
  %v1450 = vmin.f32 %v1194, 0.0
  %v1451 = vmin.f32 %v1195, 0.0
  %v1452 = vmin.f32 %v1196, 0.0
  %v1453 = vmin.f32 %v1197, 0.0
  %v1454 = vmin.f32 %v1198, 0.0
  %v1455 = vmin.f32 %v1199, 0.0
  %v1456 = vmin.f32 %v1200, 0.0
  %v1457 = vmin.f32 %v1201, 0.0
  %v1458 = vmin.f32 %v1202, 0.0
  %v1459 = vmin.f32 %v1203, 0.0
  %v1460 = vmin.f32 %v1204, 0.0
  %v1461 = vmin.f32 %v1205, 0.0
  %v1462 = vmin.f32 %v1206, 0.0
  %v1463 = vmin.f32 %v1207, 0.0
  %v1464 = vmin.f32 %v1208, 0.0
  %v1465 = vmin.f32 %v1209, 0.0
  %v1466 = vmin.f32 %v1210, 0.0
  %v1467 = vmin.f32 %v1211, 0.0
  %v1468 = vmin.f32 %v1212, 0.0
  %v1469 = vmin.f32 %v1213, 0.0
  %v1470 = vmin.f32 %v1214, 0.0
  %v1471 = vmin.f32 %v1215, 0.0
  %v1472 = vmin.f32 %v1216, 0.0
  %v1473 = vmin.f32 %v1217, 0.0
  %v1474 = vmin.f32 %v1218, 0.0
  %v1475 = vmin.f32 %v1219, 0.0
  %v1476 = vmin.f32 %v1220, 0.0
  %v1477 = vmin.f32 %v1221, 0.0
  %v1478 = vmin.f32 %v1222, 0.0
  %v1479 = vmin.f32 %v1223, 0.0
  %v1480 = vmin.f32 %v1224, 0.0
  %v1481 = vmin.f32 %v1225, 0.0
  %v1482 = vmin.f32 %v1226, 0.0
  %v1483 = vmin.f32 %v1227, 0.0
  %v1484 = vmin.f32 %v1228, 0.0
  %v1485 = vmul.f32 %v1357, 1.442695
  %v1486 = vpow.pop %v1485
  %v1487 = vmul.f32 %v1358, 1.442695
  %v1488 = vpow.pop %v1487
  %v1489 = vmul.f32 %v1359, 1.442695
  %v1490 = vpow.pop %v1489
  %v1491 = vmul.f32 %v1360, 1.442695
  %v1492 = vpow.pop %v1491
  %v1493 = vmul.f32 %v1361, 1.442695
  %v1494 = vpow.pop %v1493
  %v1495 = vmul.f32 %v1362, 1.442695
  %v1496 = vpow.pop %v1495
  %v1497 = vmul.f32 %v1363, 1.442695
  %v1498 = vpow.pop %v1497
  %v1499 = vmul.f32 %v1364, 1.442695
  %v1500 = vpow.pop %v1499
  %v1501 = vmul.f32 %v1365, 1.442695
  %v1502 = vpow.pop %v1501
  %v1503 = vmul.f32 %v1366, 1.442695
  %v1504 = vpow.pop %v1503
  %v1505 = vmul.f32 %v1367, 1.442695
  %v1506 = vpow.pop %v1505
  %v1507 = vmul.f32 %v1368, 1.442695
  %v1508 = vpow.pop %v1507
  %v1509 = vmul.f32 %v1369, 1.442695
  %v1510 = vpow.pop %v1509
  %v1511 = vmul.f32 %v1370, 1.442695
  %v1512 = vpow.pop %v1511
  %v1513 = vmul.f32 %v1371, 1.442695
  %v1514 = vpow.pop %v1513
  %v1515 = vmul.f32 %v1372, 1.442695
  %v1516 = vpow.pop %v1515
  %v1517 = vmul.f32 %v1373, 1.442695
  %v1518 = vpow.pop %v1517
  %v1519 = vmul.f32 %v1374, 1.442695
  %v1520 = vpow.pop %v1519
  %v1521 = vmul.f32 %v1375, 1.442695
  %v1522 = vpow.pop %v1521
  %v1523 = vmul.f32 %v1376, 1.442695
  %v1524 = vpow.pop %v1523
  %v1525 = vmul.f32 %v1377, 1.442695
  %v1526 = vpow.pop %v1525
  %v1527 = vmul.f32 %v1378, 1.442695
  %v1528 = vpow.pop %v1527
  %v1529 = vmul.f32 %v1379, 1.442695
  %v1530 = vpow.pop %v1529
  %v1531 = vmul.f32 %v1380, 1.442695
  %v1532 = vpow.pop %v1531
  %v1533 = vmul.f32 %v1381, 1.442695
  %v1534 = vpow.pop %v1533
  %v1535 = vmul.f32 %v1382, 1.442695
  %v1536 = vpow.pop %v1535
  %v1537 = vmul.f32 %v1383, 1.442695
  %v1538 = vpow.pop %v1537
  %v1539 = vmul.f32 %v1384, 1.442695
  %v1540 = vpow.pop %v1539
  %v1541 = vmul.f32 %v1385, 1.442695
  %v1542 = vpow.pop %v1541
  %v1543 = vmul.f32 %v1386, 1.442695
  %v1544 = vpow.pop %v1543
  %v1545 = vmul.f32 %v1387, 1.442695
  %v1546 = vpow.pop %v1545
  %v1547 = vmul.f32 %v1388, 1.442695
  %v1548 = vpow.pop %v1547
  %v1549 = vmul.f32 %v1389, 1.442695
  %v1550 = vpow.pop %v1549
  %v1551 = vmul.f32 %v1390, 1.442695
  %v1552 = vpow.pop %v1551
  %v1553 = vmul.f32 %v1391, 1.442695
  %v1554 = vpow.pop %v1553
  %v1555 = vmul.f32 %v1392, 1.442695
  %v1556 = vpow.pop %v1555
  %v1557 = vmul.f32 %v1393, 1.442695
  %v1558 = vpow.pop %v1557
  %v1559 = vmul.f32 %v1394, 1.442695
  %v1560 = vpow.pop %v1559
  %v1561 = vmul.f32 %v1395, 1.442695
  %v1562 = vpow.pop %v1561
  %v1563 = vmul.f32 %v1396, 1.442695
  %v1564 = vpow.pop %v1563
  %v1565 = vmul.f32 %v1397, 1.442695
  %v1566 = vpow.pop %v1565
  %v1567 = vmul.f32 %v1398, 1.442695
  %v1568 = vpow.pop %v1567
  %v1569 = vmul.f32 %v1399, 1.442695
  %v1570 = vpow.pop %v1569
  %v1571 = vmul.f32 %v1400, 1.442695
  %v1572 = vpow.pop %v1571
  %v1573 = vmul.f32 %v1401, 1.442695
  %v1574 = vpow.pop %v1573
  %v1575 = vmul.f32 %v1402, 1.442695
  %v1576 = vpow.pop %v1575
  %v1577 = vmul.f32 %v1403, 1.442695
  %v1578 = vpow.pop %v1577
  %v1579 = vmul.f32 %v1404, 1.442695
  %v1580 = vpow.pop %v1579
  %v1581 = vmul.f32 %v1405, 1.442695
  %v1582 = vpow.pop %v1581
  %v1583 = vmul.f32 %v1406, 1.442695
  %v1584 = vpow.pop %v1583
  %v1585 = vmul.f32 %v1407, 1.442695
  %v1586 = vpow.pop %v1585
  %v1587 = vmul.f32 %v1408, 1.442695
  %v1588 = vpow.pop %v1587
  %v1589 = vmul.f32 %v1409, 1.442695
  %v1590 = vpow.pop %v1589
  %v1591 = vmul.f32 %v1410, 1.442695
  %v1592 = vpow.pop %v1591
  %v1593 = vmul.f32 %v1411, 1.442695
  %v1594 = vpow.pop %v1593
  %v1595 = vmul.f32 %v1412, 1.442695
  %v1596 = vpow.pop %v1595
  %v1597 = vmul.f32 %v1413, 1.442695
  %v1598 = vpow.pop %v1597
  %v1599 = vmul.f32 %v1414, 1.442695
  %v1600 = vpow.pop %v1599
  %v1601 = vmul.f32 %v1415, 1.442695
  %v1602 = vpow.pop %v1601
  %v1603 = vmul.f32 %v1416, 1.442695
  %v1604 = vpow.pop %v1603
  %v1605 = vmul.f32 %v1417, 1.442695
  %v1606 = vpow.pop %v1605
  %v1607 = vmul.f32 %v1418, 1.442695
  %v1608 = vpow.pop %v1607
  %v1609 = vmul.f32 %v1419, 1.442695
  %v1610 = vpow.pop %v1609
  %v1611 = vmul.f32 %v1420, 1.442695
  %v1612 = vpow.pop %v1611
  %v1613 = vmul.f32 %v1421, 1.442695
  %v1614 = vpow.pop %v1613
  %v1615 = vmul.f32 %v1422, 1.442695
  %v1616 = vpow.pop %v1615
  %v1617 = vmul.f32 %v1423, 1.442695
  %v1618 = vpow.pop %v1617
  %v1619 = vmul.f32 %v1424, 1.442695
  %v1620 = vpow.pop %v1619
  %v1621 = vmul.f32 %v1425, 1.442695
  %v1622 = vpow.pop %v1621
  %v1623 = vmul.f32 %v1426, 1.442695
  %v1624 = vpow.pop %v1623
  %v1625 = vmul.f32 %v1427, 1.442695
  %v1626 = vpow.pop %v1625
  %v1627 = vmul.f32 %v1428, 1.442695
  %v1628 = vpow.pop %v1627
  %v1629 = vmul.f32 %v1429, 1.442695
  %v1630 = vpow.pop %v1629
  %v1631 = vmul.f32 %v1430, 1.442695
  %v1632 = vpow.pop %v1631
  %v1633 = vmul.f32 %v1431, 1.442695
  %v1634 = vpow.pop %v1633
  %v1635 = vmul.f32 %v1432, 1.442695
  %v1636 = vpow.pop %v1635
  %v1637 = vmul.f32 %v1433, 1.442695
  %v1638 = vpow.pop %v1637
  %v1639 = vmul.f32 %v1434, 1.442695
  %v1640 = vpow.pop %v1639
  %v1641 = vmul.f32 %v1435, 1.442695
  %v1642 = vpow.pop %v1641
  %v1643 = vmul.f32 %v1436, 1.442695
  %v1644 = vpow.pop %v1643
  %v1645 = vmul.f32 %v1437, 1.442695
  %v1646 = vpow.pop %v1645
  %v1647 = vmul.f32 %v1438, 1.442695
  %v1648 = vpow.pop %v1647
  %v1649 = vmul.f32 %v1439, 1.442695
  %v1650 = vpow.pop %v1649
  %v1651 = vmul.f32 %v1440, 1.442695
  %v1652 = vpow.pop %v1651
  %v1653 = vmul.f32 %v1441, 1.442695
  %v1654 = vpow.pop %v1653
  %v1655 = vmul.f32 %v1442, 1.442695
  %v1656 = vpow.pop %v1655
  %v1657 = vmul.f32 %v1443, 1.442695
  %v1658 = vpow.pop %v1657
  %v1659 = vmul.f32 %v1444, 1.442695
  %v1660 = vpow.pop %v1659
  %v1661 = vmul.f32 %v1445, 1.442695
  %v1662 = vpow.pop %v1661
  %v1663 = vmul.f32 %v1446, 1.442695
  %v1664 = vpow.pop %v1663
  %v1665 = vmul.f32 %v1447, 1.442695
  %v1666 = vpow.pop %v1665
  %v1667 = vmul.f32 %v1448, 1.442695
  %v1668 = vpow.pop %v1667
  %v1669 = vmul.f32 %v1449, 1.442695
  %v1670 = vpow.pop %v1669
  %v1671 = vmul.f32 %v1450, 1.442695
  %v1672 = vpow.pop %v1671
  %v1673 = vmul.f32 %v1451, 1.442695
  %v1674 = vpow.pop %v1673
  %v1675 = vmul.f32 %v1452, 1.442695
  %v1676 = vpow.pop %v1675
  %v1677 = vmul.f32 %v1453, 1.442695
  %v1678 = vpow.pop %v1677
  %v1679 = vmul.f32 %v1454, 1.442695
  %v1680 = vpow.pop %v1679
  %v1681 = vmul.f32 %v1455, 1.442695
  %v1682 = vpow.pop %v1681
  %v1683 = vmul.f32 %v1456, 1.442695
  %v1684 = vpow.pop %v1683
  %v1685 = vmul.f32 %v1457, 1.442695
  %v1686 = vpow.pop %v1685
  %v1687 = vmul.f32 %v1458, 1.442695
  %v1688 = vpow.pop %v1687
  %v1689 = vmul.f32 %v1459, 1.442695
  %v1690 = vpow.pop %v1689
  %v1691 = vmul.f32 %v1460, 1.442695
  %v1692 = vpow.pop %v1691
  %v1693 = vmul.f32 %v1461, 1.442695
  %v1694 = vpow.pop %v1693
  %v1695 = vmul.f32 %v1462, 1.442695
  %v1696 = vpow.pop %v1695
  %v1697 = vmul.f32 %v1463, 1.442695
  %v1698 = vpow.pop %v1697
  %v1699 = vmul.f32 %v1464, 1.442695
  %v1700 = vpow.pop %v1699
  %v1701 = vmul.f32 %v1465, 1.442695
  %v1702 = vpow.pop %v1701
  %v1703 = vmul.f32 %v1466, 1.442695
  %v1704 = vpow.pop %v1703
  %v1705 = vmul.f32 %v1467, 1.442695
  %v1706 = vpow.pop %v1705
  %v1707 = vmul.f32 %v1468, 1.442695
  %v1708 = vpow.pop %v1707
  %v1709 = vmul.f32 %v1469, 1.442695
  %v1710 = vpow.pop %v1709
  %v1711 = vmul.f32 %v1470, 1.442695
  %v1712 = vpow.pop %v1711
  %v1713 = vmul.f32 %v1471, 1.442695
  %v1714 = vpow.pop %v1713
  %v1715 = vmul.f32 %v1472, 1.442695
  %v1716 = vpow.pop %v1715
  %v1717 = vmul.f32 %v1473, 1.442695
  %v1718 = vpow.pop %v1717
  %v1719 = vmul.f32 %v1474, 1.442695
  %v1720 = vpow.pop %v1719
  %v1721 = vmul.f32 %v1475, 1.442695
  %v1722 = vpow.pop %v1721
  %v1723 = vmul.f32 %v1476, 1.442695
  %v1724 = vpow.pop %v1723
  %v1725 = vmul.f32 %v1477, 1.442695
  %v1726 = vpow.pop %v1725
  %v1727 = vmul.f32 %v1478, 1.442695
  %v1728 = vpow.pop %v1727
  %v1729 = vmul.f32 %v1479, 1.442695
  %v1730 = vpow.pop %v1729
  %v1731 = vmul.f32 %v1480, 1.442695
  %v1732 = vpow.pop %v1731
  %v1733 = vmul.f32 %v1481, 1.442695
  %v1734 = vpow.pop %v1733
  %v1735 = vmul.f32 %v1482, 1.442695
  %v1736 = vpow.pop %v1735
  %v1737 = vmul.f32 %v1483, 1.442695
  %v1738 = vpow.pop %v1737
  %v1739 = vmul.f32 %v1484, 1.442695
  %v1740 = vpow.pop %v1739
  %v1741 = vsub.f32 %v1486, 1.0
  %v1742 = vsub.f32 %v1488, 1.0
  %v1743 = vsub.f32 %v1490, 1.0
  %v1744 = vsub.f32 %v1492, 1.0
  %v1745 = vsub.f32 %v1494, 1.0
  %v1746 = vsub.f32 %v1496, 1.0
  %v1747 = vsub.f32 %v1498, 1.0
  %v1748 = vsub.f32 %v1500, 1.0
  %v1749 = vsub.f32 %v1502, 1.0
  %v1750 = vsub.f32 %v1504, 1.0
  %v1751 = vsub.f32 %v1506, 1.0
  %v1752 = vsub.f32 %v1508, 1.0
  %v1753 = vsub.f32 %v1510, 1.0
  %v1754 = vsub.f32 %v1512, 1.0
  %v1755 = vsub.f32 %v1514, 1.0
  %v1756 = vsub.f32 %v1516, 1.0
  %v1757 = vsub.f32 %v1518, 1.0
  %v1758 = vsub.f32 %v1520, 1.0
  %v1759 = vsub.f32 %v1522, 1.0
  %v1760 = vsub.f32 %v1524, 1.0
  %v1761 = vsub.f32 %v1526, 1.0
  %v1762 = vsub.f32 %v1528, 1.0
  %v1763 = vsub.f32 %v1530, 1.0
  %v1764 = vsub.f32 %v1532, 1.0
  %v1765 = vsub.f32 %v1534, 1.0
  %v1766 = vsub.f32 %v1536, 1.0
  %v1767 = vsub.f32 %v1538, 1.0
  %v1768 = vsub.f32 %v1540, 1.0
  %v1769 = vsub.f32 %v1542, 1.0
  %v1770 = vsub.f32 %v1544, 1.0
  %v1771 = vsub.f32 %v1546, 1.0
  %v1772 = vsub.f32 %v1548, 1.0
  %v1773 = vsub.f32 %v1550, 1.0
  %v1774 = vsub.f32 %v1552, 1.0
  %v1775 = vsub.f32 %v1554, 1.0
  %v1776 = vsub.f32 %v1556, 1.0
  %v1777 = vsub.f32 %v1558, 1.0
  %v1778 = vsub.f32 %v1560, 1.0
  %v1779 = vsub.f32 %v1562, 1.0
  %v1780 = vsub.f32 %v1564, 1.0
  %v1781 = vsub.f32 %v1566, 1.0
  %v1782 = vsub.f32 %v1568, 1.0
  %v1783 = vsub.f32 %v1570, 1.0
  %v1784 = vsub.f32 %v1572, 1.0
  %v1785 = vsub.f32 %v1574, 1.0
  %v1786 = vsub.f32 %v1576, 1.0
  %v1787 = vsub.f32 %v1578, 1.0
  %v1788 = vsub.f32 %v1580, 1.0
  %v1789 = vsub.f32 %v1582, 1.0
  %v1790 = vsub.f32 %v1584, 1.0
  %v1791 = vsub.f32 %v1586, 1.0
  %v1792 = vsub.f32 %v1588, 1.0
  %v1793 = vsub.f32 %v1590, 1.0
  %v1794 = vsub.f32 %v1592, 1.0
  %v1795 = vsub.f32 %v1594, 1.0
  %v1796 = vsub.f32 %v1596, 1.0
  %v1797 = vsub.f32 %v1598, 1.0
  %v1798 = vsub.f32 %v1600, 1.0
  %v1799 = vsub.f32 %v1602, 1.0
  %v1800 = vsub.f32 %v1604, 1.0
  %v1801 = vsub.f32 %v1606, 1.0
  %v1802 = vsub.f32 %v1608, 1.0
  %v1803 = vsub.f32 %v1610, 1.0
  %v1804 = vsub.f32 %v1612, 1.0
  %v1805 = vsub.f32 %v1614, 1.0
  %v1806 = vsub.f32 %v1616, 1.0
  %v1807 = vsub.f32 %v1618, 1.0
  %v1808 = vsub.f32 %v1620, 1.0
  %v1809 = vsub.f32 %v1622, 1.0
  %v1810 = vsub.f32 %v1624, 1.0
  %v1811 = vsub.f32 %v1626, 1.0
  %v1812 = vsub.f32 %v1628, 1.0
  %v1813 = vsub.f32 %v1630, 1.0
  %v1814 = vsub.f32 %v1632, 1.0
  %v1815 = vsub.f32 %v1634, 1.0
  %v1816 = vsub.f32 %v1636, 1.0
  %v1817 = vsub.f32 %v1638, 1.0
  %v1818 = vsub.f32 %v1640, 1.0
  %v1819 = vsub.f32 %v1642, 1.0
  %v1820 = vsub.f32 %v1644, 1.0
  %v1821 = vsub.f32 %v1646, 1.0
  %v1822 = vsub.f32 %v1648, 1.0
  %v1823 = vsub.f32 %v1650, 1.0
  %v1824 = vsub.f32 %v1652, 1.0
  %v1825 = vsub.f32 %v1654, 1.0
  %v1826 = vsub.f32 %v1656, 1.0
  %v1827 = vsub.f32 %v1658, 1.0
  %v1828 = vsub.f32 %v1660, 1.0
  %v1829 = vsub.f32 %v1662, 1.0
  %v1830 = vsub.f32 %v1664, 1.0
  %v1831 = vsub.f32 %v1666, 1.0
  %v1832 = vsub.f32 %v1668, 1.0
  %v1833 = vsub.f32 %v1670, 1.0
  %v1834 = vsub.f32 %v1672, 1.0
  %v1835 = vsub.f32 %v1674, 1.0
  %v1836 = vsub.f32 %v1676, 1.0
  %v1837 = vsub.f32 %v1678, 1.0
  %v1838 = vsub.f32 %v1680, 1.0
  %v1839 = vsub.f32 %v1682, 1.0
  %v1840 = vsub.f32 %v1684, 1.0
  %v1841 = vsub.f32 %v1686, 1.0
  %v1842 = vsub.f32 %v1688, 1.0
  %v1843 = vsub.f32 %v1690, 1.0
  %v1844 = vsub.f32 %v1692, 1.0
  %v1845 = vsub.f32 %v1694, 1.0
  %v1846 = vsub.f32 %v1696, 1.0
  %v1847 = vsub.f32 %v1698, 1.0
  %v1848 = vsub.f32 %v1700, 1.0
  %v1849 = vsub.f32 %v1702, 1.0
  %v1850 = vsub.f32 %v1704, 1.0
  %v1851 = vsub.f32 %v1706, 1.0
  %v1852 = vsub.f32 %v1708, 1.0
  %v1853 = vsub.f32 %v1710, 1.0
  %v1854 = vsub.f32 %v1712, 1.0
  %v1855 = vsub.f32 %v1714, 1.0
  %v1856 = vsub.f32 %v1716, 1.0
  %v1857 = vsub.f32 %v1718, 1.0
  %v1858 = vsub.f32 %v1720, 1.0
  %v1859 = vsub.f32 %v1722, 1.0
  %v1860 = vsub.f32 %v1724, 1.0
  %v1861 = vsub.f32 %v1726, 1.0
  %v1862 = vsub.f32 %v1728, 1.0
  %v1863 = vsub.f32 %v1730, 1.0
  %v1864 = vsub.f32 %v1732, 1.0
  %v1865 = vsub.f32 %v1734, 1.0
  %v1866 = vsub.f32 %v1736, 1.0
  %v1867 = vsub.f32 %v1738, 1.0
  %v1868 = vsub.f32 %v1740, 1.0
  %v1869 = vsel %vm1229, %v1101, %v1741
  %v1870 = vsel %vm1230, %v1102, %v1742
  %v1871 = vsel %vm1231, %v1103, %v1743
  %v1872 = vsel %vm1232, %v1104, %v1744
  %v1873 = vsel %vm1233, %v1105, %v1745
  %v1874 = vsel %vm1234, %v1106, %v1746
  %v1875 = vsel %vm1235, %v1107, %v1747
  %v1876 = vsel %vm1236, %v1108, %v1748
  %v1877 = vsel %vm1237, %v1109, %v1749
  %v1878 = vsel %vm1238, %v1110, %v1750
  %v1879 = vsel %vm1239, %v1111, %v1751
  %v1880 = vsel %vm1240, %v1112, %v1752
  %v1881 = vsel %vm1241, %v1113, %v1753
  %v1882 = vsel %vm1242, %v1114, %v1754
  %v1883 = vsel %vm1243, %v1115, %v1755
  %v1884 = vsel %vm1244, %v1116, %v1756
  %v1885 = vsel %vm1245, %v1117, %v1757
  %v1886 = vsel %vm1246, %v1118, %v1758
  %v1887 = vsel %vm1247, %v1119, %v1759
  %v1888 = vsel %vm1248, %v1120, %v1760
  %v1889 = vsel %vm1249, %v1121, %v1761
  %v1890 = vsel %vm1250, %v1122, %v1762
  %v1891 = vsel %vm1251, %v1123, %v1763
  %v1892 = vsel %vm1252, %v1124, %v1764
  %v1893 = vsel %vm1253, %v1125, %v1765
  %v1894 = vsel %vm1254, %v1126, %v1766
  %v1895 = vsel %vm1255, %v1127, %v1767
  %v1896 = vsel %vm1256, %v1128, %v1768
  %v1897 = vsel %vm1257, %v1129, %v1769
  %v1898 = vsel %vm1258, %v1130, %v1770
  %v1899 = vsel %vm1259, %v1131, %v1771
  %v1900 = vsel %vm1260, %v1132, %v1772
  %v1901 = vsel %vm1261, %v1133, %v1773
  %v1902 = vsel %vm1262, %v1134, %v1774
  %v1903 = vsel %vm1263, %v1135, %v1775
  %v1904 = vsel %vm1264, %v1136, %v1776
  %v1905 = vsel %vm1265, %v1137, %v1777
  %v1906 = vsel %vm1266, %v1138, %v1778
  %v1907 = vsel %vm1267, %v1139, %v1779
  %v1908 = vsel %vm1268, %v1140, %v1780
  %v1909 = vsel %vm1269, %v1141, %v1781
  %v1910 = vsel %vm1270, %v1142, %v1782
  %v1911 = vsel %vm1271, %v1143, %v1783
  %v1912 = vsel %vm1272, %v1144, %v1784
  %v1913 = vsel %vm1273, %v1145, %v1785
  %v1914 = vsel %vm1274, %v1146, %v1786
  %v1915 = vsel %vm1275, %v1147, %v1787
  %v1916 = vsel %vm1276, %v1148, %v1788
  %v1917 = vsel %vm1277, %v1149, %v1789
  %v1918 = vsel %vm1278, %v1150, %v1790
  %v1919 = vsel %vm1279, %v1151, %v1791
  %v1920 = vsel %vm1280, %v1152, %v1792
  %v1921 = vsel %vm1281, %v1153, %v1793
  %v1922 = vsel %vm1282, %v1154, %v1794
  %v1923 = vsel %vm1283, %v1155, %v1795
  %v1924 = vsel %vm1284, %v1156, %v1796
  %v1925 = vsel %vm1285, %v1157, %v1797
  %v1926 = vsel %vm1286, %v1158, %v1798
  %v1927 = vsel %vm1287, %v1159, %v1799
  %v1928 = vsel %vm1288, %v1160, %v1800
  %v1929 = vsel %vm1289, %v1161, %v1801
  %v1930 = vsel %vm1290, %v1162, %v1802
  %v1931 = vsel %vm1291, %v1163, %v1803
  %v1932 = vsel %vm1292, %v1164, %v1804
  %v1933 = vsel %vm1293, %v1165, %v1805
  %v1934 = vsel %vm1294, %v1166, %v1806
  %v1935 = vsel %vm1295, %v1167, %v1807
  %v1936 = vsel %vm1296, %v1168, %v1808
  %v1937 = vsel %vm1297, %v1169, %v1809
  %v1938 = vsel %vm1298, %v1170, %v1810
  %v1939 = vsel %vm1299, %v1171, %v1811
  %v1940 = vsel %vm1300, %v1172, %v1812
  %v1941 = vsel %vm1301, %v1173, %v1813
  %v1942 = vsel %vm1302, %v1174, %v1814
  %v1943 = vsel %vm1303, %v1175, %v1815
  %v1944 = vsel %vm1304, %v1176, %v1816
  %v1945 = vsel %vm1305, %v1177, %v1817
  %v1946 = vsel %vm1306, %v1178, %v1818
  %v1947 = vsel %vm1307, %v1179, %v1819
  %v1948 = vsel %vm1308, %v1180, %v1820
  %v1949 = vsel %vm1309, %v1181, %v1821
  %v1950 = vsel %vm1310, %v1182, %v1822
  %v1951 = vsel %vm1311, %v1183, %v1823
  %v1952 = vsel %vm1312, %v1184, %v1824
  %v1953 = vsel %vm1313, %v1185, %v1825
  %v1954 = vsel %vm1314, %v1186, %v1826
  %v1955 = vsel %vm1315, %v1187, %v1827
  %v1956 = vsel %vm1316, %v1188, %v1828
  %v1957 = vsel %vm1317, %v1189, %v1829
  %v1958 = vsel %vm1318, %v1190, %v1830
  %v1959 = vsel %vm1319, %v1191, %v1831
  %v1960 = vsel %vm1320, %v1192, %v1832
  %v1961 = vsel %vm1321, %v1193, %v1833
  %v1962 = vsel %vm1322, %v1194, %v1834
  %v1963 = vsel %vm1323, %v1195, %v1835
  %v1964 = vsel %vm1324, %v1196, %v1836
  %v1965 = vsel %vm1325, %v1197, %v1837
  %v1966 = vsel %vm1326, %v1198, %v1838
  %v1967 = vsel %vm1327, %v1199, %v1839
  %v1968 = vsel %vm1328, %v1200, %v1840
  %v1969 = vsel %vm1329, %v1201, %v1841
  %v1970 = vsel %vm1330, %v1202, %v1842
  %v1971 = vsel %vm1331, %v1203, %v1843
  %v1972 = vsel %vm1332, %v1204, %v1844
  %v1973 = vsel %vm1333, %v1205, %v1845
  %v1974 = vsel %vm1334, %v1206, %v1846
  %v1975 = vsel %vm1335, %v1207, %v1847
  %v1976 = vsel %vm1336, %v1208, %v1848
  %v1977 = vsel %vm1337, %v1209, %v1849
  %v1978 = vsel %vm1338, %v1210, %v1850
  %v1979 = vsel %vm1339, %v1211, %v1851
  %v1980 = vsel %vm1340, %v1212, %v1852
  %v1981 = vsel %vm1341, %v1213, %v1853
  %v1982 = vsel %vm1342, %v1214, %v1854
  %v1983 = vsel %vm1343, %v1215, %v1855
  %v1984 = vsel %vm1344, %v1216, %v1856
  %v1985 = vsel %vm1345, %v1217, %v1857
  %v1986 = vsel %vm1346, %v1218, %v1858
  %v1987 = vsel %vm1347, %v1219, %v1859
  %v1988 = vsel %vm1348, %v1220, %v1860
  %v1989 = vsel %vm1349, %v1221, %v1861
  %v1990 = vsel %vm1350, %v1222, %v1862
  %v1991 = vsel %vm1351, %v1223, %v1863
  %v1992 = vsel %vm1352, %v1224, %v1864
  %v1993 = vsel %vm1353, %v1225, %v1865
  %v1994 = vsel %vm1354, %v1226, %v1866
  %v1995 = vsel %vm1355, %v1227, %v1867
  %v1996 = vsel %vm1356, %v1228, %v1868
  %v1997 = vpack.c.bf16 %v1871, %v1869
  %v1998 = vpack.c.bf16 %v1872, %v1870
  %v1999 = vpack.c.bf16 %v1875, %v1873
  %v2000 = vpack.c.bf16 %v1876, %v1874
  %v2001 = vpack.c.bf16 %v1879, %v1877
  %v2002 = vpack.c.bf16 %v1880, %v1878
  %v2003 = vpack.c.bf16 %v1883, %v1881
  %v2004 = vpack.c.bf16 %v1884, %v1882
  %v2005 = vpack.c.bf16 %v1887, %v1885
  %v2006 = vpack.c.bf16 %v1888, %v1886
  %v2007 = vpack.c.bf16 %v1891, %v1889
  %v2008 = vpack.c.bf16 %v1892, %v1890
  %v2009 = vpack.c.bf16 %v1895, %v1893
  %v2010 = vpack.c.bf16 %v1896, %v1894
  %v2011 = vpack.c.bf16 %v1899, %v1897
  %v2012 = vpack.c.bf16 %v1900, %v1898
  %v2013 = vpack.c.bf16 %v1903, %v1901
  %v2014 = vpack.c.bf16 %v1904, %v1902
  %v2015 = vpack.c.bf16 %v1907, %v1905
  %v2016 = vpack.c.bf16 %v1908, %v1906
  %v2017 = vpack.c.bf16 %v1911, %v1909
  %v2018 = vpack.c.bf16 %v1912, %v1910
  %v2019 = vpack.c.bf16 %v1915, %v1913
  %v2020 = vpack.c.bf16 %v1916, %v1914
  %v2021 = vpack.c.bf16 %v1919, %v1917
  %v2022 = vpack.c.bf16 %v1920, %v1918
  %v2023 = vpack.c.bf16 %v1923, %v1921
  %v2024 = vpack.c.bf16 %v1924, %v1922
  %v2025 = vpack.c.bf16 %v1927, %v1925
  %v2026 = vpack.c.bf16 %v1928, %v1926
  %v2027 = vpack.c.bf16 %v1931, %v1929
  %v2028 = vpack.c.bf16 %v1932, %v1930
  %v2029 = vpack.c.bf16 %v1935, %v1933
  %v2030 = vpack.c.bf16 %v1936, %v1934
  %v2031 = vpack.c.bf16 %v1939, %v1937
  %v2032 = vpack.c.bf16 %v1940, %v1938
  %v2033 = vpack.c.bf16 %v1943, %v1941
  %v2034 = vpack.c.bf16 %v1944, %v1942
  %v2035 = vpack.c.bf16 %v1947, %v1945
  %v2036 = vpack.c.bf16 %v1948, %v1946
  %v2037 = vpack.c.bf16 %v1951, %v1949
  %v2038 = vpack.c.bf16 %v1952, %v1950
  %v2039 = vpack.c.bf16 %v1955, %v1953
  %v2040 = vpack.c.bf16 %v1956, %v1954
  %v2041 = vpack.c.bf16 %v1959, %v1957
  %v2042 = vpack.c.bf16 %v1960, %v1958
  %v2043 = vpack.c.bf16 %v1963, %v1961
  %v2044 = vpack.c.bf16 %v1964, %v1962
  %v2045 = vpack.c.bf16 %v1967, %v1965
  %v2046 = vpack.c.bf16 %v1968, %v1966
  %v2047 = vpack.c.bf16 %v1971, %v1969
  %v2048 = vpack.c.bf16 %v1972, %v1970
  %v2049 = vpack.c.bf16 %v1975, %v1973
  %v2050 = vpack.c.bf16 %v1976, %v1974
  %v2051 = vpack.c.bf16 %v1979, %v1977
  %v2052 = vpack.c.bf16 %v1980, %v1978
  %v2053 = vpack.c.bf16 %v1983, %v1981
  %v2054 = vpack.c.bf16 %v1984, %v1982
  %v2055 = vpack.c.bf16 %v1987, %v1985
  %v2056 = vpack.c.bf16 %v1988, %v1986
  %v2057 = vpack.c.bf16 %v1991, %v1989
  %v2058 = vpack.c.bf16 %v1992, %v1990
  %v2059 = vpack.c.bf16 %v1995, %v1993
  %v2060 = vpack.c.bf16 %v1996, %v1994
  %v2061 = vld [vmem:[%s3] sm:$0xff]
  %v2062 = vld [vmem:[%s3 + $0x8] sm:$0xff]
  %v2063 = vld [vmem:[%s3 + $0x10] sm:$0xff]
  %v2064 = vld [vmem:[%s3 + $0x18] sm:$0xff]
  %v2065 = vld [vmem:[%s3 + $0x20] sm:$0xff]
  %v2066 = vld [vmem:[%s3 + $0x28] sm:$0xff]
  %v2067 = vld [vmem:[%s3 + $0x30] sm:$0xff]
  %v2068 = vld [vmem:[%s3 + $0x38] sm:$0xff]
  %v2069 = vld [vmem:[%s3 + $0x40] sm:$0xff]
  %v2070 = vld [vmem:[%s3 + $0x48] sm:$0xff]
  %v2071 = vld [vmem:[%s3 + $0x50] sm:$0xff]
  %v2072 = vld [vmem:[%s3 + $0x58] sm:$0xff]
  %v2073 = vld [vmem:[%s3 + $0x60] sm:$0xff]
  %v2074 = vld [vmem:[%s3 + $0x68] sm:$0xff]
  %v2075 = vld [vmem:[%s3 + $0x70] sm:$0xff]
  %v2076 = vld [vmem:[%s3 + $0x78] sm:$0xff]
  %v2077 = vld [vmem:[%s3 + $0x80] sm:$0xff]
  %v2078 = vld [vmem:[%s3 + $0x88] sm:$0xff]
  %v2079 = vld [vmem:[%s3 + $0x90] sm:$0xff]
  %v2080 = vld [vmem:[%s3 + $0x98] sm:$0xff]
  %v2081 = vld [vmem:[%s3 + $0xa0] sm:$0xff]
  %v2082 = vld [vmem:[%s3 + $0xa8] sm:$0xff]
  %v2083 = vld [vmem:[%s3 + $0xb0] sm:$0xff]
  %v2084 = vld [vmem:[%s3 + $0xb8] sm:$0xff]
  %v2085 = vld [vmem:[%s3 + $0xc0] sm:$0xff]
  %v2086 = vld [vmem:[%s3 + $0xc8] sm:$0xff]
  %v2087 = vld [vmem:[%s3 + $0xd0] sm:$0xff]
  %v2088 = vld [vmem:[%s3 + $0xd8] sm:$0xff]
  %v2089 = vld [vmem:[%s3 + $0xe0] sm:$0xff]
  %v2090 = vld [vmem:[%s3 + $0xe8] sm:$0xff]
  %v2091 = vld [vmem:[%s3 + $0xf0] sm:$0xff]
  %v2092 = vld [vmem:[%s3 + $0xf8] sm:$0xff]
  %v2093 = vld [vmem:[%s4] ss:$8 sm:$0x3]
  %v2095 = vlaneseq
  %v2096 = vshrl.u32 %v2095, 7
  %v2097 = vsub.s32 0, %v2096
  %v2098 = vrot.slane %v2093, %v2097
  %v2099 = vlaneseq
  %v2100 = vshrl.u32 %v2099, 7
  %v2101 = vsub.s32 1, %v2100
  %v2102 = vrot.slane %v2093, %v2101
  %v2137 = vunpack.c.l.b16 %v2061
  %v2138 = vunpack.c.h.b16 %v2061
  %v2139 = vunpack.c.l.b16 %v2062
  %v2140 = vunpack.c.h.b16 %v2062
  %v2141 = vunpack.c.l.b16 %v2063
  %v2142 = vunpack.c.h.b16 %v2063
  %v2143 = vunpack.c.l.b16 %v2064
  %v2144 = vunpack.c.h.b16 %v2064
  %v2145 = vunpack.c.l.b16 %v2065
  %v2146 = vunpack.c.h.b16 %v2065
  %v2147 = vunpack.c.l.b16 %v2066
  %v2148 = vunpack.c.h.b16 %v2066
  %v2149 = vunpack.c.l.b16 %v2067
  %v2150 = vunpack.c.h.b16 %v2067
  %v2151 = vunpack.c.l.b16 %v2068
  %v2152 = vunpack.c.h.b16 %v2068
  %v2153 = vunpack.c.l.b16 %v2069
  %v2154 = vunpack.c.h.b16 %v2069
  %v2155 = vunpack.c.l.b16 %v2070
  %v2156 = vunpack.c.h.b16 %v2070
  %v2157 = vunpack.c.l.b16 %v2071
  %v2158 = vunpack.c.h.b16 %v2071
  %v2159 = vunpack.c.l.b16 %v2072
  %v2160 = vunpack.c.h.b16 %v2072
  %v2161 = vunpack.c.l.b16 %v2073
  %v2162 = vunpack.c.h.b16 %v2073
  %v2163 = vunpack.c.l.b16 %v2074
  %v2164 = vunpack.c.h.b16 %v2074
  %v2165 = vunpack.c.l.b16 %v2075
  %v2166 = vunpack.c.h.b16 %v2075
  %v2167 = vunpack.c.l.b16 %v2076
  %v2168 = vunpack.c.h.b16 %v2076
  %v2169 = vunpack.c.l.b16 %v2077
  %v2170 = vunpack.c.h.b16 %v2077
  %v2171 = vunpack.c.l.b16 %v2078
  %v2172 = vunpack.c.h.b16 %v2078
  %v2173 = vunpack.c.l.b16 %v2079
  %v2174 = vunpack.c.h.b16 %v2079
  %v2175 = vunpack.c.l.b16 %v2080
  %v2176 = vunpack.c.h.b16 %v2080
  %v2177 = vunpack.c.l.b16 %v2081
  %v2178 = vunpack.c.h.b16 %v2081
  %v2179 = vunpack.c.l.b16 %v2082
  %v2180 = vunpack.c.h.b16 %v2082
  %v2181 = vunpack.c.l.b16 %v2083
  %v2182 = vunpack.c.h.b16 %v2083
  %v2183 = vunpack.c.l.b16 %v2084
  %v2184 = vunpack.c.h.b16 %v2084
  %v2185 = vunpack.c.l.b16 %v2085
  %v2186 = vunpack.c.h.b16 %v2085
  %v2187 = vunpack.c.l.b16 %v2086
  %v2188 = vunpack.c.h.b16 %v2086
  %v2189 = vunpack.c.l.b16 %v2087
  %v2190 = vunpack.c.h.b16 %v2087
  %v2191 = vunpack.c.l.b16 %v2088
  %v2192 = vunpack.c.h.b16 %v2088
  %v2193 = vunpack.c.l.b16 %v2089
  %v2194 = vunpack.c.h.b16 %v2089
  %v2195 = vunpack.c.l.b16 %v2090
  %v2196 = vunpack.c.h.b16 %v2090
  %v2197 = vunpack.c.l.b16 %v2091
  %v2198 = vunpack.c.h.b16 %v2091
  %v2199 = vunpack.c.l.b16 %v2092
  %v2200 = vunpack.c.h.b16 %v2092
  %v2201 = vpack.c.b16 %v2139, %v2137
  %v2202 = vpack.c.b16 %v2140, %v2138
  %v2203 = vpack.c.b16 %v2143, %v2141
  %v2204 = vpack.c.b16 %v2144, %v2142
  %v2205 = vpack.c.b16 %v2147, %v2145
  %v2206 = vpack.c.b16 %v2148, %v2146
  %v2207 = vpack.c.b16 %v2151, %v2149
  %v2208 = vpack.c.b16 %v2152, %v2150
  %v2209 = vpack.c.b16 %v2155, %v2153
  %v2210 = vpack.c.b16 %v2156, %v2154
  %v2211 = vpack.c.b16 %v2159, %v2157
  %v2212 = vpack.c.b16 %v2160, %v2158
  %v2213 = vpack.c.b16 %v2163, %v2161
  %v2214 = vpack.c.b16 %v2164, %v2162
  %v2215 = vpack.c.b16 %v2167, %v2165
  %v2216 = vpack.c.b16 %v2168, %v2166
  %v2217 = vpack.c.b16 %v2171, %v2169
  %v2218 = vpack.c.b16 %v2172, %v2170
  %v2219 = vpack.c.b16 %v2175, %v2173
  %v2220 = vpack.c.b16 %v2176, %v2174
  %v2221 = vpack.c.b16 %v2179, %v2177
  %v2222 = vpack.c.b16 %v2180, %v2178
  %v2223 = vpack.c.b16 %v2183, %v2181
  %v2224 = vpack.c.b16 %v2184, %v2182
  %v2225 = vpack.c.b16 %v2187, %v2185
  %v2226 = vpack.c.b16 %v2188, %v2186
  %v2227 = vpack.c.b16 %v2191, %v2189
  %v2228 = vpack.c.b16 %v2192, %v2190
  %v2229 = vpack.c.b16 %v2195, %v2193
  %v2230 = vpack.c.b16 %v2196, %v2194
  %v2231 = vpack.c.b16 %v2199, %v2197
  %v2232 = vpack.c.b16 %v2200, %v2198
  %2265 = vmatprep.subr.bf16.mxu0 %v2216
  %2266 = vmatpush1.bf16.msra.mxu0 %v2215
  %2267 = vmatprep.subr.bf16.mxu0 %v2214
  %2268 = vmatpush1.bf16.msra.mxu0 %v2213
  %2269 = vmatprep.subr.bf16.mxu0 %v2212
  %2270 = vmatpush1.bf16.msra.mxu0 %v2211
  %2271 = vmatprep.subr.bf16.mxu0 %v2210
  %2272 = vmatpush1.bf16.msra.mxu0 %v2209
  %2273 = vmatprep.subr.bf16.mxu0 %v2208
  %2274 = vmatpush1.bf16.msra.mxu0 %v2207
  %2275 = vmatprep.subr.bf16.mxu0 %v2206
  %2276 = vmatpush1.bf16.msra.mxu0 %v2205
  %2277 = vmatprep.subr.bf16.mxu0 %v2204
  %2278 = vmatpush1.bf16.msra.mxu0 %v2203
  %2279 = vmatprep.subr.bf16.mxu0 %v2202
  %2280 = vmatpush1.bf16.msra.mxu0 %v2201
  %2281 = vmatprep.subr.bf16.mxu0 %v2232
  %2282 = vmatpush2.bf16.msra.mxu0 %v2231
  %2283 = vmatprep.subr.bf16.mxu0 %v2230
  %2284 = vmatpush2.bf16.msra.mxu0 %v2229
  %2285 = vmatprep.subr.bf16.mxu0 %v2228
  %2286 = vmatpush2.bf16.msra.mxu0 %v2227
  %2287 = vmatprep.subr.bf16.mxu0 %v2226
  %2288 = vmatpush2.bf16.msra.mxu0 %v2225
  %2289 = vmatprep.subr.bf16.mxu0 %v2224
  %2290 = vmatpush2.bf16.msra.mxu0 %v2223
  %2291 = vmatprep.subr.bf16.mxu0 %v2222
  %2292 = vmatpush2.bf16.msra.mxu0 %v2221
  %2293 = vmatprep.subr.bf16.mxu0 %v2220
  %2294 = vmatpush2.bf16.msra.mxu0 %v2219
  %2295 = vmatprep.subr.bf16.mxu0 %v2218
  %2296 = vmatpush2.bf16.msra.mxu0 %v2217
  %2297 = vmatprep.mubr.bf16.mxu0 %v1998
  %2298 = vmatmul.mubr.bf16.gmra.mxu0 %v1997
  %v2299 = vpop.f32.mrf.mxu0
  %v2300 = vadd.f32 %v2098, %v2299
  %v2301 = vpop.f32.mrf.mxu0
  %v2302 = vadd.f32 %v2102, %v2301
  %v2303 = vpop.f32.mrf.mxu0
  %v2304 = vadd.f32 %v2098, %v2303
  %v2305 = vpop.f32.mrf.mxu0
  %v2306 = vadd.f32 %v2102, %v2305
  %2307 = vmatprep.mubr.bf16.mxu0 %v2000
  %2308 = vmatmul.mubr.bf16.gmra.mxu0 %v1999
  %v2309 = vpop.f32.mrf.mxu0
  %v2310 = vadd.f32 %v2098, %v2309
  %v2311 = vpop.f32.mrf.mxu0
  %v2312 = vadd.f32 %v2102, %v2311
  %v2313 = vpop.f32.mrf.mxu0
  %v2314 = vadd.f32 %v2098, %v2313
  %v2315 = vpop.f32.mrf.mxu0
  %v2316 = vadd.f32 %v2102, %v2315
  %2317 = vmatprep.mubr.bf16.mxu0 %v2002
  %2318 = vmatmul.mubr.bf16.gmra.mxu0 %v2001
  %v2319 = vpop.f32.mrf.mxu0
  %v2320 = vadd.f32 %v2098, %v2319
  %v2321 = vpop.f32.mrf.mxu0
  %v2322 = vadd.f32 %v2102, %v2321
  %v2323 = vpop.f32.mrf.mxu0
  %v2324 = vadd.f32 %v2098, %v2323
  %v2325 = vpop.f32.mrf.mxu0
  %v2326 = vadd.f32 %v2102, %v2325
  %2327 = vmatprep.mubr.bf16.mxu0 %v2004
  %2328 = vmatmul.mubr.bf16.gmra.mxu0 %v2003
  %v2329 = vpop.f32.mrf.mxu0
  %v2330 = vadd.f32 %v2098, %v2329
  %v2331 = vpop.f32.mrf.mxu0
  %v2332 = vadd.f32 %v2102, %v2331
  %v2333 = vpop.f32.mrf.mxu0
  %v2334 = vadd.f32 %v2098, %v2333
  %v2335 = vpop.f32.mrf.mxu0
  %v2336 = vadd.f32 %v2102, %v2335
  %2337 = vmatprep.mubr.bf16.mxu0 %v2006
  %2338 = vmatmul.mubr.bf16.gmra.mxu0 %v2005
  %v2339 = vpop.f32.mrf.mxu0
  %v2340 = vadd.f32 %v2098, %v2339
  %v2341 = vpop.f32.mrf.mxu0
  %v2342 = vadd.f32 %v2102, %v2341
  %v2343 = vpop.f32.mrf.mxu0
  %v2344 = vadd.f32 %v2098, %v2343
  %v2345 = vpop.f32.mrf.mxu0
  %v2346 = vadd.f32 %v2102, %v2345
  %2347 = vmatprep.mubr.bf16.mxu0 %v2008
  %2348 = vmatmul.mubr.bf16.gmra.mxu0 %v2007
  %v2349 = vpop.f32.mrf.mxu0
  %v2350 = vadd.f32 %v2098, %v2349
  %v2351 = vpop.f32.mrf.mxu0
  %v2352 = vadd.f32 %v2102, %v2351
  %v2353 = vpop.f32.mrf.mxu0
  %v2354 = vadd.f32 %v2098, %v2353
  %v2355 = vpop.f32.mrf.mxu0
  %v2356 = vadd.f32 %v2102, %v2355
  %2357 = vmatprep.mubr.bf16.mxu0 %v2010
  %2358 = vmatmul.mubr.bf16.gmra.mxu0 %v2009
  %v2359 = vpop.f32.mrf.mxu0
  %v2360 = vadd.f32 %v2098, %v2359
  %v2361 = vpop.f32.mrf.mxu0
  %v2362 = vadd.f32 %v2102, %v2361
  %v2363 = vpop.f32.mrf.mxu0
  %v2364 = vadd.f32 %v2098, %v2363
  %v2365 = vpop.f32.mrf.mxu0
  %v2366 = vadd.f32 %v2102, %v2365
  %2367 = vmatprep.mubr.bf16.mxu0 %v2012
  %2368 = vmatmul.mubr.bf16.gmra.mxu0 %v2011
  %v2369 = vpop.f32.mrf.mxu0
  %v2370 = vadd.f32 %v2098, %v2369
  %v2371 = vpop.f32.mrf.mxu0
  %v2372 = vadd.f32 %v2102, %v2371
  %v2373 = vpop.f32.mrf.mxu0
  %v2374 = vadd.f32 %v2098, %v2373
  %v2375 = vpop.f32.mrf.mxu0
  %v2376 = vadd.f32 %v2102, %v2375
  %2377 = vmatprep.mubr.bf16.mxu0 %v2014
  %2378 = vmatmul.mubr.bf16.gmra.mxu0 %v2013
  %v2379 = vpop.f32.mrf.mxu0
  %v2380 = vadd.f32 %v2098, %v2379
  %v2381 = vpop.f32.mrf.mxu0
  %v2382 = vadd.f32 %v2102, %v2381
  %v2383 = vpop.f32.mrf.mxu0
  %v2384 = vadd.f32 %v2098, %v2383
  %v2385 = vpop.f32.mrf.mxu0
  %v2386 = vadd.f32 %v2102, %v2385
  %2387 = vmatprep.mubr.bf16.mxu0 %v2016
  %2388 = vmatmul.mubr.bf16.gmra.mxu0 %v2015
  %v2389 = vpop.f32.mrf.mxu0
  %v2390 = vadd.f32 %v2098, %v2389
  %v2391 = vpop.f32.mrf.mxu0
  %v2392 = vadd.f32 %v2102, %v2391
  %v2393 = vpop.f32.mrf.mxu0
  %v2394 = vadd.f32 %v2098, %v2393
  %v2395 = vpop.f32.mrf.mxu0
  %v2396 = vadd.f32 %v2102, %v2395
  %2397 = vmatprep.mubr.bf16.mxu0 %v2018
  %2398 = vmatmul.mubr.bf16.gmra.mxu0 %v2017
  %v2399 = vpop.f32.mrf.mxu0
  %v2400 = vadd.f32 %v2098, %v2399
  %v2401 = vpop.f32.mrf.mxu0
  %v2402 = vadd.f32 %v2102, %v2401
  %v2403 = vpop.f32.mrf.mxu0
  %v2404 = vadd.f32 %v2098, %v2403
  %v2405 = vpop.f32.mrf.mxu0
  %v2406 = vadd.f32 %v2102, %v2405
  %2407 = vmatprep.mubr.bf16.mxu0 %v2020
  %2408 = vmatmul.mubr.bf16.gmra.mxu0 %v2019
  %v2409 = vpop.f32.mrf.mxu0
  %v2410 = vadd.f32 %v2098, %v2409
  %v2411 = vpop.f32.mrf.mxu0
  %v2412 = vadd.f32 %v2102, %v2411
  %v2413 = vpop.f32.mrf.mxu0
  %v2414 = vadd.f32 %v2098, %v2413
  %v2415 = vpop.f32.mrf.mxu0
  %v2416 = vadd.f32 %v2102, %v2415
  %2417 = vmatprep.mubr.bf16.mxu0 %v2022
  %2418 = vmatmul.mubr.bf16.gmra.mxu0 %v2021
  %v2419 = vpop.f32.mrf.mxu0
  %v2420 = vadd.f32 %v2098, %v2419
  %v2421 = vpop.f32.mrf.mxu0
  %v2422 = vadd.f32 %v2102, %v2421
  %v2423 = vpop.f32.mrf.mxu0
  %v2424 = vadd.f32 %v2098, %v2423
  %v2425 = vpop.f32.mrf.mxu0
  %v2426 = vadd.f32 %v2102, %v2425
  %2427 = vmatprep.mubr.bf16.mxu0 %v2024
  %2428 = vmatmul.mubr.bf16.gmra.mxu0 %v2023
  %v2429 = vpop.f32.mrf.mxu0
  %v2430 = vadd.f32 %v2098, %v2429
  %v2431 = vpop.f32.mrf.mxu0
  %v2432 = vadd.f32 %v2102, %v2431
  %v2433 = vpop.f32.mrf.mxu0
  %v2434 = vadd.f32 %v2098, %v2433
  %v2435 = vpop.f32.mrf.mxu0
  %v2436 = vadd.f32 %v2102, %v2435
  %2437 = vmatprep.mubr.bf16.mxu0 %v2026
  %2438 = vmatmul.mubr.bf16.gmra.mxu0 %v2025
  %v2439 = vpop.f32.mrf.mxu0
  %v2440 = vadd.f32 %v2098, %v2439
  %v2441 = vpop.f32.mrf.mxu0
  %v2442 = vadd.f32 %v2102, %v2441
  %v2443 = vpop.f32.mrf.mxu0
  %v2444 = vadd.f32 %v2098, %v2443
  %v2445 = vpop.f32.mrf.mxu0
  %v2446 = vadd.f32 %v2102, %v2445
  %2447 = vmatprep.mubr.bf16.mxu0 %v2028
  %2448 = vmatmul.mubr.bf16.gmra.mxu0 %v2027
  %v2449 = vpop.f32.mrf.mxu0
  %v2450 = vadd.f32 %v2098, %v2449
  %v2451 = vpop.f32.mrf.mxu0
  %v2452 = vadd.f32 %v2102, %v2451
  %v2453 = vpop.f32.mrf.mxu0
  %v2454 = vadd.f32 %v2098, %v2453
  %v2455 = vpop.f32.mrf.mxu0
  %v2456 = vadd.f32 %v2102, %v2455
  %2457 = vmatprep.mubr.bf16.mxu0 %v2030
  %2458 = vmatmul.mubr.bf16.gmra.mxu0 %v2029
  %v2459 = vpop.f32.mrf.mxu0
  %v2460 = vadd.f32 %v2098, %v2459
  %v2461 = vpop.f32.mrf.mxu0
  %v2462 = vadd.f32 %v2102, %v2461
  %v2463 = vpop.f32.mrf.mxu0
  %v2464 = vadd.f32 %v2098, %v2463
  %v2465 = vpop.f32.mrf.mxu0
  %v2466 = vadd.f32 %v2102, %v2465
  %2467 = vmatprep.mubr.bf16.mxu0 %v2032
  %2468 = vmatmul.mubr.bf16.gmra.mxu0 %v2031
  %v2469 = vpop.f32.mrf.mxu0
  %v2470 = vadd.f32 %v2098, %v2469
  %v2471 = vpop.f32.mrf.mxu0
  %v2472 = vadd.f32 %v2102, %v2471
  %v2473 = vpop.f32.mrf.mxu0
  %v2474 = vadd.f32 %v2098, %v2473
  %v2475 = vpop.f32.mrf.mxu0
  %v2476 = vadd.f32 %v2102, %v2475
  %2477 = vmatprep.mubr.bf16.mxu0 %v2034
  %2478 = vmatmul.mubr.bf16.gmra.mxu0 %v2033
  %v2479 = vpop.f32.mrf.mxu0
  %v2480 = vadd.f32 %v2098, %v2479
  %v2481 = vpop.f32.mrf.mxu0
  %v2482 = vadd.f32 %v2102, %v2481
  %v2483 = vpop.f32.mrf.mxu0
  %v2484 = vadd.f32 %v2098, %v2483
  %v2485 = vpop.f32.mrf.mxu0
  %v2486 = vadd.f32 %v2102, %v2485
  %2487 = vmatprep.mubr.bf16.mxu0 %v2036
  %2488 = vmatmul.mubr.bf16.gmra.mxu0 %v2035
  %v2489 = vpop.f32.mrf.mxu0
  %v2490 = vadd.f32 %v2098, %v2489
  %v2491 = vpop.f32.mrf.mxu0
  %v2492 = vadd.f32 %v2102, %v2491
  %v2493 = vpop.f32.mrf.mxu0
  %v2494 = vadd.f32 %v2098, %v2493
  %v2495 = vpop.f32.mrf.mxu0
  %v2496 = vadd.f32 %v2102, %v2495
  %2497 = vmatprep.mubr.bf16.mxu0 %v2038
  %2498 = vmatmul.mubr.bf16.gmra.mxu0 %v2037
  %v2499 = vpop.f32.mrf.mxu0
  %v2500 = vadd.f32 %v2098, %v2499
  %v2501 = vpop.f32.mrf.mxu0
  %v2502 = vadd.f32 %v2102, %v2501
  %v2503 = vpop.f32.mrf.mxu0
  %v2504 = vadd.f32 %v2098, %v2503
  %v2505 = vpop.f32.mrf.mxu0
  %v2506 = vadd.f32 %v2102, %v2505
  %2507 = vmatprep.mubr.bf16.mxu0 %v2040
  %2508 = vmatmul.mubr.bf16.gmra.mxu0 %v2039
  %v2509 = vpop.f32.mrf.mxu0
  %v2510 = vadd.f32 %v2098, %v2509
  %v2511 = vpop.f32.mrf.mxu0
  %v2512 = vadd.f32 %v2102, %v2511
  %v2513 = vpop.f32.mrf.mxu0
  %v2514 = vadd.f32 %v2098, %v2513
  %v2515 = vpop.f32.mrf.mxu0
  %v2516 = vadd.f32 %v2102, %v2515
  %2517 = vmatprep.mubr.bf16.mxu0 %v2042
  %2518 = vmatmul.mubr.bf16.gmra.mxu0 %v2041
  %v2519 = vpop.f32.mrf.mxu0
  %v2520 = vadd.f32 %v2098, %v2519
  %v2521 = vpop.f32.mrf.mxu0
  %v2522 = vadd.f32 %v2102, %v2521
  %v2523 = vpop.f32.mrf.mxu0
  %v2524 = vadd.f32 %v2098, %v2523
  %v2525 = vpop.f32.mrf.mxu0
  %v2526 = vadd.f32 %v2102, %v2525
  %2527 = vmatprep.mubr.bf16.mxu0 %v2044
  %2528 = vmatmul.mubr.bf16.gmra.mxu0 %v2043
  %v2529 = vpop.f32.mrf.mxu0
  %v2530 = vadd.f32 %v2098, %v2529
  %v2531 = vpop.f32.mrf.mxu0
  %v2532 = vadd.f32 %v2102, %v2531
  %v2533 = vpop.f32.mrf.mxu0
  %v2534 = vadd.f32 %v2098, %v2533
  %v2535 = vpop.f32.mrf.mxu0
  %v2536 = vadd.f32 %v2102, %v2535
  %2537 = vmatprep.mubr.bf16.mxu0 %v2046
  %2538 = vmatmul.mubr.bf16.gmra.mxu0 %v2045
  %v2539 = vpop.f32.mrf.mxu0
  %v2540 = vadd.f32 %v2098, %v2539
  %v2541 = vpop.f32.mrf.mxu0
  %v2542 = vadd.f32 %v2102, %v2541
  %v2543 = vpop.f32.mrf.mxu0
  %v2544 = vadd.f32 %v2098, %v2543
  %v2545 = vpop.f32.mrf.mxu0
  %v2546 = vadd.f32 %v2102, %v2545
  %2547 = vmatprep.mubr.bf16.mxu0 %v2048
  %2548 = vmatmul.mubr.bf16.gmra.mxu0 %v2047
  %v2549 = vpop.f32.mrf.mxu0
  %v2550 = vadd.f32 %v2098, %v2549
  %v2551 = vpop.f32.mrf.mxu0
  %v2552 = vadd.f32 %v2102, %v2551
  %v2553 = vpop.f32.mrf.mxu0
  %v2554 = vadd.f32 %v2098, %v2553
  %v2555 = vpop.f32.mrf.mxu0
  %v2556 = vadd.f32 %v2102, %v2555
  %2557 = vmatprep.mubr.bf16.mxu0 %v2050
  %2558 = vmatmul.mubr.bf16.gmra.mxu0 %v2049
  %v2559 = vpop.f32.mrf.mxu0
  %v2560 = vadd.f32 %v2098, %v2559
  %v2561 = vpop.f32.mrf.mxu0
  %v2562 = vadd.f32 %v2102, %v2561
  %v2563 = vpop.f32.mrf.mxu0
  %v2564 = vadd.f32 %v2098, %v2563
  %v2565 = vpop.f32.mrf.mxu0
  %v2566 = vadd.f32 %v2102, %v2565
  %2567 = vmatprep.mubr.bf16.mxu0 %v2052
  %2568 = vmatmul.mubr.bf16.gmra.mxu0 %v2051
  %v2569 = vpop.f32.mrf.mxu0
  %v2570 = vadd.f32 %v2098, %v2569
  %v2571 = vpop.f32.mrf.mxu0
  %v2572 = vadd.f32 %v2102, %v2571
  %v2573 = vpop.f32.mrf.mxu0
  %v2574 = vadd.f32 %v2098, %v2573
  %v2575 = vpop.f32.mrf.mxu0
  %v2576 = vadd.f32 %v2102, %v2575
  %2577 = vmatprep.mubr.bf16.mxu0 %v2054
  %2578 = vmatmul.mubr.bf16.gmra.mxu0 %v2053
  %v2579 = vpop.f32.mrf.mxu0
  %v2580 = vadd.f32 %v2098, %v2579
  %v2581 = vpop.f32.mrf.mxu0
  %v2582 = vadd.f32 %v2102, %v2581
  %v2583 = vpop.f32.mrf.mxu0
  %v2584 = vadd.f32 %v2098, %v2583
  %v2585 = vpop.f32.mrf.mxu0
  %v2586 = vadd.f32 %v2102, %v2585
  %2587 = vmatprep.mubr.bf16.mxu0 %v2056
  %2588 = vmatmul.mubr.bf16.gmra.mxu0 %v2055
  %v2589 = vpop.f32.mrf.mxu0
  %v2590 = vadd.f32 %v2098, %v2589
  %v2591 = vpop.f32.mrf.mxu0
  %v2592 = vadd.f32 %v2102, %v2591
  %v2593 = vpop.f32.mrf.mxu0
  %v2594 = vadd.f32 %v2098, %v2593
  %v2595 = vpop.f32.mrf.mxu0
  %v2596 = vadd.f32 %v2102, %v2595
  %2597 = vmatprep.mubr.bf16.mxu0 %v2058
  %2598 = vmatmul.mubr.bf16.gmra.mxu0 %v2057
  %v2599 = vpop.f32.mrf.mxu0
  %v2600 = vadd.f32 %v2098, %v2599
  %v2601 = vpop.f32.mrf.mxu0
  %v2602 = vadd.f32 %v2102, %v2601
  %v2603 = vpop.f32.mrf.mxu0
  %v2604 = vadd.f32 %v2098, %v2603
  %v2605 = vpop.f32.mrf.mxu0
  %v2606 = vadd.f32 %v2102, %v2605
  %2607 = vmatprep.mubr.bf16.mxu0 %v2060
  %2608 = vmatmul.mubr.bf16.gmra.mxu0 %v2059
  %v2609 = vpop.f32.mrf.mxu0
  %v2610 = vadd.f32 %v2098, %v2609
  %v2611 = vpop.f32.mrf.mxu0
  %v2612 = vadd.f32 %v2102, %v2611
  %v2613 = vpop.f32.mrf.mxu0
  %v2614 = vadd.f32 %v2098, %v2613
  %v2615 = vpop.f32.mrf.mxu0
  %v2616 = vadd.f32 %v2102, %v2615
  %2617 = vdwg.mxu0
  %vm2618 = vcmp.gt.f32.partialorder %v2300, 0.0
  %vm2619 = vcmp.gt.f32.partialorder %v2302, 0.0
  %vm2620 = vcmp.gt.f32.partialorder %v2304, 0.0
  %vm2621 = vcmp.gt.f32.partialorder %v2306, 0.0
  %vm2622 = vcmp.gt.f32.partialorder %v2310, 0.0
  %vm2623 = vcmp.gt.f32.partialorder %v2312, 0.0
  %vm2624 = vcmp.gt.f32.partialorder %v2314, 0.0
  %vm2625 = vcmp.gt.f32.partialorder %v2316, 0.0
  %vm2626 = vcmp.gt.f32.partialorder %v2320, 0.0
  %vm2627 = vcmp.gt.f32.partialorder %v2322, 0.0
  %vm2628 = vcmp.gt.f32.partialorder %v2324, 0.0
  %vm2629 = vcmp.gt.f32.partialorder %v2326, 0.0
  %vm2630 = vcmp.gt.f32.partialorder %v2330, 0.0
  %vm2631 = vcmp.gt.f32.partialorder %v2332, 0.0
  %vm2632 = vcmp.gt.f32.partialorder %v2334, 0.0
  %vm2633 = vcmp.gt.f32.partialorder %v2336, 0.0
  %vm2634 = vcmp.gt.f32.partialorder %v2340, 0.0
  %vm2635 = vcmp.gt.f32.partialorder %v2342, 0.0
  %vm2636 = vcmp.gt.f32.partialorder %v2344, 0.0
  %vm2637 = vcmp.gt.f32.partialorder %v2346, 0.0
  %vm2638 = vcmp.gt.f32.partialorder %v2350, 0.0
  %vm2639 = vcmp.gt.f32.partialorder %v2352, 0.0
  %vm2640 = vcmp.gt.f32.partialorder %v2354, 0.0
  %vm2641 = vcmp.gt.f32.partialorder %v2356, 0.0
  %vm2642 = vcmp.gt.f32.partialorder %v2360, 0.0
  %vm2643 = vcmp.gt.f32.partialorder %v2362, 0.0
  %vm2644 = vcmp.gt.f32.partialorder %v2364, 0.0
  %vm2645 = vcmp.gt.f32.partialorder %v2366, 0.0
  %vm2646 = vcmp.gt.f32.partialorder %v2370, 0.0
  %vm2647 = vcmp.gt.f32.partialorder %v2372, 0.0
  %vm2648 = vcmp.gt.f32.partialorder %v2374, 0.0
  %vm2649 = vcmp.gt.f32.partialorder %v2376, 0.0
  %vm2650 = vcmp.gt.f32.partialorder %v2380, 0.0
  %vm2651 = vcmp.gt.f32.partialorder %v2382, 0.0
  %vm2652 = vcmp.gt.f32.partialorder %v2384, 0.0
  %vm2653 = vcmp.gt.f32.partialorder %v2386, 0.0
  %vm2654 = vcmp.gt.f32.partialorder %v2390, 0.0
  %vm2655 = vcmp.gt.f32.partialorder %v2392, 0.0
  %vm2656 = vcmp.gt.f32.partialorder %v2394, 0.0
  %vm2657 = vcmp.gt.f32.partialorder %v2396, 0.0
  %vm2658 = vcmp.gt.f32.partialorder %v2400, 0.0
  %vm2659 = vcmp.gt.f32.partialorder %v2402, 0.0
  %vm2660 = vcmp.gt.f32.partialorder %v2404, 0.0
  %vm2661 = vcmp.gt.f32.partialorder %v2406, 0.0
  %vm2662 = vcmp.gt.f32.partialorder %v2410, 0.0
  %vm2663 = vcmp.gt.f32.partialorder %v2412, 0.0
  %vm2664 = vcmp.gt.f32.partialorder %v2414, 0.0
  %vm2665 = vcmp.gt.f32.partialorder %v2416, 0.0
  %vm2666 = vcmp.gt.f32.partialorder %v2420, 0.0
  %vm2667 = vcmp.gt.f32.partialorder %v2422, 0.0
  %vm2668 = vcmp.gt.f32.partialorder %v2424, 0.0
  %vm2669 = vcmp.gt.f32.partialorder %v2426, 0.0
  %vm2670 = vcmp.gt.f32.partialorder %v2430, 0.0
  %vm2671 = vcmp.gt.f32.partialorder %v2432, 0.0
  %vm2672 = vcmp.gt.f32.partialorder %v2434, 0.0
  %vm2673 = vcmp.gt.f32.partialorder %v2436, 0.0
  %vm2674 = vcmp.gt.f32.partialorder %v2440, 0.0
  %vm2675 = vcmp.gt.f32.partialorder %v2442, 0.0
  %vm2676 = vcmp.gt.f32.partialorder %v2444, 0.0
  %vm2677 = vcmp.gt.f32.partialorder %v2446, 0.0
  %vm2678 = vcmp.gt.f32.partialorder %v2450, 0.0
  %vm2679 = vcmp.gt.f32.partialorder %v2452, 0.0
  %vm2680 = vcmp.gt.f32.partialorder %v2454, 0.0
  %vm2681 = vcmp.gt.f32.partialorder %v2456, 0.0
  %vm2682 = vcmp.gt.f32.partialorder %v2460, 0.0
  %vm2683 = vcmp.gt.f32.partialorder %v2462, 0.0
  %vm2684 = vcmp.gt.f32.partialorder %v2464, 0.0
  %vm2685 = vcmp.gt.f32.partialorder %v2466, 0.0
  %vm2686 = vcmp.gt.f32.partialorder %v2470, 0.0
  %vm2687 = vcmp.gt.f32.partialorder %v2472, 0.0
  %vm2688 = vcmp.gt.f32.partialorder %v2474, 0.0
  %vm2689 = vcmp.gt.f32.partialorder %v2476, 0.0
  %vm2690 = vcmp.gt.f32.partialorder %v2480, 0.0
  %vm2691 = vcmp.gt.f32.partialorder %v2482, 0.0
  %vm2692 = vcmp.gt.f32.partialorder %v2484, 0.0
  %vm2693 = vcmp.gt.f32.partialorder %v2486, 0.0
  %vm2694 = vcmp.gt.f32.partialorder %v2490, 0.0
  %vm2695 = vcmp.gt.f32.partialorder %v2492, 0.0
  %vm2696 = vcmp.gt.f32.partialorder %v2494, 0.0
  %vm2697 = vcmp.gt.f32.partialorder %v2496, 0.0
  %vm2698 = vcmp.gt.f32.partialorder %v2500, 0.0
  %vm2699 = vcmp.gt.f32.partialorder %v2502, 0.0
  %vm2700 = vcmp.gt.f32.partialorder %v2504, 0.0
  %vm2701 = vcmp.gt.f32.partialorder %v2506, 0.0
  %vm2702 = vcmp.gt.f32.partialorder %v2510, 0.0
  %vm2703 = vcmp.gt.f32.partialorder %v2512, 0.0
  %vm2704 = vcmp.gt.f32.partialorder %v2514, 0.0
  %vm2705 = vcmp.gt.f32.partialorder %v2516, 0.0
  %vm2706 = vcmp.gt.f32.partialorder %v2520, 0.0
  %vm2707 = vcmp.gt.f32.partialorder %v2522, 0.0
  %vm2708 = vcmp.gt.f32.partialorder %v2524, 0.0
  %vm2709 = vcmp.gt.f32.partialorder %v2526, 0.0
  %vm2710 = vcmp.gt.f32.partialorder %v2530, 0.0
  %vm2711 = vcmp.gt.f32.partialorder %v2532, 0.0
  %vm2712 = vcmp.gt.f32.partialorder %v2534, 0.0
  %vm2713 = vcmp.gt.f32.partialorder %v2536, 0.0
  %vm2714 = vcmp.gt.f32.partialorder %v2540, 0.0
  %vm2715 = vcmp.gt.f32.partialorder %v2542, 0.0
  %vm2716 = vcmp.gt.f32.partialorder %v2544, 0.0
  %vm2717 = vcmp.gt.f32.partialorder %v2546, 0.0
  %vm2718 = vcmp.gt.f32.partialorder %v2550, 0.0
  %vm2719 = vcmp.gt.f32.partialorder %v2552, 0.0
  %vm2720 = vcmp.gt.f32.partialorder %v2554, 0.0
  %vm2721 = vcmp.gt.f32.partialorder %v2556, 0.0
  %vm2722 = vcmp.gt.f32.partialorder %v2560, 0.0
  %vm2723 = vcmp.gt.f32.partialorder %v2562, 0.0
  %vm2724 = vcmp.gt.f32.partialorder %v2564, 0.0
  %vm2725 = vcmp.gt.f32.partialorder %v2566, 0.0
  %vm2726 = vcmp.gt.f32.partialorder %v2570, 0.0
  %vm2727 = vcmp.gt.f32.partialorder %v2572, 0.0
  %vm2728 = vcmp.gt.f32.partialorder %v2574, 0.0
  %vm2729 = vcmp.gt.f32.partialorder %v2576, 0.0
  %vm2730 = vcmp.gt.f32.partialorder %v2580, 0.0
  %vm2731 = vcmp.gt.f32.partialorder %v2582, 0.0
  %vm2732 = vcmp.gt.f32.partialorder %v2584, 0.0
  %vm2733 = vcmp.gt.f32.partialorder %v2586, 0.0
  %vm2734 = vcmp.gt.f32.partialorder %v2590, 0.0
  %vm2735 = vcmp.gt.f32.partialorder %v2592, 0.0
  %vm2736 = vcmp.gt.f32.partialorder %v2594, 0.0
  %vm2737 = vcmp.gt.f32.partialorder %v2596, 0.0
  %vm2738 = vcmp.gt.f32.partialorder %v2600, 0.0
  %vm2739 = vcmp.gt.f32.partialorder %v2602, 0.0
  %vm2740 = vcmp.gt.f32.partialorder %v2604, 0.0
  %vm2741 = vcmp.gt.f32.partialorder %v2606, 0.0
  %vm2742 = vcmp.gt.f32.partialorder %v2610, 0.0
  %vm2743 = vcmp.gt.f32.partialorder %v2612, 0.0
  %vm2744 = vcmp.gt.f32.partialorder %v2614, 0.0
  %vm2745 = vcmp.gt.f32.partialorder %v2616, 0.0
  %v2746 = vmin.f32 %v2300, 0.0
  %v2747 = vmin.f32 %v2302, 0.0
  %v2748 = vmin.f32 %v2304, 0.0
  %v2749 = vmin.f32 %v2306, 0.0
  %v2750 = vmin.f32 %v2310, 0.0
  %v2751 = vmin.f32 %v2312, 0.0
  %v2752 = vmin.f32 %v2314, 0.0
  %v2753 = vmin.f32 %v2316, 0.0
  %v2754 = vmin.f32 %v2320, 0.0
  %v2755 = vmin.f32 %v2322, 0.0
  %v2756 = vmin.f32 %v2324, 0.0
  %v2757 = vmin.f32 %v2326, 0.0
  %v2758 = vmin.f32 %v2330, 0.0
  %v2759 = vmin.f32 %v2332, 0.0
  %v2760 = vmin.f32 %v2334, 0.0
  %v2761 = vmin.f32 %v2336, 0.0
  %v2762 = vmin.f32 %v2340, 0.0
  %v2763 = vmin.f32 %v2342, 0.0
  %v2764 = vmin.f32 %v2344, 0.0
  %v2765 = vmin.f32 %v2346, 0.0
  %v2766 = vmin.f32 %v2350, 0.0
  %v2767 = vmin.f32 %v2352, 0.0
  %v2768 = vmin.f32 %v2354, 0.0
  %v2769 = vmin.f32 %v2356, 0.0
  %v2770 = vmin.f32 %v2360, 0.0
  %v2771 = vmin.f32 %v2362, 0.0
  %v2772 = vmin.f32 %v2364, 0.0
  %v2773 = vmin.f32 %v2366, 0.0
  %v2774 = vmin.f32 %v2370, 0.0
  %v2775 = vmin.f32 %v2372, 0.0
  %v2776 = vmin.f32 %v2374, 0.0
  %v2777 = vmin.f32 %v2376, 0.0
  %v2778 = vmin.f32 %v2380, 0.0
  %v2779 = vmin.f32 %v2382, 0.0
  %v2780 = vmin.f32 %v2384, 0.0
  %v2781 = vmin.f32 %v2386, 0.0
  %v2782 = vmin.f32 %v2390, 0.0
  %v2783 = vmin.f32 %v2392, 0.0
  %v2784 = vmin.f32 %v2394, 0.0
  %v2785 = vmin.f32 %v2396, 0.0
  %v2786 = vmin.f32 %v2400, 0.0
  %v2787 = vmin.f32 %v2402, 0.0
  %v2788 = vmin.f32 %v2404, 0.0
  %v2789 = vmin.f32 %v2406, 0.0
  %v2790 = vmin.f32 %v2410, 0.0
  %v2791 = vmin.f32 %v2412, 0.0
  %v2792 = vmin.f32 %v2414, 0.0
  %v2793 = vmin.f32 %v2416, 0.0
  %v2794 = vmin.f32 %v2420, 0.0
  %v2795 = vmin.f32 %v2422, 0.0
  %v2796 = vmin.f32 %v2424, 0.0
  %v2797 = vmin.f32 %v2426, 0.0
  %v2798 = vmin.f32 %v2430, 0.0
  %v2799 = vmin.f32 %v2432, 0.0
  %v2800 = vmin.f32 %v2434, 0.0
  %v2801 = vmin.f32 %v2436, 0.0
  %v2802 = vmin.f32 %v2440, 0.0
  %v2803 = vmin.f32 %v2442, 0.0
  %v2804 = vmin.f32 %v2444, 0.0
  %v2805 = vmin.f32 %v2446, 0.0
  %v2806 = vmin.f32 %v2450, 0.0
  %v2807 = vmin.f32 %v2452, 0.0
  %v2808 = vmin.f32 %v2454, 0.0
  %v2809 = vmin.f32 %v2456, 0.0
  %v2810 = vmin.f32 %v2460, 0.0
  %v2811 = vmin.f32 %v2462, 0.0
  %v2812 = vmin.f32 %v2464, 0.0
  %v2813 = vmin.f32 %v2466, 0.0
  %v2814 = vmin.f32 %v2470, 0.0
  %v2815 = vmin.f32 %v2472, 0.0
  %v2816 = vmin.f32 %v2474, 0.0
  %v2817 = vmin.f32 %v2476, 0.0
  %v2818 = vmin.f32 %v2480, 0.0
  %v2819 = vmin.f32 %v2482, 0.0
  %v2820 = vmin.f32 %v2484, 0.0
  %v2821 = vmin.f32 %v2486, 0.0
  %v2822 = vmin.f32 %v2490, 0.0
  %v2823 = vmin.f32 %v2492, 0.0
  %v2824 = vmin.f32 %v2494, 0.0
  %v2825 = vmin.f32 %v2496, 0.0
  %v2826 = vmin.f32 %v2500, 0.0
  %v2827 = vmin.f32 %v2502, 0.0
  %v2828 = vmin.f32 %v2504, 0.0
  %v2829 = vmin.f32 %v2506, 0.0
  %v2830 = vmin.f32 %v2510, 0.0
  %v2831 = vmin.f32 %v2512, 0.0
  %v2832 = vmin.f32 %v2514, 0.0
  %v2833 = vmin.f32 %v2516, 0.0
  %v2834 = vmin.f32 %v2520, 0.0
  %v2835 = vmin.f32 %v2522, 0.0
  %v2836 = vmin.f32 %v2524, 0.0
  %v2837 = vmin.f32 %v2526, 0.0
  %v2838 = vmin.f32 %v2530, 0.0
  %v2839 = vmin.f32 %v2532, 0.0
  %v2840 = vmin.f32 %v2534, 0.0
  %v2841 = vmin.f32 %v2536, 0.0
  %v2842 = vmin.f32 %v2540, 0.0
  %v2843 = vmin.f32 %v2542, 0.0
  %v2844 = vmin.f32 %v2544, 0.0
  %v2845 = vmin.f32 %v2546, 0.0
  %v2846 = vmin.f32 %v2550, 0.0
  %v2847 = vmin.f32 %v2552, 0.0
  %v2848 = vmin.f32 %v2554, 0.0
  %v2849 = vmin.f32 %v2556, 0.0
  %v2850 = vmin.f32 %v2560, 0.0
  %v2851 = vmin.f32 %v2562, 0.0
  %v2852 = vmin.f32 %v2564, 0.0
  %v2853 = vmin.f32 %v2566, 0.0
  %v2854 = vmin.f32 %v2570, 0.0
  %v2855 = vmin.f32 %v2572, 0.0
  %v2856 = vmin.f32 %v2574, 0.0
  %v2857 = vmin.f32 %v2576, 0.0
  %v2858 = vmin.f32 %v2580, 0.0
  %v2859 = vmin.f32 %v2582, 0.0
  %v2860 = vmin.f32 %v2584, 0.0
  %v2861 = vmin.f32 %v2586, 0.0
  %v2862 = vmin.f32 %v2590, 0.0
  %v2863 = vmin.f32 %v2592, 0.0
  %v2864 = vmin.f32 %v2594, 0.0
  %v2865 = vmin.f32 %v2596, 0.0
  %v2866 = vmin.f32 %v2600, 0.0
  %v2867 = vmin.f32 %v2602, 0.0
  %v2868 = vmin.f32 %v2604, 0.0
  %v2869 = vmin.f32 %v2606, 0.0
  %v2870 = vmin.f32 %v2610, 0.0
  %v2871 = vmin.f32 %v2612, 0.0
  %v2872 = vmin.f32 %v2614, 0.0
  %v2873 = vmin.f32 %v2616, 0.0
  %v2874 = vmul.f32 %v2746, 1.442695
  %v2875 = vpow.pop %v2874
  %v2876 = vmul.f32 %v2747, 1.442695
  %v2877 = vpow.pop %v2876
  %v2878 = vmul.f32 %v2748, 1.442695
  %v2879 = vpow.pop %v2878
  %v2880 = vmul.f32 %v2749, 1.442695
  %v2881 = vpow.pop %v2880
  %v2882 = vmul.f32 %v2750, 1.442695
  %v2883 = vpow.pop %v2882
  %v2884 = vmul.f32 %v2751, 1.442695
  %v2885 = vpow.pop %v2884
  %v2886 = vmul.f32 %v2752, 1.442695
  %v2887 = vpow.pop %v2886
  %v2888 = vmul.f32 %v2753, 1.442695
  %v2889 = vpow.pop %v2888
  %v2890 = vmul.f32 %v2754, 1.442695
  %v2891 = vpow.pop %v2890
  %v2892 = vmul.f32 %v2755, 1.442695
  %v2893 = vpow.pop %v2892
  %v2894 = vmul.f32 %v2756, 1.442695
  %v2895 = vpow.pop %v2894
  %v2896 = vmul.f32 %v2757, 1.442695
  %v2897 = vpow.pop %v2896
  %v2898 = vmul.f32 %v2758, 1.442695
  %v2899 = vpow.pop %v2898
  %v2900 = vmul.f32 %v2759, 1.442695
  %v2901 = vpow.pop %v2900
  %v2902 = vmul.f32 %v2760, 1.442695
  %v2903 = vpow.pop %v2902
  %v2904 = vmul.f32 %v2761, 1.442695
  %v2905 = vpow.pop %v2904
  %v2906 = vmul.f32 %v2762, 1.442695
  %v2907 = vpow.pop %v2906
  %v2908 = vmul.f32 %v2763, 1.442695
  %v2909 = vpow.pop %v2908
  %v2910 = vmul.f32 %v2764, 1.442695
  %v2911 = vpow.pop %v2910
  %v2912 = vmul.f32 %v2765, 1.442695
  %v2913 = vpow.pop %v2912
  %v2914 = vmul.f32 %v2766, 1.442695
  %v2915 = vpow.pop %v2914
  %v2916 = vmul.f32 %v2767, 1.442695
  %v2917 = vpow.pop %v2916
  %v2918 = vmul.f32 %v2768, 1.442695
  %v2919 = vpow.pop %v2918
  %v2920 = vmul.f32 %v2769, 1.442695
  %v2921 = vpow.pop %v2920
  %v2922 = vmul.f32 %v2770, 1.442695
  %v2923 = vpow.pop %v2922
  %v2924 = vmul.f32 %v2771, 1.442695
  %v2925 = vpow.pop %v2924
  %v2926 = vmul.f32 %v2772, 1.442695
  %v2927 = vpow.pop %v2926
  %v2928 = vmul.f32 %v2773, 1.442695
  %v2929 = vpow.pop %v2928
  %v2930 = vmul.f32 %v2774, 1.442695
  %v2931 = vpow.pop %v2930
  %v2932 = vmul.f32 %v2775, 1.442695
  %v2933 = vpow.pop %v2932
  %v2934 = vmul.f32 %v2776, 1.442695
  %v2935 = vpow.pop %v2934
  %v2936 = vmul.f32 %v2777, 1.442695
  %v2937 = vpow.pop %v2936
  %v2938 = vmul.f32 %v2778, 1.442695
  %v2939 = vpow.pop %v2938
  %v2940 = vmul.f32 %v2779, 1.442695
  %v2941 = vpow.pop %v2940
  %v2942 = vmul.f32 %v2780, 1.442695
  %v2943 = vpow.pop %v2942
  %v2944 = vmul.f32 %v2781, 1.442695
  %v2945 = vpow.pop %v2944
  %v2946 = vmul.f32 %v2782, 1.442695
  %v2947 = vpow.pop %v2946
  %v2948 = vmul.f32 %v2783, 1.442695
  %v2949 = vpow.pop %v2948
  %v2950 = vmul.f32 %v2784, 1.442695
  %v2951 = vpow.pop %v2950
  %v2952 = vmul.f32 %v2785, 1.442695
  %v2953 = vpow.pop %v2952
  %v2954 = vmul.f32 %v2786, 1.442695
  %v2955 = vpow.pop %v2954
  %v2956 = vmul.f32 %v2787, 1.442695
  %v2957 = vpow.pop %v2956
  %v2958 = vmul.f32 %v2788, 1.442695
  %v2959 = vpow.pop %v2958
  %v2960 = vmul.f32 %v2789, 1.442695
  %v2961 = vpow.pop %v2960
  %v2962 = vmul.f32 %v2790, 1.442695
  %v2963 = vpow.pop %v2962
  %v2964 = vmul.f32 %v2791, 1.442695
  %v2965 = vpow.pop %v2964
  %v2966 = vmul.f32 %v2792, 1.442695
  %v2967 = vpow.pop %v2966
  %v2968 = vmul.f32 %v2793, 1.442695
  %v2969 = vpow.pop %v2968
  %v2970 = vmul.f32 %v2794, 1.442695
  %v2971 = vpow.pop %v2970
  %v2972 = vmul.f32 %v2795, 1.442695
  %v2973 = vpow.pop %v2972
  %v2974 = vmul.f32 %v2796, 1.442695
  %v2975 = vpow.pop %v2974
  %v2976 = vmul.f32 %v2797, 1.442695
  %v2977 = vpow.pop %v2976
  %v2978 = vmul.f32 %v2798, 1.442695
  %v2979 = vpow.pop %v2978
  %v2980 = vmul.f32 %v2799, 1.442695
  %v2981 = vpow.pop %v2980
  %v2982 = vmul.f32 %v2800, 1.442695
  %v2983 = vpow.pop %v2982
  %v2984 = vmul.f32 %v2801, 1.442695
  %v2985 = vpow.pop %v2984
  %v2986 = vmul.f32 %v2802, 1.442695
  %v2987 = vpow.pop %v2986
  %v2988 = vmul.f32 %v2803, 1.442695
  %v2989 = vpow.pop %v2988
  %v2990 = vmul.f32 %v2804, 1.442695
  %v2991 = vpow.pop %v2990
  %v2992 = vmul.f32 %v2805, 1.442695
  %v2993 = vpow.pop %v2992
  %v2994 = vmul.f32 %v2806, 1.442695
  %v2995 = vpow.pop %v2994
  %v2996 = vmul.f32 %v2807, 1.442695
  %v2997 = vpow.pop %v2996
  %v2998 = vmul.f32 %v2808, 1.442695
  %v2999 = vpow.pop %v2998
  %v3000 = vmul.f32 %v2809, 1.442695
  %v3001 = vpow.pop %v3000
  %v3002 = vmul.f32 %v2810, 1.442695
  %v3003 = vpow.pop %v3002
  %v3004 = vmul.f32 %v2811, 1.442695
  %v3005 = vpow.pop %v3004
  %v3006 = vmul.f32 %v2812, 1.442695
  %v3007 = vpow.pop %v3006
  %v3008 = vmul.f32 %v2813, 1.442695
  %v3009 = vpow.pop %v3008
  %v3010 = vmul.f32 %v2814, 1.442695
  %v3011 = vpow.pop %v3010
  %v3012 = vmul.f32 %v2815, 1.442695
  %v3013 = vpow.pop %v3012
  %v3014 = vmul.f32 %v2816, 1.442695
  %v3015 = vpow.pop %v3014
  %v3016 = vmul.f32 %v2817, 1.442695
  %v3017 = vpow.pop %v3016
  %v3018 = vmul.f32 %v2818, 1.442695
  %v3019 = vpow.pop %v3018
  %v3020 = vmul.f32 %v2819, 1.442695
  %v3021 = vpow.pop %v3020
  %v3022 = vmul.f32 %v2820, 1.442695
  %v3023 = vpow.pop %v3022
  %v3024 = vmul.f32 %v2821, 1.442695
  %v3025 = vpow.pop %v3024
  %v3026 = vmul.f32 %v2822, 1.442695
  %v3027 = vpow.pop %v3026
  %v3028 = vmul.f32 %v2823, 1.442695
  %v3029 = vpow.pop %v3028
  %v3030 = vmul.f32 %v2824, 1.442695
  %v3031 = vpow.pop %v3030
  %v3032 = vmul.f32 %v2825, 1.442695
  %v3033 = vpow.pop %v3032
  %v3034 = vmul.f32 %v2826, 1.442695
  %v3035 = vpow.pop %v3034
  %v3036 = vmul.f32 %v2827, 1.442695
  %v3037 = vpow.pop %v3036
  %v3038 = vmul.f32 %v2828, 1.442695
  %v3039 = vpow.pop %v3038
  %v3040 = vmul.f32 %v2829, 1.442695
  %v3041 = vpow.pop %v3040
  %v3042 = vmul.f32 %v2830, 1.442695
  %v3043 = vpow.pop %v3042
  %v3044 = vmul.f32 %v2831, 1.442695
  %v3045 = vpow.pop %v3044
  %v3046 = vmul.f32 %v2832, 1.442695
  %v3047 = vpow.pop %v3046
  %v3048 = vmul.f32 %v2833, 1.442695
  %v3049 = vpow.pop %v3048
  %v3050 = vmul.f32 %v2834, 1.442695
  %v3051 = vpow.pop %v3050
  %v3052 = vmul.f32 %v2835, 1.442695
  %v3053 = vpow.pop %v3052
  %v3054 = vmul.f32 %v2836, 1.442695
  %v3055 = vpow.pop %v3054
  %v3056 = vmul.f32 %v2837, 1.442695
  %v3057 = vpow.pop %v3056
  %v3058 = vmul.f32 %v2838, 1.442695
  %v3059 = vpow.pop %v3058
  %v3060 = vmul.f32 %v2839, 1.442695
  %v3061 = vpow.pop %v3060
  %v3062 = vmul.f32 %v2840, 1.442695
  %v3063 = vpow.pop %v3062
  %v3064 = vmul.f32 %v2841, 1.442695
  %v3065 = vpow.pop %v3064
  %v3066 = vmul.f32 %v2842, 1.442695
  %v3067 = vpow.pop %v3066
  %v3068 = vmul.f32 %v2843, 1.442695
  %v3069 = vpow.pop %v3068
  %v3070 = vmul.f32 %v2844, 1.442695
  %v3071 = vpow.pop %v3070
  %v3072 = vmul.f32 %v2845, 1.442695
  %v3073 = vpow.pop %v3072
  %v3074 = vmul.f32 %v2846, 1.442695
  %v3075 = vpow.pop %v3074
  %v3076 = vmul.f32 %v2847, 1.442695
  %v3077 = vpow.pop %v3076
  %v3078 = vmul.f32 %v2848, 1.442695
  %v3079 = vpow.pop %v3078
  %v3080 = vmul.f32 %v2849, 1.442695
  %v3081 = vpow.pop %v3080
  %v3082 = vmul.f32 %v2850, 1.442695
  %v3083 = vpow.pop %v3082
  %v3084 = vmul.f32 %v2851, 1.442695
  %v3085 = vpow.pop %v3084
  %v3086 = vmul.f32 %v2852, 1.442695
  %v3087 = vpow.pop %v3086
  %v3088 = vmul.f32 %v2853, 1.442695
  %v3089 = vpow.pop %v3088
  %v3090 = vmul.f32 %v2854, 1.442695
  %v3091 = vpow.pop %v3090
  %v3092 = vmul.f32 %v2855, 1.442695
  %v3093 = vpow.pop %v3092
  %v3094 = vmul.f32 %v2856, 1.442695
  %v3095 = vpow.pop %v3094
  %v3096 = vmul.f32 %v2857, 1.442695
  %v3097 = vpow.pop %v3096
  %v3098 = vmul.f32 %v2858, 1.442695
  %v3099 = vpow.pop %v3098
  %v3100 = vmul.f32 %v2859, 1.442695
  %v3101 = vpow.pop %v3100
  %v3102 = vmul.f32 %v2860, 1.442695
  %v3103 = vpow.pop %v3102
  %v3104 = vmul.f32 %v2861, 1.442695
  %v3105 = vpow.pop %v3104
  %v3106 = vmul.f32 %v2862, 1.442695
  %v3107 = vpow.pop %v3106
  %v3108 = vmul.f32 %v2863, 1.442695
  %v3109 = vpow.pop %v3108
  %v3110 = vmul.f32 %v2864, 1.442695
  %v3111 = vpow.pop %v3110
  %v3112 = vmul.f32 %v2865, 1.442695
  %v3113 = vpow.pop %v3112
  %v3114 = vmul.f32 %v2866, 1.442695
  %v3115 = vpow.pop %v3114
  %v3116 = vmul.f32 %v2867, 1.442695
  %v3117 = vpow.pop %v3116
  %v3118 = vmul.f32 %v2868, 1.442695
  %v3119 = vpow.pop %v3118
  %v3120 = vmul.f32 %v2869, 1.442695
  %v3121 = vpow.pop %v3120
  %v3122 = vmul.f32 %v2870, 1.442695
  %v3123 = vpow.pop %v3122
  %v3124 = vmul.f32 %v2871, 1.442695
  %v3125 = vpow.pop %v3124
  %v3126 = vmul.f32 %v2872, 1.442695
  %v3127 = vpow.pop %v3126
  %v3128 = vmul.f32 %v2873, 1.442695
  %v3129 = vpow.pop %v3128
  %v3130 = vsub.f32 %v2875, 1.0
  %v3131 = vsub.f32 %v2877, 1.0
  %v3132 = vsub.f32 %v2879, 1.0
  %v3133 = vsub.f32 %v2881, 1.0
  %v3134 = vsub.f32 %v2883, 1.0
  %v3135 = vsub.f32 %v2885, 1.0
  %v3136 = vsub.f32 %v2887, 1.0
  %v3137 = vsub.f32 %v2889, 1.0
  %v3138 = vsub.f32 %v2891, 1.0
  %v3139 = vsub.f32 %v2893, 1.0
  %v3140 = vsub.f32 %v2895, 1.0
  %v3141 = vsub.f32 %v2897, 1.0
  %v3142 = vsub.f32 %v2899, 1.0
  %v3143 = vsub.f32 %v2901, 1.0
  %v3144 = vsub.f32 %v2903, 1.0
  %v3145 = vsub.f32 %v2905, 1.0
  %v3146 = vsub.f32 %v2907, 1.0
  %v3147 = vsub.f32 %v2909, 1.0
  %v3148 = vsub.f32 %v2911, 1.0
  %v3149 = vsub.f32 %v2913, 1.0
  %v3150 = vsub.f32 %v2915, 1.0
  %v3151 = vsub.f32 %v2917, 1.0
  %v3152 = vsub.f32 %v2919, 1.0
  %v3153 = vsub.f32 %v2921, 1.0
  %v3154 = vsub.f32 %v2923, 1.0
  %v3155 = vsub.f32 %v2925, 1.0
  %v3156 = vsub.f32 %v2927, 1.0
  %v3157 = vsub.f32 %v2929, 1.0
  %v3158 = vsub.f32 %v2931, 1.0
  %v3159 = vsub.f32 %v2933, 1.0
  %v3160 = vsub.f32 %v2935, 1.0
  %v3161 = vsub.f32 %v2937, 1.0
  %v3162 = vsub.f32 %v2939, 1.0
  %v3163 = vsub.f32 %v2941, 1.0
  %v3164 = vsub.f32 %v2943, 1.0
  %v3165 = vsub.f32 %v2945, 1.0
  %v3166 = vsub.f32 %v2947, 1.0
  %v3167 = vsub.f32 %v2949, 1.0
  %v3168 = vsub.f32 %v2951, 1.0
  %v3169 = vsub.f32 %v2953, 1.0
  %v3170 = vsub.f32 %v2955, 1.0
  %v3171 = vsub.f32 %v2957, 1.0
  %v3172 = vsub.f32 %v2959, 1.0
  %v3173 = vsub.f32 %v2961, 1.0
  %v3174 = vsub.f32 %v2963, 1.0
  %v3175 = vsub.f32 %v2965, 1.0
  %v3176 = vsub.f32 %v2967, 1.0
  %v3177 = vsub.f32 %v2969, 1.0
  %v3178 = vsub.f32 %v2971, 1.0
  %v3179 = vsub.f32 %v2973, 1.0
  %v3180 = vsub.f32 %v2975, 1.0
  %v3181 = vsub.f32 %v2977, 1.0
  %v3182 = vsub.f32 %v2979, 1.0
  %v3183 = vsub.f32 %v2981, 1.0
  %v3184 = vsub.f32 %v2983, 1.0
  %v3185 = vsub.f32 %v2985, 1.0
  %v3186 = vsub.f32 %v2987, 1.0
  %v3187 = vsub.f32 %v2989, 1.0
  %v3188 = vsub.f32 %v2991, 1.0
  %v3189 = vsub.f32 %v2993, 1.0
  %v3190 = vsub.f32 %v2995, 1.0
  %v3191 = vsub.f32 %v2997, 1.0
  %v3192 = vsub.f32 %v2999, 1.0
  %v3193 = vsub.f32 %v3001, 1.0
  %v3194 = vsub.f32 %v3003, 1.0
  %v3195 = vsub.f32 %v3005, 1.0
  %v3196 = vsub.f32 %v3007, 1.0
  %v3197 = vsub.f32 %v3009, 1.0
  %v3198 = vsub.f32 %v3011, 1.0
  %v3199 = vsub.f32 %v3013, 1.0
  %v3200 = vsub.f32 %v3015, 1.0
  %v3201 = vsub.f32 %v3017, 1.0
  %v3202 = vsub.f32 %v3019, 1.0
  %v3203 = vsub.f32 %v3021, 1.0
  %v3204 = vsub.f32 %v3023, 1.0
  %v3205 = vsub.f32 %v3025, 1.0
  %v3206 = vsub.f32 %v3027, 1.0
  %v3207 = vsub.f32 %v3029, 1.0
  %v3208 = vsub.f32 %v3031, 1.0
  %v3209 = vsub.f32 %v3033, 1.0
  %v3210 = vsub.f32 %v3035, 1.0
  %v3211 = vsub.f32 %v3037, 1.0
  %v3212 = vsub.f32 %v3039, 1.0
  %v3213 = vsub.f32 %v3041, 1.0
  %v3214 = vsub.f32 %v3043, 1.0
  %v3215 = vsub.f32 %v3045, 1.0
  %v3216 = vsub.f32 %v3047, 1.0
  %v3217 = vsub.f32 %v3049, 1.0
  %v3218 = vsub.f32 %v3051, 1.0
  %v3219 = vsub.f32 %v3053, 1.0
  %v3220 = vsub.f32 %v3055, 1.0
  %v3221 = vsub.f32 %v3057, 1.0
  %v3222 = vsub.f32 %v3059, 1.0
  %v3223 = vsub.f32 %v3061, 1.0
  %v3224 = vsub.f32 %v3063, 1.0
  %v3225 = vsub.f32 %v3065, 1.0
  %v3226 = vsub.f32 %v3067, 1.0
  %v3227 = vsub.f32 %v3069, 1.0
  %v3228 = vsub.f32 %v3071, 1.0
  %v3229 = vsub.f32 %v3073, 1.0
  %v3230 = vsub.f32 %v3075, 1.0
  %v3231 = vsub.f32 %v3077, 1.0
  %v3232 = vsub.f32 %v3079, 1.0
  %v3233 = vsub.f32 %v3081, 1.0
  %v3234 = vsub.f32 %v3083, 1.0
  %v3235 = vsub.f32 %v3085, 1.0
  %v3236 = vsub.f32 %v3087, 1.0
  %v3237 = vsub.f32 %v3089, 1.0
  %v3238 = vsub.f32 %v3091, 1.0
  %v3239 = vsub.f32 %v3093, 1.0
  %v3240 = vsub.f32 %v3095, 1.0
  %v3241 = vsub.f32 %v3097, 1.0
  %v3242 = vsub.f32 %v3099, 1.0
  %v3243 = vsub.f32 %v3101, 1.0
  %v3244 = vsub.f32 %v3103, 1.0
  %v3245 = vsub.f32 %v3105, 1.0
  %v3246 = vsub.f32 %v3107, 1.0
  %v3247 = vsub.f32 %v3109, 1.0
  %v3248 = vsub.f32 %v3111, 1.0
  %v3249 = vsub.f32 %v3113, 1.0
  %v3250 = vsub.f32 %v3115, 1.0
  %v3251 = vsub.f32 %v3117, 1.0
  %v3252 = vsub.f32 %v3119, 1.0
  %v3253 = vsub.f32 %v3121, 1.0
  %v3254 = vsub.f32 %v3123, 1.0
  %v3255 = vsub.f32 %v3125, 1.0
  %v3256 = vsub.f32 %v3127, 1.0
  %v3257 = vsub.f32 %v3129, 1.0
  %v3258 = vsel %vm2618, %v2300, %v3130
  %v3259 = vsel %vm2619, %v2302, %v3131
  %v3260 = vsel %vm2620, %v2304, %v3132
  %v3261 = vsel %vm2621, %v2306, %v3133
  %v3262 = vsel %vm2622, %v2310, %v3134
  %v3263 = vsel %vm2623, %v2312, %v3135
  %v3264 = vsel %vm2624, %v2314, %v3136
  %v3265 = vsel %vm2625, %v2316, %v3137
  %v3266 = vsel %vm2626, %v2320, %v3138
  %v3267 = vsel %vm2627, %v2322, %v3139
  %v3268 = vsel %vm2628, %v2324, %v3140
  %v3269 = vsel %vm2629, %v2326, %v3141
  %v3270 = vsel %vm2630, %v2330, %v3142
  %v3271 = vsel %vm2631, %v2332, %v3143
  %v3272 = vsel %vm2632, %v2334, %v3144
  %v3273 = vsel %vm2633, %v2336, %v3145
  %v3274 = vsel %vm2634, %v2340, %v3146
  %v3275 = vsel %vm2635, %v2342, %v3147
  %v3276 = vsel %vm2636, %v2344, %v3148
  %v3277 = vsel %vm2637, %v2346, %v3149
  %v3278 = vsel %vm2638, %v2350, %v3150
  %v3279 = vsel %vm2639, %v2352, %v3151
  %v3280 = vsel %vm2640, %v2354, %v3152
  %v3281 = vsel %vm2641, %v2356, %v3153
  %v3282 = vsel %vm2642, %v2360, %v3154
  %v3283 = vsel %vm2643, %v2362, %v3155
  %v3284 = vsel %vm2644, %v2364, %v3156
  %v3285 = vsel %vm2645, %v2366, %v3157
  %v3286 = vsel %vm2646, %v2370, %v3158
  %v3287 = vsel %vm2647, %v2372, %v3159
  %v3288 = vsel %vm2648, %v2374, %v3160
  %v3289 = vsel %vm2649, %v2376, %v3161
  %v3290 = vsel %vm2650, %v2380, %v3162
  %v3291 = vsel %vm2651, %v2382, %v3163
  %v3292 = vsel %vm2652, %v2384, %v3164
  %v3293 = vsel %vm2653, %v2386, %v3165
  %v3294 = vsel %vm2654, %v2390, %v3166
  %v3295 = vsel %vm2655, %v2392, %v3167
  %v3296 = vsel %vm2656, %v2394, %v3168
  %v3297 = vsel %vm2657, %v2396, %v3169
  %v3298 = vsel %vm2658, %v2400, %v3170
  %v3299 = vsel %vm2659, %v2402, %v3171
  %v3300 = vsel %vm2660, %v2404, %v3172
  %v3301 = vsel %vm2661, %v2406, %v3173
  %v3302 = vsel %vm2662, %v2410, %v3174
  %v3303 = vsel %vm2663, %v2412, %v3175
  %v3304 = vsel %vm2664, %v2414, %v3176
  %v3305 = vsel %vm2665, %v2416, %v3177
  %v3306 = vsel %vm2666, %v2420, %v3178
  %v3307 = vsel %vm2667, %v2422, %v3179
  %v3308 = vsel %vm2668, %v2424, %v3180
  %v3309 = vsel %vm2669, %v2426, %v3181
  %v3310 = vsel %vm2670, %v2430, %v3182
  %v3311 = vsel %vm2671, %v2432, %v3183
  %v3312 = vsel %vm2672, %v2434, %v3184
  %v3313 = vsel %vm2673, %v2436, %v3185
  %v3314 = vsel %vm2674, %v2440, %v3186
  %v3315 = vsel %vm2675, %v2442, %v3187
  %v3316 = vsel %vm2676, %v2444, %v3188
  %v3317 = vsel %vm2677, %v2446, %v3189
  %v3318 = vsel %vm2678, %v2450, %v3190
  %v3319 = vsel %vm2679, %v2452, %v3191
  %v3320 = vsel %vm2680, %v2454, %v3192
  %v3321 = vsel %vm2681, %v2456, %v3193
  %v3322 = vsel %vm2682, %v2460, %v3194
  %v3323 = vsel %vm2683, %v2462, %v3195
  %v3324 = vsel %vm2684, %v2464, %v3196
  %v3325 = vsel %vm2685, %v2466, %v3197
  %v3326 = vsel %vm2686, %v2470, %v3198
  %v3327 = vsel %vm2687, %v2472, %v3199
  %v3328 = vsel %vm2688, %v2474, %v3200
  %v3329 = vsel %vm2689, %v2476, %v3201
  %v3330 = vsel %vm2690, %v2480, %v3202
  %v3331 = vsel %vm2691, %v2482, %v3203
  %v3332 = vsel %vm2692, %v2484, %v3204
  %v3333 = vsel %vm2693, %v2486, %v3205
  %v3334 = vsel %vm2694, %v2490, %v3206
  %v3335 = vsel %vm2695, %v2492, %v3207
  %v3336 = vsel %vm2696, %v2494, %v3208
  %v3337 = vsel %vm2697, %v2496, %v3209
  %v3338 = vsel %vm2698, %v2500, %v3210
  %v3339 = vsel %vm2699, %v2502, %v3211
  %v3340 = vsel %vm2700, %v2504, %v3212
  %v3341 = vsel %vm2701, %v2506, %v3213
  %v3342 = vsel %vm2702, %v2510, %v3214
  %v3343 = vsel %vm2703, %v2512, %v3215
  %v3344 = vsel %vm2704, %v2514, %v3216
  %v3345 = vsel %vm2705, %v2516, %v3217
  %v3346 = vsel %vm2706, %v2520, %v3218
  %v3347 = vsel %vm2707, %v2522, %v3219
  %v3348 = vsel %vm2708, %v2524, %v3220
  %v3349 = vsel %vm2709, %v2526, %v3221
  %v3350 = vsel %vm2710, %v2530, %v3222
  %v3351 = vsel %vm2711, %v2532, %v3223
  %v3352 = vsel %vm2712, %v2534, %v3224
  %v3353 = vsel %vm2713, %v2536, %v3225
  %v3354 = vsel %vm2714, %v2540, %v3226
  %v3355 = vsel %vm2715, %v2542, %v3227
  %v3356 = vsel %vm2716, %v2544, %v3228
  %v3357 = vsel %vm2717, %v2546, %v3229
  %v3358 = vsel %vm2718, %v2550, %v3230
  %v3359 = vsel %vm2719, %v2552, %v3231
  %v3360 = vsel %vm2720, %v2554, %v3232
  %v3361 = vsel %vm2721, %v2556, %v3233
  %v3362 = vsel %vm2722, %v2560, %v3234
  %v3363 = vsel %vm2723, %v2562, %v3235
  %v3364 = vsel %vm2724, %v2564, %v3236
  %v3365 = vsel %vm2725, %v2566, %v3237
  %v3366 = vsel %vm2726, %v2570, %v3238
  %v3367 = vsel %vm2727, %v2572, %v3239
  %v3368 = vsel %vm2728, %v2574, %v3240
  %v3369 = vsel %vm2729, %v2576, %v3241
  %v3370 = vsel %vm2730, %v2580, %v3242
  %v3371 = vsel %vm2731, %v2582, %v3243
  %v3372 = vsel %vm2732, %v2584, %v3244
  %v3373 = vsel %vm2733, %v2586, %v3245
  %v3374 = vsel %vm2734, %v2590, %v3246
  %v3375 = vsel %vm2735, %v2592, %v3247
  %v3376 = vsel %vm2736, %v2594, %v3248
  %v3377 = vsel %vm2737, %v2596, %v3249
  %v3378 = vsel %vm2738, %v2600, %v3250
  %v3379 = vsel %vm2739, %v2602, %v3251
  %v3380 = vsel %vm2740, %v2604, %v3252
  %v3381 = vsel %vm2741, %v2606, %v3253
  %v3382 = vsel %vm2742, %v2610, %v3254
  %v3383 = vsel %vm2743, %v2612, %v3255
  %v3384 = vsel %vm2744, %v2614, %v3256
  %v3385 = vsel %vm2745, %v2616, %v3257
  %v3386 = vpack.c.bf16 %v3260, %v3258
  %v3387 = vpack.c.bf16 %v3261, %v3259
  %v3388 = vpack.c.bf16 %v3264, %v3262
  %v3389 = vpack.c.bf16 %v3265, %v3263
  %v3390 = vpack.c.bf16 %v3268, %v3266
  %v3391 = vpack.c.bf16 %v3269, %v3267
  %v3392 = vpack.c.bf16 %v3272, %v3270
  %v3393 = vpack.c.bf16 %v3273, %v3271
  %v3394 = vpack.c.bf16 %v3276, %v3274
  %v3395 = vpack.c.bf16 %v3277, %v3275
  %v3396 = vpack.c.bf16 %v3280, %v3278
  %v3397 = vpack.c.bf16 %v3281, %v3279
  %v3398 = vpack.c.bf16 %v3284, %v3282
  %v3399 = vpack.c.bf16 %v3285, %v3283
  %v3400 = vpack.c.bf16 %v3288, %v3286
  %v3401 = vpack.c.bf16 %v3289, %v3287
  %v3402 = vpack.c.bf16 %v3292, %v3290
  %v3403 = vpack.c.bf16 %v3293, %v3291
  %v3404 = vpack.c.bf16 %v3296, %v3294
  %v3405 = vpack.c.bf16 %v3297, %v3295
  %v3406 = vpack.c.bf16 %v3300, %v3298
  %v3407 = vpack.c.bf16 %v3301, %v3299
  %v3408 = vpack.c.bf16 %v3304, %v3302
  %v3409 = vpack.c.bf16 %v3305, %v3303
  %v3410 = vpack.c.bf16 %v3308, %v3306
  %v3411 = vpack.c.bf16 %v3309, %v3307
  %v3412 = vpack.c.bf16 %v3312, %v3310
  %v3413 = vpack.c.bf16 %v3313, %v3311
  %v3414 = vpack.c.bf16 %v3316, %v3314
  %v3415 = vpack.c.bf16 %v3317, %v3315
  %v3416 = vpack.c.bf16 %v3320, %v3318
  %v3417 = vpack.c.bf16 %v3321, %v3319
  %v3418 = vpack.c.bf16 %v3324, %v3322
  %v3419 = vpack.c.bf16 %v3325, %v3323
  %v3420 = vpack.c.bf16 %v3328, %v3326
  %v3421 = vpack.c.bf16 %v3329, %v3327
  %v3422 = vpack.c.bf16 %v3332, %v3330
  %v3423 = vpack.c.bf16 %v3333, %v3331
  %v3424 = vpack.c.bf16 %v3336, %v3334
  %v3425 = vpack.c.bf16 %v3337, %v3335
  %v3426 = vpack.c.bf16 %v3340, %v3338
  %v3427 = vpack.c.bf16 %v3341, %v3339
  %v3428 = vpack.c.bf16 %v3344, %v3342
  %v3429 = vpack.c.bf16 %v3345, %v3343
  %v3430 = vpack.c.bf16 %v3348, %v3346
  %v3431 = vpack.c.bf16 %v3349, %v3347
  %v3432 = vpack.c.bf16 %v3352, %v3350
  %v3433 = vpack.c.bf16 %v3353, %v3351
  %v3434 = vpack.c.bf16 %v3356, %v3354
  %v3435 = vpack.c.bf16 %v3357, %v3355
  %v3436 = vpack.c.bf16 %v3360, %v3358
  %v3437 = vpack.c.bf16 %v3361, %v3359
  %v3438 = vpack.c.bf16 %v3364, %v3362
  %v3439 = vpack.c.bf16 %v3365, %v3363
  %v3440 = vpack.c.bf16 %v3368, %v3366
  %v3441 = vpack.c.bf16 %v3369, %v3367
  %v3442 = vpack.c.bf16 %v3372, %v3370
  %v3443 = vpack.c.bf16 %v3373, %v3371
  %v3444 = vpack.c.bf16 %v3376, %v3374
  %v3445 = vpack.c.bf16 %v3377, %v3375
  %v3446 = vpack.c.bf16 %v3380, %v3378
  %v3447 = vpack.c.bf16 %v3381, %v3379
  %v3448 = vpack.c.bf16 %v3384, %v3382
  %v3449 = vpack.c.bf16 %v3385, %v3383
  %s3450 = scalar_lea.vmem %s3, 256
  %v3451 = vld [vmem:[%s3450] sm:$0xff]
  %v3452 = vld [vmem:[%s3450 + $0x8] sm:$0xff]
  %v3453 = vld [vmem:[%s3450 + $0x10] sm:$0xff]
  %v3454 = vld [vmem:[%s3450 + $0x18] sm:$0xff]
  %v3455 = vld [vmem:[%s3450 + $0x20] sm:$0xff]
  %v3456 = vld [vmem:[%s3450 + $0x28] sm:$0xff]
  %v3457 = vld [vmem:[%s3450 + $0x30] sm:$0xff]
  %v3458 = vld [vmem:[%s3450 + $0x38] sm:$0xff]
  %v3459 = vld [vmem:[%s3450 + $0x40] sm:$0xff]
  %v3460 = vld [vmem:[%s3450 + $0x48] sm:$0xff]
  %v3461 = vld [vmem:[%s3450 + $0x50] sm:$0xff]
  %v3462 = vld [vmem:[%s3450 + $0x58] sm:$0xff]
  %v3463 = vld [vmem:[%s3450 + $0x60] sm:$0xff]
  %v3464 = vld [vmem:[%s3450 + $0x68] sm:$0xff]
  %v3465 = vld [vmem:[%s3450 + $0x70] sm:$0xff]
  %v3466 = vld [vmem:[%s3450 + $0x78] sm:$0xff]
  %v3467 = vld [vmem:[%s3450 + $0x80] sm:$0xff]
  %v3468 = vld [vmem:[%s3450 + $0x88] sm:$0xff]
  %v3469 = vld [vmem:[%s3450 + $0x90] sm:$0xff]
  %v3470 = vld [vmem:[%s3450 + $0x98] sm:$0xff]
  %v3471 = vld [vmem:[%s3450 + $0xa0] sm:$0xff]
  %v3472 = vld [vmem:[%s3450 + $0xa8] sm:$0xff]
  %v3473 = vld [vmem:[%s3450 + $0xb0] sm:$0xff]
  %v3474 = vld [vmem:[%s3450 + $0xb8] sm:$0xff]
  %v3475 = vld [vmem:[%s3450 + $0xc0] sm:$0xff]
  %v3476 = vld [vmem:[%s3450 + $0xc8] sm:$0xff]
  %v3477 = vld [vmem:[%s3450 + $0xd0] sm:$0xff]
  %v3478 = vld [vmem:[%s3450 + $0xd8] sm:$0xff]
  %v3479 = vld [vmem:[%s3450 + $0xe0] sm:$0xff]
  %v3480 = vld [vmem:[%s3450 + $0xe8] sm:$0xff]
  %v3481 = vld [vmem:[%s3450 + $0xf0] sm:$0xff]
  %v3482 = vld [vmem:[%s3450 + $0xf8] sm:$0xff]
  %s3483 = scalar_lea.vmem %s4, 1
  %v3484 = vld [vmem:[%s3483] ss:$8 sm:$0x3]
  %v3486 = vlaneseq
  %v3487 = vshrl.u32 %v3486, 7
  %v3488 = vsub.s32 0, %v3487
  %v3489 = vrot.slane %v3484, %v3488
  %v3490 = vlaneseq
  %v3491 = vshrl.u32 %v3490, 7
  %v3492 = vsub.s32 1, %v3491
  %v3493 = vrot.slane %v3484, %v3492
  %v3528 = vunpack.c.l.b16 %v3451
  %v3529 = vunpack.c.h.b16 %v3451
  %v3530 = vunpack.c.l.b16 %v3452
  %v3531 = vunpack.c.h.b16 %v3452
  %v3532 = vunpack.c.l.b16 %v3453
  %v3533 = vunpack.c.h.b16 %v3453
  %v3534 = vunpack.c.l.b16 %v3454
  %v3535 = vunpack.c.h.b16 %v3454
  %v3536 = vunpack.c.l.b16 %v3455
  %v3537 = vunpack.c.h.b16 %v3455
  %v3538 = vunpack.c.l.b16 %v3456
  %v3539 = vunpack.c.h.b16 %v3456
  %v3540 = vunpack.c.l.b16 %v3457
  %v3541 = vunpack.c.h.b16 %v3457
  %v3542 = vunpack.c.l.b16 %v3458
  %v3543 = vunpack.c.h.b16 %v3458
  %v3544 = vunpack.c.l.b16 %v3459
  %v3545 = vunpack.c.h.b16 %v3459
  %v3546 = vunpack.c.l.b16 %v3460
  %v3547 = vunpack.c.h.b16 %v3460
  %v3548 = vunpack.c.l.b16 %v3461
  %v3549 = vunpack.c.h.b16 %v3461
  %v3550 = vunpack.c.l.b16 %v3462
  %v3551 = vunpack.c.h.b16 %v3462
  %v3552 = vunpack.c.l.b16 %v3463
  %v3553 = vunpack.c.h.b16 %v3463
  %v3554 = vunpack.c.l.b16 %v3464
  %v3555 = vunpack.c.h.b16 %v3464
  %v3556 = vunpack.c.l.b16 %v3465
  %v3557 = vunpack.c.h.b16 %v3465
  %v3558 = vunpack.c.l.b16 %v3466
  %v3559 = vunpack.c.h.b16 %v3466
  %v3560 = vunpack.c.l.b16 %v3467
  %v3561 = vunpack.c.h.b16 %v3467
  %v3562 = vunpack.c.l.b16 %v3468
  %v3563 = vunpack.c.h.b16 %v3468
  %v3564 = vunpack.c.l.b16 %v3469
  %v3565 = vunpack.c.h.b16 %v3469
  %v3566 = vunpack.c.l.b16 %v3470
  %v3567 = vunpack.c.h.b16 %v3470
  %v3568 = vunpack.c.l.b16 %v3471
  %v3569 = vunpack.c.h.b16 %v3471
  %v3570 = vunpack.c.l.b16 %v3472
  %v3571 = vunpack.c.h.b16 %v3472
  %v3572 = vunpack.c.l.b16 %v3473
  %v3573 = vunpack.c.h.b16 %v3473
  %v3574 = vunpack.c.l.b16 %v3474
  %v3575 = vunpack.c.h.b16 %v3474
  %v3576 = vunpack.c.l.b16 %v3475
  %v3577 = vunpack.c.h.b16 %v3475
  %v3578 = vunpack.c.l.b16 %v3476
  %v3579 = vunpack.c.h.b16 %v3476
  %v3580 = vunpack.c.l.b16 %v3477
  %v3581 = vunpack.c.h.b16 %v3477
  %v3582 = vunpack.c.l.b16 %v3478
  %v3583 = vunpack.c.h.b16 %v3478
  %v3584 = vunpack.c.l.b16 %v3479
  %v3585 = vunpack.c.h.b16 %v3479
  %v3586 = vunpack.c.l.b16 %v3480
  %v3587 = vunpack.c.h.b16 %v3480
  %v3588 = vunpack.c.l.b16 %v3481
  %v3589 = vunpack.c.h.b16 %v3481
  %v3590 = vunpack.c.l.b16 %v3482
  %v3591 = vunpack.c.h.b16 %v3482
  %v3592 = vpack.c.b16 %v3530, %v3528
  %v3593 = vpack.c.b16 %v3531, %v3529
  %v3594 = vpack.c.b16 %v3534, %v3532
  %v3595 = vpack.c.b16 %v3535, %v3533
  %v3596 = vpack.c.b16 %v3538, %v3536
  %v3597 = vpack.c.b16 %v3539, %v3537
  %v3598 = vpack.c.b16 %v3542, %v3540
  %v3599 = vpack.c.b16 %v3543, %v3541
  %v3600 = vpack.c.b16 %v3546, %v3544
  %v3601 = vpack.c.b16 %v3547, %v3545
  %v3602 = vpack.c.b16 %v3550, %v3548
  %v3603 = vpack.c.b16 %v3551, %v3549
  %v3604 = vpack.c.b16 %v3554, %v3552
  %v3605 = vpack.c.b16 %v3555, %v3553
  %v3606 = vpack.c.b16 %v3558, %v3556
  %v3607 = vpack.c.b16 %v3559, %v3557
  %v3608 = vpack.c.b16 %v3562, %v3560
  %v3609 = vpack.c.b16 %v3563, %v3561
  %v3610 = vpack.c.b16 %v3566, %v3564
  %v3611 = vpack.c.b16 %v3567, %v3565
  %v3612 = vpack.c.b16 %v3570, %v3568
  %v3613 = vpack.c.b16 %v3571, %v3569
  %v3614 = vpack.c.b16 %v3574, %v3572
  %v3615 = vpack.c.b16 %v3575, %v3573
  %v3616 = vpack.c.b16 %v3578, %v3576
  %v3617 = vpack.c.b16 %v3579, %v3577
  %v3618 = vpack.c.b16 %v3582, %v3580
  %v3619 = vpack.c.b16 %v3583, %v3581
  %v3620 = vpack.c.b16 %v3586, %v3584
  %v3621 = vpack.c.b16 %v3587, %v3585
  %v3622 = vpack.c.b16 %v3590, %v3588
  %v3623 = vpack.c.b16 %v3591, %v3589
  %3656 = vmatprep.subr.bf16.mxu0 %v3607
  %3657 = vmatpush1.bf16.msra.mxu0 %v3606
  %3658 = vmatprep.subr.bf16.mxu0 %v3605
  %3659 = vmatpush1.bf16.msra.mxu0 %v3604
  %3660 = vmatprep.subr.bf16.mxu0 %v3603
  %3661 = vmatpush1.bf16.msra.mxu0 %v3602
  %3662 = vmatprep.subr.bf16.mxu0 %v3601
  %3663 = vmatpush1.bf16.msra.mxu0 %v3600
  %3664 = vmatprep.subr.bf16.mxu0 %v3599
  %3665 = vmatpush1.bf16.msra.mxu0 %v3598
  %3666 = vmatprep.subr.bf16.mxu0 %v3597
  %3667 = vmatpush1.bf16.msra.mxu0 %v3596
  %3668 = vmatprep.subr.bf16.mxu0 %v3595
  %3669 = vmatpush1.bf16.msra.mxu0 %v3594
  %3670 = vmatprep.subr.bf16.mxu0 %v3593
  %3671 = vmatpush1.bf16.msra.mxu0 %v3592
  %3672 = vmatprep.subr.bf16.mxu0 %v3623
  %3673 = vmatpush2.bf16.msra.mxu0 %v3622
  %3674 = vmatprep.subr.bf16.mxu0 %v3621
  %3675 = vmatpush2.bf16.msra.mxu0 %v3620
  %3676 = vmatprep.subr.bf16.mxu0 %v3619
  %3677 = vmatpush2.bf16.msra.mxu0 %v3618
  %3678 = vmatprep.subr.bf16.mxu0 %v3617
  %3679 = vmatpush2.bf16.msra.mxu0 %v3616
  %3680 = vmatprep.subr.bf16.mxu0 %v3615
  %3681 = vmatpush2.bf16.msra.mxu0 %v3614
  %3682 = vmatprep.subr.bf16.mxu0 %v3613
  %3683 = vmatpush2.bf16.msra.mxu0 %v3612
  %3684 = vmatprep.subr.bf16.mxu0 %v3611
  %3685 = vmatpush2.bf16.msra.mxu0 %v3610
  %3686 = vmatprep.subr.bf16.mxu0 %v3609
  %3687 = vmatpush2.bf16.msra.mxu0 %v3608
  %3688 = vmatprep.mubr.bf16.mxu0 %v3387
  %3689 = vmatmul.mubr.bf16.gmra.mxu0 %v3386
  %v3690 = vpop.f32.mrf.mxu0
  %v3691 = vadd.f32 %v3489, %v3690
  %v3692 = vpop.f32.mrf.mxu0
  %v3693 = vadd.f32 %v3493, %v3692
  %v3694 = vpop.f32.mrf.mxu0
  %v3695 = vadd.f32 %v3489, %v3694
  %v3696 = vpop.f32.mrf.mxu0
  %v3697 = vadd.f32 %v3493, %v3696
  %3698 = vmatprep.mubr.bf16.mxu0 %v3389
  %3699 = vmatmul.mubr.bf16.gmra.mxu0 %v3388
  %v3700 = vpop.f32.mrf.mxu0
  %v3701 = vadd.f32 %v3489, %v3700
  %v3702 = vpop.f32.mrf.mxu0
  %v3703 = vadd.f32 %v3493, %v3702
  %v3704 = vpop.f32.mrf.mxu0
  %v3705 = vadd.f32 %v3489, %v3704
  %v3706 = vpop.f32.mrf.mxu0
  %v3707 = vadd.f32 %v3493, %v3706
  %3708 = vmatprep.mubr.bf16.mxu0 %v3391
  %3709 = vmatmul.mubr.bf16.gmra.mxu0 %v3390
  %v3710 = vpop.f32.mrf.mxu0
  %v3711 = vadd.f32 %v3489, %v3710
  %v3712 = vpop.f32.mrf.mxu0
  %v3713 = vadd.f32 %v3493, %v3712
  %v3714 = vpop.f32.mrf.mxu0
  %v3715 = vadd.f32 %v3489, %v3714
  %v3716 = vpop.f32.mrf.mxu0
  %v3717 = vadd.f32 %v3493, %v3716
  %3718 = vmatprep.mubr.bf16.mxu0 %v3393
  %3719 = vmatmul.mubr.bf16.gmra.mxu0 %v3392
  %v3720 = vpop.f32.mrf.mxu0
  %v3721 = vadd.f32 %v3489, %v3720
  %v3722 = vpop.f32.mrf.mxu0
  %v3723 = vadd.f32 %v3493, %v3722
  %v3724 = vpop.f32.mrf.mxu0
  %v3725 = vadd.f32 %v3489, %v3724
  %v3726 = vpop.f32.mrf.mxu0
  %v3727 = vadd.f32 %v3493, %v3726
  %3728 = vmatprep.mubr.bf16.mxu0 %v3395
  %3729 = vmatmul.mubr.bf16.gmra.mxu0 %v3394
  %v3730 = vpop.f32.mrf.mxu0
  %v3731 = vadd.f32 %v3489, %v3730
  %v3732 = vpop.f32.mrf.mxu0
  %v3733 = vadd.f32 %v3493, %v3732
  %v3734 = vpop.f32.mrf.mxu0
  %v3735 = vadd.f32 %v3489, %v3734
  %v3736 = vpop.f32.mrf.mxu0
  %v3737 = vadd.f32 %v3493, %v3736
  %3738 = vmatprep.mubr.bf16.mxu0 %v3397
  %3739 = vmatmul.mubr.bf16.gmra.mxu0 %v3396
  %v3740 = vpop.f32.mrf.mxu0
  %v3741 = vadd.f32 %v3489, %v3740
  %v3742 = vpop.f32.mrf.mxu0
  %v3743 = vadd.f32 %v3493, %v3742
  %v3744 = vpop.f32.mrf.mxu0
  %v3745 = vadd.f32 %v3489, %v3744
  %v3746 = vpop.f32.mrf.mxu0
  %v3747 = vadd.f32 %v3493, %v3746
  %3748 = vmatprep.mubr.bf16.mxu0 %v3399
  %3749 = vmatmul.mubr.bf16.gmra.mxu0 %v3398
  %v3750 = vpop.f32.mrf.mxu0
  %v3751 = vadd.f32 %v3489, %v3750
  %v3752 = vpop.f32.mrf.mxu0
  %v3753 = vadd.f32 %v3493, %v3752
  %v3754 = vpop.f32.mrf.mxu0
  %v3755 = vadd.f32 %v3489, %v3754
  %v3756 = vpop.f32.mrf.mxu0
  %v3757 = vadd.f32 %v3493, %v3756
  %3758 = vmatprep.mubr.bf16.mxu0 %v3401
  %3759 = vmatmul.mubr.bf16.gmra.mxu0 %v3400
  %v3760 = vpop.f32.mrf.mxu0
  %v3761 = vadd.f32 %v3489, %v3760
  %v3762 = vpop.f32.mrf.mxu0
  %v3763 = vadd.f32 %v3493, %v3762
  %v3764 = vpop.f32.mrf.mxu0
  %v3765 = vadd.f32 %v3489, %v3764
  %v3766 = vpop.f32.mrf.mxu0
  %v3767 = vadd.f32 %v3493, %v3766
  %3768 = vmatprep.mubr.bf16.mxu0 %v3403
  %3769 = vmatmul.mubr.bf16.gmra.mxu0 %v3402
  %v3770 = vpop.f32.mrf.mxu0
  %v3771 = vadd.f32 %v3489, %v3770
  %v3772 = vpop.f32.mrf.mxu0
  %v3773 = vadd.f32 %v3493, %v3772
  %v3774 = vpop.f32.mrf.mxu0
  %v3775 = vadd.f32 %v3489, %v3774
  %v3776 = vpop.f32.mrf.mxu0
  %v3777 = vadd.f32 %v3493, %v3776
  %3778 = vmatprep.mubr.bf16.mxu0 %v3405
  %3779 = vmatmul.mubr.bf16.gmra.mxu0 %v3404
  %v3780 = vpop.f32.mrf.mxu0
  %v3781 = vadd.f32 %v3489, %v3780
  %v3782 = vpop.f32.mrf.mxu0
  %v3783 = vadd.f32 %v3493, %v3782
  %v3784 = vpop.f32.mrf.mxu0
  %v3785 = vadd.f32 %v3489, %v3784
  %v3786 = vpop.f32.mrf.mxu0
  %v3787 = vadd.f32 %v3493, %v3786
  %3788 = vmatprep.mubr.bf16.mxu0 %v3407
  %3789 = vmatmul.mubr.bf16.gmra.mxu0 %v3406
  %v3790 = vpop.f32.mrf.mxu0
  %v3791 = vadd.f32 %v3489, %v3790
  %v3792 = vpop.f32.mrf.mxu0
  %v3793 = vadd.f32 %v3493, %v3792
  %v3794 = vpop.f32.mrf.mxu0
  %v3795 = vadd.f32 %v3489, %v3794
  %v3796 = vpop.f32.mrf.mxu0
  %v3797 = vadd.f32 %v3493, %v3796
  %3798 = vmatprep.mubr.bf16.mxu0 %v3409
  %3799 = vmatmul.mubr.bf16.gmra.mxu0 %v3408
  %v3800 = vpop.f32.mrf.mxu0
  %v3801 = vadd.f32 %v3489, %v3800
  %v3802 = vpop.f32.mrf.mxu0
  %v3803 = vadd.f32 %v3493, %v3802
  %v3804 = vpop.f32.mrf.mxu0
  %v3805 = vadd.f32 %v3489, %v3804
  %v3806 = vpop.f32.mrf.mxu0
  %v3807 = vadd.f32 %v3493, %v3806
  %3808 = vmatprep.mubr.bf16.mxu0 %v3411
  %3809 = vmatmul.mubr.bf16.gmra.mxu0 %v3410
  %v3810 = vpop.f32.mrf.mxu0
  %v3811 = vadd.f32 %v3489, %v3810
  %v3812 = vpop.f32.mrf.mxu0
  %v3813 = vadd.f32 %v3493, %v3812
  %v3814 = vpop.f32.mrf.mxu0
  %v3815 = vadd.f32 %v3489, %v3814
  %v3816 = vpop.f32.mrf.mxu0
  %v3817 = vadd.f32 %v3493, %v3816
  %3818 = vmatprep.mubr.bf16.mxu0 %v3413
  %3819 = vmatmul.mubr.bf16.gmra.mxu0 %v3412
  %v3820 = vpop.f32.mrf.mxu0
  %v3821 = vadd.f32 %v3489, %v3820
  %v3822 = vpop.f32.mrf.mxu0
  %v3823 = vadd.f32 %v3493, %v3822
  %v3824 = vpop.f32.mrf.mxu0
  %v3825 = vadd.f32 %v3489, %v3824
  %v3826 = vpop.f32.mrf.mxu0
  %v3827 = vadd.f32 %v3493, %v3826
  %3828 = vmatprep.mubr.bf16.mxu0 %v3415
  %3829 = vmatmul.mubr.bf16.gmra.mxu0 %v3414
  %v3830 = vpop.f32.mrf.mxu0
  %v3831 = vadd.f32 %v3489, %v3830
  %v3832 = vpop.f32.mrf.mxu0
  %v3833 = vadd.f32 %v3493, %v3832
  %v3834 = vpop.f32.mrf.mxu0
  %v3835 = vadd.f32 %v3489, %v3834
  %v3836 = vpop.f32.mrf.mxu0
  %v3837 = vadd.f32 %v3493, %v3836
  %3838 = vmatprep.mubr.bf16.mxu0 %v3417
  %3839 = vmatmul.mubr.bf16.gmra.mxu0 %v3416
  %v3840 = vpop.f32.mrf.mxu0
  %v3841 = vadd.f32 %v3489, %v3840
  %v3842 = vpop.f32.mrf.mxu0
  %v3843 = vadd.f32 %v3493, %v3842
  %v3844 = vpop.f32.mrf.mxu0
  %v3845 = vadd.f32 %v3489, %v3844
  %v3846 = vpop.f32.mrf.mxu0
  %v3847 = vadd.f32 %v3493, %v3846
  %3848 = vmatprep.mubr.bf16.mxu0 %v3419
  %3849 = vmatmul.mubr.bf16.gmra.mxu0 %v3418
  %v3850 = vpop.f32.mrf.mxu0
  %v3851 = vadd.f32 %v3489, %v3850
  %v3852 = vpop.f32.mrf.mxu0
  %v3853 = vadd.f32 %v3493, %v3852
  %v3854 = vpop.f32.mrf.mxu0
  %v3855 = vadd.f32 %v3489, %v3854
  %v3856 = vpop.f32.mrf.mxu0
  %v3857 = vadd.f32 %v3493, %v3856
  %3858 = vmatprep.mubr.bf16.mxu0 %v3421
  %3859 = vmatmul.mubr.bf16.gmra.mxu0 %v3420
  %v3860 = vpop.f32.mrf.mxu0
  %v3861 = vadd.f32 %v3489, %v3860
  %v3862 = vpop.f32.mrf.mxu0
  %v3863 = vadd.f32 %v3493, %v3862
  %v3864 = vpop.f32.mrf.mxu0
  %v3865 = vadd.f32 %v3489, %v3864
  %v3866 = vpop.f32.mrf.mxu0
  %v3867 = vadd.f32 %v3493, %v3866
  %3868 = vmatprep.mubr.bf16.mxu0 %v3423
  %3869 = vmatmul.mubr.bf16.gmra.mxu0 %v3422
  %v3870 = vpop.f32.mrf.mxu0
  %v3871 = vadd.f32 %v3489, %v3870
  %v3872 = vpop.f32.mrf.mxu0
  %v3873 = vadd.f32 %v3493, %v3872
  %v3874 = vpop.f32.mrf.mxu0
  %v3875 = vadd.f32 %v3489, %v3874
  %v3876 = vpop.f32.mrf.mxu0
  %v3877 = vadd.f32 %v3493, %v3876
  %3878 = vmatprep.mubr.bf16.mxu0 %v3425
  %3879 = vmatmul.mubr.bf16.gmra.mxu0 %v3424
  %v3880 = vpop.f32.mrf.mxu0
  %v3881 = vadd.f32 %v3489, %v3880
  %v3882 = vpop.f32.mrf.mxu0
  %v3883 = vadd.f32 %v3493, %v3882
  %v3884 = vpop.f32.mrf.mxu0
  %v3885 = vadd.f32 %v3489, %v3884
  %v3886 = vpop.f32.mrf.mxu0
  %v3887 = vadd.f32 %v3493, %v3886
  %3888 = vmatprep.mubr.bf16.mxu0 %v3427
  %3889 = vmatmul.mubr.bf16.gmra.mxu0 %v3426
  %v3890 = vpop.f32.mrf.mxu0
  %v3891 = vadd.f32 %v3489, %v3890
  %v3892 = vpop.f32.mrf.mxu0
  %v3893 = vadd.f32 %v3493, %v3892
  %v3894 = vpop.f32.mrf.mxu0
  %v3895 = vadd.f32 %v3489, %v3894
  %v3896 = vpop.f32.mrf.mxu0
  %v3897 = vadd.f32 %v3493, %v3896
  %3898 = vmatprep.mubr.bf16.mxu0 %v3429
  %3899 = vmatmul.mubr.bf16.gmra.mxu0 %v3428
  %v3900 = vpop.f32.mrf.mxu0
  %v3901 = vadd.f32 %v3489, %v3900
  %v3902 = vpop.f32.mrf.mxu0
  %v3903 = vadd.f32 %v3493, %v3902
  %v3904 = vpop.f32.mrf.mxu0
  %v3905 = vadd.f32 %v3489, %v3904
  %v3906 = vpop.f32.mrf.mxu0
  %v3907 = vadd.f32 %v3493, %v3906
  %3908 = vmatprep.mubr.bf16.mxu0 %v3431
  %3909 = vmatmul.mubr.bf16.gmra.mxu0 %v3430
  %v3910 = vpop.f32.mrf.mxu0
  %v3911 = vadd.f32 %v3489, %v3910
  %v3912 = vpop.f32.mrf.mxu0
  %v3913 = vadd.f32 %v3493, %v3912
  %v3914 = vpop.f32.mrf.mxu0
  %v3915 = vadd.f32 %v3489, %v3914
  %v3916 = vpop.f32.mrf.mxu0
  %v3917 = vadd.f32 %v3493, %v3916
  %3918 = vmatprep.mubr.bf16.mxu0 %v3433
  %3919 = vmatmul.mubr.bf16.gmra.mxu0 %v3432
  %v3920 = vpop.f32.mrf.mxu0
  %v3921 = vadd.f32 %v3489, %v3920
  %v3922 = vpop.f32.mrf.mxu0
  %v3923 = vadd.f32 %v3493, %v3922
  %v3924 = vpop.f32.mrf.mxu0
  %v3925 = vadd.f32 %v3489, %v3924
  %v3926 = vpop.f32.mrf.mxu0
  %v3927 = vadd.f32 %v3493, %v3926
  %3928 = vmatprep.mubr.bf16.mxu0 %v3435
  %3929 = vmatmul.mubr.bf16.gmra.mxu0 %v3434
  %v3930 = vpop.f32.mrf.mxu0
  %v3931 = vadd.f32 %v3489, %v3930
  %v3932 = vpop.f32.mrf.mxu0
  %v3933 = vadd.f32 %v3493, %v3932
  %v3934 = vpop.f32.mrf.mxu0
  %v3935 = vadd.f32 %v3489, %v3934
  %v3936 = vpop.f32.mrf.mxu0
  %v3937 = vadd.f32 %v3493, %v3936
  %3938 = vmatprep.mubr.bf16.mxu0 %v3437
  %3939 = vmatmul.mubr.bf16.gmra.mxu0 %v3436
  %v3940 = vpop.f32.mrf.mxu0
  %v3941 = vadd.f32 %v3489, %v3940
  %v3942 = vpop.f32.mrf.mxu0
  %v3943 = vadd.f32 %v3493, %v3942
  %v3944 = vpop.f32.mrf.mxu0
  %v3945 = vadd.f32 %v3489, %v3944
  %v3946 = vpop.f32.mrf.mxu0
  %v3947 = vadd.f32 %v3493, %v3946
  %3948 = vmatprep.mubr.bf16.mxu0 %v3439
  %3949 = vmatmul.mubr.bf16.gmra.mxu0 %v3438
  %v3950 = vpop.f32.mrf.mxu0
  %v3951 = vadd.f32 %v3489, %v3950
  %v3952 = vpop.f32.mrf.mxu0
  %v3953 = vadd.f32 %v3493, %v3952
  %v3954 = vpop.f32.mrf.mxu0
  %v3955 = vadd.f32 %v3489, %v3954
  %v3956 = vpop.f32.mrf.mxu0
  %v3957 = vadd.f32 %v3493, %v3956
  %3958 = vmatprep.mubr.bf16.mxu0 %v3441
  %3959 = vmatmul.mubr.bf16.gmra.mxu0 %v3440
  %v3960 = vpop.f32.mrf.mxu0
  %v3961 = vadd.f32 %v3489, %v3960
  %v3962 = vpop.f32.mrf.mxu0
  %v3963 = vadd.f32 %v3493, %v3962
  %v3964 = vpop.f32.mrf.mxu0
  %v3965 = vadd.f32 %v3489, %v3964
  %v3966 = vpop.f32.mrf.mxu0
  %v3967 = vadd.f32 %v3493, %v3966
  %3968 = vmatprep.mubr.bf16.mxu0 %v3443
  %3969 = vmatmul.mubr.bf16.gmra.mxu0 %v3442
  %v3970 = vpop.f32.mrf.mxu0
  %v3971 = vadd.f32 %v3489, %v3970
  %v3972 = vpop.f32.mrf.mxu0
  %v3973 = vadd.f32 %v3493, %v3972
  %v3974 = vpop.f32.mrf.mxu0
  %v3975 = vadd.f32 %v3489, %v3974
  %v3976 = vpop.f32.mrf.mxu0
  %v3977 = vadd.f32 %v3493, %v3976
  %3978 = vmatprep.mubr.bf16.mxu0 %v3445
  %3979 = vmatmul.mubr.bf16.gmra.mxu0 %v3444
  %v3980 = vpop.f32.mrf.mxu0
  %v3981 = vadd.f32 %v3489, %v3980
  %v3982 = vpop.f32.mrf.mxu0
  %v3983 = vadd.f32 %v3493, %v3982
  %v3984 = vpop.f32.mrf.mxu0
  %v3985 = vadd.f32 %v3489, %v3984
  %v3986 = vpop.f32.mrf.mxu0
  %v3987 = vadd.f32 %v3493, %v3986
  %3988 = vmatprep.mubr.bf16.mxu0 %v3447
  %3989 = vmatmul.mubr.bf16.gmra.mxu0 %v3446
  %v3990 = vpop.f32.mrf.mxu0
  %v3991 = vadd.f32 %v3489, %v3990
  %v3992 = vpop.f32.mrf.mxu0
  %v3993 = vadd.f32 %v3493, %v3992
  %v3994 = vpop.f32.mrf.mxu0
  %v3995 = vadd.f32 %v3489, %v3994
  %v3996 = vpop.f32.mrf.mxu0
  %v3997 = vadd.f32 %v3493, %v3996
  %3998 = vmatprep.mubr.bf16.mxu0 %v3449
  %3999 = vmatmul.mubr.bf16.gmra.mxu0 %v3448
  %v4000 = vpop.f32.mrf.mxu0
  %v4001 = vadd.f32 %v3489, %v4000
  %v4002 = vpop.f32.mrf.mxu0
  %v4003 = vadd.f32 %v3493, %v4002
  %v4004 = vpop.f32.mrf.mxu0
  %v4005 = vadd.f32 %v3489, %v4004
  %v4006 = vpop.f32.mrf.mxu0
  %v4007 = vadd.f32 %v3493, %v4006
  %4008 = vdwg.mxu0
  %vm4009 = vcmp.gt.f32.partialorder %v3691, 0.0
  %vm4010 = vcmp.gt.f32.partialorder %v3693, 0.0
  %vm4011 = vcmp.gt.f32.partialorder %v3695, 0.0
  %vm4012 = vcmp.gt.f32.partialorder %v3697, 0.0
  %vm4013 = vcmp.gt.f32.partialorder %v3701, 0.0
  %vm4014 = vcmp.gt.f32.partialorder %v3703, 0.0
  %vm4015 = vcmp.gt.f32.partialorder %v3705, 0.0
  %vm4016 = vcmp.gt.f32.partialorder %v3707, 0.0
  %vm4017 = vcmp.gt.f32.partialorder %v3711, 0.0
  %vm4018 = vcmp.gt.f32.partialorder %v3713, 0.0
  %vm4019 = vcmp.gt.f32.partialorder %v3715, 0.0
  %vm4020 = vcmp.gt.f32.partialorder %v3717, 0.0
  %vm4021 = vcmp.gt.f32.partialorder %v3721, 0.0
  %vm4022 = vcmp.gt.f32.partialorder %v3723, 0.0
  %vm4023 = vcmp.gt.f32.partialorder %v3725, 0.0
  %vm4024 = vcmp.gt.f32.partialorder %v3727, 0.0
  %vm4025 = vcmp.gt.f32.partialorder %v3731, 0.0
  %vm4026 = vcmp.gt.f32.partialorder %v3733, 0.0
  %vm4027 = vcmp.gt.f32.partialorder %v3735, 0.0
  %vm4028 = vcmp.gt.f32.partialorder %v3737, 0.0
  %vm4029 = vcmp.gt.f32.partialorder %v3741, 0.0
  %vm4030 = vcmp.gt.f32.partialorder %v3743, 0.0
  %vm4031 = vcmp.gt.f32.partialorder %v3745, 0.0
  %vm4032 = vcmp.gt.f32.partialorder %v3747, 0.0
  %vm4033 = vcmp.gt.f32.partialorder %v3751, 0.0
  %vm4034 = vcmp.gt.f32.partialorder %v3753, 0.0
  %vm4035 = vcmp.gt.f32.partialorder %v3755, 0.0
  %vm4036 = vcmp.gt.f32.partialorder %v3757, 0.0
  %vm4037 = vcmp.gt.f32.partialorder %v3761, 0.0
  %vm4038 = vcmp.gt.f32.partialorder %v3763, 0.0
  %vm4039 = vcmp.gt.f32.partialorder %v3765, 0.0
  %vm4040 = vcmp.gt.f32.partialorder %v3767, 0.0
  %vm4041 = vcmp.gt.f32.partialorder %v3771, 0.0
  %vm4042 = vcmp.gt.f32.partialorder %v3773, 0.0
  %vm4043 = vcmp.gt.f32.partialorder %v3775, 0.0
  %vm4044 = vcmp.gt.f32.partialorder %v3777, 0.0
  %vm4045 = vcmp.gt.f32.partialorder %v3781, 0.0
  %vm4046 = vcmp.gt.f32.partialorder %v3783, 0.0
  %vm4047 = vcmp.gt.f32.partialorder %v3785, 0.0
  %vm4048 = vcmp.gt.f32.partialorder %v3787, 0.0
  %vm4049 = vcmp.gt.f32.partialorder %v3791, 0.0
  %vm4050 = vcmp.gt.f32.partialorder %v3793, 0.0
  %vm4051 = vcmp.gt.f32.partialorder %v3795, 0.0
  %vm4052 = vcmp.gt.f32.partialorder %v3797, 0.0
  %vm4053 = vcmp.gt.f32.partialorder %v3801, 0.0
  %vm4054 = vcmp.gt.f32.partialorder %v3803, 0.0
  %vm4055 = vcmp.gt.f32.partialorder %v3805, 0.0
  %vm4056 = vcmp.gt.f32.partialorder %v3807, 0.0
  %vm4057 = vcmp.gt.f32.partialorder %v3811, 0.0
  %vm4058 = vcmp.gt.f32.partialorder %v3813, 0.0
  %vm4059 = vcmp.gt.f32.partialorder %v3815, 0.0
  %vm4060 = vcmp.gt.f32.partialorder %v3817, 0.0
  %vm4061 = vcmp.gt.f32.partialorder %v3821, 0.0
  %vm4062 = vcmp.gt.f32.partialorder %v3823, 0.0
  %vm4063 = vcmp.gt.f32.partialorder %v3825, 0.0
  %vm4064 = vcmp.gt.f32.partialorder %v3827, 0.0
  %vm4065 = vcmp.gt.f32.partialorder %v3831, 0.0
  %vm4066 = vcmp.gt.f32.partialorder %v3833, 0.0
  %vm4067 = vcmp.gt.f32.partialorder %v3835, 0.0
  %vm4068 = vcmp.gt.f32.partialorder %v3837, 0.0
  %vm4069 = vcmp.gt.f32.partialorder %v3841, 0.0
  %vm4070 = vcmp.gt.f32.partialorder %v3843, 0.0
  %vm4071 = vcmp.gt.f32.partialorder %v3845, 0.0
  %vm4072 = vcmp.gt.f32.partialorder %v3847, 0.0
  %vm4073 = vcmp.gt.f32.partialorder %v3851, 0.0
  %vm4074 = vcmp.gt.f32.partialorder %v3853, 0.0
  %vm4075 = vcmp.gt.f32.partialorder %v3855, 0.0
  %vm4076 = vcmp.gt.f32.partialorder %v3857, 0.0
  %vm4077 = vcmp.gt.f32.partialorder %v3861, 0.0
  %vm4078 = vcmp.gt.f32.partialorder %v3863, 0.0
  %vm4079 = vcmp.gt.f32.partialorder %v3865, 0.0
  %vm4080 = vcmp.gt.f32.partialorder %v3867, 0.0
  %vm4081 = vcmp.gt.f32.partialorder %v3871, 0.0
  %vm4082 = vcmp.gt.f32.partialorder %v3873, 0.0
  %vm4083 = vcmp.gt.f32.partialorder %v3875, 0.0
  %vm4084 = vcmp.gt.f32.partialorder %v3877, 0.0
  %vm4085 = vcmp.gt.f32.partialorder %v3881, 0.0
  %vm4086 = vcmp.gt.f32.partialorder %v3883, 0.0
  %vm4087 = vcmp.gt.f32.partialorder %v3885, 0.0
  %vm4088 = vcmp.gt.f32.partialorder %v3887, 0.0
  %vm4089 = vcmp.gt.f32.partialorder %v3891, 0.0
  %vm4090 = vcmp.gt.f32.partialorder %v3893, 0.0
  %vm4091 = vcmp.gt.f32.partialorder %v3895, 0.0
  %vm4092 = vcmp.gt.f32.partialorder %v3897, 0.0
  %vm4093 = vcmp.gt.f32.partialorder %v3901, 0.0
  %vm4094 = vcmp.gt.f32.partialorder %v3903, 0.0
  %vm4095 = vcmp.gt.f32.partialorder %v3905, 0.0
  %vm4096 = vcmp.gt.f32.partialorder %v3907, 0.0
  %vm4097 = vcmp.gt.f32.partialorder %v3911, 0.0
  %vm4098 = vcmp.gt.f32.partialorder %v3913, 0.0
  %vm4099 = vcmp.gt.f32.partialorder %v3915, 0.0
  %vm4100 = vcmp.gt.f32.partialorder %v3917, 0.0
  %vm4101 = vcmp.gt.f32.partialorder %v3921, 0.0
  %vm4102 = vcmp.gt.f32.partialorder %v3923, 0.0
  %vm4103 = vcmp.gt.f32.partialorder %v3925, 0.0
  %vm4104 = vcmp.gt.f32.partialorder %v3927, 0.0
  %vm4105 = vcmp.gt.f32.partialorder %v3931, 0.0
  %vm4106 = vcmp.gt.f32.partialorder %v3933, 0.0
  %vm4107 = vcmp.gt.f32.partialorder %v3935, 0.0
  %vm4108 = vcmp.gt.f32.partialorder %v3937, 0.0
  %vm4109 = vcmp.gt.f32.partialorder %v3941, 0.0
  %vm4110 = vcmp.gt.f32.partialorder %v3943, 0.0
  %vm4111 = vcmp.gt.f32.partialorder %v3945, 0.0
  %vm4112 = vcmp.gt.f32.partialorder %v3947, 0.0
  %vm4113 = vcmp.gt.f32.partialorder %v3951, 0.0
  %vm4114 = vcmp.gt.f32.partialorder %v3953, 0.0
  %vm4115 = vcmp.gt.f32.partialorder %v3955, 0.0
  %vm4116 = vcmp.gt.f32.partialorder %v3957, 0.0
  %vm4117 = vcmp.gt.f32.partialorder %v3961, 0.0
  %vm4118 = vcmp.gt.f32.partialorder %v3963, 0.0
  %vm4119 = vcmp.gt.f32.partialorder %v3965, 0.0
  %vm4120 = vcmp.gt.f32.partialorder %v3967, 0.0
  %vm4121 = vcmp.gt.f32.partialorder %v3971, 0.0
  %vm4122 = vcmp.gt.f32.partialorder %v3973, 0.0
  %vm4123 = vcmp.gt.f32.partialorder %v3975, 0.0
  %vm4124 = vcmp.gt.f32.partialorder %v3977, 0.0
  %vm4125 = vcmp.gt.f32.partialorder %v3981, 0.0
  %vm4126 = vcmp.gt.f32.partialorder %v3983, 0.0
  %vm4127 = vcmp.gt.f32.partialorder %v3985, 0.0
  %vm4128 = vcmp.gt.f32.partialorder %v3987, 0.0
  %vm4129 = vcmp.gt.f32.partialorder %v3991, 0.0
  %vm4130 = vcmp.gt.f32.partialorder %v3993, 0.0
  %vm4131 = vcmp.gt.f32.partialorder %v3995, 0.0
  %vm4132 = vcmp.gt.f32.partialorder %v3997, 0.0
  %vm4133 = vcmp.gt.f32.partialorder %v4001, 0.0
  %vm4134 = vcmp.gt.f32.partialorder %v4003, 0.0
  %vm4135 = vcmp.gt.f32.partialorder %v4005, 0.0
  %vm4136 = vcmp.gt.f32.partialorder %v4007, 0.0
  %v4137 = vmin.f32 %v3691, 0.0
  %v4138 = vmin.f32 %v3693, 0.0
  %v4139 = vmin.f32 %v3695, 0.0
  %v4140 = vmin.f32 %v3697, 0.0
  %v4141 = vmin.f32 %v3701, 0.0
  %v4142 = vmin.f32 %v3703, 0.0
  %v4143 = vmin.f32 %v3705, 0.0
  %v4144 = vmin.f32 %v3707, 0.0
  %v4145 = vmin.f32 %v3711, 0.0
  %v4146 = vmin.f32 %v3713, 0.0
  %v4147 = vmin.f32 %v3715, 0.0
  %v4148 = vmin.f32 %v3717, 0.0
  %v4149 = vmin.f32 %v3721, 0.0
  %v4150 = vmin.f32 %v3723, 0.0
  %v4151 = vmin.f32 %v3725, 0.0
  %v4152 = vmin.f32 %v3727, 0.0
  %v4153 = vmin.f32 %v3731, 0.0
  %v4154 = vmin.f32 %v3733, 0.0
  %v4155 = vmin.f32 %v3735, 0.0
  %v4156 = vmin.f32 %v3737, 0.0
  %v4157 = vmin.f32 %v3741, 0.0
  %v4158 = vmin.f32 %v3743, 0.0
  %v4159 = vmin.f32 %v3745, 0.0
  %v4160 = vmin.f32 %v3747, 0.0
  %v4161 = vmin.f32 %v3751, 0.0
  %v4162 = vmin.f32 %v3753, 0.0
  %v4163 = vmin.f32 %v3755, 0.0
  %v4164 = vmin.f32 %v3757, 0.0
  %v4165 = vmin.f32 %v3761, 0.0
  %v4166 = vmin.f32 %v3763, 0.0
  %v4167 = vmin.f32 %v3765, 0.0
  %v4168 = vmin.f32 %v3767, 0.0
  %v4169 = vmin.f32 %v3771, 0.0
  %v4170 = vmin.f32 %v3773, 0.0
  %v4171 = vmin.f32 %v3775, 0.0
  %v4172 = vmin.f32 %v3777, 0.0
  %v4173 = vmin.f32 %v3781, 0.0
  %v4174 = vmin.f32 %v3783, 0.0
  %v4175 = vmin.f32 %v3785, 0.0
  %v4176 = vmin.f32 %v3787, 0.0
  %v4177 = vmin.f32 %v3791, 0.0
  %v4178 = vmin.f32 %v3793, 0.0
  %v4179 = vmin.f32 %v3795, 0.0
  %v4180 = vmin.f32 %v3797, 0.0
  %v4181 = vmin.f32 %v3801, 0.0
  %v4182 = vmin.f32 %v3803, 0.0
  %v4183 = vmin.f32 %v3805, 0.0
  %v4184 = vmin.f32 %v3807, 0.0
  %v4185 = vmin.f32 %v3811, 0.0
  %v4186 = vmin.f32 %v3813, 0.0
  %v4187 = vmin.f32 %v3815, 0.0
  %v4188 = vmin.f32 %v3817, 0.0
  %v4189 = vmin.f32 %v3821, 0.0
  %v4190 = vmin.f32 %v3823, 0.0
  %v4191 = vmin.f32 %v3825, 0.0
  %v4192 = vmin.f32 %v3827, 0.0
  %v4193 = vmin.f32 %v3831, 0.0
  %v4194 = vmin.f32 %v3833, 0.0
  %v4195 = vmin.f32 %v3835, 0.0
  %v4196 = vmin.f32 %v3837, 0.0
  %v4197 = vmin.f32 %v3841, 0.0
  %v4198 = vmin.f32 %v3843, 0.0
  %v4199 = vmin.f32 %v3845, 0.0
  %v4200 = vmin.f32 %v3847, 0.0
  %v4201 = vmin.f32 %v3851, 0.0
  %v4202 = vmin.f32 %v3853, 0.0
  %v4203 = vmin.f32 %v3855, 0.0
  %v4204 = vmin.f32 %v3857, 0.0
  %v4205 = vmin.f32 %v3861, 0.0
  %v4206 = vmin.f32 %v3863, 0.0
  %v4207 = vmin.f32 %v3865, 0.0
  %v4208 = vmin.f32 %v3867, 0.0
  %v4209 = vmin.f32 %v3871, 0.0
  %v4210 = vmin.f32 %v3873, 0.0
  %v4211 = vmin.f32 %v3875, 0.0
  %v4212 = vmin.f32 %v3877, 0.0
  %v4213 = vmin.f32 %v3881, 0.0
  %v4214 = vmin.f32 %v3883, 0.0
  %v4215 = vmin.f32 %v3885, 0.0
  %v4216 = vmin.f32 %v3887, 0.0
  %v4217 = vmin.f32 %v3891, 0.0
  %v4218 = vmin.f32 %v3893, 0.0
  %v4219 = vmin.f32 %v3895, 0.0
  %v4220 = vmin.f32 %v3897, 0.0
  %v4221 = vmin.f32 %v3901, 0.0
  %v4222 = vmin.f32 %v3903, 0.0
  %v4223 = vmin.f32 %v3905, 0.0
  %v4224 = vmin.f32 %v3907, 0.0
  %v4225 = vmin.f32 %v3911, 0.0
  %v4226 = vmin.f32 %v3913, 0.0
  %v4227 = vmin.f32 %v3915, 0.0
  %v4228 = vmin.f32 %v3917, 0.0
  %v4229 = vmin.f32 %v3921, 0.0
  %v4230 = vmin.f32 %v3923, 0.0
  %v4231 = vmin.f32 %v3925, 0.0
  %v4232 = vmin.f32 %v3927, 0.0
  %v4233 = vmin.f32 %v3931, 0.0
  %v4234 = vmin.f32 %v3933, 0.0
  %v4235 = vmin.f32 %v3935, 0.0
  %v4236 = vmin.f32 %v3937, 0.0
  %v4237 = vmin.f32 %v3941, 0.0
  %v4238 = vmin.f32 %v3943, 0.0
  %v4239 = vmin.f32 %v3945, 0.0
  %v4240 = vmin.f32 %v3947, 0.0
  %v4241 = vmin.f32 %v3951, 0.0
  %v4242 = vmin.f32 %v3953, 0.0
  %v4243 = vmin.f32 %v3955, 0.0
  %v4244 = vmin.f32 %v3957, 0.0
  %v4245 = vmin.f32 %v3961, 0.0
  %v4246 = vmin.f32 %v3963, 0.0
  %v4247 = vmin.f32 %v3965, 0.0
  %v4248 = vmin.f32 %v3967, 0.0
  %v4249 = vmin.f32 %v3971, 0.0
  %v4250 = vmin.f32 %v3973, 0.0
  %v4251 = vmin.f32 %v3975, 0.0
  %v4252 = vmin.f32 %v3977, 0.0
  %v4253 = vmin.f32 %v3981, 0.0
  %v4254 = vmin.f32 %v3983, 0.0
  %v4255 = vmin.f32 %v3985, 0.0
  %v4256 = vmin.f32 %v3987, 0.0
  %v4257 = vmin.f32 %v3991, 0.0
  %v4258 = vmin.f32 %v3993, 0.0
  %v4259 = vmin.f32 %v3995, 0.0
  %v4260 = vmin.f32 %v3997, 0.0
  %v4261 = vmin.f32 %v4001, 0.0
  %v4262 = vmin.f32 %v4003, 0.0
  %v4263 = vmin.f32 %v4005, 0.0
  %v4264 = vmin.f32 %v4007, 0.0
  %v4265 = vmul.f32 %v4137, 1.442695
  %v4266 = vpow.pop %v4265
  %v4267 = vmul.f32 %v4138, 1.442695
  %v4268 = vpow.pop %v4267
  %v4269 = vmul.f32 %v4139, 1.442695
  %v4270 = vpow.pop %v4269
  %v4271 = vmul.f32 %v4140, 1.442695
  %v4272 = vpow.pop %v4271
  %v4273 = vmul.f32 %v4141, 1.442695
  %v4274 = vpow.pop %v4273
  %v4275 = vmul.f32 %v4142, 1.442695
  %v4276 = vpow.pop %v4275
  %v4277 = vmul.f32 %v4143, 1.442695
  %v4278 = vpow.pop %v4277
  %v4279 = vmul.f32 %v4144, 1.442695
  %v4280 = vpow.pop %v4279
  %v4281 = vmul.f32 %v4145, 1.442695
  %v4282 = vpow.pop %v4281
  %v4283 = vmul.f32 %v4146, 1.442695
  %v4284 = vpow.pop %v4283
  %v4285 = vmul.f32 %v4147, 1.442695
  %v4286 = vpow.pop %v4285
  %v4287 = vmul.f32 %v4148, 1.442695
  %v4288 = vpow.pop %v4287
  %v4289 = vmul.f32 %v4149, 1.442695
  %v4290 = vpow.pop %v4289
  %v4291 = vmul.f32 %v4150, 1.442695
  %v4292 = vpow.pop %v4291
  %v4293 = vmul.f32 %v4151, 1.442695
  %v4294 = vpow.pop %v4293
  %v4295 = vmul.f32 %v4152, 1.442695
  %v4296 = vpow.pop %v4295
  %v4297 = vmul.f32 %v4153, 1.442695
  %v4298 = vpow.pop %v4297
  %v4299 = vmul.f32 %v4154, 1.442695
  %v4300 = vpow.pop %v4299
  %v4301 = vmul.f32 %v4155, 1.442695
  %v4302 = vpow.pop %v4301
  %v4303 = vmul.f32 %v4156, 1.442695
  %v4304 = vpow.pop %v4303
  %v4305 = vmul.f32 %v4157, 1.442695
  %v4306 = vpow.pop %v4305
  %v4307 = vmul.f32 %v4158, 1.442695
  %v4308 = vpow.pop %v4307
  %v4309 = vmul.f32 %v4159, 1.442695
  %v4310 = vpow.pop %v4309
  %v4311 = vmul.f32 %v4160, 1.442695
  %v4312 = vpow.pop %v4311
  %v4313 = vmul.f32 %v4161, 1.442695
  %v4314 = vpow.pop %v4313
  %v4315 = vmul.f32 %v4162, 1.442695
  %v4316 = vpow.pop %v4315
  %v4317 = vmul.f32 %v4163, 1.442695
  %v4318 = vpow.pop %v4317
  %v4319 = vmul.f32 %v4164, 1.442695
  %v4320 = vpow.pop %v4319
  %v4321 = vmul.f32 %v4165, 1.442695
  %v4322 = vpow.pop %v4321
  %v4323 = vmul.f32 %v4166, 1.442695
  %v4324 = vpow.pop %v4323
  %v4325 = vmul.f32 %v4167, 1.442695
  %v4326 = vpow.pop %v4325
  %v4327 = vmul.f32 %v4168, 1.442695
  %v4328 = vpow.pop %v4327
  %v4329 = vmul.f32 %v4169, 1.442695
  %v4330 = vpow.pop %v4329
  %v4331 = vmul.f32 %v4170, 1.442695
  %v4332 = vpow.pop %v4331
  %v4333 = vmul.f32 %v4171, 1.442695
  %v4334 = vpow.pop %v4333
  %v4335 = vmul.f32 %v4172, 1.442695
  %v4336 = vpow.pop %v4335
  %v4337 = vmul.f32 %v4173, 1.442695
  %v4338 = vpow.pop %v4337
  %v4339 = vmul.f32 %v4174, 1.442695
  %v4340 = vpow.pop %v4339
  %v4341 = vmul.f32 %v4175, 1.442695
  %v4342 = vpow.pop %v4341
  %v4343 = vmul.f32 %v4176, 1.442695
  %v4344 = vpow.pop %v4343
  %v4345 = vmul.f32 %v4177, 1.442695
  %v4346 = vpow.pop %v4345
  %v4347 = vmul.f32 %v4178, 1.442695
  %v4348 = vpow.pop %v4347
  %v4349 = vmul.f32 %v4179, 1.442695
  %v4350 = vpow.pop %v4349
  %v4351 = vmul.f32 %v4180, 1.442695
  %v4352 = vpow.pop %v4351
  %v4353 = vmul.f32 %v4181, 1.442695
  %v4354 = vpow.pop %v4353
  %v4355 = vmul.f32 %v4182, 1.442695
  %v4356 = vpow.pop %v4355
  %v4357 = vmul.f32 %v4183, 1.442695
  %v4358 = vpow.pop %v4357
  %v4359 = vmul.f32 %v4184, 1.442695
  %v4360 = vpow.pop %v4359
  %v4361 = vmul.f32 %v4185, 1.442695
  %v4362 = vpow.pop %v4361
  %v4363 = vmul.f32 %v4186, 1.442695
  %v4364 = vpow.pop %v4363
  %v4365 = vmul.f32 %v4187, 1.442695
  %v4366 = vpow.pop %v4365
  %v4367 = vmul.f32 %v4188, 1.442695
  %v4368 = vpow.pop %v4367
  %v4369 = vmul.f32 %v4189, 1.442695
  %v4370 = vpow.pop %v4369
  %v4371 = vmul.f32 %v4190, 1.442695
  %v4372 = vpow.pop %v4371
  %v4373 = vmul.f32 %v4191, 1.442695
  %v4374 = vpow.pop %v4373
  %v4375 = vmul.f32 %v4192, 1.442695
  %v4376 = vpow.pop %v4375
  %v4377 = vmul.f32 %v4193, 1.442695
  %v4378 = vpow.pop %v4377
  %v4379 = vmul.f32 %v4194, 1.442695
  %v4380 = vpow.pop %v4379
  %v4381 = vmul.f32 %v4195, 1.442695
  %v4382 = vpow.pop %v4381
  %v4383 = vmul.f32 %v4196, 1.442695
  %v4384 = vpow.pop %v4383
  %v4385 = vmul.f32 %v4197, 1.442695
  %v4386 = vpow.pop %v4385
  %v4387 = vmul.f32 %v4198, 1.442695
  %v4388 = vpow.pop %v4387
  %v4389 = vmul.f32 %v4199, 1.442695
  %v4390 = vpow.pop %v4389
  %v4391 = vmul.f32 %v4200, 1.442695
  %v4392 = vpow.pop %v4391
  %v4393 = vmul.f32 %v4201, 1.442695
  %v4394 = vpow.pop %v4393
  %v4395 = vmul.f32 %v4202, 1.442695
  %v4396 = vpow.pop %v4395
  %v4397 = vmul.f32 %v4203, 1.442695
  %v4398 = vpow.pop %v4397
  %v4399 = vmul.f32 %v4204, 1.442695
  %v4400 = vpow.pop %v4399
  %v4401 = vmul.f32 %v4205, 1.442695
  %v4402 = vpow.pop %v4401
  %v4403 = vmul.f32 %v4206, 1.442695
  %v4404 = vpow.pop %v4403
  %v4405 = vmul.f32 %v4207, 1.442695
  %v4406 = vpow.pop %v4405
  %v4407 = vmul.f32 %v4208, 1.442695
  %v4408 = vpow.pop %v4407
  %v4409 = vmul.f32 %v4209, 1.442695
  %v4410 = vpow.pop %v4409
  %v4411 = vmul.f32 %v4210, 1.442695
  %v4412 = vpow.pop %v4411
  %v4413 = vmul.f32 %v4211, 1.442695
  %v4414 = vpow.pop %v4413
  %v4415 = vmul.f32 %v4212, 1.442695
  %v4416 = vpow.pop %v4415
  %v4417 = vmul.f32 %v4213, 1.442695
  %v4418 = vpow.pop %v4417
  %v4419 = vmul.f32 %v4214, 1.442695
  %v4420 = vpow.pop %v4419
  %v4421 = vmul.f32 %v4215, 1.442695
  %v4422 = vpow.pop %v4421
  %v4423 = vmul.f32 %v4216, 1.442695
  %v4424 = vpow.pop %v4423
  %v4425 = vmul.f32 %v4217, 1.442695
  %v4426 = vpow.pop %v4425
  %v4427 = vmul.f32 %v4218, 1.442695
  %v4428 = vpow.pop %v4427
  %v4429 = vmul.f32 %v4219, 1.442695
  %v4430 = vpow.pop %v4429
  %v4431 = vmul.f32 %v4220, 1.442695
  %v4432 = vpow.pop %v4431
  %v4433 = vmul.f32 %v4221, 1.442695
  %v4434 = vpow.pop %v4433
  %v4435 = vmul.f32 %v4222, 1.442695
  %v4436 = vpow.pop %v4435
  %v4437 = vmul.f32 %v4223, 1.442695
  %v4438 = vpow.pop %v4437
  %v4439 = vmul.f32 %v4224, 1.442695
  %v4440 = vpow.pop %v4439
  %v4441 = vmul.f32 %v4225, 1.442695
  %v4442 = vpow.pop %v4441
  %v4443 = vmul.f32 %v4226, 1.442695
  %v4444 = vpow.pop %v4443
  %v4445 = vmul.f32 %v4227, 1.442695
  %v4446 = vpow.pop %v4445
  %v4447 = vmul.f32 %v4228, 1.442695
  %v4448 = vpow.pop %v4447
  %v4449 = vmul.f32 %v4229, 1.442695
  %v4450 = vpow.pop %v4449
  %v4451 = vmul.f32 %v4230, 1.442695
  %v4452 = vpow.pop %v4451
  %v4453 = vmul.f32 %v4231, 1.442695
  %v4454 = vpow.pop %v4453
  %v4455 = vmul.f32 %v4232, 1.442695
  %v4456 = vpow.pop %v4455
  %v4457 = vmul.f32 %v4233, 1.442695
  %v4458 = vpow.pop %v4457
  %v4459 = vmul.f32 %v4234, 1.442695
  %v4460 = vpow.pop %v4459
  %v4461 = vmul.f32 %v4235, 1.442695
  %v4462 = vpow.pop %v4461
  %v4463 = vmul.f32 %v4236, 1.442695
  %v4464 = vpow.pop %v4463
  %v4465 = vmul.f32 %v4237, 1.442695
  %v4466 = vpow.pop %v4465
  %v4467 = vmul.f32 %v4238, 1.442695
  %v4468 = vpow.pop %v4467
  %v4469 = vmul.f32 %v4239, 1.442695
  %v4470 = vpow.pop %v4469
  %v4471 = vmul.f32 %v4240, 1.442695
  %v4472 = vpow.pop %v4471
  %v4473 = vmul.f32 %v4241, 1.442695
  %v4474 = vpow.pop %v4473
  %v4475 = vmul.f32 %v4242, 1.442695
  %v4476 = vpow.pop %v4475
  %v4477 = vmul.f32 %v4243, 1.442695
  %v4478 = vpow.pop %v4477
  %v4479 = vmul.f32 %v4244, 1.442695
  %v4480 = vpow.pop %v4479
  %v4481 = vmul.f32 %v4245, 1.442695
  %v4482 = vpow.pop %v4481
  %v4483 = vmul.f32 %v4246, 1.442695
  %v4484 = vpow.pop %v4483
  %v4485 = vmul.f32 %v4247, 1.442695
  %v4486 = vpow.pop %v4485
  %v4487 = vmul.f32 %v4248, 1.442695
  %v4488 = vpow.pop %v4487
  %v4489 = vmul.f32 %v4249, 1.442695
  %v4490 = vpow.pop %v4489
  %v4491 = vmul.f32 %v4250, 1.442695
  %v4492 = vpow.pop %v4491
  %v4493 = vmul.f32 %v4251, 1.442695
  %v4494 = vpow.pop %v4493
  %v4495 = vmul.f32 %v4252, 1.442695
  %v4496 = vpow.pop %v4495
  %v4497 = vmul.f32 %v4253, 1.442695
  %v4498 = vpow.pop %v4497
  %v4499 = vmul.f32 %v4254, 1.442695
  %v4500 = vpow.pop %v4499
  %v4501 = vmul.f32 %v4255, 1.442695
  %v4502 = vpow.pop %v4501
  %v4503 = vmul.f32 %v4256, 1.442695
  %v4504 = vpow.pop %v4503
  %v4505 = vmul.f32 %v4257, 1.442695
  %v4506 = vpow.pop %v4505
  %v4507 = vmul.f32 %v4258, 1.442695
  %v4508 = vpow.pop %v4507
  %v4509 = vmul.f32 %v4259, 1.442695
  %v4510 = vpow.pop %v4509
  %v4511 = vmul.f32 %v4260, 1.442695
  %v4512 = vpow.pop %v4511
  %v4513 = vmul.f32 %v4261, 1.442695
  %v4514 = vpow.pop %v4513
  %v4515 = vmul.f32 %v4262, 1.442695
  %v4516 = vpow.pop %v4515
  %v4517 = vmul.f32 %v4263, 1.442695
  %v4518 = vpow.pop %v4517
  %v4519 = vmul.f32 %v4264, 1.442695
  %v4520 = vpow.pop %v4519
  %v4521 = vsub.f32 %v4266, 1.0
  %v4522 = vsub.f32 %v4268, 1.0
  %v4523 = vsub.f32 %v4270, 1.0
  %v4524 = vsub.f32 %v4272, 1.0
  %v4525 = vsub.f32 %v4274, 1.0
  %v4526 = vsub.f32 %v4276, 1.0
  %v4527 = vsub.f32 %v4278, 1.0
  %v4528 = vsub.f32 %v4280, 1.0
  %v4529 = vsub.f32 %v4282, 1.0
  %v4530 = vsub.f32 %v4284, 1.0
  %v4531 = vsub.f32 %v4286, 1.0
  %v4532 = vsub.f32 %v4288, 1.0
  %v4533 = vsub.f32 %v4290, 1.0
  %v4534 = vsub.f32 %v4292, 1.0
  %v4535 = vsub.f32 %v4294, 1.0
  %v4536 = vsub.f32 %v4296, 1.0
  %v4537 = vsub.f32 %v4298, 1.0
  %v4538 = vsub.f32 %v4300, 1.0
  %v4539 = vsub.f32 %v4302, 1.0
  %v4540 = vsub.f32 %v4304, 1.0
  %v4541 = vsub.f32 %v4306, 1.0
  %v4542 = vsub.f32 %v4308, 1.0
  %v4543 = vsub.f32 %v4310, 1.0
  %v4544 = vsub.f32 %v4312, 1.0
  %v4545 = vsub.f32 %v4314, 1.0
  %v4546 = vsub.f32 %v4316, 1.0
  %v4547 = vsub.f32 %v4318, 1.0
  %v4548 = vsub.f32 %v4320, 1.0
  %v4549 = vsub.f32 %v4322, 1.0
  %v4550 = vsub.f32 %v4324, 1.0
  %v4551 = vsub.f32 %v4326, 1.0
  %v4552 = vsub.f32 %v4328, 1.0
  %v4553 = vsub.f32 %v4330, 1.0
  %v4554 = vsub.f32 %v4332, 1.0
  %v4555 = vsub.f32 %v4334, 1.0
  %v4556 = vsub.f32 %v4336, 1.0
  %v4557 = vsub.f32 %v4338, 1.0
  %v4558 = vsub.f32 %v4340, 1.0
  %v4559 = vsub.f32 %v4342, 1.0
  %v4560 = vsub.f32 %v4344, 1.0
  %v4561 = vsub.f32 %v4346, 1.0
  %v4562 = vsub.f32 %v4348, 1.0
  %v4563 = vsub.f32 %v4350, 1.0
  %v4564 = vsub.f32 %v4352, 1.0
  %v4565 = vsub.f32 %v4354, 1.0
  %v4566 = vsub.f32 %v4356, 1.0
  %v4567 = vsub.f32 %v4358, 1.0
  %v4568 = vsub.f32 %v4360, 1.0
  %v4569 = vsub.f32 %v4362, 1.0
  %v4570 = vsub.f32 %v4364, 1.0
  %v4571 = vsub.f32 %v4366, 1.0
  %v4572 = vsub.f32 %v4368, 1.0
  %v4573 = vsub.f32 %v4370, 1.0
  %v4574 = vsub.f32 %v4372, 1.0
  %v4575 = vsub.f32 %v4374, 1.0
  %v4576 = vsub.f32 %v4376, 1.0
  %v4577 = vsub.f32 %v4378, 1.0
  %v4578 = vsub.f32 %v4380, 1.0
  %v4579 = vsub.f32 %v4382, 1.0
  %v4580 = vsub.f32 %v4384, 1.0
  %v4581 = vsub.f32 %v4386, 1.0
  %v4582 = vsub.f32 %v4388, 1.0
  %v4583 = vsub.f32 %v4390, 1.0
  %v4584 = vsub.f32 %v4392, 1.0
  %v4585 = vsub.f32 %v4394, 1.0
  %v4586 = vsub.f32 %v4396, 1.0
  %v4587 = vsub.f32 %v4398, 1.0
  %v4588 = vsub.f32 %v4400, 1.0
  %v4589 = vsub.f32 %v4402, 1.0
  %v4590 = vsub.f32 %v4404, 1.0
  %v4591 = vsub.f32 %v4406, 1.0
  %v4592 = vsub.f32 %v4408, 1.0
  %v4593 = vsub.f32 %v4410, 1.0
  %v4594 = vsub.f32 %v4412, 1.0
  %v4595 = vsub.f32 %v4414, 1.0
  %v4596 = vsub.f32 %v4416, 1.0
  %v4597 = vsub.f32 %v4418, 1.0
  %v4598 = vsub.f32 %v4420, 1.0
  %v4599 = vsub.f32 %v4422, 1.0
  %v4600 = vsub.f32 %v4424, 1.0
  %v4601 = vsub.f32 %v4426, 1.0
  %v4602 = vsub.f32 %v4428, 1.0
  %v4603 = vsub.f32 %v4430, 1.0
  %v4604 = vsub.f32 %v4432, 1.0
  %v4605 = vsub.f32 %v4434, 1.0
  %v4606 = vsub.f32 %v4436, 1.0
  %v4607 = vsub.f32 %v4438, 1.0
  %v4608 = vsub.f32 %v4440, 1.0
  %v4609 = vsub.f32 %v4442, 1.0
  %v4610 = vsub.f32 %v4444, 1.0
  %v4611 = vsub.f32 %v4446, 1.0
  %v4612 = vsub.f32 %v4448, 1.0
  %v4613 = vsub.f32 %v4450, 1.0
  %v4614 = vsub.f32 %v4452, 1.0
  %v4615 = vsub.f32 %v4454, 1.0
  %v4616 = vsub.f32 %v4456, 1.0
  %v4617 = vsub.f32 %v4458, 1.0
  %v4618 = vsub.f32 %v4460, 1.0
  %v4619 = vsub.f32 %v4462, 1.0
  %v4620 = vsub.f32 %v4464, 1.0
  %v4621 = vsub.f32 %v4466, 1.0
  %v4622 = vsub.f32 %v4468, 1.0
  %v4623 = vsub.f32 %v4470, 1.0
  %v4624 = vsub.f32 %v4472, 1.0
  %v4625 = vsub.f32 %v4474, 1.0
  %v4626 = vsub.f32 %v4476, 1.0
  %v4627 = vsub.f32 %v4478, 1.0
  %v4628 = vsub.f32 %v4480, 1.0
  %v4629 = vsub.f32 %v4482, 1.0
  %v4630 = vsub.f32 %v4484, 1.0
  %v4631 = vsub.f32 %v4486, 1.0
  %v4632 = vsub.f32 %v4488, 1.0
  %v4633 = vsub.f32 %v4490, 1.0
  %v4634 = vsub.f32 %v4492, 1.0
  %v4635 = vsub.f32 %v4494, 1.0
  %v4636 = vsub.f32 %v4496, 1.0
  %v4637 = vsub.f32 %v4498, 1.0
  %v4638 = vsub.f32 %v4500, 1.0
  %v4639 = vsub.f32 %v4502, 1.0
  %v4640 = vsub.f32 %v4504, 1.0
  %v4641 = vsub.f32 %v4506, 1.0
  %v4642 = vsub.f32 %v4508, 1.0
  %v4643 = vsub.f32 %v4510, 1.0
  %v4644 = vsub.f32 %v4512, 1.0
  %v4645 = vsub.f32 %v4514, 1.0
  %v4646 = vsub.f32 %v4516, 1.0
  %v4647 = vsub.f32 %v4518, 1.0
  %v4648 = vsub.f32 %v4520, 1.0
  %v4649 = vsel %vm4009, %v3691, %v4521
  %v4650 = vsel %vm4010, %v3693, %v4522
  %v4651 = vsel %vm4011, %v3695, %v4523
  %v4652 = vsel %vm4012, %v3697, %v4524
  %v4653 = vsel %vm4013, %v3701, %v4525
  %v4654 = vsel %vm4014, %v3703, %v4526
  %v4655 = vsel %vm4015, %v3705, %v4527
  %v4656 = vsel %vm4016, %v3707, %v4528
  %v4657 = vsel %vm4017, %v3711, %v4529
  %v4658 = vsel %vm4018, %v3713, %v4530
  %v4659 = vsel %vm4019, %v3715, %v4531
  %v4660 = vsel %vm4020, %v3717, %v4532
  %v4661 = vsel %vm4021, %v3721, %v4533
  %v4662 = vsel %vm4022, %v3723, %v4534
  %v4663 = vsel %vm4023, %v3725, %v4535
  %v4664 = vsel %vm4024, %v3727, %v4536
  %v4665 = vsel %vm4025, %v3731, %v4537
  %v4666 = vsel %vm4026, %v3733, %v4538
  %v4667 = vsel %vm4027, %v3735, %v4539
  %v4668 = vsel %vm4028, %v3737, %v4540
  %v4669 = vsel %vm4029, %v3741, %v4541
  %v4670 = vsel %vm4030, %v3743, %v4542
  %v4671 = vsel %vm4031, %v3745, %v4543
  %v4672 = vsel %vm4032, %v3747, %v4544
  %v4673 = vsel %vm4033, %v3751, %v4545
  %v4674 = vsel %vm4034, %v3753, %v4546
  %v4675 = vsel %vm4035, %v3755, %v4547
  %v4676 = vsel %vm4036, %v3757, %v4548
  %v4677 = vsel %vm4037, %v3761, %v4549
  %v4678 = vsel %vm4038, %v3763, %v4550
  %v4679 = vsel %vm4039, %v3765, %v4551
  %v4680 = vsel %vm4040, %v3767, %v4552
  %v4681 = vsel %vm4041, %v3771, %v4553
  %v4682 = vsel %vm4042, %v3773, %v4554
  %v4683 = vsel %vm4043, %v3775, %v4555
  %v4684 = vsel %vm4044, %v3777, %v4556
  %v4685 = vsel %vm4045, %v3781, %v4557
  %v4686 = vsel %vm4046, %v3783, %v4558
  %v4687 = vsel %vm4047, %v3785, %v4559
  %v4688 = vsel %vm4048, %v3787, %v4560
  %v4689 = vsel %vm4049, %v3791, %v4561
  %v4690 = vsel %vm4050, %v3793, %v4562
  %v4691 = vsel %vm4051, %v3795, %v4563
  %v4692 = vsel %vm4052, %v3797, %v4564
  %v4693 = vsel %vm4053, %v3801, %v4565
  %v4694 = vsel %vm4054, %v3803, %v4566
  %v4695 = vsel %vm4055, %v3805, %v4567
  %v4696 = vsel %vm4056, %v3807, %v4568
  %v4697 = vsel %vm4057, %v3811, %v4569
  %v4698 = vsel %vm4058, %v3813, %v4570
  %v4699 = vsel %vm4059, %v3815, %v4571
  %v4700 = vsel %vm4060, %v3817, %v4572
  %v4701 = vsel %vm4061, %v3821, %v4573
  %v4702 = vsel %vm4062, %v3823, %v4574
  %v4703 = vsel %vm4063, %v3825, %v4575
  %v4704 = vsel %vm4064, %v3827, %v4576
  %v4705 = vsel %vm4065, %v3831, %v4577
  %v4706 = vsel %vm4066, %v3833, %v4578
  %v4707 = vsel %vm4067, %v3835, %v4579
  %v4708 = vsel %vm4068, %v3837, %v4580
  %v4709 = vsel %vm4069, %v3841, %v4581
  %v4710 = vsel %vm4070, %v3843, %v4582
  %v4711 = vsel %vm4071, %v3845, %v4583
  %v4712 = vsel %vm4072, %v3847, %v4584
  %v4713 = vsel %vm4073, %v3851, %v4585
  %v4714 = vsel %vm4074, %v3853, %v4586
  %v4715 = vsel %vm4075, %v3855, %v4587
  %v4716 = vsel %vm4076, %v3857, %v4588
  %v4717 = vsel %vm4077, %v3861, %v4589
  %v4718 = vsel %vm4078, %v3863, %v4590
  %v4719 = vsel %vm4079, %v3865, %v4591
  %v4720 = vsel %vm4080, %v3867, %v4592
  %v4721 = vsel %vm4081, %v3871, %v4593
  %v4722 = vsel %vm4082, %v3873, %v4594
  %v4723 = vsel %vm4083, %v3875, %v4595
  %v4724 = vsel %vm4084, %v3877, %v4596
  %v4725 = vsel %vm4085, %v3881, %v4597
  %v4726 = vsel %vm4086, %v3883, %v4598
  %v4727 = vsel %vm4087, %v3885, %v4599
  %v4728 = vsel %vm4088, %v3887, %v4600
  %v4729 = vsel %vm4089, %v3891, %v4601
  %v4730 = vsel %vm4090, %v3893, %v4602
  %v4731 = vsel %vm4091, %v3895, %v4603
  %v4732 = vsel %vm4092, %v3897, %v4604
  %v4733 = vsel %vm4093, %v3901, %v4605
  %v4734 = vsel %vm4094, %v3903, %v4606
  %v4735 = vsel %vm4095, %v3905, %v4607
  %v4736 = vsel %vm4096, %v3907, %v4608
  %v4737 = vsel %vm4097, %v3911, %v4609
  %v4738 = vsel %vm4098, %v3913, %v4610
  %v4739 = vsel %vm4099, %v3915, %v4611
  %v4740 = vsel %vm4100, %v3917, %v4612
  %v4741 = vsel %vm4101, %v3921, %v4613
  %v4742 = vsel %vm4102, %v3923, %v4614
  %v4743 = vsel %vm4103, %v3925, %v4615
  %v4744 = vsel %vm4104, %v3927, %v4616
  %v4745 = vsel %vm4105, %v3931, %v4617
  %v4746 = vsel %vm4106, %v3933, %v4618
  %v4747 = vsel %vm4107, %v3935, %v4619
  %v4748 = vsel %vm4108, %v3937, %v4620
  %v4749 = vsel %vm4109, %v3941, %v4621
  %v4750 = vsel %vm4110, %v3943, %v4622
  %v4751 = vsel %vm4111, %v3945, %v4623
  %v4752 = vsel %vm4112, %v3947, %v4624
  %v4753 = vsel %vm4113, %v3951, %v4625
  %v4754 = vsel %vm4114, %v3953, %v4626
  %v4755 = vsel %vm4115, %v3955, %v4627
  %v4756 = vsel %vm4116, %v3957, %v4628
  %v4757 = vsel %vm4117, %v3961, %v4629
  %v4758 = vsel %vm4118, %v3963, %v4630
  %v4759 = vsel %vm4119, %v3965, %v4631
  %v4760 = vsel %vm4120, %v3967, %v4632
  %v4761 = vsel %vm4121, %v3971, %v4633
  %v4762 = vsel %vm4122, %v3973, %v4634
  %v4763 = vsel %vm4123, %v3975, %v4635
  %v4764 = vsel %vm4124, %v3977, %v4636
  %v4765 = vsel %vm4125, %v3981, %v4637
  %v4766 = vsel %vm4126, %v3983, %v4638
  %v4767 = vsel %vm4127, %v3985, %v4639
  %v4768 = vsel %vm4128, %v3987, %v4640
  %v4769 = vsel %vm4129, %v3991, %v4641
  %v4770 = vsel %vm4130, %v3993, %v4642
  %v4771 = vsel %vm4131, %v3995, %v4643
  %v4772 = vsel %vm4132, %v3997, %v4644
  %v4773 = vsel %vm4133, %v4001, %v4645
  %v4774 = vsel %vm4134, %v4003, %v4646
  %v4775 = vsel %vm4135, %v4005, %v4647
  %v4776 = vsel %vm4136, %v4007, %v4648
  %v4777 = vpack.c.bf16 %v4651, %v4649
  %v4778 = vpack.c.bf16 %v4652, %v4650
  %v4779 = vpack.c.bf16 %v4655, %v4653
  %v4780 = vpack.c.bf16 %v4656, %v4654
  %v4781 = vpack.c.bf16 %v4659, %v4657
  %v4782 = vpack.c.bf16 %v4660, %v4658
  %v4783 = vpack.c.bf16 %v4663, %v4661
  %v4784 = vpack.c.bf16 %v4664, %v4662
  %v4785 = vpack.c.bf16 %v4667, %v4665
  %v4786 = vpack.c.bf16 %v4668, %v4666
  %v4787 = vpack.c.bf16 %v4671, %v4669
  %v4788 = vpack.c.bf16 %v4672, %v4670
  %v4789 = vpack.c.bf16 %v4675, %v4673
  %v4790 = vpack.c.bf16 %v4676, %v4674
  %v4791 = vpack.c.bf16 %v4679, %v4677
  %v4792 = vpack.c.bf16 %v4680, %v4678
  %v4793 = vpack.c.bf16 %v4683, %v4681
  %v4794 = vpack.c.bf16 %v4684, %v4682
  %v4795 = vpack.c.bf16 %v4687, %v4685
  %v4796 = vpack.c.bf16 %v4688, %v4686
  %v4797 = vpack.c.bf16 %v4691, %v4689
  %v4798 = vpack.c.bf16 %v4692, %v4690
  %v4799 = vpack.c.bf16 %v4695, %v4693
  %v4800 = vpack.c.bf16 %v4696, %v4694
  %v4801 = vpack.c.bf16 %v4699, %v4697
  %v4802 = vpack.c.bf16 %v4700, %v4698
  %v4803 = vpack.c.bf16 %v4703, %v4701
  %v4804 = vpack.c.bf16 %v4704, %v4702
  %v4805 = vpack.c.bf16 %v4707, %v4705
  %v4806 = vpack.c.bf16 %v4708, %v4706
  %v4807 = vpack.c.bf16 %v4711, %v4709
  %v4808 = vpack.c.bf16 %v4712, %v4710
  %v4809 = vpack.c.bf16 %v4715, %v4713
  %v4810 = vpack.c.bf16 %v4716, %v4714
  %v4811 = vpack.c.bf16 %v4719, %v4717
  %v4812 = vpack.c.bf16 %v4720, %v4718
  %v4813 = vpack.c.bf16 %v4723, %v4721
  %v4814 = vpack.c.bf16 %v4724, %v4722
  %v4815 = vpack.c.bf16 %v4727, %v4725
  %v4816 = vpack.c.bf16 %v4728, %v4726
  %v4817 = vpack.c.bf16 %v4731, %v4729
  %v4818 = vpack.c.bf16 %v4732, %v4730
  %v4819 = vpack.c.bf16 %v4735, %v4733
  %v4820 = vpack.c.bf16 %v4736, %v4734
  %v4821 = vpack.c.bf16 %v4739, %v4737
  %v4822 = vpack.c.bf16 %v4740, %v4738
  %v4823 = vpack.c.bf16 %v4743, %v4741
  %v4824 = vpack.c.bf16 %v4744, %v4742
  %v4825 = vpack.c.bf16 %v4747, %v4745
  %v4826 = vpack.c.bf16 %v4748, %v4746
  %v4827 = vpack.c.bf16 %v4751, %v4749
  %v4828 = vpack.c.bf16 %v4752, %v4750
  %v4829 = vpack.c.bf16 %v4755, %v4753
  %v4830 = vpack.c.bf16 %v4756, %v4754
  %v4831 = vpack.c.bf16 %v4759, %v4757
  %v4832 = vpack.c.bf16 %v4760, %v4758
  %v4833 = vpack.c.bf16 %v4763, %v4761
  %v4834 = vpack.c.bf16 %v4764, %v4762
  %v4835 = vpack.c.bf16 %v4767, %v4765
  %v4836 = vpack.c.bf16 %v4768, %v4766
  %v4837 = vpack.c.bf16 %v4771, %v4769
  %v4838 = vpack.c.bf16 %v4772, %v4770
  %v4839 = vpack.c.bf16 %v4775, %v4773
  %v4840 = vpack.c.bf16 %v4776, %v4774
  %s4841 = scalar_lea.vmem %s3, 512
  %v4842 = vld [vmem:[%s4841] sm:$0xff]
  %v4843 = vld [vmem:[%s4841 + $0x8] sm:$0xff]
  %v4844 = vld [vmem:[%s4841 + $0x10] sm:$0xff]
  %v4845 = vld [vmem:[%s4841 + $0x18] sm:$0xff]
  %v4846 = vld [vmem:[%s4841 + $0x20] sm:$0xff]
  %v4847 = vld [vmem:[%s4841 + $0x28] sm:$0xff]
  %v4848 = vld [vmem:[%s4841 + $0x30] sm:$0xff]
  %v4849 = vld [vmem:[%s4841 + $0x38] sm:$0xff]
  %v4850 = vld [vmem:[%s4841 + $0x40] sm:$0xff]
  %v4851 = vld [vmem:[%s4841 + $0x48] sm:$0xff]
  %v4852 = vld [vmem:[%s4841 + $0x50] sm:$0xff]
  %v4853 = vld [vmem:[%s4841 + $0x58] sm:$0xff]
  %v4854 = vld [vmem:[%s4841 + $0x60] sm:$0xff]
  %v4855 = vld [vmem:[%s4841 + $0x68] sm:$0xff]
  %v4856 = vld [vmem:[%s4841 + $0x70] sm:$0xff]
  %v4857 = vld [vmem:[%s4841 + $0x78] sm:$0xff]
  %v4858 = vld [vmem:[%s4841 + $0x80] sm:$0xff]
  %v4859 = vld [vmem:[%s4841 + $0x88] sm:$0xff]
  %v4860 = vld [vmem:[%s4841 + $0x90] sm:$0xff]
  %v4861 = vld [vmem:[%s4841 + $0x98] sm:$0xff]
  %v4862 = vld [vmem:[%s4841 + $0xa0] sm:$0xff]
  %v4863 = vld [vmem:[%s4841 + $0xa8] sm:$0xff]
  %v4864 = vld [vmem:[%s4841 + $0xb0] sm:$0xff]
  %v4865 = vld [vmem:[%s4841 + $0xb8] sm:$0xff]
  %v4866 = vld [vmem:[%s4841 + $0xc0] sm:$0xff]
  %v4867 = vld [vmem:[%s4841 + $0xc8] sm:$0xff]
  %v4868 = vld [vmem:[%s4841 + $0xd0] sm:$0xff]
  %v4869 = vld [vmem:[%s4841 + $0xd8] sm:$0xff]
  %v4870 = vld [vmem:[%s4841 + $0xe0] sm:$0xff]
  %v4871 = vld [vmem:[%s4841 + $0xe8] sm:$0xff]
  %v4872 = vld [vmem:[%s4841 + $0xf0] sm:$0xff]
  %v4873 = vld [vmem:[%s4841 + $0xf8] sm:$0xff]
  %s4874 = scalar_lea.vmem %s4, 2
  %v4875 = vld [vmem:[%s4874] ss:$8 sm:$0x3]
  %v4877 = vlaneseq
  %v4878 = vshrl.u32 %v4877, 7
  %v4879 = vsub.s32 0, %v4878
  %v4880 = vrot.slane %v4875, %v4879
  %v4881 = vlaneseq
  %v4882 = vshrl.u32 %v4881, 7
  %v4883 = vsub.s32 1, %v4882
  %v4884 = vrot.slane %v4875, %v4883
  %v4919 = vunpack.c.l.b16 %v4842
  %v4920 = vunpack.c.h.b16 %v4842
  %v4921 = vunpack.c.l.b16 %v4843
  %v4922 = vunpack.c.h.b16 %v4843
  %v4923 = vunpack.c.l.b16 %v4844
  %v4924 = vunpack.c.h.b16 %v4844
  %v4925 = vunpack.c.l.b16 %v4845
  %v4926 = vunpack.c.h.b16 %v4845
  %v4927 = vunpack.c.l.b16 %v4846
  %v4928 = vunpack.c.h.b16 %v4846
  %v4929 = vunpack.c.l.b16 %v4847
  %v4930 = vunpack.c.h.b16 %v4847
  %v4931 = vunpack.c.l.b16 %v4848
  %v4932 = vunpack.c.h.b16 %v4848
  %v4933 = vunpack.c.l.b16 %v4849
  %v4934 = vunpack.c.h.b16 %v4849
  %v4935 = vunpack.c.l.b16 %v4850
  %v4936 = vunpack.c.h.b16 %v4850
  %v4937 = vunpack.c.l.b16 %v4851
  %v4938 = vunpack.c.h.b16 %v4851
  %v4939 = vunpack.c.l.b16 %v4852
  %v4940 = vunpack.c.h.b16 %v4852
  %v4941 = vunpack.c.l.b16 %v4853
  %v4942 = vunpack.c.h.b16 %v4853
  %v4943 = vunpack.c.l.b16 %v4854
  %v4944 = vunpack.c.h.b16 %v4854
  %v4945 = vunpack.c.l.b16 %v4855
  %v4946 = vunpack.c.h.b16 %v4855
  %v4947 = vunpack.c.l.b16 %v4856
  %v4948 = vunpack.c.h.b16 %v4856
  %v4949 = vunpack.c.l.b16 %v4857
  %v4950 = vunpack.c.h.b16 %v4857
  %v4951 = vunpack.c.l.b16 %v4858
  %v4952 = vunpack.c.h.b16 %v4858
  %v4953 = vunpack.c.l.b16 %v4859
  %v4954 = vunpack.c.h.b16 %v4859
  %v4955 = vunpack.c.l.b16 %v4860
  %v4956 = vunpack.c.h.b16 %v4860
  %v4957 = vunpack.c.l.b16 %v4861
  %v4958 = vunpack.c.h.b16 %v4861
  %v4959 = vunpack.c.l.b16 %v4862
  %v4960 = vunpack.c.h.b16 %v4862
  %v4961 = vunpack.c.l.b16 %v4863
  %v4962 = vunpack.c.h.b16 %v4863
  %v4963 = vunpack.c.l.b16 %v4864
  %v4964 = vunpack.c.h.b16 %v4864
  %v4965 = vunpack.c.l.b16 %v4865
  %v4966 = vunpack.c.h.b16 %v4865
  %v4967 = vunpack.c.l.b16 %v4866
  %v4968 = vunpack.c.h.b16 %v4866
  %v4969 = vunpack.c.l.b16 %v4867
  %v4970 = vunpack.c.h.b16 %v4867
  %v4971 = vunpack.c.l.b16 %v4868
  %v4972 = vunpack.c.h.b16 %v4868
  %v4973 = vunpack.c.l.b16 %v4869
  %v4974 = vunpack.c.h.b16 %v4869
  %v4975 = vunpack.c.l.b16 %v4870
  %v4976 = vunpack.c.h.b16 %v4870
  %v4977 = vunpack.c.l.b16 %v4871
  %v4978 = vunpack.c.h.b16 %v4871
  %v4979 = vunpack.c.l.b16 %v4872
  %v4980 = vunpack.c.h.b16 %v4872
  %v4981 = vunpack.c.l.b16 %v4873
  %v4982 = vunpack.c.h.b16 %v4873
  %v4983 = vpack.c.b16 %v4921, %v4919
  %v4984 = vpack.c.b16 %v4922, %v4920
  %v4985 = vpack.c.b16 %v4925, %v4923
  %v4986 = vpack.c.b16 %v4926, %v4924
  %v4987 = vpack.c.b16 %v4929, %v4927
  %v4988 = vpack.c.b16 %v4930, %v4928
  %v4989 = vpack.c.b16 %v4933, %v4931
  %v4990 = vpack.c.b16 %v4934, %v4932
  %v4991 = vpack.c.b16 %v4937, %v4935
  %v4992 = vpack.c.b16 %v4938, %v4936
  %v4993 = vpack.c.b16 %v4941, %v4939
  %v4994 = vpack.c.b16 %v4942, %v4940
  %v4995 = vpack.c.b16 %v4945, %v4943
  %v4996 = vpack.c.b16 %v4946, %v4944
  %v4997 = vpack.c.b16 %v4949, %v4947
  %v4998 = vpack.c.b16 %v4950, %v4948
  %v4999 = vpack.c.b16 %v4953, %v4951
  %v5000 = vpack.c.b16 %v4954, %v4952
  %v5001 = vpack.c.b16 %v4957, %v4955
  %v5002 = vpack.c.b16 %v4958, %v4956
  %v5003 = vpack.c.b16 %v4961, %v4959
  %v5004 = vpack.c.b16 %v4962, %v4960
  %v5005 = vpack.c.b16 %v4965, %v4963
  %v5006 = vpack.c.b16 %v4966, %v4964
  %v5007 = vpack.c.b16 %v4969, %v4967
  %v5008 = vpack.c.b16 %v4970, %v4968
  %v5009 = vpack.c.b16 %v4973, %v4971
  %v5010 = vpack.c.b16 %v4974, %v4972
  %v5011 = vpack.c.b16 %v4977, %v4975
  %v5012 = vpack.c.b16 %v4978, %v4976
  %v5013 = vpack.c.b16 %v4981, %v4979
  %v5014 = vpack.c.b16 %v4982, %v4980
  %5047 = vmatprep.subr.bf16.mxu0 %v4998
  %5048 = vmatpush1.bf16.msra.mxu0 %v4997
  %5049 = vmatprep.subr.bf16.mxu0 %v4996
  %5050 = vmatpush1.bf16.msra.mxu0 %v4995
  %5051 = vmatprep.subr.bf16.mxu0 %v4994
  %5052 = vmatpush1.bf16.msra.mxu0 %v4993
  %5053 = vmatprep.subr.bf16.mxu0 %v4992
  %5054 = vmatpush1.bf16.msra.mxu0 %v4991
  %5055 = vmatprep.subr.bf16.mxu0 %v4990
  %5056 = vmatpush1.bf16.msra.mxu0 %v4989
  %5057 = vmatprep.subr.bf16.mxu0 %v4988
  %5058 = vmatpush1.bf16.msra.mxu0 %v4987
  %5059 = vmatprep.subr.bf16.mxu0 %v4986
  %5060 = vmatpush1.bf16.msra.mxu0 %v4985
  %5061 = vmatprep.subr.bf16.mxu0 %v4984
  %5062 = vmatpush1.bf16.msra.mxu0 %v4983
  %5063 = vmatprep.subr.bf16.mxu0 %v5014
  %5064 = vmatpush2.bf16.msra.mxu0 %v5013
  %5065 = vmatprep.subr.bf16.mxu0 %v5012
  %5066 = vmatpush2.bf16.msra.mxu0 %v5011
  %5067 = vmatprep.subr.bf16.mxu0 %v5010
  %5068 = vmatpush2.bf16.msra.mxu0 %v5009
  %5069 = vmatprep.subr.bf16.mxu0 %v5008
  %5070 = vmatpush2.bf16.msra.mxu0 %v5007
  %5071 = vmatprep.subr.bf16.mxu0 %v5006
  %5072 = vmatpush2.bf16.msra.mxu0 %v5005
  %5073 = vmatprep.subr.bf16.mxu0 %v5004
  %5074 = vmatpush2.bf16.msra.mxu0 %v5003
  %5075 = vmatprep.subr.bf16.mxu0 %v5002
  %5076 = vmatpush2.bf16.msra.mxu0 %v5001
  %5077 = vmatprep.subr.bf16.mxu0 %v5000
  %5078 = vmatpush2.bf16.msra.mxu0 %v4999
  %5079 = vmatprep.mubr.bf16.mxu0 %v4778
  %5080 = vmatmul.mubr.bf16.gmra.mxu0 %v4777
  %v5081 = vpop.f32.mrf.mxu0
  %v5082 = vadd.f32 %v4880, %v5081
  %v5083 = vpop.f32.mrf.mxu0
  %v5084 = vadd.f32 %v4884, %v5083
  %v5085 = vpop.f32.mrf.mxu0
  %v5086 = vadd.f32 %v4880, %v5085
  %v5087 = vpop.f32.mrf.mxu0
  %v5088 = vadd.f32 %v4884, %v5087
  %5089 = vmatprep.mubr.bf16.mxu0 %v4780
  %5090 = vmatmul.mubr.bf16.gmra.mxu0 %v4779
  %v5091 = vpop.f32.mrf.mxu0
  %v5092 = vadd.f32 %v4880, %v5091
  %v5093 = vpop.f32.mrf.mxu0
  %v5094 = vadd.f32 %v4884, %v5093
  %v5095 = vpop.f32.mrf.mxu0
  %v5096 = vadd.f32 %v4880, %v5095
  %v5097 = vpop.f32.mrf.mxu0
  %v5098 = vadd.f32 %v4884, %v5097
  %5099 = vmatprep.mubr.bf16.mxu0 %v4782
  %5100 = vmatmul.mubr.bf16.gmra.mxu0 %v4781
  %v5101 = vpop.f32.mrf.mxu0
  %v5102 = vadd.f32 %v4880, %v5101
  %v5103 = vpop.f32.mrf.mxu0
  %v5104 = vadd.f32 %v4884, %v5103
  %v5105 = vpop.f32.mrf.mxu0
  %v5106 = vadd.f32 %v4880, %v5105
  %v5107 = vpop.f32.mrf.mxu0
  %v5108 = vadd.f32 %v4884, %v5107
  %5109 = vmatprep.mubr.bf16.mxu0 %v4784
  %5110 = vmatmul.mubr.bf16.gmra.mxu0 %v4783
  %v5111 = vpop.f32.mrf.mxu0
  %v5112 = vadd.f32 %v4880, %v5111
  %v5113 = vpop.f32.mrf.mxu0
  %v5114 = vadd.f32 %v4884, %v5113
  %v5115 = vpop.f32.mrf.mxu0
  %v5116 = vadd.f32 %v4880, %v5115
  %v5117 = vpop.f32.mrf.mxu0
  %v5118 = vadd.f32 %v4884, %v5117
  %5119 = vmatprep.mubr.bf16.mxu0 %v4786
  %5120 = vmatmul.mubr.bf16.gmra.mxu0 %v4785
  %v5121 = vpop.f32.mrf.mxu0
  %v5122 = vadd.f32 %v4880, %v5121
  %v5123 = vpop.f32.mrf.mxu0
  %v5124 = vadd.f32 %v4884, %v5123
  %v5125 = vpop.f32.mrf.mxu0
  %v5126 = vadd.f32 %v4880, %v5125
  %v5127 = vpop.f32.mrf.mxu0
  %v5128 = vadd.f32 %v4884, %v5127
  %5129 = vmatprep.mubr.bf16.mxu0 %v4788
  %5130 = vmatmul.mubr.bf16.gmra.mxu0 %v4787
  %v5131 = vpop.f32.mrf.mxu0
  %v5132 = vadd.f32 %v4880, %v5131
  %v5133 = vpop.f32.mrf.mxu0
  %v5134 = vadd.f32 %v4884, %v5133
  %v5135 = vpop.f32.mrf.mxu0
  %v5136 = vadd.f32 %v4880, %v5135
  %v5137 = vpop.f32.mrf.mxu0
  %v5138 = vadd.f32 %v4884, %v5137
  %5139 = vmatprep.mubr.bf16.mxu0 %v4790
  %5140 = vmatmul.mubr.bf16.gmra.mxu0 %v4789
  %v5141 = vpop.f32.mrf.mxu0
  %v5142 = vadd.f32 %v4880, %v5141
  %v5143 = vpop.f32.mrf.mxu0
  %v5144 = vadd.f32 %v4884, %v5143
  %v5145 = vpop.f32.mrf.mxu0
  %v5146 = vadd.f32 %v4880, %v5145
  %v5147 = vpop.f32.mrf.mxu0
  %v5148 = vadd.f32 %v4884, %v5147
  %5149 = vmatprep.mubr.bf16.mxu0 %v4792
  %5150 = vmatmul.mubr.bf16.gmra.mxu0 %v4791
  %v5151 = vpop.f32.mrf.mxu0
  %v5152 = vadd.f32 %v4880, %v5151
  %v5153 = vpop.f32.mrf.mxu0
  %v5154 = vadd.f32 %v4884, %v5153
  %v5155 = vpop.f32.mrf.mxu0
  %v5156 = vadd.f32 %v4880, %v5155
  %v5157 = vpop.f32.mrf.mxu0
  %v5158 = vadd.f32 %v4884, %v5157
  %5159 = vmatprep.mubr.bf16.mxu0 %v4794
  %5160 = vmatmul.mubr.bf16.gmra.mxu0 %v4793
  %v5161 = vpop.f32.mrf.mxu0
  %v5162 = vadd.f32 %v4880, %v5161
  %v5163 = vpop.f32.mrf.mxu0
  %v5164 = vadd.f32 %v4884, %v5163
  %v5165 = vpop.f32.mrf.mxu0
  %v5166 = vadd.f32 %v4880, %v5165
  %v5167 = vpop.f32.mrf.mxu0
  %v5168 = vadd.f32 %v4884, %v5167
  %5169 = vmatprep.mubr.bf16.mxu0 %v4796
  %5170 = vmatmul.mubr.bf16.gmra.mxu0 %v4795
  %v5171 = vpop.f32.mrf.mxu0
  %v5172 = vadd.f32 %v4880, %v5171
  %v5173 = vpop.f32.mrf.mxu0
  %v5174 = vadd.f32 %v4884, %v5173
  %v5175 = vpop.f32.mrf.mxu0
  %v5176 = vadd.f32 %v4880, %v5175
  %v5177 = vpop.f32.mrf.mxu0
  %v5178 = vadd.f32 %v4884, %v5177
  %5179 = vmatprep.mubr.bf16.mxu0 %v4798
  %5180 = vmatmul.mubr.bf16.gmra.mxu0 %v4797
  %v5181 = vpop.f32.mrf.mxu0
  %v5182 = vadd.f32 %v4880, %v5181
  %v5183 = vpop.f32.mrf.mxu0
  %v5184 = vadd.f32 %v4884, %v5183
  %v5185 = vpop.f32.mrf.mxu0
  %v5186 = vadd.f32 %v4880, %v5185
  %v5187 = vpop.f32.mrf.mxu0
  %v5188 = vadd.f32 %v4884, %v5187
  %5189 = vmatprep.mubr.bf16.mxu0 %v4800
  %5190 = vmatmul.mubr.bf16.gmra.mxu0 %v4799
  %v5191 = vpop.f32.mrf.mxu0
  %v5192 = vadd.f32 %v4880, %v5191
  %v5193 = vpop.f32.mrf.mxu0
  %v5194 = vadd.f32 %v4884, %v5193
  %v5195 = vpop.f32.mrf.mxu0
  %v5196 = vadd.f32 %v4880, %v5195
  %v5197 = vpop.f32.mrf.mxu0
  %v5198 = vadd.f32 %v4884, %v5197
  %5199 = vmatprep.mubr.bf16.mxu0 %v4802
  %5200 = vmatmul.mubr.bf16.gmra.mxu0 %v4801
  %v5201 = vpop.f32.mrf.mxu0
  %v5202 = vadd.f32 %v4880, %v5201
  %v5203 = vpop.f32.mrf.mxu0
  %v5204 = vadd.f32 %v4884, %v5203
  %v5205 = vpop.f32.mrf.mxu0
  %v5206 = vadd.f32 %v4880, %v5205
  %v5207 = vpop.f32.mrf.mxu0
  %v5208 = vadd.f32 %v4884, %v5207
  %5209 = vmatprep.mubr.bf16.mxu0 %v4804
  %5210 = vmatmul.mubr.bf16.gmra.mxu0 %v4803
  %v5211 = vpop.f32.mrf.mxu0
  %v5212 = vadd.f32 %v4880, %v5211
  %v5213 = vpop.f32.mrf.mxu0
  %v5214 = vadd.f32 %v4884, %v5213
  %v5215 = vpop.f32.mrf.mxu0
  %v5216 = vadd.f32 %v4880, %v5215
  %v5217 = vpop.f32.mrf.mxu0
  %v5218 = vadd.f32 %v4884, %v5217
  %5219 = vmatprep.mubr.bf16.mxu0 %v4806
  %5220 = vmatmul.mubr.bf16.gmra.mxu0 %v4805
  %v5221 = vpop.f32.mrf.mxu0
  %v5222 = vadd.f32 %v4880, %v5221
  %v5223 = vpop.f32.mrf.mxu0
  %v5224 = vadd.f32 %v4884, %v5223
  %v5225 = vpop.f32.mrf.mxu0
  %v5226 = vadd.f32 %v4880, %v5225
  %v5227 = vpop.f32.mrf.mxu0
  %v5228 = vadd.f32 %v4884, %v5227
  %5229 = vmatprep.mubr.bf16.mxu0 %v4808
  %5230 = vmatmul.mubr.bf16.gmra.mxu0 %v4807
  %v5231 = vpop.f32.mrf.mxu0
  %v5232 = vadd.f32 %v4880, %v5231
  %v5233 = vpop.f32.mrf.mxu0
  %v5234 = vadd.f32 %v4884, %v5233
  %v5235 = vpop.f32.mrf.mxu0
  %v5236 = vadd.f32 %v4880, %v5235
  %v5237 = vpop.f32.mrf.mxu0
  %v5238 = vadd.f32 %v4884, %v5237
  %5239 = vmatprep.mubr.bf16.mxu0 %v4810
  %5240 = vmatmul.mubr.bf16.gmra.mxu0 %v4809
  %v5241 = vpop.f32.mrf.mxu0
  %v5242 = vadd.f32 %v4880, %v5241
  %v5243 = vpop.f32.mrf.mxu0
  %v5244 = vadd.f32 %v4884, %v5243
  %v5245 = vpop.f32.mrf.mxu0
  %v5246 = vadd.f32 %v4880, %v5245
  %v5247 = vpop.f32.mrf.mxu0
  %v5248 = vadd.f32 %v4884, %v5247
  %5249 = vmatprep.mubr.bf16.mxu0 %v4812
  %5250 = vmatmul.mubr.bf16.gmra.mxu0 %v4811
  %v5251 = vpop.f32.mrf.mxu0
  %v5252 = vadd.f32 %v4880, %v5251
  %v5253 = vpop.f32.mrf.mxu0
  %v5254 = vadd.f32 %v4884, %v5253
  %v5255 = vpop.f32.mrf.mxu0
  %v5256 = vadd.f32 %v4880, %v5255
  %v5257 = vpop.f32.mrf.mxu0
  %v5258 = vadd.f32 %v4884, %v5257
  %5259 = vmatprep.mubr.bf16.mxu0 %v4814
  %5260 = vmatmul.mubr.bf16.gmra.mxu0 %v4813
  %v5261 = vpop.f32.mrf.mxu0
  %v5262 = vadd.f32 %v4880, %v5261
  %v5263 = vpop.f32.mrf.mxu0
  %v5264 = vadd.f32 %v4884, %v5263
  %v5265 = vpop.f32.mrf.mxu0
  %v5266 = vadd.f32 %v4880, %v5265
  %v5267 = vpop.f32.mrf.mxu0
  %v5268 = vadd.f32 %v4884, %v5267
  %5269 = vmatprep.mubr.bf16.mxu0 %v4816
  %5270 = vmatmul.mubr.bf16.gmra.mxu0 %v4815
  %v5271 = vpop.f32.mrf.mxu0
  %v5272 = vadd.f32 %v4880, %v5271
  %v5273 = vpop.f32.mrf.mxu0
  %v5274 = vadd.f32 %v4884, %v5273
  %v5275 = vpop.f32.mrf.mxu0
  %v5276 = vadd.f32 %v4880, %v5275
  %v5277 = vpop.f32.mrf.mxu0
  %v5278 = vadd.f32 %v4884, %v5277
  %5279 = vmatprep.mubr.bf16.mxu0 %v4818
  %5280 = vmatmul.mubr.bf16.gmra.mxu0 %v4817
  %v5281 = vpop.f32.mrf.mxu0
  %v5282 = vadd.f32 %v4880, %v5281
  %v5283 = vpop.f32.mrf.mxu0
  %v5284 = vadd.f32 %v4884, %v5283
  %v5285 = vpop.f32.mrf.mxu0
  %v5286 = vadd.f32 %v4880, %v5285
  %v5287 = vpop.f32.mrf.mxu0
  %v5288 = vadd.f32 %v4884, %v5287
  %5289 = vmatprep.mubr.bf16.mxu0 %v4820
  %5290 = vmatmul.mubr.bf16.gmra.mxu0 %v4819
  %v5291 = vpop.f32.mrf.mxu0
  %v5292 = vadd.f32 %v4880, %v5291
  %v5293 = vpop.f32.mrf.mxu0
  %v5294 = vadd.f32 %v4884, %v5293
  %v5295 = vpop.f32.mrf.mxu0
  %v5296 = vadd.f32 %v4880, %v5295
  %v5297 = vpop.f32.mrf.mxu0
  %v5298 = vadd.f32 %v4884, %v5297
  %5299 = vmatprep.mubr.bf16.mxu0 %v4822
  %5300 = vmatmul.mubr.bf16.gmra.mxu0 %v4821
  %v5301 = vpop.f32.mrf.mxu0
  %v5302 = vadd.f32 %v4880, %v5301
  %v5303 = vpop.f32.mrf.mxu0
  %v5304 = vadd.f32 %v4884, %v5303
  %v5305 = vpop.f32.mrf.mxu0
  %v5306 = vadd.f32 %v4880, %v5305
  %v5307 = vpop.f32.mrf.mxu0
  %v5308 = vadd.f32 %v4884, %v5307
  %5309 = vmatprep.mubr.bf16.mxu0 %v4824
  %5310 = vmatmul.mubr.bf16.gmra.mxu0 %v4823
  %v5311 = vpop.f32.mrf.mxu0
  %v5312 = vadd.f32 %v4880, %v5311
  %v5313 = vpop.f32.mrf.mxu0
  %v5314 = vadd.f32 %v4884, %v5313
  %v5315 = vpop.f32.mrf.mxu0
  %v5316 = vadd.f32 %v4880, %v5315
  %v5317 = vpop.f32.mrf.mxu0
  %v5318 = vadd.f32 %v4884, %v5317
  %5319 = vmatprep.mubr.bf16.mxu0 %v4826
  %5320 = vmatmul.mubr.bf16.gmra.mxu0 %v4825
  %v5321 = vpop.f32.mrf.mxu0
  %v5322 = vadd.f32 %v4880, %v5321
  %v5323 = vpop.f32.mrf.mxu0
  %v5324 = vadd.f32 %v4884, %v5323
  %v5325 = vpop.f32.mrf.mxu0
  %v5326 = vadd.f32 %v4880, %v5325
  %v5327 = vpop.f32.mrf.mxu0
  %v5328 = vadd.f32 %v4884, %v5327
  %5329 = vmatprep.mubr.bf16.mxu0 %v4828
  %5330 = vmatmul.mubr.bf16.gmra.mxu0 %v4827
  %v5331 = vpop.f32.mrf.mxu0
  %v5332 = vadd.f32 %v4880, %v5331
  %v5333 = vpop.f32.mrf.mxu0
  %v5334 = vadd.f32 %v4884, %v5333
  %v5335 = vpop.f32.mrf.mxu0
  %v5336 = vadd.f32 %v4880, %v5335
  %v5337 = vpop.f32.mrf.mxu0
  %v5338 = vadd.f32 %v4884, %v5337
  %5339 = vmatprep.mubr.bf16.mxu0 %v4830
  %5340 = vmatmul.mubr.bf16.gmra.mxu0 %v4829
  %v5341 = vpop.f32.mrf.mxu0
  %v5342 = vadd.f32 %v4880, %v5341
  %v5343 = vpop.f32.mrf.mxu0
  %v5344 = vadd.f32 %v4884, %v5343
  %v5345 = vpop.f32.mrf.mxu0
  %v5346 = vadd.f32 %v4880, %v5345
  %v5347 = vpop.f32.mrf.mxu0
  %v5348 = vadd.f32 %v4884, %v5347
  %5349 = vmatprep.mubr.bf16.mxu0 %v4832
  %5350 = vmatmul.mubr.bf16.gmra.mxu0 %v4831
  %v5351 = vpop.f32.mrf.mxu0
  %v5352 = vadd.f32 %v4880, %v5351
  %v5353 = vpop.f32.mrf.mxu0
  %v5354 = vadd.f32 %v4884, %v5353
  %v5355 = vpop.f32.mrf.mxu0
  %v5356 = vadd.f32 %v4880, %v5355
  %v5357 = vpop.f32.mrf.mxu0
  %v5358 = vadd.f32 %v4884, %v5357
  %5359 = vmatprep.mubr.bf16.mxu0 %v4834
  %5360 = vmatmul.mubr.bf16.gmra.mxu0 %v4833
  %v5361 = vpop.f32.mrf.mxu0
  %v5362 = vadd.f32 %v4880, %v5361
  %v5363 = vpop.f32.mrf.mxu0
  %v5364 = vadd.f32 %v4884, %v5363
  %v5365 = vpop.f32.mrf.mxu0
  %v5366 = vadd.f32 %v4880, %v5365
  %v5367 = vpop.f32.mrf.mxu0
  %v5368 = vadd.f32 %v4884, %v5367
  %5369 = vmatprep.mubr.bf16.mxu0 %v4836
  %5370 = vmatmul.mubr.bf16.gmra.mxu0 %v4835
  %v5371 = vpop.f32.mrf.mxu0
  %v5372 = vadd.f32 %v4880, %v5371
  %v5373 = vpop.f32.mrf.mxu0
  %v5374 = vadd.f32 %v4884, %v5373
  %v5375 = vpop.f32.mrf.mxu0
  %v5376 = vadd.f32 %v4880, %v5375
  %v5377 = vpop.f32.mrf.mxu0
  %v5378 = vadd.f32 %v4884, %v5377
  %5379 = vmatprep.mubr.bf16.mxu0 %v4838
  %5380 = vmatmul.mubr.bf16.gmra.mxu0 %v4837
  %v5381 = vpop.f32.mrf.mxu0
  %v5382 = vadd.f32 %v4880, %v5381
  %v5383 = vpop.f32.mrf.mxu0
  %v5384 = vadd.f32 %v4884, %v5383
  %v5385 = vpop.f32.mrf.mxu0
  %v5386 = vadd.f32 %v4880, %v5385
  %v5387 = vpop.f32.mrf.mxu0
  %v5388 = vadd.f32 %v4884, %v5387
  %5389 = vmatprep.mubr.bf16.mxu0 %v4840
  %5390 = vmatmul.mubr.bf16.gmra.mxu0 %v4839
  %v5391 = vpop.f32.mrf.mxu0
  %v5392 = vadd.f32 %v4880, %v5391
  %v5393 = vpop.f32.mrf.mxu0
  %v5394 = vadd.f32 %v4884, %v5393
  %v5395 = vpop.f32.mrf.mxu0
  %v5396 = vadd.f32 %v4880, %v5395
  %v5397 = vpop.f32.mrf.mxu0
  %v5398 = vadd.f32 %v4884, %v5397
  %5399 = vdwg.mxu0
  %vm5400 = vcmp.gt.f32.partialorder %v5082, 0.0
  %vm5401 = vcmp.gt.f32.partialorder %v5084, 0.0
  %vm5402 = vcmp.gt.f32.partialorder %v5086, 0.0
  %vm5403 = vcmp.gt.f32.partialorder %v5088, 0.0
  %vm5404 = vcmp.gt.f32.partialorder %v5092, 0.0
  %vm5405 = vcmp.gt.f32.partialorder %v5094, 0.0
  %vm5406 = vcmp.gt.f32.partialorder %v5096, 0.0
  %vm5407 = vcmp.gt.f32.partialorder %v5098, 0.0
  %vm5408 = vcmp.gt.f32.partialorder %v5102, 0.0
  %vm5409 = vcmp.gt.f32.partialorder %v5104, 0.0
  %vm5410 = vcmp.gt.f32.partialorder %v5106, 0.0
  %vm5411 = vcmp.gt.f32.partialorder %v5108, 0.0
  %vm5412 = vcmp.gt.f32.partialorder %v5112, 0.0
  %vm5413 = vcmp.gt.f32.partialorder %v5114, 0.0
  %vm5414 = vcmp.gt.f32.partialorder %v5116, 0.0
  %vm5415 = vcmp.gt.f32.partialorder %v5118, 0.0
  %vm5416 = vcmp.gt.f32.partialorder %v5122, 0.0
  %vm5417 = vcmp.gt.f32.partialorder %v5124, 0.0
  %vm5418 = vcmp.gt.f32.partialorder %v5126, 0.0
  %vm5419 = vcmp.gt.f32.partialorder %v5128, 0.0
  %vm5420 = vcmp.gt.f32.partialorder %v5132, 0.0
  %vm5421 = vcmp.gt.f32.partialorder %v5134, 0.0
  %vm5422 = vcmp.gt.f32.partialorder %v5136, 0.0
  %vm5423 = vcmp.gt.f32.partialorder %v5138, 0.0
  %vm5424 = vcmp.gt.f32.partialorder %v5142, 0.0
  %vm5425 = vcmp.gt.f32.partialorder %v5144, 0.0
  %vm5426 = vcmp.gt.f32.partialorder %v5146, 0.0
  %vm5427 = vcmp.gt.f32.partialorder %v5148, 0.0
  %vm5428 = vcmp.gt.f32.partialorder %v5152, 0.0
  %vm5429 = vcmp.gt.f32.partialorder %v5154, 0.0
  %vm5430 = vcmp.gt.f32.partialorder %v5156, 0.0
  %vm5431 = vcmp.gt.f32.partialorder %v5158, 0.0
  %vm5432 = vcmp.gt.f32.partialorder %v5162, 0.0
  %vm5433 = vcmp.gt.f32.partialorder %v5164, 0.0
  %vm5434 = vcmp.gt.f32.partialorder %v5166, 0.0
  %vm5435 = vcmp.gt.f32.partialorder %v5168, 0.0
  %vm5436 = vcmp.gt.f32.partialorder %v5172, 0.0
  %vm5437 = vcmp.gt.f32.partialorder %v5174, 0.0
  %vm5438 = vcmp.gt.f32.partialorder %v5176, 0.0
  %vm5439 = vcmp.gt.f32.partialorder %v5178, 0.0
  %vm5440 = vcmp.gt.f32.partialorder %v5182, 0.0
  %vm5441 = vcmp.gt.f32.partialorder %v5184, 0.0
  %vm5442 = vcmp.gt.f32.partialorder %v5186, 0.0
  %vm5443 = vcmp.gt.f32.partialorder %v5188, 0.0
  %vm5444 = vcmp.gt.f32.partialorder %v5192, 0.0
  %vm5445 = vcmp.gt.f32.partialorder %v5194, 0.0
  %vm5446 = vcmp.gt.f32.partialorder %v5196, 0.0
  %vm5447 = vcmp.gt.f32.partialorder %v5198, 0.0
  %vm5448 = vcmp.gt.f32.partialorder %v5202, 0.0
  %vm5449 = vcmp.gt.f32.partialorder %v5204, 0.0
  %vm5450 = vcmp.gt.f32.partialorder %v5206, 0.0
  %vm5451 = vcmp.gt.f32.partialorder %v5208, 0.0
  %vm5452 = vcmp.gt.f32.partialorder %v5212, 0.0
  %vm5453 = vcmp.gt.f32.partialorder %v5214, 0.0
  %vm5454 = vcmp.gt.f32.partialorder %v5216, 0.0
  %vm5455 = vcmp.gt.f32.partialorder %v5218, 0.0
  %vm5456 = vcmp.gt.f32.partialorder %v5222, 0.0
  %vm5457 = vcmp.gt.f32.partialorder %v5224, 0.0
  %vm5458 = vcmp.gt.f32.partialorder %v5226, 0.0
  %vm5459 = vcmp.gt.f32.partialorder %v5228, 0.0
  %vm5460 = vcmp.gt.f32.partialorder %v5232, 0.0
  %vm5461 = vcmp.gt.f32.partialorder %v5234, 0.0
  %vm5462 = vcmp.gt.f32.partialorder %v5236, 0.0
  %vm5463 = vcmp.gt.f32.partialorder %v5238, 0.0
  %vm5464 = vcmp.gt.f32.partialorder %v5242, 0.0
  %vm5465 = vcmp.gt.f32.partialorder %v5244, 0.0
  %vm5466 = vcmp.gt.f32.partialorder %v5246, 0.0
  %vm5467 = vcmp.gt.f32.partialorder %v5248, 0.0
  %vm5468 = vcmp.gt.f32.partialorder %v5252, 0.0
  %vm5469 = vcmp.gt.f32.partialorder %v5254, 0.0
  %vm5470 = vcmp.gt.f32.partialorder %v5256, 0.0
  %vm5471 = vcmp.gt.f32.partialorder %v5258, 0.0
  %vm5472 = vcmp.gt.f32.partialorder %v5262, 0.0
  %vm5473 = vcmp.gt.f32.partialorder %v5264, 0.0
  %vm5474 = vcmp.gt.f32.partialorder %v5266, 0.0
  %vm5475 = vcmp.gt.f32.partialorder %v5268, 0.0
  %vm5476 = vcmp.gt.f32.partialorder %v5272, 0.0
  %vm5477 = vcmp.gt.f32.partialorder %v5274, 0.0
  %vm5478 = vcmp.gt.f32.partialorder %v5276, 0.0
  %vm5479 = vcmp.gt.f32.partialorder %v5278, 0.0
  %vm5480 = vcmp.gt.f32.partialorder %v5282, 0.0
  %vm5481 = vcmp.gt.f32.partialorder %v5284, 0.0
  %vm5482 = vcmp.gt.f32.partialorder %v5286, 0.0
  %vm5483 = vcmp.gt.f32.partialorder %v5288, 0.0
  %vm5484 = vcmp.gt.f32.partialorder %v5292, 0.0
  %vm5485 = vcmp.gt.f32.partialorder %v5294, 0.0
  %vm5486 = vcmp.gt.f32.partialorder %v5296, 0.0
  %vm5487 = vcmp.gt.f32.partialorder %v5298, 0.0
  %vm5488 = vcmp.gt.f32.partialorder %v5302, 0.0
  %vm5489 = vcmp.gt.f32.partialorder %v5304, 0.0
  %vm5490 = vcmp.gt.f32.partialorder %v5306, 0.0
  %vm5491 = vcmp.gt.f32.partialorder %v5308, 0.0
  %vm5492 = vcmp.gt.f32.partialorder %v5312, 0.0
  %vm5493 = vcmp.gt.f32.partialorder %v5314, 0.0
  %vm5494 = vcmp.gt.f32.partialorder %v5316, 0.0
  %vm5495 = vcmp.gt.f32.partialorder %v5318, 0.0
  %vm5496 = vcmp.gt.f32.partialorder %v5322, 0.0
  %vm5497 = vcmp.gt.f32.partialorder %v5324, 0.0
  %vm5498 = vcmp.gt.f32.partialorder %v5326, 0.0
  %vm5499 = vcmp.gt.f32.partialorder %v5328, 0.0
  %vm5500 = vcmp.gt.f32.partialorder %v5332, 0.0
  %vm5501 = vcmp.gt.f32.partialorder %v5334, 0.0
  %vm5502 = vcmp.gt.f32.partialorder %v5336, 0.0
  %vm5503 = vcmp.gt.f32.partialorder %v5338, 0.0
  %vm5504 = vcmp.gt.f32.partialorder %v5342, 0.0
  %vm5505 = vcmp.gt.f32.partialorder %v5344, 0.0
  %vm5506 = vcmp.gt.f32.partialorder %v5346, 0.0
  %vm5507 = vcmp.gt.f32.partialorder %v5348, 0.0
  %vm5508 = vcmp.gt.f32.partialorder %v5352, 0.0
  %vm5509 = vcmp.gt.f32.partialorder %v5354, 0.0
  %vm5510 = vcmp.gt.f32.partialorder %v5356, 0.0
  %vm5511 = vcmp.gt.f32.partialorder %v5358, 0.0
  %vm5512 = vcmp.gt.f32.partialorder %v5362, 0.0
  %vm5513 = vcmp.gt.f32.partialorder %v5364, 0.0
  %vm5514 = vcmp.gt.f32.partialorder %v5366, 0.0
  %vm5515 = vcmp.gt.f32.partialorder %v5368, 0.0
  %vm5516 = vcmp.gt.f32.partialorder %v5372, 0.0
  %vm5517 = vcmp.gt.f32.partialorder %v5374, 0.0
  %vm5518 = vcmp.gt.f32.partialorder %v5376, 0.0
  %vm5519 = vcmp.gt.f32.partialorder %v5378, 0.0
  %vm5520 = vcmp.gt.f32.partialorder %v5382, 0.0
  %vm5521 = vcmp.gt.f32.partialorder %v5384, 0.0
  %vm5522 = vcmp.gt.f32.partialorder %v5386, 0.0
  %vm5523 = vcmp.gt.f32.partialorder %v5388, 0.0
  %vm5524 = vcmp.gt.f32.partialorder %v5392, 0.0
  %vm5525 = vcmp.gt.f32.partialorder %v5394, 0.0
  %vm5526 = vcmp.gt.f32.partialorder %v5396, 0.0
  %vm5527 = vcmp.gt.f32.partialorder %v5398, 0.0
  %v5528 = vmin.f32 %v5082, 0.0
  %v5529 = vmin.f32 %v5084, 0.0
  %v5530 = vmin.f32 %v5086, 0.0
  %v5531 = vmin.f32 %v5088, 0.0
  %v5532 = vmin.f32 %v5092, 0.0
  %v5533 = vmin.f32 %v5094, 0.0
  %v5534 = vmin.f32 %v5096, 0.0
  %v5535 = vmin.f32 %v5098, 0.0
  %v5536 = vmin.f32 %v5102, 0.0
  %v5537 = vmin.f32 %v5104, 0.0
  %v5538 = vmin.f32 %v5106, 0.0
  %v5539 = vmin.f32 %v5108, 0.0
  %v5540 = vmin.f32 %v5112, 0.0
  %v5541 = vmin.f32 %v5114, 0.0
  %v5542 = vmin.f32 %v5116, 0.0
  %v5543 = vmin.f32 %v5118, 0.0
  %v5544 = vmin.f32 %v5122, 0.0
  %v5545 = vmin.f32 %v5124, 0.0
  %v5546 = vmin.f32 %v5126, 0.0
  %v5547 = vmin.f32 %v5128, 0.0
  %v5548 = vmin.f32 %v5132, 0.0
  %v5549 = vmin.f32 %v5134, 0.0
  %v5550 = vmin.f32 %v5136, 0.0
  %v5551 = vmin.f32 %v5138, 0.0
  %v5552 = vmin.f32 %v5142, 0.0
  %v5553 = vmin.f32 %v5144, 0.0
  %v5554 = vmin.f32 %v5146, 0.0
  %v5555 = vmin.f32 %v5148, 0.0
  %v5556 = vmin.f32 %v5152, 0.0
  %v5557 = vmin.f32 %v5154, 0.0
  %v5558 = vmin.f32 %v5156, 0.0
  %v5559 = vmin.f32 %v5158, 0.0
  %v5560 = vmin.f32 %v5162, 0.0
  %v5561 = vmin.f32 %v5164, 0.0
  %v5562 = vmin.f32 %v5166, 0.0
  %v5563 = vmin.f32 %v5168, 0.0
  %v5564 = vmin.f32 %v5172, 0.0
  %v5565 = vmin.f32 %v5174, 0.0
  %v5566 = vmin.f32 %v5176, 0.0
  %v5567 = vmin.f32 %v5178, 0.0
  %v5568 = vmin.f32 %v5182, 0.0
  %v5569 = vmin.f32 %v5184, 0.0
  %v5570 = vmin.f32 %v5186, 0.0
  %v5571 = vmin.f32 %v5188, 0.0
  %v5572 = vmin.f32 %v5192, 0.0
  %v5573 = vmin.f32 %v5194, 0.0
  %v5574 = vmin.f32 %v5196, 0.0
  %v5575 = vmin.f32 %v5198, 0.0
  %v5576 = vmin.f32 %v5202, 0.0
  %v5577 = vmin.f32 %v5204, 0.0
  %v5578 = vmin.f32 %v5206, 0.0
  %v5579 = vmin.f32 %v5208, 0.0
  %v5580 = vmin.f32 %v5212, 0.0
  %v5581 = vmin.f32 %v5214, 0.0
  %v5582 = vmin.f32 %v5216, 0.0
  %v5583 = vmin.f32 %v5218, 0.0
  %v5584 = vmin.f32 %v5222, 0.0
  %v5585 = vmin.f32 %v5224, 0.0
  %v5586 = vmin.f32 %v5226, 0.0
  %v5587 = vmin.f32 %v5228, 0.0
  %v5588 = vmin.f32 %v5232, 0.0
  %v5589 = vmin.f32 %v5234, 0.0
  %v5590 = vmin.f32 %v5236, 0.0
  %v5591 = vmin.f32 %v5238, 0.0
  %v5592 = vmin.f32 %v5242, 0.0
  %v5593 = vmin.f32 %v5244, 0.0
  %v5594 = vmin.f32 %v5246, 0.0
  %v5595 = vmin.f32 %v5248, 0.0
  %v5596 = vmin.f32 %v5252, 0.0
  %v5597 = vmin.f32 %v5254, 0.0
  %v5598 = vmin.f32 %v5256, 0.0
  %v5599 = vmin.f32 %v5258, 0.0
  %v5600 = vmin.f32 %v5262, 0.0
  %v5601 = vmin.f32 %v5264, 0.0
  %v5602 = vmin.f32 %v5266, 0.0
  %v5603 = vmin.f32 %v5268, 0.0
  %v5604 = vmin.f32 %v5272, 0.0
  %v5605 = vmin.f32 %v5274, 0.0
  %v5606 = vmin.f32 %v5276, 0.0
  %v5607 = vmin.f32 %v5278, 0.0
  %v5608 = vmin.f32 %v5282, 0.0
  %v5609 = vmin.f32 %v5284, 0.0
  %v5610 = vmin.f32 %v5286, 0.0
  %v5611 = vmin.f32 %v5288, 0.0
  %v5612 = vmin.f32 %v5292, 0.0
  %v5613 = vmin.f32 %v5294, 0.0
  %v5614 = vmin.f32 %v5296, 0.0
  %v5615 = vmin.f32 %v5298, 0.0
  %v5616 = vmin.f32 %v5302, 0.0
  %v5617 = vmin.f32 %v5304, 0.0
  %v5618 = vmin.f32 %v5306, 0.0
  %v5619 = vmin.f32 %v5308, 0.0
  %v5620 = vmin.f32 %v5312, 0.0
  %v5621 = vmin.f32 %v5314, 0.0
  %v5622 = vmin.f32 %v5316, 0.0
  %v5623 = vmin.f32 %v5318, 0.0
  %v5624 = vmin.f32 %v5322, 0.0
  %v5625 = vmin.f32 %v5324, 0.0
  %v5626 = vmin.f32 %v5326, 0.0
  %v5627 = vmin.f32 %v5328, 0.0
  %v5628 = vmin.f32 %v5332, 0.0
  %v5629 = vmin.f32 %v5334, 0.0
  %v5630 = vmin.f32 %v5336, 0.0
  %v5631 = vmin.f32 %v5338, 0.0
  %v5632 = vmin.f32 %v5342, 0.0
  %v5633 = vmin.f32 %v5344, 0.0
  %v5634 = vmin.f32 %v5346, 0.0
  %v5635 = vmin.f32 %v5348, 0.0
  %v5636 = vmin.f32 %v5352, 0.0
  %v5637 = vmin.f32 %v5354, 0.0
  %v5638 = vmin.f32 %v5356, 0.0
  %v5639 = vmin.f32 %v5358, 0.0
  %v5640 = vmin.f32 %v5362, 0.0
  %v5641 = vmin.f32 %v5364, 0.0
  %v5642 = vmin.f32 %v5366, 0.0
  %v5643 = vmin.f32 %v5368, 0.0
  %v5644 = vmin.f32 %v5372, 0.0
  %v5645 = vmin.f32 %v5374, 0.0
  %v5646 = vmin.f32 %v5376, 0.0
  %v5647 = vmin.f32 %v5378, 0.0
  %v5648 = vmin.f32 %v5382, 0.0
  %v5649 = vmin.f32 %v5384, 0.0
  %v5650 = vmin.f32 %v5386, 0.0
  %v5651 = vmin.f32 %v5388, 0.0
  %v5652 = vmin.f32 %v5392, 0.0
  %v5653 = vmin.f32 %v5394, 0.0
  %v5654 = vmin.f32 %v5396, 0.0
  %v5655 = vmin.f32 %v5398, 0.0
  %v5656 = vmul.f32 %v5528, 1.442695
  %v5657 = vpow.pop %v5656
  %v5658 = vmul.f32 %v5529, 1.442695
  %v5659 = vpow.pop %v5658
  %v5660 = vmul.f32 %v5530, 1.442695
  %v5661 = vpow.pop %v5660
  %v5662 = vmul.f32 %v5531, 1.442695
  %v5663 = vpow.pop %v5662
  %v5664 = vmul.f32 %v5532, 1.442695
  %v5665 = vpow.pop %v5664
  %v5666 = vmul.f32 %v5533, 1.442695
  %v5667 = vpow.pop %v5666
  %v5668 = vmul.f32 %v5534, 1.442695
  %v5669 = vpow.pop %v5668
  %v5670 = vmul.f32 %v5535, 1.442695
  %v5671 = vpow.pop %v5670
  %v5672 = vmul.f32 %v5536, 1.442695
  %v5673 = vpow.pop %v5672
  %v5674 = vmul.f32 %v5537, 1.442695
  %v5675 = vpow.pop %v5674
  %v5676 = vmul.f32 %v5538, 1.442695
  %v5677 = vpow.pop %v5676
  %v5678 = vmul.f32 %v5539, 1.442695
  %v5679 = vpow.pop %v5678
  %v5680 = vmul.f32 %v5540, 1.442695
  %v5681 = vpow.pop %v5680
  %v5682 = vmul.f32 %v5541, 1.442695
  %v5683 = vpow.pop %v5682
  %v5684 = vmul.f32 %v5542, 1.442695
  %v5685 = vpow.pop %v5684
  %v5686 = vmul.f32 %v5543, 1.442695
  %v5687 = vpow.pop %v5686
  %v5688 = vmul.f32 %v5544, 1.442695
  %v5689 = vpow.pop %v5688
  %v5690 = vmul.f32 %v5545, 1.442695
  %v5691 = vpow.pop %v5690
  %v5692 = vmul.f32 %v5546, 1.442695
  %v5693 = vpow.pop %v5692
  %v5694 = vmul.f32 %v5547, 1.442695
  %v5695 = vpow.pop %v5694
  %v5696 = vmul.f32 %v5548, 1.442695
  %v5697 = vpow.pop %v5696
  %v5698 = vmul.f32 %v5549, 1.442695
  %v5699 = vpow.pop %v5698
  %v5700 = vmul.f32 %v5550, 1.442695
  %v5701 = vpow.pop %v5700
  %v5702 = vmul.f32 %v5551, 1.442695
  %v5703 = vpow.pop %v5702
  %v5704 = vmul.f32 %v5552, 1.442695
  %v5705 = vpow.pop %v5704
  %v5706 = vmul.f32 %v5553, 1.442695
  %v5707 = vpow.pop %v5706
  %v5708 = vmul.f32 %v5554, 1.442695
  %v5709 = vpow.pop %v5708
  %v5710 = vmul.f32 %v5555, 1.442695
  %v5711 = vpow.pop %v5710
  %v5712 = vmul.f32 %v5556, 1.442695
  %v5713 = vpow.pop %v5712
  %v5714 = vmul.f32 %v5557, 1.442695
  %v5715 = vpow.pop %v5714
  %v5716 = vmul.f32 %v5558, 1.442695
  %v5717 = vpow.pop %v5716
  %v5718 = vmul.f32 %v5559, 1.442695
  %v5719 = vpow.pop %v5718
  %v5720 = vmul.f32 %v5560, 1.442695
  %v5721 = vpow.pop %v5720
  %v5722 = vmul.f32 %v5561, 1.442695
  %v5723 = vpow.pop %v5722
  %v5724 = vmul.f32 %v5562, 1.442695
  %v5725 = vpow.pop %v5724
  %v5726 = vmul.f32 %v5563, 1.442695
  %v5727 = vpow.pop %v5726
  %v5728 = vmul.f32 %v5564, 1.442695
  %v5729 = vpow.pop %v5728
  %v5730 = vmul.f32 %v5565, 1.442695
  %v5731 = vpow.pop %v5730
  %v5732 = vmul.f32 %v5566, 1.442695
  %v5733 = vpow.pop %v5732
  %v5734 = vmul.f32 %v5567, 1.442695
  %v5735 = vpow.pop %v5734
  %v5736 = vmul.f32 %v5568, 1.442695
  %v5737 = vpow.pop %v5736
  %v5738 = vmul.f32 %v5569, 1.442695
  %v5739 = vpow.pop %v5738
  %v5740 = vmul.f32 %v5570, 1.442695
  %v5741 = vpow.pop %v5740
  %v5742 = vmul.f32 %v5571, 1.442695
  %v5743 = vpow.pop %v5742
  %v5744 = vmul.f32 %v5572, 1.442695
  %v5745 = vpow.pop %v5744
  %v5746 = vmul.f32 %v5573, 1.442695
  %v5747 = vpow.pop %v5746
  %v5748 = vmul.f32 %v5574, 1.442695
  %v5749 = vpow.pop %v5748
  %v5750 = vmul.f32 %v5575, 1.442695
  %v5751 = vpow.pop %v5750
  %v5752 = vmul.f32 %v5576, 1.442695
  %v5753 = vpow.pop %v5752
  %v5754 = vmul.f32 %v5577, 1.442695
  %v5755 = vpow.pop %v5754
  %v5756 = vmul.f32 %v5578, 1.442695
  %v5757 = vpow.pop %v5756
  %v5758 = vmul.f32 %v5579, 1.442695
  %v5759 = vpow.pop %v5758
  %v5760 = vmul.f32 %v5580, 1.442695
  %v5761 = vpow.pop %v5760
  %v5762 = vmul.f32 %v5581, 1.442695
  %v5763 = vpow.pop %v5762
  %v5764 = vmul.f32 %v5582, 1.442695
  %v5765 = vpow.pop %v5764
  %v5766 = vmul.f32 %v5583, 1.442695
  %v5767 = vpow.pop %v5766
  %v5768 = vmul.f32 %v5584, 1.442695
  %v5769 = vpow.pop %v5768
  %v5770 = vmul.f32 %v5585, 1.442695
  %v5771 = vpow.pop %v5770
  %v5772 = vmul.f32 %v5586, 1.442695
  %v5773 = vpow.pop %v5772
  %v5774 = vmul.f32 %v5587, 1.442695
  %v5775 = vpow.pop %v5774
  %v5776 = vmul.f32 %v5588, 1.442695
  %v5777 = vpow.pop %v5776
  %v5778 = vmul.f32 %v5589, 1.442695
  %v5779 = vpow.pop %v5778
  %v5780 = vmul.f32 %v5590, 1.442695
  %v5781 = vpow.pop %v5780
  %v5782 = vmul.f32 %v5591, 1.442695
  %v5783 = vpow.pop %v5782
  %v5784 = vmul.f32 %v5592, 1.442695
  %v5785 = vpow.pop %v5784
  %v5786 = vmul.f32 %v5593, 1.442695
  %v5787 = vpow.pop %v5786
  %v5788 = vmul.f32 %v5594, 1.442695
  %v5789 = vpow.pop %v5788
  %v5790 = vmul.f32 %v5595, 1.442695
  %v5791 = vpow.pop %v5790
  %v5792 = vmul.f32 %v5596, 1.442695
  %v5793 = vpow.pop %v5792
  %v5794 = vmul.f32 %v5597, 1.442695
  %v5795 = vpow.pop %v5794
  %v5796 = vmul.f32 %v5598, 1.442695
  %v5797 = vpow.pop %v5796
  %v5798 = vmul.f32 %v5599, 1.442695
  %v5799 = vpow.pop %v5798
  %v5800 = vmul.f32 %v5600, 1.442695
  %v5801 = vpow.pop %v5800
  %v5802 = vmul.f32 %v5601, 1.442695
  %v5803 = vpow.pop %v5802
  %v5804 = vmul.f32 %v5602, 1.442695
  %v5805 = vpow.pop %v5804
  %v5806 = vmul.f32 %v5603, 1.442695
  %v5807 = vpow.pop %v5806
  %v5808 = vmul.f32 %v5604, 1.442695
  %v5809 = vpow.pop %v5808
  %v5810 = vmul.f32 %v5605, 1.442695
  %v5811 = vpow.pop %v5810
  %v5812 = vmul.f32 %v5606, 1.442695
  %v5813 = vpow.pop %v5812
  %v5814 = vmul.f32 %v5607, 1.442695
  %v5815 = vpow.pop %v5814
  %v5816 = vmul.f32 %v5608, 1.442695
  %v5817 = vpow.pop %v5816
  %v5818 = vmul.f32 %v5609, 1.442695
  %v5819 = vpow.pop %v5818
  %v5820 = vmul.f32 %v5610, 1.442695
  %v5821 = vpow.pop %v5820
  %v5822 = vmul.f32 %v5611, 1.442695
  %v5823 = vpow.pop %v5822
  %v5824 = vmul.f32 %v5612, 1.442695
  %v5825 = vpow.pop %v5824
  %v5826 = vmul.f32 %v5613, 1.442695
  %v5827 = vpow.pop %v5826
  %v5828 = vmul.f32 %v5614, 1.442695
  %v5829 = vpow.pop %v5828
  %v5830 = vmul.f32 %v5615, 1.442695
  %v5831 = vpow.pop %v5830
  %v5832 = vmul.f32 %v5616, 1.442695
  %v5833 = vpow.pop %v5832
  %v5834 = vmul.f32 %v5617, 1.442695
  %v5835 = vpow.pop %v5834
  %v5836 = vmul.f32 %v5618, 1.442695
  %v5837 = vpow.pop %v5836
  %v5838 = vmul.f32 %v5619, 1.442695
  %v5839 = vpow.pop %v5838
  %v5840 = vmul.f32 %v5620, 1.442695
  %v5841 = vpow.pop %v5840
  %v5842 = vmul.f32 %v5621, 1.442695
  %v5843 = vpow.pop %v5842
  %v5844 = vmul.f32 %v5622, 1.442695
  %v5845 = vpow.pop %v5844
  %v5846 = vmul.f32 %v5623, 1.442695
  %v5847 = vpow.pop %v5846
  %v5848 = vmul.f32 %v5624, 1.442695
  %v5849 = vpow.pop %v5848
  %v5850 = vmul.f32 %v5625, 1.442695
  %v5851 = vpow.pop %v5850
  %v5852 = vmul.f32 %v5626, 1.442695
  %v5853 = vpow.pop %v5852
  %v5854 = vmul.f32 %v5627, 1.442695
  %v5855 = vpow.pop %v5854
  %v5856 = vmul.f32 %v5628, 1.442695
  %v5857 = vpow.pop %v5856
  %v5858 = vmul.f32 %v5629, 1.442695
  %v5859 = vpow.pop %v5858
  %v5860 = vmul.f32 %v5630, 1.442695
  %v5861 = vpow.pop %v5860
  %v5862 = vmul.f32 %v5631, 1.442695
  %v5863 = vpow.pop %v5862
  %v5864 = vmul.f32 %v5632, 1.442695
  %v5865 = vpow.pop %v5864
  %v5866 = vmul.f32 %v5633, 1.442695
  %v5867 = vpow.pop %v5866
  %v5868 = vmul.f32 %v5634, 1.442695
  %v5869 = vpow.pop %v5868
  %v5870 = vmul.f32 %v5635, 1.442695
  %v5871 = vpow.pop %v5870
  %v5872 = vmul.f32 %v5636, 1.442695
  %v5873 = vpow.pop %v5872
  %v5874 = vmul.f32 %v5637, 1.442695
  %v5875 = vpow.pop %v5874
  %v5876 = vmul.f32 %v5638, 1.442695
  %v5877 = vpow.pop %v5876
  %v5878 = vmul.f32 %v5639, 1.442695
  %v5879 = vpow.pop %v5878
  %v5880 = vmul.f32 %v5640, 1.442695
  %v5881 = vpow.pop %v5880
  %v5882 = vmul.f32 %v5641, 1.442695
  %v5883 = vpow.pop %v5882
  %v5884 = vmul.f32 %v5642, 1.442695
  %v5885 = vpow.pop %v5884
  %v5886 = vmul.f32 %v5643, 1.442695
  %v5887 = vpow.pop %v5886
  %v5888 = vmul.f32 %v5644, 1.442695
  %v5889 = vpow.pop %v5888
  %v5890 = vmul.f32 %v5645, 1.442695
  %v5891 = vpow.pop %v5890
  %v5892 = vmul.f32 %v5646, 1.442695
  %v5893 = vpow.pop %v5892
  %v5894 = vmul.f32 %v5647, 1.442695
  %v5895 = vpow.pop %v5894
  %v5896 = vmul.f32 %v5648, 1.442695
  %v5897 = vpow.pop %v5896
  %v5898 = vmul.f32 %v5649, 1.442695
  %v5899 = vpow.pop %v5898
  %v5900 = vmul.f32 %v5650, 1.442695
  %v5901 = vpow.pop %v5900
  %v5902 = vmul.f32 %v5651, 1.442695
  %v5903 = vpow.pop %v5902
  %v5904 = vmul.f32 %v5652, 1.442695
  %v5905 = vpow.pop %v5904
  %v5906 = vmul.f32 %v5653, 1.442695
  %v5907 = vpow.pop %v5906
  %v5908 = vmul.f32 %v5654, 1.442695
  %v5909 = vpow.pop %v5908
  %v5910 = vmul.f32 %v5655, 1.442695
  %v5911 = vpow.pop %v5910
  %v5912 = vsub.f32 %v5657, 1.0
  %v5913 = vsub.f32 %v5659, 1.0
  %v5914 = vsub.f32 %v5661, 1.0
  %v5915 = vsub.f32 %v5663, 1.0
  %v5916 = vsub.f32 %v5665, 1.0
  %v5917 = vsub.f32 %v5667, 1.0
  %v5918 = vsub.f32 %v5669, 1.0
  %v5919 = vsub.f32 %v5671, 1.0
  %v5920 = vsub.f32 %v5673, 1.0
  %v5921 = vsub.f32 %v5675, 1.0
  %v5922 = vsub.f32 %v5677, 1.0
  %v5923 = vsub.f32 %v5679, 1.0
  %v5924 = vsub.f32 %v5681, 1.0
  %v5925 = vsub.f32 %v5683, 1.0
  %v5926 = vsub.f32 %v5685, 1.0
  %v5927 = vsub.f32 %v5687, 1.0
  %v5928 = vsub.f32 %v5689, 1.0
  %v5929 = vsub.f32 %v5691, 1.0
  %v5930 = vsub.f32 %v5693, 1.0
  %v5931 = vsub.f32 %v5695, 1.0
  %v5932 = vsub.f32 %v5697, 1.0
  %v5933 = vsub.f32 %v5699, 1.0
  %v5934 = vsub.f32 %v5701, 1.0
  %v5935 = vsub.f32 %v5703, 1.0
  %v5936 = vsub.f32 %v5705, 1.0
  %v5937 = vsub.f32 %v5707, 1.0
  %v5938 = vsub.f32 %v5709, 1.0
  %v5939 = vsub.f32 %v5711, 1.0
  %v5940 = vsub.f32 %v5713, 1.0
  %v5941 = vsub.f32 %v5715, 1.0
  %v5942 = vsub.f32 %v5717, 1.0
  %v5943 = vsub.f32 %v5719, 1.0
  %v5944 = vsub.f32 %v5721, 1.0
  %v5945 = vsub.f32 %v5723, 1.0
  %v5946 = vsub.f32 %v5725, 1.0
  %v5947 = vsub.f32 %v5727, 1.0
  %v5948 = vsub.f32 %v5729, 1.0
  %v5949 = vsub.f32 %v5731, 1.0
  %v5950 = vsub.f32 %v5733, 1.0
  %v5951 = vsub.f32 %v5735, 1.0
  %v5952 = vsub.f32 %v5737, 1.0
  %v5953 = vsub.f32 %v5739, 1.0
  %v5954 = vsub.f32 %v5741, 1.0
  %v5955 = vsub.f32 %v5743, 1.0
  %v5956 = vsub.f32 %v5745, 1.0
  %v5957 = vsub.f32 %v5747, 1.0
  %v5958 = vsub.f32 %v5749, 1.0
  %v5959 = vsub.f32 %v5751, 1.0
  %v5960 = vsub.f32 %v5753, 1.0
  %v5961 = vsub.f32 %v5755, 1.0
  %v5962 = vsub.f32 %v5757, 1.0
  %v5963 = vsub.f32 %v5759, 1.0
  %v5964 = vsub.f32 %v5761, 1.0
  %v5965 = vsub.f32 %v5763, 1.0
  %v5966 = vsub.f32 %v5765, 1.0
  %v5967 = vsub.f32 %v5767, 1.0
  %v5968 = vsub.f32 %v5769, 1.0
  %v5969 = vsub.f32 %v5771, 1.0
  %v5970 = vsub.f32 %v5773, 1.0
  %v5971 = vsub.f32 %v5775, 1.0
  %v5972 = vsub.f32 %v5777, 1.0
  %v5973 = vsub.f32 %v5779, 1.0
  %v5974 = vsub.f32 %v5781, 1.0
  %v5975 = vsub.f32 %v5783, 1.0
  %v5976 = vsub.f32 %v5785, 1.0
  %v5977 = vsub.f32 %v5787, 1.0
  %v5978 = vsub.f32 %v5789, 1.0
  %v5979 = vsub.f32 %v5791, 1.0
  %v5980 = vsub.f32 %v5793, 1.0
  %v5981 = vsub.f32 %v5795, 1.0
  %v5982 = vsub.f32 %v5797, 1.0
  %v5983 = vsub.f32 %v5799, 1.0
  %v5984 = vsub.f32 %v5801, 1.0
  %v5985 = vsub.f32 %v5803, 1.0
  %v5986 = vsub.f32 %v5805, 1.0
  %v5987 = vsub.f32 %v5807, 1.0
  %v5988 = vsub.f32 %v5809, 1.0
  %v5989 = vsub.f32 %v5811, 1.0
  %v5990 = vsub.f32 %v5813, 1.0
  %v5991 = vsub.f32 %v5815, 1.0
  %v5992 = vsub.f32 %v5817, 1.0
  %v5993 = vsub.f32 %v5819, 1.0
  %v5994 = vsub.f32 %v5821, 1.0
  %v5995 = vsub.f32 %v5823, 1.0
  %v5996 = vsub.f32 %v5825, 1.0
  %v5997 = vsub.f32 %v5827, 1.0
  %v5998 = vsub.f32 %v5829, 1.0
  %v5999 = vsub.f32 %v5831, 1.0
  %v6000 = vsub.f32 %v5833, 1.0
  %v6001 = vsub.f32 %v5835, 1.0
  %v6002 = vsub.f32 %v5837, 1.0
  %v6003 = vsub.f32 %v5839, 1.0
  %v6004 = vsub.f32 %v5841, 1.0
  %v6005 = vsub.f32 %v5843, 1.0
  %v6006 = vsub.f32 %v5845, 1.0
  %v6007 = vsub.f32 %v5847, 1.0
  %v6008 = vsub.f32 %v5849, 1.0
  %v6009 = vsub.f32 %v5851, 1.0
  %v6010 = vsub.f32 %v5853, 1.0
  %v6011 = vsub.f32 %v5855, 1.0
  %v6012 = vsub.f32 %v5857, 1.0
  %v6013 = vsub.f32 %v5859, 1.0
  %v6014 = vsub.f32 %v5861, 1.0
  %v6015 = vsub.f32 %v5863, 1.0
  %v6016 = vsub.f32 %v5865, 1.0
  %v6017 = vsub.f32 %v5867, 1.0
  %v6018 = vsub.f32 %v5869, 1.0
  %v6019 = vsub.f32 %v5871, 1.0
  %v6020 = vsub.f32 %v5873, 1.0
  %v6021 = vsub.f32 %v5875, 1.0
  %v6022 = vsub.f32 %v5877, 1.0
  %v6023 = vsub.f32 %v5879, 1.0
  %v6024 = vsub.f32 %v5881, 1.0
  %v6025 = vsub.f32 %v5883, 1.0
  %v6026 = vsub.f32 %v5885, 1.0
  %v6027 = vsub.f32 %v5887, 1.0
  %v6028 = vsub.f32 %v5889, 1.0
  %v6029 = vsub.f32 %v5891, 1.0
  %v6030 = vsub.f32 %v5893, 1.0
  %v6031 = vsub.f32 %v5895, 1.0
  %v6032 = vsub.f32 %v5897, 1.0
  %v6033 = vsub.f32 %v5899, 1.0
  %v6034 = vsub.f32 %v5901, 1.0
  %v6035 = vsub.f32 %v5903, 1.0
  %v6036 = vsub.f32 %v5905, 1.0
  %v6037 = vsub.f32 %v5907, 1.0
  %v6038 = vsub.f32 %v5909, 1.0
  %v6039 = vsub.f32 %v5911, 1.0
  %v6040 = vsel %vm5400, %v5082, %v5912
  %v6041 = vsel %vm5401, %v5084, %v5913
  %v6042 = vsel %vm5402, %v5086, %v5914
  %v6043 = vsel %vm5403, %v5088, %v5915
  %v6044 = vsel %vm5404, %v5092, %v5916
  %v6045 = vsel %vm5405, %v5094, %v5917
  %v6046 = vsel %vm5406, %v5096, %v5918
  %v6047 = vsel %vm5407, %v5098, %v5919
  %v6048 = vsel %vm5408, %v5102, %v5920
  %v6049 = vsel %vm5409, %v5104, %v5921
  %v6050 = vsel %vm5410, %v5106, %v5922
  %v6051 = vsel %vm5411, %v5108, %v5923
  %v6052 = vsel %vm5412, %v5112, %v5924
  %v6053 = vsel %vm5413, %v5114, %v5925
  %v6054 = vsel %vm5414, %v5116, %v5926
  %v6055 = vsel %vm5415, %v5118, %v5927
  %v6056 = vsel %vm5416, %v5122, %v5928
  %v6057 = vsel %vm5417, %v5124, %v5929
  %v6058 = vsel %vm5418, %v5126, %v5930
  %v6059 = vsel %vm5419, %v5128, %v5931
  %v6060 = vsel %vm5420, %v5132, %v5932
  %v6061 = vsel %vm5421, %v5134, %v5933
  %v6062 = vsel %vm5422, %v5136, %v5934
  %v6063 = vsel %vm5423, %v5138, %v5935
  %v6064 = vsel %vm5424, %v5142, %v5936
  %v6065 = vsel %vm5425, %v5144, %v5937
  %v6066 = vsel %vm5426, %v5146, %v5938
  %v6067 = vsel %vm5427, %v5148, %v5939
  %v6068 = vsel %vm5428, %v5152, %v5940
  %v6069 = vsel %vm5429, %v5154, %v5941
  %v6070 = vsel %vm5430, %v5156, %v5942
  %v6071 = vsel %vm5431, %v5158, %v5943
  %v6072 = vsel %vm5432, %v5162, %v5944
  %v6073 = vsel %vm5433, %v5164, %v5945
  %v6074 = vsel %vm5434, %v5166, %v5946
  %v6075 = vsel %vm5435, %v5168, %v5947
  %v6076 = vsel %vm5436, %v5172, %v5948
  %v6077 = vsel %vm5437, %v5174, %v5949
  %v6078 = vsel %vm5438, %v5176, %v5950
  %v6079 = vsel %vm5439, %v5178, %v5951
  %v6080 = vsel %vm5440, %v5182, %v5952
  %v6081 = vsel %vm5441, %v5184, %v5953
  %v6082 = vsel %vm5442, %v5186, %v5954
  %v6083 = vsel %vm5443, %v5188, %v5955
  %v6084 = vsel %vm5444, %v5192, %v5956
  %v6085 = vsel %vm5445, %v5194, %v5957
  %v6086 = vsel %vm5446, %v5196, %v5958
  %v6087 = vsel %vm5447, %v5198, %v5959
  %v6088 = vsel %vm5448, %v5202, %v5960
  %v6089 = vsel %vm5449, %v5204, %v5961
  %v6090 = vsel %vm5450, %v5206, %v5962
  %v6091 = vsel %vm5451, %v5208, %v5963
  %v6092 = vsel %vm5452, %v5212, %v5964
  %v6093 = vsel %vm5453, %v5214, %v5965
  %v6094 = vsel %vm5454, %v5216, %v5966
  %v6095 = vsel %vm5455, %v5218, %v5967
  %v6096 = vsel %vm5456, %v5222, %v5968
  %v6097 = vsel %vm5457, %v5224, %v5969
  %v6098 = vsel %vm5458, %v5226, %v5970
  %v6099 = vsel %vm5459, %v5228, %v5971
  %v6100 = vsel %vm5460, %v5232, %v5972
  %v6101 = vsel %vm5461, %v5234, %v5973
  %v6102 = vsel %vm5462, %v5236, %v5974
  %v6103 = vsel %vm5463, %v5238, %v5975
  %v6104 = vsel %vm5464, %v5242, %v5976
  %v6105 = vsel %vm5465, %v5244, %v5977
  %v6106 = vsel %vm5466, %v5246, %v5978
  %v6107 = vsel %vm5467, %v5248, %v5979
  %v6108 = vsel %vm5468, %v5252, %v5980
  %v6109 = vsel %vm5469, %v5254, %v5981
  %v6110 = vsel %vm5470, %v5256, %v5982
  %v6111 = vsel %vm5471, %v5258, %v5983
  %v6112 = vsel %vm5472, %v5262, %v5984
  %v6113 = vsel %vm5473, %v5264, %v5985
  %v6114 = vsel %vm5474, %v5266, %v5986
  %v6115 = vsel %vm5475, %v5268, %v5987
  %v6116 = vsel %vm5476, %v5272, %v5988
  %v6117 = vsel %vm5477, %v5274, %v5989
  %v6118 = vsel %vm5478, %v5276, %v5990
  %v6119 = vsel %vm5479, %v5278, %v5991
  %v6120 = vsel %vm5480, %v5282, %v5992
  %v6121 = vsel %vm5481, %v5284, %v5993
  %v6122 = vsel %vm5482, %v5286, %v5994
  %v6123 = vsel %vm5483, %v5288, %v5995
  %v6124 = vsel %vm5484, %v5292, %v5996
  %v6125 = vsel %vm5485, %v5294, %v5997
  %v6126 = vsel %vm5486, %v5296, %v5998
  %v6127 = vsel %vm5487, %v5298, %v5999
  %v6128 = vsel %vm5488, %v5302, %v6000
  %v6129 = vsel %vm5489, %v5304, %v6001
  %v6130 = vsel %vm5490, %v5306, %v6002
  %v6131 = vsel %vm5491, %v5308, %v6003
  %v6132 = vsel %vm5492, %v5312, %v6004
  %v6133 = vsel %vm5493, %v5314, %v6005
  %v6134 = vsel %vm5494, %v5316, %v6006
  %v6135 = vsel %vm5495, %v5318, %v6007
  %v6136 = vsel %vm5496, %v5322, %v6008
  %v6137 = vsel %vm5497, %v5324, %v6009
  %v6138 = vsel %vm5498, %v5326, %v6010
  %v6139 = vsel %vm5499, %v5328, %v6011
  %v6140 = vsel %vm5500, %v5332, %v6012
  %v6141 = vsel %vm5501, %v5334, %v6013
  %v6142 = vsel %vm5502, %v5336, %v6014
  %v6143 = vsel %vm5503, %v5338, %v6015
  %v6144 = vsel %vm5504, %v5342, %v6016
  %v6145 = vsel %vm5505, %v5344, %v6017
  %v6146 = vsel %vm5506, %v5346, %v6018
  %v6147 = vsel %vm5507, %v5348, %v6019
  %v6148 = vsel %vm5508, %v5352, %v6020
  %v6149 = vsel %vm5509, %v5354, %v6021
  %v6150 = vsel %vm5510, %v5356, %v6022
  %v6151 = vsel %vm5511, %v5358, %v6023
  %v6152 = vsel %vm5512, %v5362, %v6024
  %v6153 = vsel %vm5513, %v5364, %v6025
  %v6154 = vsel %vm5514, %v5366, %v6026
  %v6155 = vsel %vm5515, %v5368, %v6027
  %v6156 = vsel %vm5516, %v5372, %v6028
  %v6157 = vsel %vm5517, %v5374, %v6029
  %v6158 = vsel %vm5518, %v5376, %v6030
  %v6159 = vsel %vm5519, %v5378, %v6031
  %v6160 = vsel %vm5520, %v5382, %v6032
  %v6161 = vsel %vm5521, %v5384, %v6033
  %v6162 = vsel %vm5522, %v5386, %v6034
  %v6163 = vsel %vm5523, %v5388, %v6035
  %v6164 = vsel %vm5524, %v5392, %v6036
  %v6165 = vsel %vm5525, %v5394, %v6037
  %v6166 = vsel %vm5526, %v5396, %v6038
  %v6167 = vsel %vm5527, %v5398, %v6039
  %v6168 = vpack.c.bf16 %v6042, %v6040
  %v6169 = vpack.c.bf16 %v6043, %v6041
  %v6170 = vpack.c.bf16 %v6046, %v6044
  %v6171 = vpack.c.bf16 %v6047, %v6045
  %v6172 = vpack.c.bf16 %v6050, %v6048
  %v6173 = vpack.c.bf16 %v6051, %v6049
  %v6174 = vpack.c.bf16 %v6054, %v6052
  %v6175 = vpack.c.bf16 %v6055, %v6053
  %v6176 = vpack.c.bf16 %v6058, %v6056
  %v6177 = vpack.c.bf16 %v6059, %v6057
  %v6178 = vpack.c.bf16 %v6062, %v6060
  %v6179 = vpack.c.bf16 %v6063, %v6061
  %v6180 = vpack.c.bf16 %v6066, %v6064
  %v6181 = vpack.c.bf16 %v6067, %v6065
  %v6182 = vpack.c.bf16 %v6070, %v6068
  %v6183 = vpack.c.bf16 %v6071, %v6069
  %v6184 = vpack.c.bf16 %v6074, %v6072
  %v6185 = vpack.c.bf16 %v6075, %v6073
  %v6186 = vpack.c.bf16 %v6078, %v6076
  %v6187 = vpack.c.bf16 %v6079, %v6077
  %v6188 = vpack.c.bf16 %v6082, %v6080
  %v6189 = vpack.c.bf16 %v6083, %v6081
  %v6190 = vpack.c.bf16 %v6086, %v6084
  %v6191 = vpack.c.bf16 %v6087, %v6085
  %v6192 = vpack.c.bf16 %v6090, %v6088
  %v6193 = vpack.c.bf16 %v6091, %v6089
  %v6194 = vpack.c.bf16 %v6094, %v6092
  %v6195 = vpack.c.bf16 %v6095, %v6093
  %v6196 = vpack.c.bf16 %v6098, %v6096
  %v6197 = vpack.c.bf16 %v6099, %v6097
  %v6198 = vpack.c.bf16 %v6102, %v6100
  %v6199 = vpack.c.bf16 %v6103, %v6101
  %v6200 = vpack.c.bf16 %v6106, %v6104
  %v6201 = vpack.c.bf16 %v6107, %v6105
  %v6202 = vpack.c.bf16 %v6110, %v6108
  %v6203 = vpack.c.bf16 %v6111, %v6109
  %v6204 = vpack.c.bf16 %v6114, %v6112
  %v6205 = vpack.c.bf16 %v6115, %v6113
  %v6206 = vpack.c.bf16 %v6118, %v6116
  %v6207 = vpack.c.bf16 %v6119, %v6117
  %v6208 = vpack.c.bf16 %v6122, %v6120
  %v6209 = vpack.c.bf16 %v6123, %v6121
  %v6210 = vpack.c.bf16 %v6126, %v6124
  %v6211 = vpack.c.bf16 %v6127, %v6125
  %v6212 = vpack.c.bf16 %v6130, %v6128
  %v6213 = vpack.c.bf16 %v6131, %v6129
  %v6214 = vpack.c.bf16 %v6134, %v6132
  %v6215 = vpack.c.bf16 %v6135, %v6133
  %v6216 = vpack.c.bf16 %v6138, %v6136
  %v6217 = vpack.c.bf16 %v6139, %v6137
  %v6218 = vpack.c.bf16 %v6142, %v6140
  %v6219 = vpack.c.bf16 %v6143, %v6141
  %v6220 = vpack.c.bf16 %v6146, %v6144
  %v6221 = vpack.c.bf16 %v6147, %v6145
  %v6222 = vpack.c.bf16 %v6150, %v6148
  %v6223 = vpack.c.bf16 %v6151, %v6149
  %v6224 = vpack.c.bf16 %v6154, %v6152
  %v6225 = vpack.c.bf16 %v6155, %v6153
  %v6226 = vpack.c.bf16 %v6158, %v6156
  %v6227 = vpack.c.bf16 %v6159, %v6157
  %v6228 = vpack.c.bf16 %v6162, %v6160
  %v6229 = vpack.c.bf16 %v6163, %v6161
  %v6230 = vpack.c.bf16 %v6166, %v6164
  %v6231 = vpack.c.bf16 %v6167, %v6165
  %s6232 = scalar_lea.vmem %s3, 768
  %v6233 = vld [vmem:[%s6232] sm:$0xff]
  %v6234 = vld [vmem:[%s6232 + $0x8] sm:$0xff]
  %v6235 = vld [vmem:[%s6232 + $0x10] sm:$0xff]
  %v6236 = vld [vmem:[%s6232 + $0x18] sm:$0xff]
  %v6237 = vld [vmem:[%s6232 + $0x20] sm:$0xff]
  %v6238 = vld [vmem:[%s6232 + $0x28] sm:$0xff]
  %v6239 = vld [vmem:[%s6232 + $0x30] sm:$0xff]
  %v6240 = vld [vmem:[%s6232 + $0x38] sm:$0xff]
  %v6241 = vld [vmem:[%s6232 + $0x40] sm:$0xff]
  %v6242 = vld [vmem:[%s6232 + $0x48] sm:$0xff]
  %v6243 = vld [vmem:[%s6232 + $0x50] sm:$0xff]
  %v6244 = vld [vmem:[%s6232 + $0x58] sm:$0xff]
  %v6245 = vld [vmem:[%s6232 + $0x60] sm:$0xff]
  %v6246 = vld [vmem:[%s6232 + $0x68] sm:$0xff]
  %v6247 = vld [vmem:[%s6232 + $0x70] sm:$0xff]
  %v6248 = vld [vmem:[%s6232 + $0x78] sm:$0xff]
  %v6249 = vld [vmem:[%s6232 + $0x80] sm:$0xff]
  %v6250 = vld [vmem:[%s6232 + $0x88] sm:$0xff]
  %v6251 = vld [vmem:[%s6232 + $0x90] sm:$0xff]
  %v6252 = vld [vmem:[%s6232 + $0x98] sm:$0xff]
  %v6253 = vld [vmem:[%s6232 + $0xa0] sm:$0xff]
  %v6254 = vld [vmem:[%s6232 + $0xa8] sm:$0xff]
  %v6255 = vld [vmem:[%s6232 + $0xb0] sm:$0xff]
  %v6256 = vld [vmem:[%s6232 + $0xb8] sm:$0xff]
  %v6257 = vld [vmem:[%s6232 + $0xc0] sm:$0xff]
  %v6258 = vld [vmem:[%s6232 + $0xc8] sm:$0xff]
  %v6259 = vld [vmem:[%s6232 + $0xd0] sm:$0xff]
  %v6260 = vld [vmem:[%s6232 + $0xd8] sm:$0xff]
  %v6261 = vld [vmem:[%s6232 + $0xe0] sm:$0xff]
  %v6262 = vld [vmem:[%s6232 + $0xe8] sm:$0xff]
  %v6263 = vld [vmem:[%s6232 + $0xf0] sm:$0xff]
  %v6264 = vld [vmem:[%s6232 + $0xf8] sm:$0xff]
  %s6265 = scalar_lea.vmem %s4, 3
  %v6266 = vld [vmem:[%s6265] ss:$8 sm:$0x3]
  %v6268 = vlaneseq
  %v6269 = vshrl.u32 %v6268, 7
  %v6270 = vsub.s32 0, %v6269
  %v6271 = vrot.slane %v6266, %v6270
  %v6272 = vlaneseq
  %v6273 = vshrl.u32 %v6272, 7
  %v6274 = vsub.s32 1, %v6273
  %v6275 = vrot.slane %v6266, %v6274
  %v6310 = vunpack.c.l.b16 %v6233
  %v6311 = vunpack.c.h.b16 %v6233
  %v6312 = vunpack.c.l.b16 %v6234
  %v6313 = vunpack.c.h.b16 %v6234
  %v6314 = vunpack.c.l.b16 %v6235
  %v6315 = vunpack.c.h.b16 %v6235
  %v6316 = vunpack.c.l.b16 %v6236
  %v6317 = vunpack.c.h.b16 %v6236
  %v6318 = vunpack.c.l.b16 %v6237
  %v6319 = vunpack.c.h.b16 %v6237
  %v6320 = vunpack.c.l.b16 %v6238
  %v6321 = vunpack.c.h.b16 %v6238
  %v6322 = vunpack.c.l.b16 %v6239
  %v6323 = vunpack.c.h.b16 %v6239
  %v6324 = vunpack.c.l.b16 %v6240
  %v6325 = vunpack.c.h.b16 %v6240
  %v6326 = vunpack.c.l.b16 %v6241
  %v6327 = vunpack.c.h.b16 %v6241
  %v6328 = vunpack.c.l.b16 %v6242
  %v6329 = vunpack.c.h.b16 %v6242
  %v6330 = vunpack.c.l.b16 %v6243
  %v6331 = vunpack.c.h.b16 %v6243
  %v6332 = vunpack.c.l.b16 %v6244
  %v6333 = vunpack.c.h.b16 %v6244
  %v6334 = vunpack.c.l.b16 %v6245
  %v6335 = vunpack.c.h.b16 %v6245
  %v6336 = vunpack.c.l.b16 %v6246
  %v6337 = vunpack.c.h.b16 %v6246
  %v6338 = vunpack.c.l.b16 %v6247
  %v6339 = vunpack.c.h.b16 %v6247
  %v6340 = vunpack.c.l.b16 %v6248
  %v6341 = vunpack.c.h.b16 %v6248
  %v6342 = vunpack.c.l.b16 %v6249
  %v6343 = vunpack.c.h.b16 %v6249
  %v6344 = vunpack.c.l.b16 %v6250
  %v6345 = vunpack.c.h.b16 %v6250
  %v6346 = vunpack.c.l.b16 %v6251
  %v6347 = vunpack.c.h.b16 %v6251
  %v6348 = vunpack.c.l.b16 %v6252
  %v6349 = vunpack.c.h.b16 %v6252
  %v6350 = vunpack.c.l.b16 %v6253
  %v6351 = vunpack.c.h.b16 %v6253
  %v6352 = vunpack.c.l.b16 %v6254
  %v6353 = vunpack.c.h.b16 %v6254
  %v6354 = vunpack.c.l.b16 %v6255
  %v6355 = vunpack.c.h.b16 %v6255
  %v6356 = vunpack.c.l.b16 %v6256
  %v6357 = vunpack.c.h.b16 %v6256
  %v6358 = vunpack.c.l.b16 %v6257
  %v6359 = vunpack.c.h.b16 %v6257
  %v6360 = vunpack.c.l.b16 %v6258
  %v6361 = vunpack.c.h.b16 %v6258
  %v6362 = vunpack.c.l.b16 %v6259
  %v6363 = vunpack.c.h.b16 %v6259
  %v6364 = vunpack.c.l.b16 %v6260
  %v6365 = vunpack.c.h.b16 %v6260
  %v6366 = vunpack.c.l.b16 %v6261
  %v6367 = vunpack.c.h.b16 %v6261
  %v6368 = vunpack.c.l.b16 %v6262
  %v6369 = vunpack.c.h.b16 %v6262
  %v6370 = vunpack.c.l.b16 %v6263
  %v6371 = vunpack.c.h.b16 %v6263
  %v6372 = vunpack.c.l.b16 %v6264
  %v6373 = vunpack.c.h.b16 %v6264
  %v6374 = vpack.c.b16 %v6312, %v6310
  %v6375 = vpack.c.b16 %v6313, %v6311
  %v6376 = vpack.c.b16 %v6316, %v6314
  %v6377 = vpack.c.b16 %v6317, %v6315
  %v6378 = vpack.c.b16 %v6320, %v6318
  %v6379 = vpack.c.b16 %v6321, %v6319
  %v6380 = vpack.c.b16 %v6324, %v6322
  %v6381 = vpack.c.b16 %v6325, %v6323
  %v6382 = vpack.c.b16 %v6328, %v6326
  %v6383 = vpack.c.b16 %v6329, %v6327
  %v6384 = vpack.c.b16 %v6332, %v6330
  %v6385 = vpack.c.b16 %v6333, %v6331
  %v6386 = vpack.c.b16 %v6336, %v6334
  %v6387 = vpack.c.b16 %v6337, %v6335
  %v6388 = vpack.c.b16 %v6340, %v6338
  %v6389 = vpack.c.b16 %v6341, %v6339
  %v6390 = vpack.c.b16 %v6344, %v6342
  %v6391 = vpack.c.b16 %v6345, %v6343
  %v6392 = vpack.c.b16 %v6348, %v6346
  %v6393 = vpack.c.b16 %v6349, %v6347
  %v6394 = vpack.c.b16 %v6352, %v6350
  %v6395 = vpack.c.b16 %v6353, %v6351
  %v6396 = vpack.c.b16 %v6356, %v6354
  %v6397 = vpack.c.b16 %v6357, %v6355
  %v6398 = vpack.c.b16 %v6360, %v6358
  %v6399 = vpack.c.b16 %v6361, %v6359
  %v6400 = vpack.c.b16 %v6364, %v6362
  %v6401 = vpack.c.b16 %v6365, %v6363
  %v6402 = vpack.c.b16 %v6368, %v6366
  %v6403 = vpack.c.b16 %v6369, %v6367
  %v6404 = vpack.c.b16 %v6372, %v6370
  %v6405 = vpack.c.b16 %v6373, %v6371
  %6438 = vmatprep.subr.bf16.mxu0 %v6389
  %6439 = vmatpush1.bf16.msra.mxu0 %v6388
  %6440 = vmatprep.subr.bf16.mxu0 %v6387
  %6441 = vmatpush1.bf16.msra.mxu0 %v6386
  %6442 = vmatprep.subr.bf16.mxu0 %v6385
  %6443 = vmatpush1.bf16.msra.mxu0 %v6384
  %6444 = vmatprep.subr.bf16.mxu0 %v6383
  %6445 = vmatpush1.bf16.msra.mxu0 %v6382
  %6446 = vmatprep.subr.bf16.mxu0 %v6381
  %6447 = vmatpush1.bf16.msra.mxu0 %v6380
  %6448 = vmatprep.subr.bf16.mxu0 %v6379
  %6449 = vmatpush1.bf16.msra.mxu0 %v6378
  %6450 = vmatprep.subr.bf16.mxu0 %v6377
  %6451 = vmatpush1.bf16.msra.mxu0 %v6376
  %6452 = vmatprep.subr.bf16.mxu0 %v6375
  %6453 = vmatpush1.bf16.msra.mxu0 %v6374
  %6454 = vmatprep.subr.bf16.mxu0 %v6405
  %6455 = vmatpush2.bf16.msra.mxu0 %v6404
  %6456 = vmatprep.subr.bf16.mxu0 %v6403
  %6457 = vmatpush2.bf16.msra.mxu0 %v6402
  %6458 = vmatprep.subr.bf16.mxu0 %v6401
  %6459 = vmatpush2.bf16.msra.mxu0 %v6400
  %6460 = vmatprep.subr.bf16.mxu0 %v6399
  %6461 = vmatpush2.bf16.msra.mxu0 %v6398
  %6462 = vmatprep.subr.bf16.mxu0 %v6397
  %6463 = vmatpush2.bf16.msra.mxu0 %v6396
  %6464 = vmatprep.subr.bf16.mxu0 %v6395
  %6465 = vmatpush2.bf16.msra.mxu0 %v6394
  %6466 = vmatprep.subr.bf16.mxu0 %v6393
  %6467 = vmatpush2.bf16.msra.mxu0 %v6392
  %6468 = vmatprep.subr.bf16.mxu0 %v6391
  %6469 = vmatpush2.bf16.msra.mxu0 %v6390
  %6470 = vmatprep.mubr.bf16.mxu0 %v6169
  %6471 = vmatmul.mubr.bf16.gmra.mxu0 %v6168
  %v6472 = vpop.f32.mrf.mxu0
  %v6473 = vadd.f32 %v6271, %v6472
  %v6474 = vpop.f32.mrf.mxu0
  %v6475 = vadd.f32 %v6275, %v6474
  %v6476 = vpop.f32.mrf.mxu0
  %v6477 = vadd.f32 %v6271, %v6476
  %v6478 = vpop.f32.mrf.mxu0
  %v6479 = vadd.f32 %v6275, %v6478
  %6480 = vmatprep.mubr.bf16.mxu0 %v6171
  %6481 = vmatmul.mubr.bf16.gmra.mxu0 %v6170
  %v6482 = vpop.f32.mrf.mxu0
  %v6483 = vadd.f32 %v6271, %v6482
  %v6484 = vpop.f32.mrf.mxu0
  %v6485 = vadd.f32 %v6275, %v6484
  %v6486 = vpop.f32.mrf.mxu0
  %v6487 = vadd.f32 %v6271, %v6486
  %v6488 = vpop.f32.mrf.mxu0
  %v6489 = vadd.f32 %v6275, %v6488
  %6490 = vmatprep.mubr.bf16.mxu0 %v6173
  %6491 = vmatmul.mubr.bf16.gmra.mxu0 %v6172
  %v6492 = vpop.f32.mrf.mxu0
  %v6493 = vadd.f32 %v6271, %v6492
  %v6494 = vpop.f32.mrf.mxu0
  %v6495 = vadd.f32 %v6275, %v6494
  %v6496 = vpop.f32.mrf.mxu0
  %v6497 = vadd.f32 %v6271, %v6496
  %v6498 = vpop.f32.mrf.mxu0
  %v6499 = vadd.f32 %v6275, %v6498
  %6500 = vmatprep.mubr.bf16.mxu0 %v6175
  %6501 = vmatmul.mubr.bf16.gmra.mxu0 %v6174
  %v6502 = vpop.f32.mrf.mxu0
  %v6503 = vadd.f32 %v6271, %v6502
  %v6504 = vpop.f32.mrf.mxu0
  %v6505 = vadd.f32 %v6275, %v6504
  %v6506 = vpop.f32.mrf.mxu0
  %v6507 = vadd.f32 %v6271, %v6506
  %v6508 = vpop.f32.mrf.mxu0
  %v6509 = vadd.f32 %v6275, %v6508
  %6510 = vmatprep.mubr.bf16.mxu0 %v6177
  %6511 = vmatmul.mubr.bf16.gmra.mxu0 %v6176
  %v6512 = vpop.f32.mrf.mxu0
  %v6513 = vadd.f32 %v6271, %v6512
  %v6514 = vpop.f32.mrf.mxu0
  %v6515 = vadd.f32 %v6275, %v6514
  %v6516 = vpop.f32.mrf.mxu0
  %v6517 = vadd.f32 %v6271, %v6516
  %v6518 = vpop.f32.mrf.mxu0
  %v6519 = vadd.f32 %v6275, %v6518
  %6520 = vmatprep.mubr.bf16.mxu0 %v6179
  %6521 = vmatmul.mubr.bf16.gmra.mxu0 %v6178
  %v6522 = vpop.f32.mrf.mxu0
  %v6523 = vadd.f32 %v6271, %v6522
  %v6524 = vpop.f32.mrf.mxu0
  %v6525 = vadd.f32 %v6275, %v6524
  %v6526 = vpop.f32.mrf.mxu0
  %v6527 = vadd.f32 %v6271, %v6526
  %v6528 = vpop.f32.mrf.mxu0
  %v6529 = vadd.f32 %v6275, %v6528
  %6530 = vmatprep.mubr.bf16.mxu0 %v6181
  %6531 = vmatmul.mubr.bf16.gmra.mxu0 %v6180
  %v6532 = vpop.f32.mrf.mxu0
  %v6533 = vadd.f32 %v6271, %v6532
  %v6534 = vpop.f32.mrf.mxu0
  %v6535 = vadd.f32 %v6275, %v6534
  %v6536 = vpop.f32.mrf.mxu0
  %v6537 = vadd.f32 %v6271, %v6536
  %v6538 = vpop.f32.mrf.mxu0
  %v6539 = vadd.f32 %v6275, %v6538
  %6540 = vmatprep.mubr.bf16.mxu0 %v6183
  %6541 = vmatmul.mubr.bf16.gmra.mxu0 %v6182
  %v6542 = vpop.f32.mrf.mxu0
  %v6543 = vadd.f32 %v6271, %v6542
  %v6544 = vpop.f32.mrf.mxu0
  %v6545 = vadd.f32 %v6275, %v6544
  %v6546 = vpop.f32.mrf.mxu0
  %v6547 = vadd.f32 %v6271, %v6546
  %v6548 = vpop.f32.mrf.mxu0
  %v6549 = vadd.f32 %v6275, %v6548
  %6550 = vmatprep.mubr.bf16.mxu0 %v6185
  %6551 = vmatmul.mubr.bf16.gmra.mxu0 %v6184
  %v6552 = vpop.f32.mrf.mxu0
  %v6553 = vadd.f32 %v6271, %v6552
  %v6554 = vpop.f32.mrf.mxu0
  %v6555 = vadd.f32 %v6275, %v6554
  %v6556 = vpop.f32.mrf.mxu0
  %v6557 = vadd.f32 %v6271, %v6556
  %v6558 = vpop.f32.mrf.mxu0
  %v6559 = vadd.f32 %v6275, %v6558
  %6560 = vmatprep.mubr.bf16.mxu0 %v6187
  %6561 = vmatmul.mubr.bf16.gmra.mxu0 %v6186
  %v6562 = vpop.f32.mrf.mxu0
  %v6563 = vadd.f32 %v6271, %v6562
  %v6564 = vpop.f32.mrf.mxu0
  %v6565 = vadd.f32 %v6275, %v6564
  %v6566 = vpop.f32.mrf.mxu0
  %v6567 = vadd.f32 %v6271, %v6566
  %v6568 = vpop.f32.mrf.mxu0
  %v6569 = vadd.f32 %v6275, %v6568
  %6570 = vmatprep.mubr.bf16.mxu0 %v6189
  %6571 = vmatmul.mubr.bf16.gmra.mxu0 %v6188
  %v6572 = vpop.f32.mrf.mxu0
  %v6573 = vadd.f32 %v6271, %v6572
  %v6574 = vpop.f32.mrf.mxu0
  %v6575 = vadd.f32 %v6275, %v6574
  %v6576 = vpop.f32.mrf.mxu0
  %v6577 = vadd.f32 %v6271, %v6576
  %v6578 = vpop.f32.mrf.mxu0
  %v6579 = vadd.f32 %v6275, %v6578
  %6580 = vmatprep.mubr.bf16.mxu0 %v6191
  %6581 = vmatmul.mubr.bf16.gmra.mxu0 %v6190
  %v6582 = vpop.f32.mrf.mxu0
  %v6583 = vadd.f32 %v6271, %v6582
  %v6584 = vpop.f32.mrf.mxu0
  %v6585 = vadd.f32 %v6275, %v6584
  %v6586 = vpop.f32.mrf.mxu0
  %v6587 = vadd.f32 %v6271, %v6586
  %v6588 = vpop.f32.mrf.mxu0
  %v6589 = vadd.f32 %v6275, %v6588
  %6590 = vmatprep.mubr.bf16.mxu0 %v6193
  %6591 = vmatmul.mubr.bf16.gmra.mxu0 %v6192
  %v6592 = vpop.f32.mrf.mxu0
  %v6593 = vadd.f32 %v6271, %v6592
  %v6594 = vpop.f32.mrf.mxu0
  %v6595 = vadd.f32 %v6275, %v6594
  %v6596 = vpop.f32.mrf.mxu0
  %v6597 = vadd.f32 %v6271, %v6596
  %v6598 = vpop.f32.mrf.mxu0
  %v6599 = vadd.f32 %v6275, %v6598
  %6600 = vmatprep.mubr.bf16.mxu0 %v6195
  %6601 = vmatmul.mubr.bf16.gmra.mxu0 %v6194
  %v6602 = vpop.f32.mrf.mxu0
  %v6603 = vadd.f32 %v6271, %v6602
  %v6604 = vpop.f32.mrf.mxu0
  %v6605 = vadd.f32 %v6275, %v6604
  %v6606 = vpop.f32.mrf.mxu0
  %v6607 = vadd.f32 %v6271, %v6606
  %v6608 = vpop.f32.mrf.mxu0
  %v6609 = vadd.f32 %v6275, %v6608
  %6610 = vmatprep.mubr.bf16.mxu0 %v6197
  %6611 = vmatmul.mubr.bf16.gmra.mxu0 %v6196
  %v6612 = vpop.f32.mrf.mxu0
  %v6613 = vadd.f32 %v6271, %v6612
  %v6614 = vpop.f32.mrf.mxu0
  %v6615 = vadd.f32 %v6275, %v6614
  %v6616 = vpop.f32.mrf.mxu0
  %v6617 = vadd.f32 %v6271, %v6616
  %v6618 = vpop.f32.mrf.mxu0
  %v6619 = vadd.f32 %v6275, %v6618
  %6620 = vmatprep.mubr.bf16.mxu0 %v6199
  %6621 = vmatmul.mubr.bf16.gmra.mxu0 %v6198
  %v6622 = vpop.f32.mrf.mxu0
  %v6623 = vadd.f32 %v6271, %v6622
  %v6624 = vpop.f32.mrf.mxu0
  %v6625 = vadd.f32 %v6275, %v6624
  %v6626 = vpop.f32.mrf.mxu0
  %v6627 = vadd.f32 %v6271, %v6626
  %v6628 = vpop.f32.mrf.mxu0
  %v6629 = vadd.f32 %v6275, %v6628
  %6630 = vmatprep.mubr.bf16.mxu0 %v6201
  %6631 = vmatmul.mubr.bf16.gmra.mxu0 %v6200
  %v6632 = vpop.f32.mrf.mxu0
  %v6633 = vadd.f32 %v6271, %v6632
  %v6634 = vpop.f32.mrf.mxu0
  %v6635 = vadd.f32 %v6275, %v6634
  %v6636 = vpop.f32.mrf.mxu0
  %v6637 = vadd.f32 %v6271, %v6636
  %v6638 = vpop.f32.mrf.mxu0
  %v6639 = vadd.f32 %v6275, %v6638
  %6640 = vmatprep.mubr.bf16.mxu0 %v6203
  %6641 = vmatmul.mubr.bf16.gmra.mxu0 %v6202
  %v6642 = vpop.f32.mrf.mxu0
  %v6643 = vadd.f32 %v6271, %v6642
  %v6644 = vpop.f32.mrf.mxu0
  %v6645 = vadd.f32 %v6275, %v6644
  %v6646 = vpop.f32.mrf.mxu0
  %v6647 = vadd.f32 %v6271, %v6646
  %v6648 = vpop.f32.mrf.mxu0
  %v6649 = vadd.f32 %v6275, %v6648
  %6650 = vmatprep.mubr.bf16.mxu0 %v6205
  %6651 = vmatmul.mubr.bf16.gmra.mxu0 %v6204
  %v6652 = vpop.f32.mrf.mxu0
  %v6653 = vadd.f32 %v6271, %v6652
  %v6654 = vpop.f32.mrf.mxu0
  %v6655 = vadd.f32 %v6275, %v6654
  %v6656 = vpop.f32.mrf.mxu0
  %v6657 = vadd.f32 %v6271, %v6656
  %v6658 = vpop.f32.mrf.mxu0
  %v6659 = vadd.f32 %v6275, %v6658
  %6660 = vmatprep.mubr.bf16.mxu0 %v6207
  %6661 = vmatmul.mubr.bf16.gmra.mxu0 %v6206
  %v6662 = vpop.f32.mrf.mxu0
  %v6663 = vadd.f32 %v6271, %v6662
  %v6664 = vpop.f32.mrf.mxu0
  %v6665 = vadd.f32 %v6275, %v6664
  %v6666 = vpop.f32.mrf.mxu0
  %v6667 = vadd.f32 %v6271, %v6666
  %v6668 = vpop.f32.mrf.mxu0
  %v6669 = vadd.f32 %v6275, %v6668
  %6670 = vmatprep.mubr.bf16.mxu0 %v6209
  %6671 = vmatmul.mubr.bf16.gmra.mxu0 %v6208
  %v6672 = vpop.f32.mrf.mxu0
  %v6673 = vadd.f32 %v6271, %v6672
  %v6674 = vpop.f32.mrf.mxu0
  %v6675 = vadd.f32 %v6275, %v6674
  %v6676 = vpop.f32.mrf.mxu0
  %v6677 = vadd.f32 %v6271, %v6676
  %v6678 = vpop.f32.mrf.mxu0
  %v6679 = vadd.f32 %v6275, %v6678
  %6680 = vmatprep.mubr.bf16.mxu0 %v6211
  %6681 = vmatmul.mubr.bf16.gmra.mxu0 %v6210
  %v6682 = vpop.f32.mrf.mxu0
  %v6683 = vadd.f32 %v6271, %v6682
  %v6684 = vpop.f32.mrf.mxu0
  %v6685 = vadd.f32 %v6275, %v6684
  %v6686 = vpop.f32.mrf.mxu0
  %v6687 = vadd.f32 %v6271, %v6686
  %v6688 = vpop.f32.mrf.mxu0
  %v6689 = vadd.f32 %v6275, %v6688
  %6690 = vmatprep.mubr.bf16.mxu0 %v6213
  %6691 = vmatmul.mubr.bf16.gmra.mxu0 %v6212
  %v6692 = vpop.f32.mrf.mxu0
  %v6693 = vadd.f32 %v6271, %v6692
  %v6694 = vpop.f32.mrf.mxu0
  %v6695 = vadd.f32 %v6275, %v6694
  %v6696 = vpop.f32.mrf.mxu0
  %v6697 = vadd.f32 %v6271, %v6696
  %v6698 = vpop.f32.mrf.mxu0
  %v6699 = vadd.f32 %v6275, %v6698
  %6700 = vmatprep.mubr.bf16.mxu0 %v6215
  %6701 = vmatmul.mubr.bf16.gmra.mxu0 %v6214
  %v6702 = vpop.f32.mrf.mxu0
  %v6703 = vadd.f32 %v6271, %v6702
  %v6704 = vpop.f32.mrf.mxu0
  %v6705 = vadd.f32 %v6275, %v6704
  %v6706 = vpop.f32.mrf.mxu0
  %v6707 = vadd.f32 %v6271, %v6706
  %v6708 = vpop.f32.mrf.mxu0
  %v6709 = vadd.f32 %v6275, %v6708
  %6710 = vmatprep.mubr.bf16.mxu0 %v6217
  %6711 = vmatmul.mubr.bf16.gmra.mxu0 %v6216
  %v6712 = vpop.f32.mrf.mxu0
  %v6713 = vadd.f32 %v6271, %v6712
  %v6714 = vpop.f32.mrf.mxu0
  %v6715 = vadd.f32 %v6275, %v6714
  %v6716 = vpop.f32.mrf.mxu0
  %v6717 = vadd.f32 %v6271, %v6716
  %v6718 = vpop.f32.mrf.mxu0
  %v6719 = vadd.f32 %v6275, %v6718
  %6720 = vmatprep.mubr.bf16.mxu0 %v6219
  %6721 = vmatmul.mubr.bf16.gmra.mxu0 %v6218
  %v6722 = vpop.f32.mrf.mxu0
  %v6723 = vadd.f32 %v6271, %v6722
  %v6724 = vpop.f32.mrf.mxu0
  %v6725 = vadd.f32 %v6275, %v6724
  %v6726 = vpop.f32.mrf.mxu0
  %v6727 = vadd.f32 %v6271, %v6726
  %v6728 = vpop.f32.mrf.mxu0
  %v6729 = vadd.f32 %v6275, %v6728
  %6730 = vmatprep.mubr.bf16.mxu0 %v6221
  %6731 = vmatmul.mubr.bf16.gmra.mxu0 %v6220
  %v6732 = vpop.f32.mrf.mxu0
  %v6733 = vadd.f32 %v6271, %v6732
  %v6734 = vpop.f32.mrf.mxu0
  %v6735 = vadd.f32 %v6275, %v6734
  %v6736 = vpop.f32.mrf.mxu0
  %v6737 = vadd.f32 %v6271, %v6736
  %v6738 = vpop.f32.mrf.mxu0
  %v6739 = vadd.f32 %v6275, %v6738
  %6740 = vmatprep.mubr.bf16.mxu0 %v6223
  %6741 = vmatmul.mubr.bf16.gmra.mxu0 %v6222
  %v6742 = vpop.f32.mrf.mxu0
  %v6743 = vadd.f32 %v6271, %v6742
  %v6744 = vpop.f32.mrf.mxu0
  %v6745 = vadd.f32 %v6275, %v6744
  %v6746 = vpop.f32.mrf.mxu0
  %v6747 = vadd.f32 %v6271, %v6746
  %v6748 = vpop.f32.mrf.mxu0
  %v6749 = vadd.f32 %v6275, %v6748
  %6750 = vmatprep.mubr.bf16.mxu0 %v6225
  %6751 = vmatmul.mubr.bf16.gmra.mxu0 %v6224
  %v6752 = vpop.f32.mrf.mxu0
  %v6753 = vadd.f32 %v6271, %v6752
  %v6754 = vpop.f32.mrf.mxu0
  %v6755 = vadd.f32 %v6275, %v6754
  %v6756 = vpop.f32.mrf.mxu0
  %v6757 = vadd.f32 %v6271, %v6756
  %v6758 = vpop.f32.mrf.mxu0
  %v6759 = vadd.f32 %v6275, %v6758
  %6760 = vmatprep.mubr.bf16.mxu0 %v6227
  %6761 = vmatmul.mubr.bf16.gmra.mxu0 %v6226
  %v6762 = vpop.f32.mrf.mxu0
  %v6763 = vadd.f32 %v6271, %v6762
  %v6764 = vpop.f32.mrf.mxu0
  %v6765 = vadd.f32 %v6275, %v6764
  %v6766 = vpop.f32.mrf.mxu0
  %v6767 = vadd.f32 %v6271, %v6766
  %v6768 = vpop.f32.mrf.mxu0
  %v6769 = vadd.f32 %v6275, %v6768
  %6770 = vmatprep.mubr.bf16.mxu0 %v6229
  %6771 = vmatmul.mubr.bf16.gmra.mxu0 %v6228
  %v6772 = vpop.f32.mrf.mxu0
  %v6773 = vadd.f32 %v6271, %v6772
  %v6774 = vpop.f32.mrf.mxu0
  %v6775 = vadd.f32 %v6275, %v6774
  %v6776 = vpop.f32.mrf.mxu0
  %v6777 = vadd.f32 %v6271, %v6776
  %v6778 = vpop.f32.mrf.mxu0
  %v6779 = vadd.f32 %v6275, %v6778
  %6780 = vmatprep.mubr.bf16.mxu0 %v6231
  %6781 = vmatmul.mubr.bf16.gmra.mxu0 %v6230
  %v6782 = vpop.f32.mrf.mxu0
  %v6783 = vadd.f32 %v6271, %v6782
  %v6784 = vpop.f32.mrf.mxu0
  %v6785 = vadd.f32 %v6275, %v6784
  %v6786 = vpop.f32.mrf.mxu0
  %v6787 = vadd.f32 %v6271, %v6786
  %v6788 = vpop.f32.mrf.mxu0
  %v6789 = vadd.f32 %v6275, %v6788
  %6790 = vdwg.mxu0
  %vm6791 = vcmp.gt.f32.partialorder %v6473, 0.0
  %vm6792 = vcmp.gt.f32.partialorder %v6475, 0.0
  %vm6793 = vcmp.gt.f32.partialorder %v6477, 0.0
  %vm6794 = vcmp.gt.f32.partialorder %v6479, 0.0
  %vm6795 = vcmp.gt.f32.partialorder %v6483, 0.0
  %vm6796 = vcmp.gt.f32.partialorder %v6485, 0.0
  %vm6797 = vcmp.gt.f32.partialorder %v6487, 0.0
  %vm6798 = vcmp.gt.f32.partialorder %v6489, 0.0
  %vm6799 = vcmp.gt.f32.partialorder %v6493, 0.0
  %vm6800 = vcmp.gt.f32.partialorder %v6495, 0.0
  %vm6801 = vcmp.gt.f32.partialorder %v6497, 0.0
  %vm6802 = vcmp.gt.f32.partialorder %v6499, 0.0
  %vm6803 = vcmp.gt.f32.partialorder %v6503, 0.0
  %vm6804 = vcmp.gt.f32.partialorder %v6505, 0.0
  %vm6805 = vcmp.gt.f32.partialorder %v6507, 0.0
  %vm6806 = vcmp.gt.f32.partialorder %v6509, 0.0
  %vm6807 = vcmp.gt.f32.partialorder %v6513, 0.0
  %vm6808 = vcmp.gt.f32.partialorder %v6515, 0.0
  %vm6809 = vcmp.gt.f32.partialorder %v6517, 0.0
  %vm6810 = vcmp.gt.f32.partialorder %v6519, 0.0
  %vm6811 = vcmp.gt.f32.partialorder %v6523, 0.0
  %vm6812 = vcmp.gt.f32.partialorder %v6525, 0.0
  %vm6813 = vcmp.gt.f32.partialorder %v6527, 0.0
  %vm6814 = vcmp.gt.f32.partialorder %v6529, 0.0
  %vm6815 = vcmp.gt.f32.partialorder %v6533, 0.0
  %vm6816 = vcmp.gt.f32.partialorder %v6535, 0.0
  %vm6817 = vcmp.gt.f32.partialorder %v6537, 0.0
  %vm6818 = vcmp.gt.f32.partialorder %v6539, 0.0
  %vm6819 = vcmp.gt.f32.partialorder %v6543, 0.0
  %vm6820 = vcmp.gt.f32.partialorder %v6545, 0.0
  %vm6821 = vcmp.gt.f32.partialorder %v6547, 0.0
  %vm6822 = vcmp.gt.f32.partialorder %v6549, 0.0
  %vm6823 = vcmp.gt.f32.partialorder %v6553, 0.0
  %vm6824 = vcmp.gt.f32.partialorder %v6555, 0.0
  %vm6825 = vcmp.gt.f32.partialorder %v6557, 0.0
  %vm6826 = vcmp.gt.f32.partialorder %v6559, 0.0
  %vm6827 = vcmp.gt.f32.partialorder %v6563, 0.0
  %vm6828 = vcmp.gt.f32.partialorder %v6565, 0.0
  %vm6829 = vcmp.gt.f32.partialorder %v6567, 0.0
  %vm6830 = vcmp.gt.f32.partialorder %v6569, 0.0
  %vm6831 = vcmp.gt.f32.partialorder %v6573, 0.0
  %vm6832 = vcmp.gt.f32.partialorder %v6575, 0.0
  %vm6833 = vcmp.gt.f32.partialorder %v6577, 0.0
  %vm6834 = vcmp.gt.f32.partialorder %v6579, 0.0
  %vm6835 = vcmp.gt.f32.partialorder %v6583, 0.0
  %vm6836 = vcmp.gt.f32.partialorder %v6585, 0.0
  %vm6837 = vcmp.gt.f32.partialorder %v6587, 0.0
  %vm6838 = vcmp.gt.f32.partialorder %v6589, 0.0
  %vm6839 = vcmp.gt.f32.partialorder %v6593, 0.0
  %vm6840 = vcmp.gt.f32.partialorder %v6595, 0.0
  %vm6841 = vcmp.gt.f32.partialorder %v6597, 0.0
  %vm6842 = vcmp.gt.f32.partialorder %v6599, 0.0
  %vm6843 = vcmp.gt.f32.partialorder %v6603, 0.0
  %vm6844 = vcmp.gt.f32.partialorder %v6605, 0.0
  %vm6845 = vcmp.gt.f32.partialorder %v6607, 0.0
  %vm6846 = vcmp.gt.f32.partialorder %v6609, 0.0
  %vm6847 = vcmp.gt.f32.partialorder %v6613, 0.0
  %vm6848 = vcmp.gt.f32.partialorder %v6615, 0.0
  %vm6849 = vcmp.gt.f32.partialorder %v6617, 0.0
  %vm6850 = vcmp.gt.f32.partialorder %v6619, 0.0
  %vm6851 = vcmp.gt.f32.partialorder %v6623, 0.0
  %vm6852 = vcmp.gt.f32.partialorder %v6625, 0.0
  %vm6853 = vcmp.gt.f32.partialorder %v6627, 0.0
  %vm6854 = vcmp.gt.f32.partialorder %v6629, 0.0
  %vm6855 = vcmp.gt.f32.partialorder %v6633, 0.0
  %vm6856 = vcmp.gt.f32.partialorder %v6635, 0.0
  %vm6857 = vcmp.gt.f32.partialorder %v6637, 0.0
  %vm6858 = vcmp.gt.f32.partialorder %v6639, 0.0
  %vm6859 = vcmp.gt.f32.partialorder %v6643, 0.0
  %vm6860 = vcmp.gt.f32.partialorder %v6645, 0.0
  %vm6861 = vcmp.gt.f32.partialorder %v6647, 0.0
  %vm6862 = vcmp.gt.f32.partialorder %v6649, 0.0
  %vm6863 = vcmp.gt.f32.partialorder %v6653, 0.0
  %vm6864 = vcmp.gt.f32.partialorder %v6655, 0.0
  %vm6865 = vcmp.gt.f32.partialorder %v6657, 0.0
  %vm6866 = vcmp.gt.f32.partialorder %v6659, 0.0
  %vm6867 = vcmp.gt.f32.partialorder %v6663, 0.0
  %vm6868 = vcmp.gt.f32.partialorder %v6665, 0.0
  %vm6869 = vcmp.gt.f32.partialorder %v6667, 0.0
  %vm6870 = vcmp.gt.f32.partialorder %v6669, 0.0
  %vm6871 = vcmp.gt.f32.partialorder %v6673, 0.0
  %vm6872 = vcmp.gt.f32.partialorder %v6675, 0.0
  %vm6873 = vcmp.gt.f32.partialorder %v6677, 0.0
  %vm6874 = vcmp.gt.f32.partialorder %v6679, 0.0
  %vm6875 = vcmp.gt.f32.partialorder %v6683, 0.0
  %vm6876 = vcmp.gt.f32.partialorder %v6685, 0.0
  %vm6877 = vcmp.gt.f32.partialorder %v6687, 0.0
  %vm6878 = vcmp.gt.f32.partialorder %v6689, 0.0
  %vm6879 = vcmp.gt.f32.partialorder %v6693, 0.0
  %vm6880 = vcmp.gt.f32.partialorder %v6695, 0.0
  %vm6881 = vcmp.gt.f32.partialorder %v6697, 0.0
  %vm6882 = vcmp.gt.f32.partialorder %v6699, 0.0
  %vm6883 = vcmp.gt.f32.partialorder %v6703, 0.0
  %vm6884 = vcmp.gt.f32.partialorder %v6705, 0.0
  %vm6885 = vcmp.gt.f32.partialorder %v6707, 0.0
  %vm6886 = vcmp.gt.f32.partialorder %v6709, 0.0
  %vm6887 = vcmp.gt.f32.partialorder %v6713, 0.0
  %vm6888 = vcmp.gt.f32.partialorder %v6715, 0.0
  %vm6889 = vcmp.gt.f32.partialorder %v6717, 0.0
  %vm6890 = vcmp.gt.f32.partialorder %v6719, 0.0
  %vm6891 = vcmp.gt.f32.partialorder %v6723, 0.0
  %vm6892 = vcmp.gt.f32.partialorder %v6725, 0.0
  %vm6893 = vcmp.gt.f32.partialorder %v6727, 0.0
  %vm6894 = vcmp.gt.f32.partialorder %v6729, 0.0
  %vm6895 = vcmp.gt.f32.partialorder %v6733, 0.0
  %vm6896 = vcmp.gt.f32.partialorder %v6735, 0.0
  %vm6897 = vcmp.gt.f32.partialorder %v6737, 0.0
  %vm6898 = vcmp.gt.f32.partialorder %v6739, 0.0
  %vm6899 = vcmp.gt.f32.partialorder %v6743, 0.0
  %vm6900 = vcmp.gt.f32.partialorder %v6745, 0.0
  %vm6901 = vcmp.gt.f32.partialorder %v6747, 0.0
  %vm6902 = vcmp.gt.f32.partialorder %v6749, 0.0
  %vm6903 = vcmp.gt.f32.partialorder %v6753, 0.0
  %vm6904 = vcmp.gt.f32.partialorder %v6755, 0.0
  %vm6905 = vcmp.gt.f32.partialorder %v6757, 0.0
  %vm6906 = vcmp.gt.f32.partialorder %v6759, 0.0
  %vm6907 = vcmp.gt.f32.partialorder %v6763, 0.0
  %vm6908 = vcmp.gt.f32.partialorder %v6765, 0.0
  %vm6909 = vcmp.gt.f32.partialorder %v6767, 0.0
  %vm6910 = vcmp.gt.f32.partialorder %v6769, 0.0
  %vm6911 = vcmp.gt.f32.partialorder %v6773, 0.0
  %vm6912 = vcmp.gt.f32.partialorder %v6775, 0.0
  %vm6913 = vcmp.gt.f32.partialorder %v6777, 0.0
  %vm6914 = vcmp.gt.f32.partialorder %v6779, 0.0
  %vm6915 = vcmp.gt.f32.partialorder %v6783, 0.0
  %vm6916 = vcmp.gt.f32.partialorder %v6785, 0.0
  %vm6917 = vcmp.gt.f32.partialorder %v6787, 0.0
  %vm6918 = vcmp.gt.f32.partialorder %v6789, 0.0
  %v6919 = vmin.f32 %v6473, 0.0
  %v6920 = vmin.f32 %v6475, 0.0
  %v6921 = vmin.f32 %v6477, 0.0
  %v6922 = vmin.f32 %v6479, 0.0
  %v6923 = vmin.f32 %v6483, 0.0
  %v6924 = vmin.f32 %v6485, 0.0
  %v6925 = vmin.f32 %v6487, 0.0
  %v6926 = vmin.f32 %v6489, 0.0
  %v6927 = vmin.f32 %v6493, 0.0
  %v6928 = vmin.f32 %v6495, 0.0
  %v6929 = vmin.f32 %v6497, 0.0
  %v6930 = vmin.f32 %v6499, 0.0
  %v6931 = vmin.f32 %v6503, 0.0
  %v6932 = vmin.f32 %v6505, 0.0
  %v6933 = vmin.f32 %v6507, 0.0
  %v6934 = vmin.f32 %v6509, 0.0
  %v6935 = vmin.f32 %v6513, 0.0
  %v6936 = vmin.f32 %v6515, 0.0
  %v6937 = vmin.f32 %v6517, 0.0
  %v6938 = vmin.f32 %v6519, 0.0
  %v6939 = vmin.f32 %v6523, 0.0
  %v6940 = vmin.f32 %v6525, 0.0
  %v6941 = vmin.f32 %v6527, 0.0
  %v6942 = vmin.f32 %v6529, 0.0
  %v6943 = vmin.f32 %v6533, 0.0
  %v6944 = vmin.f32 %v6535, 0.0
  %v6945 = vmin.f32 %v6537, 0.0
  %v6946 = vmin.f32 %v6539, 0.0
  %v6947 = vmin.f32 %v6543, 0.0
  %v6948 = vmin.f32 %v6545, 0.0
  %v6949 = vmin.f32 %v6547, 0.0
  %v6950 = vmin.f32 %v6549, 0.0
  %v6951 = vmin.f32 %v6553, 0.0
  %v6952 = vmin.f32 %v6555, 0.0
  %v6953 = vmin.f32 %v6557, 0.0
  %v6954 = vmin.f32 %v6559, 0.0
  %v6955 = vmin.f32 %v6563, 0.0
  %v6956 = vmin.f32 %v6565, 0.0
  %v6957 = vmin.f32 %v6567, 0.0
  %v6958 = vmin.f32 %v6569, 0.0
  %v6959 = vmin.f32 %v6573, 0.0
  %v6960 = vmin.f32 %v6575, 0.0
  %v6961 = vmin.f32 %v6577, 0.0
  %v6962 = vmin.f32 %v6579, 0.0
  %v6963 = vmin.f32 %v6583, 0.0
  %v6964 = vmin.f32 %v6585, 0.0
  %v6965 = vmin.f32 %v6587, 0.0
  %v6966 = vmin.f32 %v6589, 0.0
  %v6967 = vmin.f32 %v6593, 0.0
  %v6968 = vmin.f32 %v6595, 0.0
  %v6969 = vmin.f32 %v6597, 0.0
  %v6970 = vmin.f32 %v6599, 0.0
  %v6971 = vmin.f32 %v6603, 0.0
  %v6972 = vmin.f32 %v6605, 0.0
  %v6973 = vmin.f32 %v6607, 0.0
  %v6974 = vmin.f32 %v6609, 0.0
  %v6975 = vmin.f32 %v6613, 0.0
  %v6976 = vmin.f32 %v6615, 0.0
  %v6977 = vmin.f32 %v6617, 0.0
  %v6978 = vmin.f32 %v6619, 0.0
  %v6979 = vmin.f32 %v6623, 0.0
  %v6980 = vmin.f32 %v6625, 0.0
  %v6981 = vmin.f32 %v6627, 0.0
  %v6982 = vmin.f32 %v6629, 0.0
  %v6983 = vmin.f32 %v6633, 0.0
  %v6984 = vmin.f32 %v6635, 0.0
  %v6985 = vmin.f32 %v6637, 0.0
  %v6986 = vmin.f32 %v6639, 0.0
  %v6987 = vmin.f32 %v6643, 0.0
  %v6988 = vmin.f32 %v6645, 0.0
  %v6989 = vmin.f32 %v6647, 0.0
  %v6990 = vmin.f32 %v6649, 0.0
  %v6991 = vmin.f32 %v6653, 0.0
  %v6992 = vmin.f32 %v6655, 0.0
  %v6993 = vmin.f32 %v6657, 0.0
  %v6994 = vmin.f32 %v6659, 0.0
  %v6995 = vmin.f32 %v6663, 0.0
  %v6996 = vmin.f32 %v6665, 0.0
  %v6997 = vmin.f32 %v6667, 0.0
  %v6998 = vmin.f32 %v6669, 0.0
  %v6999 = vmin.f32 %v6673, 0.0
  %v7000 = vmin.f32 %v6675, 0.0
  %v7001 = vmin.f32 %v6677, 0.0
  %v7002 = vmin.f32 %v6679, 0.0
  %v7003 = vmin.f32 %v6683, 0.0
  %v7004 = vmin.f32 %v6685, 0.0
  %v7005 = vmin.f32 %v6687, 0.0
  %v7006 = vmin.f32 %v6689, 0.0
  %v7007 = vmin.f32 %v6693, 0.0
  %v7008 = vmin.f32 %v6695, 0.0
  %v7009 = vmin.f32 %v6697, 0.0
  %v7010 = vmin.f32 %v6699, 0.0
  %v7011 = vmin.f32 %v6703, 0.0
  %v7012 = vmin.f32 %v6705, 0.0
  %v7013 = vmin.f32 %v6707, 0.0
  %v7014 = vmin.f32 %v6709, 0.0
  %v7015 = vmin.f32 %v6713, 0.0
  %v7016 = vmin.f32 %v6715, 0.0
  %v7017 = vmin.f32 %v6717, 0.0
  %v7018 = vmin.f32 %v6719, 0.0
  %v7019 = vmin.f32 %v6723, 0.0
  %v7020 = vmin.f32 %v6725, 0.0
  %v7021 = vmin.f32 %v6727, 0.0
  %v7022 = vmin.f32 %v6729, 0.0
  %v7023 = vmin.f32 %v6733, 0.0
  %v7024 = vmin.f32 %v6735, 0.0
  %v7025 = vmin.f32 %v6737, 0.0
  %v7026 = vmin.f32 %v6739, 0.0
  %v7027 = vmin.f32 %v6743, 0.0
  %v7028 = vmin.f32 %v6745, 0.0
  %v7029 = vmin.f32 %v6747, 0.0
  %v7030 = vmin.f32 %v6749, 0.0
  %v7031 = vmin.f32 %v6753, 0.0
  %v7032 = vmin.f32 %v6755, 0.0
  %v7033 = vmin.f32 %v6757, 0.0
  %v7034 = vmin.f32 %v6759, 0.0
  %v7035 = vmin.f32 %v6763, 0.0
  %v7036 = vmin.f32 %v6765, 0.0
  %v7037 = vmin.f32 %v6767, 0.0
  %v7038 = vmin.f32 %v6769, 0.0
  %v7039 = vmin.f32 %v6773, 0.0
  %v7040 = vmin.f32 %v6775, 0.0
  %v7041 = vmin.f32 %v6777, 0.0
  %v7042 = vmin.f32 %v6779, 0.0
  %v7043 = vmin.f32 %v6783, 0.0
  %v7044 = vmin.f32 %v6785, 0.0
  %v7045 = vmin.f32 %v6787, 0.0
  %v7046 = vmin.f32 %v6789, 0.0
  %v7047 = vmul.f32 %v6919, 1.442695
  %v7048 = vpow.pop %v7047
  %v7049 = vmul.f32 %v6920, 1.442695
  %v7050 = vpow.pop %v7049
  %v7051 = vmul.f32 %v6921, 1.442695
  %v7052 = vpow.pop %v7051
  %v7053 = vmul.f32 %v6922, 1.442695
  %v7054 = vpow.pop %v7053
  %v7055 = vmul.f32 %v6923, 1.442695
  %v7056 = vpow.pop %v7055
  %v7057 = vmul.f32 %v6924, 1.442695
  %v7058 = vpow.pop %v7057
  %v7059 = vmul.f32 %v6925, 1.442695
  %v7060 = vpow.pop %v7059
  %v7061 = vmul.f32 %v6926, 1.442695
  %v7062 = vpow.pop %v7061
  %v7063 = vmul.f32 %v6927, 1.442695
  %v7064 = vpow.pop %v7063
  %v7065 = vmul.f32 %v6928, 1.442695
  %v7066 = vpow.pop %v7065
  %v7067 = vmul.f32 %v6929, 1.442695
  %v7068 = vpow.pop %v7067
  %v7069 = vmul.f32 %v6930, 1.442695
  %v7070 = vpow.pop %v7069
  %v7071 = vmul.f32 %v6931, 1.442695
  %v7072 = vpow.pop %v7071
  %v7073 = vmul.f32 %v6932, 1.442695
  %v7074 = vpow.pop %v7073
  %v7075 = vmul.f32 %v6933, 1.442695
  %v7076 = vpow.pop %v7075
  %v7077 = vmul.f32 %v6934, 1.442695
  %v7078 = vpow.pop %v7077
  %v7079 = vmul.f32 %v6935, 1.442695
  %v7080 = vpow.pop %v7079
  %v7081 = vmul.f32 %v6936, 1.442695
  %v7082 = vpow.pop %v7081
  %v7083 = vmul.f32 %v6937, 1.442695
  %v7084 = vpow.pop %v7083
  %v7085 = vmul.f32 %v6938, 1.442695
  %v7086 = vpow.pop %v7085
  %v7087 = vmul.f32 %v6939, 1.442695
  %v7088 = vpow.pop %v7087
  %v7089 = vmul.f32 %v6940, 1.442695
  %v7090 = vpow.pop %v7089
  %v7091 = vmul.f32 %v6941, 1.442695
  %v7092 = vpow.pop %v7091
  %v7093 = vmul.f32 %v6942, 1.442695
  %v7094 = vpow.pop %v7093
  %v7095 = vmul.f32 %v6943, 1.442695
  %v7096 = vpow.pop %v7095
  %v7097 = vmul.f32 %v6944, 1.442695
  %v7098 = vpow.pop %v7097
  %v7099 = vmul.f32 %v6945, 1.442695
  %v7100 = vpow.pop %v7099
  %v7101 = vmul.f32 %v6946, 1.442695
  %v7102 = vpow.pop %v7101
  %v7103 = vmul.f32 %v6947, 1.442695
  %v7104 = vpow.pop %v7103
  %v7105 = vmul.f32 %v6948, 1.442695
  %v7106 = vpow.pop %v7105
  %v7107 = vmul.f32 %v6949, 1.442695
  %v7108 = vpow.pop %v7107
  %v7109 = vmul.f32 %v6950, 1.442695
  %v7110 = vpow.pop %v7109
  %v7111 = vmul.f32 %v6951, 1.442695
  %v7112 = vpow.pop %v7111
  %v7113 = vmul.f32 %v6952, 1.442695
  %v7114 = vpow.pop %v7113
  %v7115 = vmul.f32 %v6953, 1.442695
  %v7116 = vpow.pop %v7115
  %v7117 = vmul.f32 %v6954, 1.442695
  %v7118 = vpow.pop %v7117
  %v7119 = vmul.f32 %v6955, 1.442695
  %v7120 = vpow.pop %v7119
  %v7121 = vmul.f32 %v6956, 1.442695
  %v7122 = vpow.pop %v7121
  %v7123 = vmul.f32 %v6957, 1.442695
  %v7124 = vpow.pop %v7123
  %v7125 = vmul.f32 %v6958, 1.442695
  %v7126 = vpow.pop %v7125
  %v7127 = vmul.f32 %v6959, 1.442695
  %v7128 = vpow.pop %v7127
  %v7129 = vmul.f32 %v6960, 1.442695
  %v7130 = vpow.pop %v7129
  %v7131 = vmul.f32 %v6961, 1.442695
  %v7132 = vpow.pop %v7131
  %v7133 = vmul.f32 %v6962, 1.442695
  %v7134 = vpow.pop %v7133
  %v7135 = vmul.f32 %v6963, 1.442695
  %v7136 = vpow.pop %v7135
  %v7137 = vmul.f32 %v6964, 1.442695
  %v7138 = vpow.pop %v7137
  %v7139 = vmul.f32 %v6965, 1.442695
  %v7140 = vpow.pop %v7139
  %v7141 = vmul.f32 %v6966, 1.442695
  %v7142 = vpow.pop %v7141
  %v7143 = vmul.f32 %v6967, 1.442695
  %v7144 = vpow.pop %v7143
  %v7145 = vmul.f32 %v6968, 1.442695
  %v7146 = vpow.pop %v7145
  %v7147 = vmul.f32 %v6969, 1.442695
  %v7148 = vpow.pop %v7147
  %v7149 = vmul.f32 %v6970, 1.442695
  %v7150 = vpow.pop %v7149
  %v7151 = vmul.f32 %v6971, 1.442695
  %v7152 = vpow.pop %v7151
  %v7153 = vmul.f32 %v6972, 1.442695
  %v7154 = vpow.pop %v7153
  %v7155 = vmul.f32 %v6973, 1.442695
  %v7156 = vpow.pop %v7155
  %v7157 = vmul.f32 %v6974, 1.442695
  %v7158 = vpow.pop %v7157
  %v7159 = vmul.f32 %v6975, 1.442695
  %v7160 = vpow.pop %v7159
  %v7161 = vmul.f32 %v6976, 1.442695
  %v7162 = vpow.pop %v7161
  %v7163 = vmul.f32 %v6977, 1.442695
  %v7164 = vpow.pop %v7163
  %v7165 = vmul.f32 %v6978, 1.442695
  %v7166 = vpow.pop %v7165
  %v7167 = vmul.f32 %v6979, 1.442695
  %v7168 = vpow.pop %v7167
  %v7169 = vmul.f32 %v6980, 1.442695
  %v7170 = vpow.pop %v7169
  %v7171 = vmul.f32 %v6981, 1.442695
  %v7172 = vpow.pop %v7171
  %v7173 = vmul.f32 %v6982, 1.442695
  %v7174 = vpow.pop %v7173
  %v7175 = vmul.f32 %v6983, 1.442695
  %v7176 = vpow.pop %v7175
  %v7177 = vmul.f32 %v6984, 1.442695
  %v7178 = vpow.pop %v7177
  %v7179 = vmul.f32 %v6985, 1.442695
  %v7180 = vpow.pop %v7179
  %v7181 = vmul.f32 %v6986, 1.442695
  %v7182 = vpow.pop %v7181
  %v7183 = vmul.f32 %v6987, 1.442695
  %v7184 = vpow.pop %v7183
  %v7185 = vmul.f32 %v6988, 1.442695
  %v7186 = vpow.pop %v7185
  %v7187 = vmul.f32 %v6989, 1.442695
  %v7188 = vpow.pop %v7187
  %v7189 = vmul.f32 %v6990, 1.442695
  %v7190 = vpow.pop %v7189
  %v7191 = vmul.f32 %v6991, 1.442695
  %v7192 = vpow.pop %v7191
  %v7193 = vmul.f32 %v6992, 1.442695
  %v7194 = vpow.pop %v7193
  %v7195 = vmul.f32 %v6993, 1.442695
  %v7196 = vpow.pop %v7195
  %v7197 = vmul.f32 %v6994, 1.442695
  %v7198 = vpow.pop %v7197
  %v7199 = vmul.f32 %v6995, 1.442695
  %v7200 = vpow.pop %v7199
  %v7201 = vmul.f32 %v6996, 1.442695
  %v7202 = vpow.pop %v7201
  %v7203 = vmul.f32 %v6997, 1.442695
  %v7204 = vpow.pop %v7203
  %v7205 = vmul.f32 %v6998, 1.442695
  %v7206 = vpow.pop %v7205
  %v7207 = vmul.f32 %v6999, 1.442695
  %v7208 = vpow.pop %v7207
  %v7209 = vmul.f32 %v7000, 1.442695
  %v7210 = vpow.pop %v7209
  %v7211 = vmul.f32 %v7001, 1.442695
  %v7212 = vpow.pop %v7211
  %v7213 = vmul.f32 %v7002, 1.442695
  %v7214 = vpow.pop %v7213
  %v7215 = vmul.f32 %v7003, 1.442695
  %v7216 = vpow.pop %v7215
  %v7217 = vmul.f32 %v7004, 1.442695
  %v7218 = vpow.pop %v7217
  %v7219 = vmul.f32 %v7005, 1.442695
  %v7220 = vpow.pop %v7219
  %v7221 = vmul.f32 %v7006, 1.442695
  %v7222 = vpow.pop %v7221
  %v7223 = vmul.f32 %v7007, 1.442695
  %v7224 = vpow.pop %v7223
  %v7225 = vmul.f32 %v7008, 1.442695
  %v7226 = vpow.pop %v7225
  %v7227 = vmul.f32 %v7009, 1.442695
  %v7228 = vpow.pop %v7227
  %v7229 = vmul.f32 %v7010, 1.442695
  %v7230 = vpow.pop %v7229
  %v7231 = vmul.f32 %v7011, 1.442695
  %v7232 = vpow.pop %v7231
  %v7233 = vmul.f32 %v7012, 1.442695
  %v7234 = vpow.pop %v7233
  %v7235 = vmul.f32 %v7013, 1.442695
  %v7236 = vpow.pop %v7235
  %v7237 = vmul.f32 %v7014, 1.442695
  %v7238 = vpow.pop %v7237
  %v7239 = vmul.f32 %v7015, 1.442695
  %v7240 = vpow.pop %v7239
  %v7241 = vmul.f32 %v7016, 1.442695
  %v7242 = vpow.pop %v7241
  %v7243 = vmul.f32 %v7017, 1.442695
  %v7244 = vpow.pop %v7243
  %v7245 = vmul.f32 %v7018, 1.442695
  %v7246 = vpow.pop %v7245
  %v7247 = vmul.f32 %v7019, 1.442695
  %v7248 = vpow.pop %v7247
  %v7249 = vmul.f32 %v7020, 1.442695
  %v7250 = vpow.pop %v7249
  %v7251 = vmul.f32 %v7021, 1.442695
  %v7252 = vpow.pop %v7251
  %v7253 = vmul.f32 %v7022, 1.442695
  %v7254 = vpow.pop %v7253
  %v7255 = vmul.f32 %v7023, 1.442695
  %v7256 = vpow.pop %v7255
  %v7257 = vmul.f32 %v7024, 1.442695
  %v7258 = vpow.pop %v7257
  %v7259 = vmul.f32 %v7025, 1.442695
  %v7260 = vpow.pop %v7259
  %v7261 = vmul.f32 %v7026, 1.442695
  %v7262 = vpow.pop %v7261
  %v7263 = vmul.f32 %v7027, 1.442695
  %v7264 = vpow.pop %v7263
  %v7265 = vmul.f32 %v7028, 1.442695
  %v7266 = vpow.pop %v7265
  %v7267 = vmul.f32 %v7029, 1.442695
  %v7268 = vpow.pop %v7267
  %v7269 = vmul.f32 %v7030, 1.442695
  %v7270 = vpow.pop %v7269
  %v7271 = vmul.f32 %v7031, 1.442695
  %v7272 = vpow.pop %v7271
  %v7273 = vmul.f32 %v7032, 1.442695
  %v7274 = vpow.pop %v7273
  %v7275 = vmul.f32 %v7033, 1.442695
  %v7276 = vpow.pop %v7275
  %v7277 = vmul.f32 %v7034, 1.442695
  %v7278 = vpow.pop %v7277
  %v7279 = vmul.f32 %v7035, 1.442695
  %v7280 = vpow.pop %v7279
  %v7281 = vmul.f32 %v7036, 1.442695
  %v7282 = vpow.pop %v7281
  %v7283 = vmul.f32 %v7037, 1.442695
  %v7284 = vpow.pop %v7283
  %v7285 = vmul.f32 %v7038, 1.442695
  %v7286 = vpow.pop %v7285
  %v7287 = vmul.f32 %v7039, 1.442695
  %v7288 = vpow.pop %v7287
  %v7289 = vmul.f32 %v7040, 1.442695
  %v7290 = vpow.pop %v7289
  %v7291 = vmul.f32 %v7041, 1.442695
  %v7292 = vpow.pop %v7291
  %v7293 = vmul.f32 %v7042, 1.442695
  %v7294 = vpow.pop %v7293
  %v7295 = vmul.f32 %v7043, 1.442695
  %v7296 = vpow.pop %v7295
  %v7297 = vmul.f32 %v7044, 1.442695
  %v7298 = vpow.pop %v7297
  %v7299 = vmul.f32 %v7045, 1.442695
  %v7300 = vpow.pop %v7299
  %v7301 = vmul.f32 %v7046, 1.442695
  %v7302 = vpow.pop %v7301
  %v7303 = vsub.f32 %v7048, 1.0
  %v7304 = vsub.f32 %v7050, 1.0
  %v7305 = vsub.f32 %v7052, 1.0
  %v7306 = vsub.f32 %v7054, 1.0
  %v7307 = vsub.f32 %v7056, 1.0
  %v7308 = vsub.f32 %v7058, 1.0
  %v7309 = vsub.f32 %v7060, 1.0
  %v7310 = vsub.f32 %v7062, 1.0
  %v7311 = vsub.f32 %v7064, 1.0
  %v7312 = vsub.f32 %v7066, 1.0
  %v7313 = vsub.f32 %v7068, 1.0
  %v7314 = vsub.f32 %v7070, 1.0
  %v7315 = vsub.f32 %v7072, 1.0
  %v7316 = vsub.f32 %v7074, 1.0
  %v7317 = vsub.f32 %v7076, 1.0
  %v7318 = vsub.f32 %v7078, 1.0
  %v7319 = vsub.f32 %v7080, 1.0
  %v7320 = vsub.f32 %v7082, 1.0
  %v7321 = vsub.f32 %v7084, 1.0
  %v7322 = vsub.f32 %v7086, 1.0
  %v7323 = vsub.f32 %v7088, 1.0
  %v7324 = vsub.f32 %v7090, 1.0
  %v7325 = vsub.f32 %v7092, 1.0
  %v7326 = vsub.f32 %v7094, 1.0
  %v7327 = vsub.f32 %v7096, 1.0
  %v7328 = vsub.f32 %v7098, 1.0
  %v7329 = vsub.f32 %v7100, 1.0
  %v7330 = vsub.f32 %v7102, 1.0
  %v7331 = vsub.f32 %v7104, 1.0
  %v7332 = vsub.f32 %v7106, 1.0
  %v7333 = vsub.f32 %v7108, 1.0
  %v7334 = vsub.f32 %v7110, 1.0
  %v7335 = vsub.f32 %v7112, 1.0
  %v7336 = vsub.f32 %v7114, 1.0
  %v7337 = vsub.f32 %v7116, 1.0
  %v7338 = vsub.f32 %v7118, 1.0
  %v7339 = vsub.f32 %v7120, 1.0
  %v7340 = vsub.f32 %v7122, 1.0
  %v7341 = vsub.f32 %v7124, 1.0
  %v7342 = vsub.f32 %v7126, 1.0
  %v7343 = vsub.f32 %v7128, 1.0
  %v7344 = vsub.f32 %v7130, 1.0
  %v7345 = vsub.f32 %v7132, 1.0
  %v7346 = vsub.f32 %v7134, 1.0
  %v7347 = vsub.f32 %v7136, 1.0
  %v7348 = vsub.f32 %v7138, 1.0
  %v7349 = vsub.f32 %v7140, 1.0
  %v7350 = vsub.f32 %v7142, 1.0
  %v7351 = vsub.f32 %v7144, 1.0
  %v7352 = vsub.f32 %v7146, 1.0
  %v7353 = vsub.f32 %v7148, 1.0
  %v7354 = vsub.f32 %v7150, 1.0
  %v7355 = vsub.f32 %v7152, 1.0
  %v7356 = vsub.f32 %v7154, 1.0
  %v7357 = vsub.f32 %v7156, 1.0
  %v7358 = vsub.f32 %v7158, 1.0
  %v7359 = vsub.f32 %v7160, 1.0
  %v7360 = vsub.f32 %v7162, 1.0
  %v7361 = vsub.f32 %v7164, 1.0
  %v7362 = vsub.f32 %v7166, 1.0
  %v7363 = vsub.f32 %v7168, 1.0
  %v7364 = vsub.f32 %v7170, 1.0
  %v7365 = vsub.f32 %v7172, 1.0
  %v7366 = vsub.f32 %v7174, 1.0
  %v7367 = vsub.f32 %v7176, 1.0
  %v7368 = vsub.f32 %v7178, 1.0
  %v7369 = vsub.f32 %v7180, 1.0
  %v7370 = vsub.f32 %v7182, 1.0
  %v7371 = vsub.f32 %v7184, 1.0
  %v7372 = vsub.f32 %v7186, 1.0
  %v7373 = vsub.f32 %v7188, 1.0
  %v7374 = vsub.f32 %v7190, 1.0
  %v7375 = vsub.f32 %v7192, 1.0
  %v7376 = vsub.f32 %v7194, 1.0
  %v7377 = vsub.f32 %v7196, 1.0
  %v7378 = vsub.f32 %v7198, 1.0
  %v7379 = vsub.f32 %v7200, 1.0
  %v7380 = vsub.f32 %v7202, 1.0
  %v7381 = vsub.f32 %v7204, 1.0
  %v7382 = vsub.f32 %v7206, 1.0
  %v7383 = vsub.f32 %v7208, 1.0
  %v7384 = vsub.f32 %v7210, 1.0
  %v7385 = vsub.f32 %v7212, 1.0
  %v7386 = vsub.f32 %v7214, 1.0
  %v7387 = vsub.f32 %v7216, 1.0
  %v7388 = vsub.f32 %v7218, 1.0
  %v7389 = vsub.f32 %v7220, 1.0
  %v7390 = vsub.f32 %v7222, 1.0
  %v7391 = vsub.f32 %v7224, 1.0
  %v7392 = vsub.f32 %v7226, 1.0
  %v7393 = vsub.f32 %v7228, 1.0
  %v7394 = vsub.f32 %v7230, 1.0
  %v7395 = vsub.f32 %v7232, 1.0
  %v7396 = vsub.f32 %v7234, 1.0
  %v7397 = vsub.f32 %v7236, 1.0
  %v7398 = vsub.f32 %v7238, 1.0
  %v7399 = vsub.f32 %v7240, 1.0
  %v7400 = vsub.f32 %v7242, 1.0
  %v7401 = vsub.f32 %v7244, 1.0
  %v7402 = vsub.f32 %v7246, 1.0
  %v7403 = vsub.f32 %v7248, 1.0
  %v7404 = vsub.f32 %v7250, 1.0
  %v7405 = vsub.f32 %v7252, 1.0
  %v7406 = vsub.f32 %v7254, 1.0
  %v7407 = vsub.f32 %v7256, 1.0
  %v7408 = vsub.f32 %v7258, 1.0
  %v7409 = vsub.f32 %v7260, 1.0
  %v7410 = vsub.f32 %v7262, 1.0
  %v7411 = vsub.f32 %v7264, 1.0
  %v7412 = vsub.f32 %v7266, 1.0
  %v7413 = vsub.f32 %v7268, 1.0
  %v7414 = vsub.f32 %v7270, 1.0
  %v7415 = vsub.f32 %v7272, 1.0
  %v7416 = vsub.f32 %v7274, 1.0
  %v7417 = vsub.f32 %v7276, 1.0
  %v7418 = vsub.f32 %v7278, 1.0
  %v7419 = vsub.f32 %v7280, 1.0
  %v7420 = vsub.f32 %v7282, 1.0
  %v7421 = vsub.f32 %v7284, 1.0
  %v7422 = vsub.f32 %v7286, 1.0
  %v7423 = vsub.f32 %v7288, 1.0
  %v7424 = vsub.f32 %v7290, 1.0
  %v7425 = vsub.f32 %v7292, 1.0
  %v7426 = vsub.f32 %v7294, 1.0
  %v7427 = vsub.f32 %v7296, 1.0
  %v7428 = vsub.f32 %v7298, 1.0
  %v7429 = vsub.f32 %v7300, 1.0
  %v7430 = vsub.f32 %v7302, 1.0
  %v7431 = vsel %vm6791, %v6473, %v7303
  %v7432 = vsel %vm6792, %v6475, %v7304
  %v7433 = vsel %vm6793, %v6477, %v7305
  %v7434 = vsel %vm6794, %v6479, %v7306
  %v7435 = vsel %vm6795, %v6483, %v7307
  %v7436 = vsel %vm6796, %v6485, %v7308
  %v7437 = vsel %vm6797, %v6487, %v7309
  %v7438 = vsel %vm6798, %v6489, %v7310
  %v7439 = vsel %vm6799, %v6493, %v7311
  %v7440 = vsel %vm6800, %v6495, %v7312
  %v7441 = vsel %vm6801, %v6497, %v7313
  %v7442 = vsel %vm6802, %v6499, %v7314
  %v7443 = vsel %vm6803, %v6503, %v7315
  %v7444 = vsel %vm6804, %v6505, %v7316
  %v7445 = vsel %vm6805, %v6507, %v7317
  %v7446 = vsel %vm6806, %v6509, %v7318
  %v7447 = vsel %vm6807, %v6513, %v7319
  %v7448 = vsel %vm6808, %v6515, %v7320
  %v7449 = vsel %vm6809, %v6517, %v7321
  %v7450 = vsel %vm6810, %v6519, %v7322
  %v7451 = vsel %vm6811, %v6523, %v7323
  %v7452 = vsel %vm6812, %v6525, %v7324
  %v7453 = vsel %vm6813, %v6527, %v7325
  %v7454 = vsel %vm6814, %v6529, %v7326
  %v7455 = vsel %vm6815, %v6533, %v7327
  %v7456 = vsel %vm6816, %v6535, %v7328
  %v7457 = vsel %vm6817, %v6537, %v7329
  %v7458 = vsel %vm6818, %v6539, %v7330
  %v7459 = vsel %vm6819, %v6543, %v7331
  %v7460 = vsel %vm6820, %v6545, %v7332
  %v7461 = vsel %vm6821, %v6547, %v7333
  %v7462 = vsel %vm6822, %v6549, %v7334
  %v7463 = vsel %vm6823, %v6553, %v7335
  %v7464 = vsel %vm6824, %v6555, %v7336
  %v7465 = vsel %vm6825, %v6557, %v7337
  %v7466 = vsel %vm6826, %v6559, %v7338
  %v7467 = vsel %vm6827, %v6563, %v7339
  %v7468 = vsel %vm6828, %v6565, %v7340
  %v7469 = vsel %vm6829, %v6567, %v7341
  %v7470 = vsel %vm6830, %v6569, %v7342
  %v7471 = vsel %vm6831, %v6573, %v7343
  %v7472 = vsel %vm6832, %v6575, %v7344
  %v7473 = vsel %vm6833, %v6577, %v7345
  %v7474 = vsel %vm6834, %v6579, %v7346
  %v7475 = vsel %vm6835, %v6583, %v7347
  %v7476 = vsel %vm6836, %v6585, %v7348
  %v7477 = vsel %vm6837, %v6587, %v7349
  %v7478 = vsel %vm6838, %v6589, %v7350
  %v7479 = vsel %vm6839, %v6593, %v7351
  %v7480 = vsel %vm6840, %v6595, %v7352
  %v7481 = vsel %vm6841, %v6597, %v7353
  %v7482 = vsel %vm6842, %v6599, %v7354
  %v7483 = vsel %vm6843, %v6603, %v7355
  %v7484 = vsel %vm6844, %v6605, %v7356
  %v7485 = vsel %vm6845, %v6607, %v7357
  %v7486 = vsel %vm6846, %v6609, %v7358
  %v7487 = vsel %vm6847, %v6613, %v7359
  %v7488 = vsel %vm6848, %v6615, %v7360
  %v7489 = vsel %vm6849, %v6617, %v7361
  %v7490 = vsel %vm6850, %v6619, %v7362
  %v7491 = vsel %vm6851, %v6623, %v7363
  %v7492 = vsel %vm6852, %v6625, %v7364
  %v7493 = vsel %vm6853, %v6627, %v7365
  %v7494 = vsel %vm6854, %v6629, %v7366
  %v7495 = vsel %vm6855, %v6633, %v7367
  %v7496 = vsel %vm6856, %v6635, %v7368
  %v7497 = vsel %vm6857, %v6637, %v7369
  %v7498 = vsel %vm6858, %v6639, %v7370
  %v7499 = vsel %vm6859, %v6643, %v7371
  %v7500 = vsel %vm6860, %v6645, %v7372
  %v7501 = vsel %vm6861, %v6647, %v7373
  %v7502 = vsel %vm6862, %v6649, %v7374
  %v7503 = vsel %vm6863, %v6653, %v7375
  %v7504 = vsel %vm6864, %v6655, %v7376
  %v7505 = vsel %vm6865, %v6657, %v7377
  %v7506 = vsel %vm6866, %v6659, %v7378
  %v7507 = vsel %vm6867, %v6663, %v7379
  %v7508 = vsel %vm6868, %v6665, %v7380
  %v7509 = vsel %vm6869, %v6667, %v7381
  %v7510 = vsel %vm6870, %v6669, %v7382
  %v7511 = vsel %vm6871, %v6673, %v7383
  %v7512 = vsel %vm6872, %v6675, %v7384
  %v7513 = vsel %vm6873, %v6677, %v7385
  %v7514 = vsel %vm6874, %v6679, %v7386
  %v7515 = vsel %vm6875, %v6683, %v7387
  %v7516 = vsel %vm6876, %v6685, %v7388
  %v7517 = vsel %vm6877, %v6687, %v7389
  %v7518 = vsel %vm6878, %v6689, %v7390
  %v7519 = vsel %vm6879, %v6693, %v7391
  %v7520 = vsel %vm6880, %v6695, %v7392
  %v7521 = vsel %vm6881, %v6697, %v7393
  %v7522 = vsel %vm6882, %v6699, %v7394
  %v7523 = vsel %vm6883, %v6703, %v7395
  %v7524 = vsel %vm6884, %v6705, %v7396
  %v7525 = vsel %vm6885, %v6707, %v7397
  %v7526 = vsel %vm6886, %v6709, %v7398
  %v7527 = vsel %vm6887, %v6713, %v7399
  %v7528 = vsel %vm6888, %v6715, %v7400
  %v7529 = vsel %vm6889, %v6717, %v7401
  %v7530 = vsel %vm6890, %v6719, %v7402
  %v7531 = vsel %vm6891, %v6723, %v7403
  %v7532 = vsel %vm6892, %v6725, %v7404
  %v7533 = vsel %vm6893, %v6727, %v7405
  %v7534 = vsel %vm6894, %v6729, %v7406
  %v7535 = vsel %vm6895, %v6733, %v7407
  %v7536 = vsel %vm6896, %v6735, %v7408
  %v7537 = vsel %vm6897, %v6737, %v7409
  %v7538 = vsel %vm6898, %v6739, %v7410
  %v7539 = vsel %vm6899, %v6743, %v7411
  %v7540 = vsel %vm6900, %v6745, %v7412
  %v7541 = vsel %vm6901, %v6747, %v7413
  %v7542 = vsel %vm6902, %v6749, %v7414
  %v7543 = vsel %vm6903, %v6753, %v7415
  %v7544 = vsel %vm6904, %v6755, %v7416
  %v7545 = vsel %vm6905, %v6757, %v7417
  %v7546 = vsel %vm6906, %v6759, %v7418
  %v7547 = vsel %vm6907, %v6763, %v7419
  %v7548 = vsel %vm6908, %v6765, %v7420
  %v7549 = vsel %vm6909, %v6767, %v7421
  %v7550 = vsel %vm6910, %v6769, %v7422
  %v7551 = vsel %vm6911, %v6773, %v7423
  %v7552 = vsel %vm6912, %v6775, %v7424
  %v7553 = vsel %vm6913, %v6777, %v7425
  %v7554 = vsel %vm6914, %v6779, %v7426
  %v7555 = vsel %vm6915, %v6783, %v7427
  %v7556 = vsel %vm6916, %v6785, %v7428
  %v7557 = vsel %vm6917, %v6787, %v7429
  %v7558 = vsel %vm6918, %v6789, %v7430
  %v7559 = vpack.c.bf16 %v7433, %v7431
  %v7560 = vpack.c.bf16 %v7434, %v7432
  %v7561 = vpack.c.bf16 %v7437, %v7435
  %v7562 = vpack.c.bf16 %v7438, %v7436
  %v7563 = vpack.c.bf16 %v7441, %v7439
  %v7564 = vpack.c.bf16 %v7442, %v7440
  %v7565 = vpack.c.bf16 %v7445, %v7443
  %v7566 = vpack.c.bf16 %v7446, %v7444
  %v7567 = vpack.c.bf16 %v7449, %v7447
  %v7568 = vpack.c.bf16 %v7450, %v7448
  %v7569 = vpack.c.bf16 %v7453, %v7451
  %v7570 = vpack.c.bf16 %v7454, %v7452
  %v7571 = vpack.c.bf16 %v7457, %v7455
  %v7572 = vpack.c.bf16 %v7458, %v7456
  %v7573 = vpack.c.bf16 %v7461, %v7459
  %v7574 = vpack.c.bf16 %v7462, %v7460
  %v7575 = vpack.c.bf16 %v7465, %v7463
  %v7576 = vpack.c.bf16 %v7466, %v7464
  %v7577 = vpack.c.bf16 %v7469, %v7467
  %v7578 = vpack.c.bf16 %v7470, %v7468
  %v7579 = vpack.c.bf16 %v7473, %v7471
  %v7580 = vpack.c.bf16 %v7474, %v7472
  %v7581 = vpack.c.bf16 %v7477, %v7475
  %v7582 = vpack.c.bf16 %v7478, %v7476
  %v7583 = vpack.c.bf16 %v7481, %v7479
  %v7584 = vpack.c.bf16 %v7482, %v7480
  %v7585 = vpack.c.bf16 %v7485, %v7483
  %v7586 = vpack.c.bf16 %v7486, %v7484
  %v7587 = vpack.c.bf16 %v7489, %v7487
  %v7588 = vpack.c.bf16 %v7490, %v7488
  %v7589 = vpack.c.bf16 %v7493, %v7491
  %v7590 = vpack.c.bf16 %v7494, %v7492
  %v7591 = vpack.c.bf16 %v7497, %v7495
  %v7592 = vpack.c.bf16 %v7498, %v7496
  %v7593 = vpack.c.bf16 %v7501, %v7499
  %v7594 = vpack.c.bf16 %v7502, %v7500
  %v7595 = vpack.c.bf16 %v7505, %v7503
  %v7596 = vpack.c.bf16 %v7506, %v7504
  %v7597 = vpack.c.bf16 %v7509, %v7507
  %v7598 = vpack.c.bf16 %v7510, %v7508
  %v7599 = vpack.c.bf16 %v7513, %v7511
  %v7600 = vpack.c.bf16 %v7514, %v7512
  %v7601 = vpack.c.bf16 %v7517, %v7515
  %v7602 = vpack.c.bf16 %v7518, %v7516
  %v7603 = vpack.c.bf16 %v7521, %v7519
  %v7604 = vpack.c.bf16 %v7522, %v7520
  %v7605 = vpack.c.bf16 %v7525, %v7523
  %v7606 = vpack.c.bf16 %v7526, %v7524
  %v7607 = vpack.c.bf16 %v7529, %v7527
  %v7608 = vpack.c.bf16 %v7530, %v7528
  %v7609 = vpack.c.bf16 %v7533, %v7531
  %v7610 = vpack.c.bf16 %v7534, %v7532
  %v7611 = vpack.c.bf16 %v7537, %v7535
  %v7612 = vpack.c.bf16 %v7538, %v7536
  %v7613 = vpack.c.bf16 %v7541, %v7539
  %v7614 = vpack.c.bf16 %v7542, %v7540
  %v7615 = vpack.c.bf16 %v7545, %v7543
  %v7616 = vpack.c.bf16 %v7546, %v7544
  %v7617 = vpack.c.bf16 %v7549, %v7547
  %v7618 = vpack.c.bf16 %v7550, %v7548
  %v7619 = vpack.c.bf16 %v7553, %v7551
  %v7620 = vpack.c.bf16 %v7554, %v7552
  %v7621 = vpack.c.bf16 %v7557, %v7555
  %v7622 = vpack.c.bf16 %v7558, %v7556
  %s7623 = scalar_lea.vmem %s3, 1024
  %v7624 = vld [vmem:[%s7623] sm:$0xff]
  %v7625 = vld [vmem:[%s7623 + $0x8] sm:$0xff]
  %v7626 = vld [vmem:[%s7623 + $0x10] sm:$0xff]
  %v7627 = vld [vmem:[%s7623 + $0x18] sm:$0xff]
  %v7628 = vld [vmem:[%s7623 + $0x20] sm:$0xff]
  %v7629 = vld [vmem:[%s7623 + $0x28] sm:$0xff]
  %v7630 = vld [vmem:[%s7623 + $0x30] sm:$0xff]
  %v7631 = vld [vmem:[%s7623 + $0x38] sm:$0xff]
  %v7632 = vld [vmem:[%s7623 + $0x40] sm:$0xff]
  %v7633 = vld [vmem:[%s7623 + $0x48] sm:$0xff]
  %v7634 = vld [vmem:[%s7623 + $0x50] sm:$0xff]
  %v7635 = vld [vmem:[%s7623 + $0x58] sm:$0xff]
  %v7636 = vld [vmem:[%s7623 + $0x60] sm:$0xff]
  %v7637 = vld [vmem:[%s7623 + $0x68] sm:$0xff]
  %v7638 = vld [vmem:[%s7623 + $0x70] sm:$0xff]
  %v7639 = vld [vmem:[%s7623 + $0x78] sm:$0xff]
  %v7640 = vld [vmem:[%s7623 + $0x80] sm:$0xff]
  %v7641 = vld [vmem:[%s7623 + $0x88] sm:$0xff]
  %v7642 = vld [vmem:[%s7623 + $0x90] sm:$0xff]
  %v7643 = vld [vmem:[%s7623 + $0x98] sm:$0xff]
  %v7644 = vld [vmem:[%s7623 + $0xa0] sm:$0xff]
  %v7645 = vld [vmem:[%s7623 + $0xa8] sm:$0xff]
  %v7646 = vld [vmem:[%s7623 + $0xb0] sm:$0xff]
  %v7647 = vld [vmem:[%s7623 + $0xb8] sm:$0xff]
  %v7648 = vld [vmem:[%s7623 + $0xc0] sm:$0xff]
  %v7649 = vld [vmem:[%s7623 + $0xc8] sm:$0xff]
  %v7650 = vld [vmem:[%s7623 + $0xd0] sm:$0xff]
  %v7651 = vld [vmem:[%s7623 + $0xd8] sm:$0xff]
  %v7652 = vld [vmem:[%s7623 + $0xe0] sm:$0xff]
  %v7653 = vld [vmem:[%s7623 + $0xe8] sm:$0xff]
  %v7654 = vld [vmem:[%s7623 + $0xf0] sm:$0xff]
  %v7655 = vld [vmem:[%s7623 + $0xf8] sm:$0xff]
  %s7656 = scalar_lea.vmem %s4, 4
  %v7657 = vld [vmem:[%s7656] ss:$8 sm:$0x3]
  %v7659 = vlaneseq
  %v7660 = vshrl.u32 %v7659, 7
  %v7661 = vsub.s32 0, %v7660
  %v7662 = vrot.slane %v7657, %v7661
  %v7663 = vlaneseq
  %v7664 = vshrl.u32 %v7663, 7
  %v7665 = vsub.s32 1, %v7664
  %v7666 = vrot.slane %v7657, %v7665
  %v7701 = vunpack.c.l.b16 %v7624
  %v7702 = vunpack.c.h.b16 %v7624
  %v7703 = vunpack.c.l.b16 %v7625
  %v7704 = vunpack.c.h.b16 %v7625
  %v7705 = vunpack.c.l.b16 %v7626
  %v7706 = vunpack.c.h.b16 %v7626
  %v7707 = vunpack.c.l.b16 %v7627
  %v7708 = vunpack.c.h.b16 %v7627
  %v7709 = vunpack.c.l.b16 %v7628
  %v7710 = vunpack.c.h.b16 %v7628
  %v7711 = vunpack.c.l.b16 %v7629
  %v7712 = vunpack.c.h.b16 %v7629
  %v7713 = vunpack.c.l.b16 %v7630
  %v7714 = vunpack.c.h.b16 %v7630
  %v7715 = vunpack.c.l.b16 %v7631
  %v7716 = vunpack.c.h.b16 %v7631
  %v7717 = vunpack.c.l.b16 %v7632
  %v7718 = vunpack.c.h.b16 %v7632
  %v7719 = vunpack.c.l.b16 %v7633
  %v7720 = vunpack.c.h.b16 %v7633
  %v7721 = vunpack.c.l.b16 %v7634
  %v7722 = vunpack.c.h.b16 %v7634
  %v7723 = vunpack.c.l.b16 %v7635
  %v7724 = vunpack.c.h.b16 %v7635
  %v7725 = vunpack.c.l.b16 %v7636
  %v7726 = vunpack.c.h.b16 %v7636
  %v7727 = vunpack.c.l.b16 %v7637
  %v7728 = vunpack.c.h.b16 %v7637
  %v7729 = vunpack.c.l.b16 %v7638
  %v7730 = vunpack.c.h.b16 %v7638
  %v7731 = vunpack.c.l.b16 %v7639
  %v7732 = vunpack.c.h.b16 %v7639
  %v7733 = vunpack.c.l.b16 %v7640
  %v7734 = vunpack.c.h.b16 %v7640
  %v7735 = vunpack.c.l.b16 %v7641
  %v7736 = vunpack.c.h.b16 %v7641
  %v7737 = vunpack.c.l.b16 %v7642
  %v7738 = vunpack.c.h.b16 %v7642
  %v7739 = vunpack.c.l.b16 %v7643
  %v7740 = vunpack.c.h.b16 %v7643
  %v7741 = vunpack.c.l.b16 %v7644
  %v7742 = vunpack.c.h.b16 %v7644
  %v7743 = vunpack.c.l.b16 %v7645
  %v7744 = vunpack.c.h.b16 %v7645
  %v7745 = vunpack.c.l.b16 %v7646
  %v7746 = vunpack.c.h.b16 %v7646
  %v7747 = vunpack.c.l.b16 %v7647
  %v7748 = vunpack.c.h.b16 %v7647
  %v7749 = vunpack.c.l.b16 %v7648
  %v7750 = vunpack.c.h.b16 %v7648
  %v7751 = vunpack.c.l.b16 %v7649
  %v7752 = vunpack.c.h.b16 %v7649
  %v7753 = vunpack.c.l.b16 %v7650
  %v7754 = vunpack.c.h.b16 %v7650
  %v7755 = vunpack.c.l.b16 %v7651
  %v7756 = vunpack.c.h.b16 %v7651
  %v7757 = vunpack.c.l.b16 %v7652
  %v7758 = vunpack.c.h.b16 %v7652
  %v7759 = vunpack.c.l.b16 %v7653
  %v7760 = vunpack.c.h.b16 %v7653
  %v7761 = vunpack.c.l.b16 %v7654
  %v7762 = vunpack.c.h.b16 %v7654
  %v7763 = vunpack.c.l.b16 %v7655
  %v7764 = vunpack.c.h.b16 %v7655
  %v7765 = vpack.c.b16 %v7703, %v7701
  %v7766 = vpack.c.b16 %v7704, %v7702
  %v7767 = vpack.c.b16 %v7707, %v7705
  %v7768 = vpack.c.b16 %v7708, %v7706
  %v7769 = vpack.c.b16 %v7711, %v7709
  %v7770 = vpack.c.b16 %v7712, %v7710
  %v7771 = vpack.c.b16 %v7715, %v7713
  %v7772 = vpack.c.b16 %v7716, %v7714
  %v7773 = vpack.c.b16 %v7719, %v7717
  %v7774 = vpack.c.b16 %v7720, %v7718
  %v7775 = vpack.c.b16 %v7723, %v7721
  %v7776 = vpack.c.b16 %v7724, %v7722
  %v7777 = vpack.c.b16 %v7727, %v7725
  %v7778 = vpack.c.b16 %v7728, %v7726
  %v7779 = vpack.c.b16 %v7731, %v7729
  %v7780 = vpack.c.b16 %v7732, %v7730
  %v7781 = vpack.c.b16 %v7735, %v7733
  %v7782 = vpack.c.b16 %v7736, %v7734
  %v7783 = vpack.c.b16 %v7739, %v7737
  %v7784 = vpack.c.b16 %v7740, %v7738
  %v7785 = vpack.c.b16 %v7743, %v7741
  %v7786 = vpack.c.b16 %v7744, %v7742
  %v7787 = vpack.c.b16 %v7747, %v7745
  %v7788 = vpack.c.b16 %v7748, %v7746
  %v7789 = vpack.c.b16 %v7751, %v7749
  %v7790 = vpack.c.b16 %v7752, %v7750
  %v7791 = vpack.c.b16 %v7755, %v7753
  %v7792 = vpack.c.b16 %v7756, %v7754
  %v7793 = vpack.c.b16 %v7759, %v7757
  %v7794 = vpack.c.b16 %v7760, %v7758
  %v7795 = vpack.c.b16 %v7763, %v7761
  %v7796 = vpack.c.b16 %v7764, %v7762
  %7829 = vmatprep.subr.bf16.mxu0 %v7780
  %7830 = vmatpush1.bf16.msra.mxu0 %v7779
  %7831 = vmatprep.subr.bf16.mxu0 %v7778
  %7832 = vmatpush1.bf16.msra.mxu0 %v7777
  %7833 = vmatprep.subr.bf16.mxu0 %v7776
  %7834 = vmatpush1.bf16.msra.mxu0 %v7775
  %7835 = vmatprep.subr.bf16.mxu0 %v7774
  %7836 = vmatpush1.bf16.msra.mxu0 %v7773
  %7837 = vmatprep.subr.bf16.mxu0 %v7772
  %7838 = vmatpush1.bf16.msra.mxu0 %v7771
  %7839 = vmatprep.subr.bf16.mxu0 %v7770
  %7840 = vmatpush1.bf16.msra.mxu0 %v7769
  %7841 = vmatprep.subr.bf16.mxu0 %v7768
  %7842 = vmatpush1.bf16.msra.mxu0 %v7767
  %7843 = vmatprep.subr.bf16.mxu0 %v7766
  %7844 = vmatpush1.bf16.msra.mxu0 %v7765
  %7845 = vmatprep.subr.bf16.mxu0 %v7796
  %7846 = vmatpush2.bf16.msra.mxu0 %v7795
  %7847 = vmatprep.subr.bf16.mxu0 %v7794
  %7848 = vmatpush2.bf16.msra.mxu0 %v7793
  %7849 = vmatprep.subr.bf16.mxu0 %v7792
  %7850 = vmatpush2.bf16.msra.mxu0 %v7791
  %7851 = vmatprep.subr.bf16.mxu0 %v7790
  %7852 = vmatpush2.bf16.msra.mxu0 %v7789
  %7853 = vmatprep.subr.bf16.mxu0 %v7788
  %7854 = vmatpush2.bf16.msra.mxu0 %v7787
  %7855 = vmatprep.subr.bf16.mxu0 %v7786
  %7856 = vmatpush2.bf16.msra.mxu0 %v7785
  %7857 = vmatprep.subr.bf16.mxu0 %v7784
  %7858 = vmatpush2.bf16.msra.mxu0 %v7783
  %7859 = vmatprep.subr.bf16.mxu0 %v7782
  %7860 = vmatpush2.bf16.msra.mxu0 %v7781
  %7861 = vmatprep.mubr.bf16.mxu0 %v7560
  %7862 = vmatmul.mubr.bf16.gmra.mxu0 %v7559
  %v7863 = vpop.f32.mrf.mxu0
  %v7864 = vadd.f32 %v7662, %v7863
  %v7865 = vpop.f32.mrf.mxu0
  %v7866 = vadd.f32 %v7666, %v7865
  %v7867 = vpop.f32.mrf.mxu0
  %v7868 = vadd.f32 %v7662, %v7867
  %v7869 = vpop.f32.mrf.mxu0
  %v7870 = vadd.f32 %v7666, %v7869
  %7871 = vmatprep.mubr.bf16.mxu0 %v7562
  %7872 = vmatmul.mubr.bf16.gmra.mxu0 %v7561
  %v7873 = vpop.f32.mrf.mxu0
  %v7874 = vadd.f32 %v7662, %v7873
  %v7875 = vpop.f32.mrf.mxu0
  %v7876 = vadd.f32 %v7666, %v7875
  %v7877 = vpop.f32.mrf.mxu0
  %v7878 = vadd.f32 %v7662, %v7877
  %v7879 = vpop.f32.mrf.mxu0
  %v7880 = vadd.f32 %v7666, %v7879
  %7881 = vmatprep.mubr.bf16.mxu0 %v7564
  %7882 = vmatmul.mubr.bf16.gmra.mxu0 %v7563
  %v7883 = vpop.f32.mrf.mxu0
  %v7884 = vadd.f32 %v7662, %v7883
  %v7885 = vpop.f32.mrf.mxu0
  %v7886 = vadd.f32 %v7666, %v7885
  %v7887 = vpop.f32.mrf.mxu0
  %v7888 = vadd.f32 %v7662, %v7887
  %v7889 = vpop.f32.mrf.mxu0
  %v7890 = vadd.f32 %v7666, %v7889
  %7891 = vmatprep.mubr.bf16.mxu0 %v7566
  %7892 = vmatmul.mubr.bf16.gmra.mxu0 %v7565
  %v7893 = vpop.f32.mrf.mxu0
  %v7894 = vadd.f32 %v7662, %v7893
  %v7895 = vpop.f32.mrf.mxu0
  %v7896 = vadd.f32 %v7666, %v7895
  %v7897 = vpop.f32.mrf.mxu0
  %v7898 = vadd.f32 %v7662, %v7897
  %v7899 = vpop.f32.mrf.mxu0
  %v7900 = vadd.f32 %v7666, %v7899
  %7901 = vmatprep.mubr.bf16.mxu0 %v7568
  %7902 = vmatmul.mubr.bf16.gmra.mxu0 %v7567
  %v7903 = vpop.f32.mrf.mxu0
  %v7904 = vadd.f32 %v7662, %v7903
  %v7905 = vpop.f32.mrf.mxu0
  %v7906 = vadd.f32 %v7666, %v7905
  %v7907 = vpop.f32.mrf.mxu0
  %v7908 = vadd.f32 %v7662, %v7907
  %v7909 = vpop.f32.mrf.mxu0
  %v7910 = vadd.f32 %v7666, %v7909
  %7911 = vmatprep.mubr.bf16.mxu0 %v7570
  %7912 = vmatmul.mubr.bf16.gmra.mxu0 %v7569
  %v7913 = vpop.f32.mrf.mxu0
  %v7914 = vadd.f32 %v7662, %v7913
  %v7915 = vpop.f32.mrf.mxu0
  %v7916 = vadd.f32 %v7666, %v7915
  %v7917 = vpop.f32.mrf.mxu0
  %v7918 = vadd.f32 %v7662, %v7917
  %v7919 = vpop.f32.mrf.mxu0
  %v7920 = vadd.f32 %v7666, %v7919
  %7921 = vmatprep.mubr.bf16.mxu0 %v7572
  %7922 = vmatmul.mubr.bf16.gmra.mxu0 %v7571
  %v7923 = vpop.f32.mrf.mxu0
  %v7924 = vadd.f32 %v7662, %v7923
  %v7925 = vpop.f32.mrf.mxu0
  %v7926 = vadd.f32 %v7666, %v7925
  %v7927 = vpop.f32.mrf.mxu0
  %v7928 = vadd.f32 %v7662, %v7927
  %v7929 = vpop.f32.mrf.mxu0
  %v7930 = vadd.f32 %v7666, %v7929
  %7931 = vmatprep.mubr.bf16.mxu0 %v7574
  %7932 = vmatmul.mubr.bf16.gmra.mxu0 %v7573
  %v7933 = vpop.f32.mrf.mxu0
  %v7934 = vadd.f32 %v7662, %v7933
  %v7935 = vpop.f32.mrf.mxu0
  %v7936 = vadd.f32 %v7666, %v7935
  %v7937 = vpop.f32.mrf.mxu0
  %v7938 = vadd.f32 %v7662, %v7937
  %v7939 = vpop.f32.mrf.mxu0
  %v7940 = vadd.f32 %v7666, %v7939
  %7941 = vmatprep.mubr.bf16.mxu0 %v7576
  %7942 = vmatmul.mubr.bf16.gmra.mxu0 %v7575
  %v7943 = vpop.f32.mrf.mxu0
  %v7944 = vadd.f32 %v7662, %v7943
  %v7945 = vpop.f32.mrf.mxu0
  %v7946 = vadd.f32 %v7666, %v7945
  %v7947 = vpop.f32.mrf.mxu0
  %v7948 = vadd.f32 %v7662, %v7947
  %v7949 = vpop.f32.mrf.mxu0
  %v7950 = vadd.f32 %v7666, %v7949
  %7951 = vmatprep.mubr.bf16.mxu0 %v7578
  %7952 = vmatmul.mubr.bf16.gmra.mxu0 %v7577
  %v7953 = vpop.f32.mrf.mxu0
  %v7954 = vadd.f32 %v7662, %v7953
  %v7955 = vpop.f32.mrf.mxu0
  %v7956 = vadd.f32 %v7666, %v7955
  %v7957 = vpop.f32.mrf.mxu0
  %v7958 = vadd.f32 %v7662, %v7957
  %v7959 = vpop.f32.mrf.mxu0
  %v7960 = vadd.f32 %v7666, %v7959
  %7961 = vmatprep.mubr.bf16.mxu0 %v7580
  %7962 = vmatmul.mubr.bf16.gmra.mxu0 %v7579
  %v7963 = vpop.f32.mrf.mxu0
  %v7964 = vadd.f32 %v7662, %v7963
  %v7965 = vpop.f32.mrf.mxu0
  %v7966 = vadd.f32 %v7666, %v7965
  %v7967 = vpop.f32.mrf.mxu0
  %v7968 = vadd.f32 %v7662, %v7967
  %v7969 = vpop.f32.mrf.mxu0
  %v7970 = vadd.f32 %v7666, %v7969
  %7971 = vmatprep.mubr.bf16.mxu0 %v7582
  %7972 = vmatmul.mubr.bf16.gmra.mxu0 %v7581
  %v7973 = vpop.f32.mrf.mxu0
  %v7974 = vadd.f32 %v7662, %v7973
  %v7975 = vpop.f32.mrf.mxu0
  %v7976 = vadd.f32 %v7666, %v7975
  %v7977 = vpop.f32.mrf.mxu0
  %v7978 = vadd.f32 %v7662, %v7977
  %v7979 = vpop.f32.mrf.mxu0
  %v7980 = vadd.f32 %v7666, %v7979
  %7981 = vmatprep.mubr.bf16.mxu0 %v7584
  %7982 = vmatmul.mubr.bf16.gmra.mxu0 %v7583
  %v7983 = vpop.f32.mrf.mxu0
  %v7984 = vadd.f32 %v7662, %v7983
  %v7985 = vpop.f32.mrf.mxu0
  %v7986 = vadd.f32 %v7666, %v7985
  %v7987 = vpop.f32.mrf.mxu0
  %v7988 = vadd.f32 %v7662, %v7987
  %v7989 = vpop.f32.mrf.mxu0
  %v7990 = vadd.f32 %v7666, %v7989
  %7991 = vmatprep.mubr.bf16.mxu0 %v7586
  %7992 = vmatmul.mubr.bf16.gmra.mxu0 %v7585
  %v7993 = vpop.f32.mrf.mxu0
  %v7994 = vadd.f32 %v7662, %v7993
  %v7995 = vpop.f32.mrf.mxu0
  %v7996 = vadd.f32 %v7666, %v7995
  %v7997 = vpop.f32.mrf.mxu0
  %v7998 = vadd.f32 %v7662, %v7997
  %v7999 = vpop.f32.mrf.mxu0
  %v8000 = vadd.f32 %v7666, %v7999
  %8001 = vmatprep.mubr.bf16.mxu0 %v7588
  %8002 = vmatmul.mubr.bf16.gmra.mxu0 %v7587
  %v8003 = vpop.f32.mrf.mxu0
  %v8004 = vadd.f32 %v7662, %v8003
  %v8005 = vpop.f32.mrf.mxu0
  %v8006 = vadd.f32 %v7666, %v8005
  %v8007 = vpop.f32.mrf.mxu0
  %v8008 = vadd.f32 %v7662, %v8007
  %v8009 = vpop.f32.mrf.mxu0
  %v8010 = vadd.f32 %v7666, %v8009
  %8011 = vmatprep.mubr.bf16.mxu0 %v7590
  %8012 = vmatmul.mubr.bf16.gmra.mxu0 %v7589
  %v8013 = vpop.f32.mrf.mxu0
  %v8014 = vadd.f32 %v7662, %v8013
  %v8015 = vpop.f32.mrf.mxu0
  %v8016 = vadd.f32 %v7666, %v8015
  %v8017 = vpop.f32.mrf.mxu0
  %v8018 = vadd.f32 %v7662, %v8017
  %v8019 = vpop.f32.mrf.mxu0
  %v8020 = vadd.f32 %v7666, %v8019
  %8021 = vmatprep.mubr.bf16.mxu0 %v7592
  %8022 = vmatmul.mubr.bf16.gmra.mxu0 %v7591
  %v8023 = vpop.f32.mrf.mxu0
  %v8024 = vadd.f32 %v7662, %v8023
  %v8025 = vpop.f32.mrf.mxu0
  %v8026 = vadd.f32 %v7666, %v8025
  %v8027 = vpop.f32.mrf.mxu0
  %v8028 = vadd.f32 %v7662, %v8027
  %v8029 = vpop.f32.mrf.mxu0
  %v8030 = vadd.f32 %v7666, %v8029
  %8031 = vmatprep.mubr.bf16.mxu0 %v7594
  %8032 = vmatmul.mubr.bf16.gmra.mxu0 %v7593
  %v8033 = vpop.f32.mrf.mxu0
  %v8034 = vadd.f32 %v7662, %v8033
  %v8035 = vpop.f32.mrf.mxu0
  %v8036 = vadd.f32 %v7666, %v8035
  %v8037 = vpop.f32.mrf.mxu0
  %v8038 = vadd.f32 %v7662, %v8037
  %v8039 = vpop.f32.mrf.mxu0
  %v8040 = vadd.f32 %v7666, %v8039
  %8041 = vmatprep.mubr.bf16.mxu0 %v7596
  %8042 = vmatmul.mubr.bf16.gmra.mxu0 %v7595
  %v8043 = vpop.f32.mrf.mxu0
  %v8044 = vadd.f32 %v7662, %v8043
  %v8045 = vpop.f32.mrf.mxu0
  %v8046 = vadd.f32 %v7666, %v8045
  %v8047 = vpop.f32.mrf.mxu0
  %v8048 = vadd.f32 %v7662, %v8047
  %v8049 = vpop.f32.mrf.mxu0
  %v8050 = vadd.f32 %v7666, %v8049
  %8051 = vmatprep.mubr.bf16.mxu0 %v7598
  %8052 = vmatmul.mubr.bf16.gmra.mxu0 %v7597
  %v8053 = vpop.f32.mrf.mxu0
  %v8054 = vadd.f32 %v7662, %v8053
  %v8055 = vpop.f32.mrf.mxu0
  %v8056 = vadd.f32 %v7666, %v8055
  %v8057 = vpop.f32.mrf.mxu0
  %v8058 = vadd.f32 %v7662, %v8057
  %v8059 = vpop.f32.mrf.mxu0
  %v8060 = vadd.f32 %v7666, %v8059
  %8061 = vmatprep.mubr.bf16.mxu0 %v7600
  %8062 = vmatmul.mubr.bf16.gmra.mxu0 %v7599
  %v8063 = vpop.f32.mrf.mxu0
  %v8064 = vadd.f32 %v7662, %v8063
  %v8065 = vpop.f32.mrf.mxu0
  %v8066 = vadd.f32 %v7666, %v8065
  %v8067 = vpop.f32.mrf.mxu0
  %v8068 = vadd.f32 %v7662, %v8067
  %v8069 = vpop.f32.mrf.mxu0
  %v8070 = vadd.f32 %v7666, %v8069
  %8071 = vmatprep.mubr.bf16.mxu0 %v7602
  %8072 = vmatmul.mubr.bf16.gmra.mxu0 %v7601
  %v8073 = vpop.f32.mrf.mxu0
  %v8074 = vadd.f32 %v7662, %v8073
  %v8075 = vpop.f32.mrf.mxu0
  %v8076 = vadd.f32 %v7666, %v8075
  %v8077 = vpop.f32.mrf.mxu0
  %v8078 = vadd.f32 %v7662, %v8077
  %v8079 = vpop.f32.mrf.mxu0
  %v8080 = vadd.f32 %v7666, %v8079
  %8081 = vmatprep.mubr.bf16.mxu0 %v7604
  %8082 = vmatmul.mubr.bf16.gmra.mxu0 %v7603
  %v8083 = vpop.f32.mrf.mxu0
  %v8084 = vadd.f32 %v7662, %v8083
  %v8085 = vpop.f32.mrf.mxu0
  %v8086 = vadd.f32 %v7666, %v8085
  %v8087 = vpop.f32.mrf.mxu0
  %v8088 = vadd.f32 %v7662, %v8087
  %v8089 = vpop.f32.mrf.mxu0
  %v8090 = vadd.f32 %v7666, %v8089
  %8091 = vmatprep.mubr.bf16.mxu0 %v7606
  %8092 = vmatmul.mubr.bf16.gmra.mxu0 %v7605
  %v8093 = vpop.f32.mrf.mxu0
  %v8094 = vadd.f32 %v7662, %v8093
  %v8095 = vpop.f32.mrf.mxu0
  %v8096 = vadd.f32 %v7666, %v8095
  %v8097 = vpop.f32.mrf.mxu0
  %v8098 = vadd.f32 %v7662, %v8097
  %v8099 = vpop.f32.mrf.mxu0
  %v8100 = vadd.f32 %v7666, %v8099
  %8101 = vmatprep.mubr.bf16.mxu0 %v7608
  %8102 = vmatmul.mubr.bf16.gmra.mxu0 %v7607
  %v8103 = vpop.f32.mrf.mxu0
  %v8104 = vadd.f32 %v7662, %v8103
  %v8105 = vpop.f32.mrf.mxu0
  %v8106 = vadd.f32 %v7666, %v8105
  %v8107 = vpop.f32.mrf.mxu0
  %v8108 = vadd.f32 %v7662, %v8107
  %v8109 = vpop.f32.mrf.mxu0
  %v8110 = vadd.f32 %v7666, %v8109
  %8111 = vmatprep.mubr.bf16.mxu0 %v7610
  %8112 = vmatmul.mubr.bf16.gmra.mxu0 %v7609
  %v8113 = vpop.f32.mrf.mxu0
  %v8114 = vadd.f32 %v7662, %v8113
  %v8115 = vpop.f32.mrf.mxu0
  %v8116 = vadd.f32 %v7666, %v8115
  %v8117 = vpop.f32.mrf.mxu0
  %v8118 = vadd.f32 %v7662, %v8117
  %v8119 = vpop.f32.mrf.mxu0
  %v8120 = vadd.f32 %v7666, %v8119
  %8121 = vmatprep.mubr.bf16.mxu0 %v7612
  %8122 = vmatmul.mubr.bf16.gmra.mxu0 %v7611
  %v8123 = vpop.f32.mrf.mxu0
  %v8124 = vadd.f32 %v7662, %v8123
  %v8125 = vpop.f32.mrf.mxu0
  %v8126 = vadd.f32 %v7666, %v8125
  %v8127 = vpop.f32.mrf.mxu0
  %v8128 = vadd.f32 %v7662, %v8127
  %v8129 = vpop.f32.mrf.mxu0
  %v8130 = vadd.f32 %v7666, %v8129
  %8131 = vmatprep.mubr.bf16.mxu0 %v7614
  %8132 = vmatmul.mubr.bf16.gmra.mxu0 %v7613
  %v8133 = vpop.f32.mrf.mxu0
  %v8134 = vadd.f32 %v7662, %v8133
  %v8135 = vpop.f32.mrf.mxu0
  %v8136 = vadd.f32 %v7666, %v8135
  %v8137 = vpop.f32.mrf.mxu0
  %v8138 = vadd.f32 %v7662, %v8137
  %v8139 = vpop.f32.mrf.mxu0
  %v8140 = vadd.f32 %v7666, %v8139
  %8141 = vmatprep.mubr.bf16.mxu0 %v7616
  %8142 = vmatmul.mubr.bf16.gmra.mxu0 %v7615
  %v8143 = vpop.f32.mrf.mxu0
  %v8144 = vadd.f32 %v7662, %v8143
  %v8145 = vpop.f32.mrf.mxu0
  %v8146 = vadd.f32 %v7666, %v8145
  %v8147 = vpop.f32.mrf.mxu0
  %v8148 = vadd.f32 %v7662, %v8147
  %v8149 = vpop.f32.mrf.mxu0
  %v8150 = vadd.f32 %v7666, %v8149
  %8151 = vmatprep.mubr.bf16.mxu0 %v7618
  %8152 = vmatmul.mubr.bf16.gmra.mxu0 %v7617
  %v8153 = vpop.f32.mrf.mxu0
  %v8154 = vadd.f32 %v7662, %v8153
  %v8155 = vpop.f32.mrf.mxu0
  %v8156 = vadd.f32 %v7666, %v8155
  %v8157 = vpop.f32.mrf.mxu0
  %v8158 = vadd.f32 %v7662, %v8157
  %v8159 = vpop.f32.mrf.mxu0
  %v8160 = vadd.f32 %v7666, %v8159
  %8161 = vmatprep.mubr.bf16.mxu0 %v7620
  %8162 = vmatmul.mubr.bf16.gmra.mxu0 %v7619
  %v8163 = vpop.f32.mrf.mxu0
  %v8164 = vadd.f32 %v7662, %v8163
  %v8165 = vpop.f32.mrf.mxu0
  %v8166 = vadd.f32 %v7666, %v8165
  %v8167 = vpop.f32.mrf.mxu0
  %v8168 = vadd.f32 %v7662, %v8167
  %v8169 = vpop.f32.mrf.mxu0
  %v8170 = vadd.f32 %v7666, %v8169
  %8171 = vmatprep.mubr.bf16.mxu0 %v7622
  %8172 = vmatmul.mubr.bf16.gmra.mxu0 %v7621
  %v8173 = vpop.f32.mrf.mxu0
  %v8174 = vadd.f32 %v7662, %v8173
  %v8175 = vpop.f32.mrf.mxu0
  %v8176 = vadd.f32 %v7666, %v8175
  %v8177 = vpop.f32.mrf.mxu0
  %v8178 = vadd.f32 %v7662, %v8177
  %v8179 = vpop.f32.mrf.mxu0
  %v8180 = vadd.f32 %v7666, %v8179
  %8181 = vdwg.mxu0
  %v8182 = vadd.f32 %v7864, %v771
  %v8183 = vadd.f32 %v7866, %v773
  %v8184 = vadd.f32 %v7868, %v775
  %v8185 = vadd.f32 %v7870, %v777
  %v8186 = vadd.f32 %v7874, %v781
  %v8187 = vadd.f32 %v7876, %v783
  %v8188 = vadd.f32 %v7878, %v785
  %v8189 = vadd.f32 %v7880, %v787
  %v8190 = vadd.f32 %v7884, %v791
  %v8191 = vadd.f32 %v7886, %v793
  %v8192 = vadd.f32 %v7888, %v795
  %v8193 = vadd.f32 %v7890, %v797
  %v8194 = vadd.f32 %v7894, %v801
  %v8195 = vadd.f32 %v7896, %v803
  %v8196 = vadd.f32 %v7898, %v805
  %v8197 = vadd.f32 %v7900, %v807
  %v8198 = vadd.f32 %v7904, %v811
  %v8199 = vadd.f32 %v7906, %v813
  %v8200 = vadd.f32 %v7908, %v815
  %v8201 = vadd.f32 %v7910, %v817
  %v8202 = vadd.f32 %v7914, %v821
  %v8203 = vadd.f32 %v7916, %v823
  %v8204 = vadd.f32 %v7918, %v825
  %v8205 = vadd.f32 %v7920, %v827
  %v8206 = vadd.f32 %v7924, %v831
  %v8207 = vadd.f32 %v7926, %v833
  %v8208 = vadd.f32 %v7928, %v835
  %v8209 = vadd.f32 %v7930, %v837
  %v8210 = vadd.f32 %v7934, %v841
  %v8211 = vadd.f32 %v7936, %v843
  %v8212 = vadd.f32 %v7938, %v845
  %v8213 = vadd.f32 %v7940, %v847
  %v8214 = vadd.f32 %v7944, %v851
  %v8215 = vadd.f32 %v7946, %v853
  %v8216 = vadd.f32 %v7948, %v855
  %v8217 = vadd.f32 %v7950, %v857
  %v8218 = vadd.f32 %v7954, %v861
  %v8219 = vadd.f32 %v7956, %v863
  %v8220 = vadd.f32 %v7958, %v865
  %v8221 = vadd.f32 %v7960, %v867
  %v8222 = vadd.f32 %v7964, %v871
  %v8223 = vadd.f32 %v7966, %v873
  %v8224 = vadd.f32 %v7968, %v875
  %v8225 = vadd.f32 %v7970, %v877
  %v8226 = vadd.f32 %v7974, %v881
  %v8227 = vadd.f32 %v7976, %v883
  %v8228 = vadd.f32 %v7978, %v885
  %v8229 = vadd.f32 %v7980, %v887
  %v8230 = vadd.f32 %v7984, %v891
  %v8231 = vadd.f32 %v7986, %v893
  %v8232 = vadd.f32 %v7988, %v895
  %v8233 = vadd.f32 %v7990, %v897
  %v8234 = vadd.f32 %v7994, %v901
  %v8235 = vadd.f32 %v7996, %v903
  %v8236 = vadd.f32 %v7998, %v905
  %v8237 = vadd.f32 %v8000, %v907
  %v8238 = vadd.f32 %v8004, %v911
  %v8239 = vadd.f32 %v8006, %v913
  %v8240 = vadd.f32 %v8008, %v915
  %v8241 = vadd.f32 %v8010, %v917
  %v8242 = vadd.f32 %v8014, %v921
  %v8243 = vadd.f32 %v8016, %v923
  %v8244 = vadd.f32 %v8018, %v925
  %v8245 = vadd.f32 %v8020, %v927
  %v8246 = vadd.f32 %v8024, %v931
  %v8247 = vadd.f32 %v8026, %v933
  %v8248 = vadd.f32 %v8028, %v935
  %v8249 = vadd.f32 %v8030, %v937
  %v8250 = vadd.f32 %v8034, %v941
  %v8251 = vadd.f32 %v8036, %v943
  %v8252 = vadd.f32 %v8038, %v945
  %v8253 = vadd.f32 %v8040, %v947
  %v8254 = vadd.f32 %v8044, %v951
  %v8255 = vadd.f32 %v8046, %v953
  %v8256 = vadd.f32 %v8048, %v955
  %v8257 = vadd.f32 %v8050, %v957
  %v8258 = vadd.f32 %v8054, %v961
  %v8259 = vadd.f32 %v8056, %v963
  %v8260 = vadd.f32 %v8058, %v965
  %v8261 = vadd.f32 %v8060, %v967
  %v8262 = vadd.f32 %v8064, %v971
  %v8263 = vadd.f32 %v8066, %v973
  %v8264 = vadd.f32 %v8068, %v975
  %v8265 = vadd.f32 %v8070, %v977
  %v8266 = vadd.f32 %v8074, %v981
  %v8267 = vadd.f32 %v8076, %v983
  %v8268 = vadd.f32 %v8078, %v985
  %v8269 = vadd.f32 %v8080, %v987
  %v8270 = vadd.f32 %v8084, %v991
  %v8271 = vadd.f32 %v8086, %v993
  %v8272 = vadd.f32 %v8088, %v995
  %v8273 = vadd.f32 %v8090, %v997
  %v8274 = vadd.f32 %v8094, %v1001
  %v8275 = vadd.f32 %v8096, %v1003
  %v8276 = vadd.f32 %v8098, %v1005
  %v8277 = vadd.f32 %v8100, %v1007
  %v8278 = vadd.f32 %v8104, %v1011
  %v8279 = vadd.f32 %v8106, %v1013
  %v8280 = vadd.f32 %v8108, %v1015
  %v8281 = vadd.f32 %v8110, %v1017
  %v8282 = vadd.f32 %v8114, %v1021
  %v8283 = vadd.f32 %v8116, %v1023
  %v8284 = vadd.f32 %v8118, %v1025
  %v8285 = vadd.f32 %v8120, %v1027
  %v8286 = vadd.f32 %v8124, %v1031
  %v8287 = vadd.f32 %v8126, %v1033
  %v8288 = vadd.f32 %v8128, %v1035
  %v8289 = vadd.f32 %v8130, %v1037
  %v8290 = vadd.f32 %v8134, %v1041
  %v8291 = vadd.f32 %v8136, %v1043
  %v8292 = vadd.f32 %v8138, %v1045
  %v8293 = vadd.f32 %v8140, %v1047
  %v8294 = vadd.f32 %v8144, %v1051
  %v8295 = vadd.f32 %v8146, %v1053
  %v8296 = vadd.f32 %v8148, %v1055
  %v8297 = vadd.f32 %v8150, %v1057
  %v8298 = vadd.f32 %v8154, %v1061
  %v8299 = vadd.f32 %v8156, %v1063
  %v8300 = vadd.f32 %v8158, %v1065
  %v8301 = vadd.f32 %v8160, %v1067
  %v8302 = vadd.f32 %v8164, %v1071
  %v8303 = vadd.f32 %v8166, %v1073
  %v8304 = vadd.f32 %v8168, %v1075
  %v8305 = vadd.f32 %v8170, %v1077
  %v8306 = vadd.f32 %v8174, %v1081
  %v8307 = vadd.f32 %v8176, %v1083
  %v8308 = vadd.f32 %v8178, %v1085
  %v8309 = vadd.f32 %v8180, %v1087
  %vm8310 = vcmp.gt.f32.partialorder %v8182, 0.0
  %vm8311 = vcmp.gt.f32.partialorder %v8183, 0.0
  %vm8312 = vcmp.gt.f32.partialorder %v8184, 0.0
  %vm8313 = vcmp.gt.f32.partialorder %v8185, 0.0
  %vm8314 = vcmp.gt.f32.partialorder %v8186, 0.0
  %vm8315 = vcmp.gt.f32.partialorder %v8187, 0.0
  %vm8316 = vcmp.gt.f32.partialorder %v8188, 0.0
  %vm8317 = vcmp.gt.f32.partialorder %v8189, 0.0
  %vm8318 = vcmp.gt.f32.partialorder %v8190, 0.0
  %vm8319 = vcmp.gt.f32.partialorder %v8191, 0.0
  %vm8320 = vcmp.gt.f32.partialorder %v8192, 0.0
  %vm8321 = vcmp.gt.f32.partialorder %v8193, 0.0
  %vm8322 = vcmp.gt.f32.partialorder %v8194, 0.0
  %vm8323 = vcmp.gt.f32.partialorder %v8195, 0.0
  %vm8324 = vcmp.gt.f32.partialorder %v8196, 0.0
  %vm8325 = vcmp.gt.f32.partialorder %v8197, 0.0
  %vm8326 = vcmp.gt.f32.partialorder %v8198, 0.0
  %vm8327 = vcmp.gt.f32.partialorder %v8199, 0.0
  %vm8328 = vcmp.gt.f32.partialorder %v8200, 0.0
  %vm8329 = vcmp.gt.f32.partialorder %v8201, 0.0
  %vm8330 = vcmp.gt.f32.partialorder %v8202, 0.0
  %vm8331 = vcmp.gt.f32.partialorder %v8203, 0.0
  %vm8332 = vcmp.gt.f32.partialorder %v8204, 0.0
  %vm8333 = vcmp.gt.f32.partialorder %v8205, 0.0
  %vm8334 = vcmp.gt.f32.partialorder %v8206, 0.0
  %vm8335 = vcmp.gt.f32.partialorder %v8207, 0.0
  %vm8336 = vcmp.gt.f32.partialorder %v8208, 0.0
  %vm8337 = vcmp.gt.f32.partialorder %v8209, 0.0
  %vm8338 = vcmp.gt.f32.partialorder %v8210, 0.0
  %vm8339 = vcmp.gt.f32.partialorder %v8211, 0.0
  %vm8340 = vcmp.gt.f32.partialorder %v8212, 0.0
  %vm8341 = vcmp.gt.f32.partialorder %v8213, 0.0
  %vm8342 = vcmp.gt.f32.partialorder %v8214, 0.0
  %vm8343 = vcmp.gt.f32.partialorder %v8215, 0.0
  %vm8344 = vcmp.gt.f32.partialorder %v8216, 0.0
  %vm8345 = vcmp.gt.f32.partialorder %v8217, 0.0
  %vm8346 = vcmp.gt.f32.partialorder %v8218, 0.0
  %vm8347 = vcmp.gt.f32.partialorder %v8219, 0.0
  %vm8348 = vcmp.gt.f32.partialorder %v8220, 0.0
  %vm8349 = vcmp.gt.f32.partialorder %v8221, 0.0
  %vm8350 = vcmp.gt.f32.partialorder %v8222, 0.0
  %vm8351 = vcmp.gt.f32.partialorder %v8223, 0.0
  %vm8352 = vcmp.gt.f32.partialorder %v8224, 0.0
  %vm8353 = vcmp.gt.f32.partialorder %v8225, 0.0
  %vm8354 = vcmp.gt.f32.partialorder %v8226, 0.0
  %vm8355 = vcmp.gt.f32.partialorder %v8227, 0.0
  %vm8356 = vcmp.gt.f32.partialorder %v8228, 0.0
  %vm8357 = vcmp.gt.f32.partialorder %v8229, 0.0
  %vm8358 = vcmp.gt.f32.partialorder %v8230, 0.0
  %vm8359 = vcmp.gt.f32.partialorder %v8231, 0.0
  %vm8360 = vcmp.gt.f32.partialorder %v8232, 0.0
  %vm8361 = vcmp.gt.f32.partialorder %v8233, 0.0
  %vm8362 = vcmp.gt.f32.partialorder %v8234, 0.0
  %vm8363 = vcmp.gt.f32.partialorder %v8235, 0.0
  %vm8364 = vcmp.gt.f32.partialorder %v8236, 0.0
  %vm8365 = vcmp.gt.f32.partialorder %v8237, 0.0
  %vm8366 = vcmp.gt.f32.partialorder %v8238, 0.0
  %vm8367 = vcmp.gt.f32.partialorder %v8239, 0.0
  %vm8368 = vcmp.gt.f32.partialorder %v8240, 0.0
  %vm8369 = vcmp.gt.f32.partialorder %v8241, 0.0
  %vm8370 = vcmp.gt.f32.partialorder %v8242, 0.0
  %vm8371 = vcmp.gt.f32.partialorder %v8243, 0.0
  %vm8372 = vcmp.gt.f32.partialorder %v8244, 0.0
  %vm8373 = vcmp.gt.f32.partialorder %v8245, 0.0
  %vm8374 = vcmp.gt.f32.partialorder %v8246, 0.0
  %vm8375 = vcmp.gt.f32.partialorder %v8247, 0.0
  %vm8376 = vcmp.gt.f32.partialorder %v8248, 0.0
  %vm8377 = vcmp.gt.f32.partialorder %v8249, 0.0
  %vm8378 = vcmp.gt.f32.partialorder %v8250, 0.0
  %vm8379 = vcmp.gt.f32.partialorder %v8251, 0.0
  %vm8380 = vcmp.gt.f32.partialorder %v8252, 0.0
  %vm8381 = vcmp.gt.f32.partialorder %v8253, 0.0
  %vm8382 = vcmp.gt.f32.partialorder %v8254, 0.0
  %vm8383 = vcmp.gt.f32.partialorder %v8255, 0.0
  %vm8384 = vcmp.gt.f32.partialorder %v8256, 0.0
  %vm8385 = vcmp.gt.f32.partialorder %v8257, 0.0
  %vm8386 = vcmp.gt.f32.partialorder %v8258, 0.0
  %vm8387 = vcmp.gt.f32.partialorder %v8259, 0.0
  %vm8388 = vcmp.gt.f32.partialorder %v8260, 0.0
  %vm8389 = vcmp.gt.f32.partialorder %v8261, 0.0
  %vm8390 = vcmp.gt.f32.partialorder %v8262, 0.0
  %vm8391 = vcmp.gt.f32.partialorder %v8263, 0.0
  %vm8392 = vcmp.gt.f32.partialorder %v8264, 0.0
  %vm8393 = vcmp.gt.f32.partialorder %v8265, 0.0
  %vm8394 = vcmp.gt.f32.partialorder %v8266, 0.0
  %vm8395 = vcmp.gt.f32.partialorder %v8267, 0.0
  %vm8396 = vcmp.gt.f32.partialorder %v8268, 0.0
  %vm8397 = vcmp.gt.f32.partialorder %v8269, 0.0
  %vm8398 = vcmp.gt.f32.partialorder %v8270, 0.0
  %vm8399 = vcmp.gt.f32.partialorder %v8271, 0.0
  %vm8400 = vcmp.gt.f32.partialorder %v8272, 0.0
  %vm8401 = vcmp.gt.f32.partialorder %v8273, 0.0
  %vm8402 = vcmp.gt.f32.partialorder %v8274, 0.0
  %vm8403 = vcmp.gt.f32.partialorder %v8275, 0.0
  %vm8404 = vcmp.gt.f32.partialorder %v8276, 0.0
  %vm8405 = vcmp.gt.f32.partialorder %v8277, 0.0
  %vm8406 = vcmp.gt.f32.partialorder %v8278, 0.0
  %vm8407 = vcmp.gt.f32.partialorder %v8279, 0.0
  %vm8408 = vcmp.gt.f32.partialorder %v8280, 0.0
  %vm8409 = vcmp.gt.f32.partialorder %v8281, 0.0
  %vm8410 = vcmp.gt.f32.partialorder %v8282, 0.0
  %vm8411 = vcmp.gt.f32.partialorder %v8283, 0.0
  %vm8412 = vcmp.gt.f32.partialorder %v8284, 0.0
  %vm8413 = vcmp.gt.f32.partialorder %v8285, 0.0
  %vm8414 = vcmp.gt.f32.partialorder %v8286, 0.0
  %vm8415 = vcmp.gt.f32.partialorder %v8287, 0.0
  %vm8416 = vcmp.gt.f32.partialorder %v8288, 0.0
  %vm8417 = vcmp.gt.f32.partialorder %v8289, 0.0
  %vm8418 = vcmp.gt.f32.partialorder %v8290, 0.0
  %vm8419 = vcmp.gt.f32.partialorder %v8291, 0.0
  %vm8420 = vcmp.gt.f32.partialorder %v8292, 0.0
  %vm8421 = vcmp.gt.f32.partialorder %v8293, 0.0
  %vm8422 = vcmp.gt.f32.partialorder %v8294, 0.0
  %vm8423 = vcmp.gt.f32.partialorder %v8295, 0.0
  %vm8424 = vcmp.gt.f32.partialorder %v8296, 0.0
  %vm8425 = vcmp.gt.f32.partialorder %v8297, 0.0
  %vm8426 = vcmp.gt.f32.partialorder %v8298, 0.0
  %vm8427 = vcmp.gt.f32.partialorder %v8299, 0.0
  %vm8428 = vcmp.gt.f32.partialorder %v8300, 0.0
  %vm8429 = vcmp.gt.f32.partialorder %v8301, 0.0
  %vm8430 = vcmp.gt.f32.partialorder %v8302, 0.0
  %vm8431 = vcmp.gt.f32.partialorder %v8303, 0.0
  %vm8432 = vcmp.gt.f32.partialorder %v8304, 0.0
  %vm8433 = vcmp.gt.f32.partialorder %v8305, 0.0
  %vm8434 = vcmp.gt.f32.partialorder %v8306, 0.0
  %vm8435 = vcmp.gt.f32.partialorder %v8307, 0.0
  %vm8436 = vcmp.gt.f32.partialorder %v8308, 0.0
  %vm8437 = vcmp.gt.f32.partialorder %v8309, 0.0
  %v8438 = vmin.f32 %v8182, 0.0
  %v8439 = vmin.f32 %v8183, 0.0
  %v8440 = vmin.f32 %v8184, 0.0
  %v8441 = vmin.f32 %v8185, 0.0
  %v8442 = vmin.f32 %v8186, 0.0
  %v8443 = vmin.f32 %v8187, 0.0
  %v8444 = vmin.f32 %v8188, 0.0
  %v8445 = vmin.f32 %v8189, 0.0
  %v8446 = vmin.f32 %v8190, 0.0
  %v8447 = vmin.f32 %v8191, 0.0
  %v8448 = vmin.f32 %v8192, 0.0
  %v8449 = vmin.f32 %v8193, 0.0
  %v8450 = vmin.f32 %v8194, 0.0
  %v8451 = vmin.f32 %v8195, 0.0
  %v8452 = vmin.f32 %v8196, 0.0
  %v8453 = vmin.f32 %v8197, 0.0
  %v8454 = vmin.f32 %v8198, 0.0
  %v8455 = vmin.f32 %v8199, 0.0
  %v8456 = vmin.f32 %v8200, 0.0
  %v8457 = vmin.f32 %v8201, 0.0
  %v8458 = vmin.f32 %v8202, 0.0
  %v8459 = vmin.f32 %v8203, 0.0
  %v8460 = vmin.f32 %v8204, 0.0
  %v8461 = vmin.f32 %v8205, 0.0
  %v8462 = vmin.f32 %v8206, 0.0
  %v8463 = vmin.f32 %v8207, 0.0
  %v8464 = vmin.f32 %v8208, 0.0
  %v8465 = vmin.f32 %v8209, 0.0
  %v8466 = vmin.f32 %v8210, 0.0
  %v8467 = vmin.f32 %v8211, 0.0
  %v8468 = vmin.f32 %v8212, 0.0
  %v8469 = vmin.f32 %v8213, 0.0
  %v8470 = vmin.f32 %v8214, 0.0
  %v8471 = vmin.f32 %v8215, 0.0
  %v8472 = vmin.f32 %v8216, 0.0
  %v8473 = vmin.f32 %v8217, 0.0
  %v8474 = vmin.f32 %v8218, 0.0
  %v8475 = vmin.f32 %v8219, 0.0
  %v8476 = vmin.f32 %v8220, 0.0
  %v8477 = vmin.f32 %v8221, 0.0
  %v8478 = vmin.f32 %v8222, 0.0
  %v8479 = vmin.f32 %v8223, 0.0
  %v8480 = vmin.f32 %v8224, 0.0
  %v8481 = vmin.f32 %v8225, 0.0
  %v8482 = vmin.f32 %v8226, 0.0
  %v8483 = vmin.f32 %v8227, 0.0
  %v8484 = vmin.f32 %v8228, 0.0
  %v8485 = vmin.f32 %v8229, 0.0
  %v8486 = vmin.f32 %v8230, 0.0
  %v8487 = vmin.f32 %v8231, 0.0
  %v8488 = vmin.f32 %v8232, 0.0
  %v8489 = vmin.f32 %v8233, 0.0
  %v8490 = vmin.f32 %v8234, 0.0
  %v8491 = vmin.f32 %v8235, 0.0
  %v8492 = vmin.f32 %v8236, 0.0
  %v8493 = vmin.f32 %v8237, 0.0
  %v8494 = vmin.f32 %v8238, 0.0
  %v8495 = vmin.f32 %v8239, 0.0
  %v8496 = vmin.f32 %v8240, 0.0
  %v8497 = vmin.f32 %v8241, 0.0
  %v8498 = vmin.f32 %v8242, 0.0
  %v8499 = vmin.f32 %v8243, 0.0
  %v8500 = vmin.f32 %v8244, 0.0
  %v8501 = vmin.f32 %v8245, 0.0
  %v8502 = vmin.f32 %v8246, 0.0
  %v8503 = vmin.f32 %v8247, 0.0
  %v8504 = vmin.f32 %v8248, 0.0
  %v8505 = vmin.f32 %v8249, 0.0
  %v8506 = vmin.f32 %v8250, 0.0
  %v8507 = vmin.f32 %v8251, 0.0
  %v8508 = vmin.f32 %v8252, 0.0
  %v8509 = vmin.f32 %v8253, 0.0
  %v8510 = vmin.f32 %v8254, 0.0
  %v8511 = vmin.f32 %v8255, 0.0
  %v8512 = vmin.f32 %v8256, 0.0
  %v8513 = vmin.f32 %v8257, 0.0
  %v8514 = vmin.f32 %v8258, 0.0
  %v8515 = vmin.f32 %v8259, 0.0
  %v8516 = vmin.f32 %v8260, 0.0
  %v8517 = vmin.f32 %v8261, 0.0
  %v8518 = vmin.f32 %v8262, 0.0
  %v8519 = vmin.f32 %v8263, 0.0
  %v8520 = vmin.f32 %v8264, 0.0
  %v8521 = vmin.f32 %v8265, 0.0
  %v8522 = vmin.f32 %v8266, 0.0
  %v8523 = vmin.f32 %v8267, 0.0
  %v8524 = vmin.f32 %v8268, 0.0
  %v8525 = vmin.f32 %v8269, 0.0
  %v8526 = vmin.f32 %v8270, 0.0
  %v8527 = vmin.f32 %v8271, 0.0
  %v8528 = vmin.f32 %v8272, 0.0
  %v8529 = vmin.f32 %v8273, 0.0
  %v8530 = vmin.f32 %v8274, 0.0
  %v8531 = vmin.f32 %v8275, 0.0
  %v8532 = vmin.f32 %v8276, 0.0
  %v8533 = vmin.f32 %v8277, 0.0
  %v8534 = vmin.f32 %v8278, 0.0
  %v8535 = vmin.f32 %v8279, 0.0
  %v8536 = vmin.f32 %v8280, 0.0
  %v8537 = vmin.f32 %v8281, 0.0
  %v8538 = vmin.f32 %v8282, 0.0
  %v8539 = vmin.f32 %v8283, 0.0
  %v8540 = vmin.f32 %v8284, 0.0
  %v8541 = vmin.f32 %v8285, 0.0
  %v8542 = vmin.f32 %v8286, 0.0
  %v8543 = vmin.f32 %v8287, 0.0
  %v8544 = vmin.f32 %v8288, 0.0
  %v8545 = vmin.f32 %v8289, 0.0
  %v8546 = vmin.f32 %v8290, 0.0
  %v8547 = vmin.f32 %v8291, 0.0
  %v8548 = vmin.f32 %v8292, 0.0
  %v8549 = vmin.f32 %v8293, 0.0
  %v8550 = vmin.f32 %v8294, 0.0
  %v8551 = vmin.f32 %v8295, 0.0
  %v8552 = vmin.f32 %v8296, 0.0
  %v8553 = vmin.f32 %v8297, 0.0
  %v8554 = vmin.f32 %v8298, 0.0
  %v8555 = vmin.f32 %v8299, 0.0
  %v8556 = vmin.f32 %v8300, 0.0
  %v8557 = vmin.f32 %v8301, 0.0
  %v8558 = vmin.f32 %v8302, 0.0
  %v8559 = vmin.f32 %v8303, 0.0
  %v8560 = vmin.f32 %v8304, 0.0
  %v8561 = vmin.f32 %v8305, 0.0
  %v8562 = vmin.f32 %v8306, 0.0
  %v8563 = vmin.f32 %v8307, 0.0
  %v8564 = vmin.f32 %v8308, 0.0
  %v8565 = vmin.f32 %v8309, 0.0
  %v8566 = vmul.f32 %v8438, 1.442695
  %v8567 = vpow.pop %v8566
  %v8568 = vmul.f32 %v8439, 1.442695
  %v8569 = vpow.pop %v8568
  %v8570 = vmul.f32 %v8440, 1.442695
  %v8571 = vpow.pop %v8570
  %v8572 = vmul.f32 %v8441, 1.442695
  %v8573 = vpow.pop %v8572
  %v8574 = vmul.f32 %v8442, 1.442695
  %v8575 = vpow.pop %v8574
  %v8576 = vmul.f32 %v8443, 1.442695
  %v8577 = vpow.pop %v8576
  %v8578 = vmul.f32 %v8444, 1.442695
  %v8579 = vpow.pop %v8578
  %v8580 = vmul.f32 %v8445, 1.442695
  %v8581 = vpow.pop %v8580
  %v8582 = vmul.f32 %v8446, 1.442695
  %v8583 = vpow.pop %v8582
  %v8584 = vmul.f32 %v8447, 1.442695
  %v8585 = vpow.pop %v8584
  %v8586 = vmul.f32 %v8448, 1.442695
  %v8587 = vpow.pop %v8586
  %v8588 = vmul.f32 %v8449, 1.442695
  %v8589 = vpow.pop %v8588
  %v8590 = vmul.f32 %v8450, 1.442695
  %v8591 = vpow.pop %v8590
  %v8592 = vmul.f32 %v8451, 1.442695
  %v8593 = vpow.pop %v8592
  %v8594 = vmul.f32 %v8452, 1.442695
  %v8595 = vpow.pop %v8594
  %v8596 = vmul.f32 %v8453, 1.442695
  %v8597 = vpow.pop %v8596
  %v8598 = vmul.f32 %v8454, 1.442695
  %v8599 = vpow.pop %v8598
  %v8600 = vmul.f32 %v8455, 1.442695
  %v8601 = vpow.pop %v8600
  %v8602 = vmul.f32 %v8456, 1.442695
  %v8603 = vpow.pop %v8602
  %v8604 = vmul.f32 %v8457, 1.442695
  %v8605 = vpow.pop %v8604
  %v8606 = vmul.f32 %v8458, 1.442695
  %v8607 = vpow.pop %v8606
  %v8608 = vmul.f32 %v8459, 1.442695
  %v8609 = vpow.pop %v8608
  %v8610 = vmul.f32 %v8460, 1.442695
  %v8611 = vpow.pop %v8610
  %v8612 = vmul.f32 %v8461, 1.442695
  %v8613 = vpow.pop %v8612
  %v8614 = vmul.f32 %v8462, 1.442695
  %v8615 = vpow.pop %v8614
  %v8616 = vmul.f32 %v8463, 1.442695
  %v8617 = vpow.pop %v8616
  %v8618 = vmul.f32 %v8464, 1.442695
  %v8619 = vpow.pop %v8618
  %v8620 = vmul.f32 %v8465, 1.442695
  %v8621 = vpow.pop %v8620
  %v8622 = vmul.f32 %v8466, 1.442695
  %v8623 = vpow.pop %v8622
  %v8624 = vmul.f32 %v8467, 1.442695
  %v8625 = vpow.pop %v8624
  %v8626 = vmul.f32 %v8468, 1.442695
  %v8627 = vpow.pop %v8626
  %v8628 = vmul.f32 %v8469, 1.442695
  %v8629 = vpow.pop %v8628
  %v8630 = vmul.f32 %v8470, 1.442695
  %v8631 = vpow.pop %v8630
  %v8632 = vmul.f32 %v8471, 1.442695
  %v8633 = vpow.pop %v8632
  %v8634 = vmul.f32 %v8472, 1.442695
  %v8635 = vpow.pop %v8634
  %v8636 = vmul.f32 %v8473, 1.442695
  %v8637 = vpow.pop %v8636
  %v8638 = vmul.f32 %v8474, 1.442695
  %v8639 = vpow.pop %v8638
  %v8640 = vmul.f32 %v8475, 1.442695
  %v8641 = vpow.pop %v8640
  %v8642 = vmul.f32 %v8476, 1.442695
  %v8643 = vpow.pop %v8642
  %v8644 = vmul.f32 %v8477, 1.442695
  %v8645 = vpow.pop %v8644
  %v8646 = vmul.f32 %v8478, 1.442695
  %v8647 = vpow.pop %v8646
  %v8648 = vmul.f32 %v8479, 1.442695
  %v8649 = vpow.pop %v8648
  %v8650 = vmul.f32 %v8480, 1.442695
  %v8651 = vpow.pop %v8650
  %v8652 = vmul.f32 %v8481, 1.442695
  %v8653 = vpow.pop %v8652
  %v8654 = vmul.f32 %v8482, 1.442695
  %v8655 = vpow.pop %v8654
  %v8656 = vmul.f32 %v8483, 1.442695
  %v8657 = vpow.pop %v8656
  %v8658 = vmul.f32 %v8484, 1.442695
  %v8659 = vpow.pop %v8658
  %v8660 = vmul.f32 %v8485, 1.442695
  %v8661 = vpow.pop %v8660
  %v8662 = vmul.f32 %v8486, 1.442695
  %v8663 = vpow.pop %v8662
  %v8664 = vmul.f32 %v8487, 1.442695
  %v8665 = vpow.pop %v8664
  %v8666 = vmul.f32 %v8488, 1.442695
  %v8667 = vpow.pop %v8666
  %v8668 = vmul.f32 %v8489, 1.442695
  %v8669 = vpow.pop %v8668
  %v8670 = vmul.f32 %v8490, 1.442695
  %v8671 = vpow.pop %v8670
  %v8672 = vmul.f32 %v8491, 1.442695
  %v8673 = vpow.pop %v8672
  %v8674 = vmul.f32 %v8492, 1.442695
  %v8675 = vpow.pop %v8674
  %v8676 = vmul.f32 %v8493, 1.442695
  %v8677 = vpow.pop %v8676
  %v8678 = vmul.f32 %v8494, 1.442695
  %v8679 = vpow.pop %v8678
  %v8680 = vmul.f32 %v8495, 1.442695
  %v8681 = vpow.pop %v8680
  %v8682 = vmul.f32 %v8496, 1.442695
  %v8683 = vpow.pop %v8682
  %v8684 = vmul.f32 %v8497, 1.442695
  %v8685 = vpow.pop %v8684
  %v8686 = vmul.f32 %v8498, 1.442695
  %v8687 = vpow.pop %v8686
  %v8688 = vmul.f32 %v8499, 1.442695
  %v8689 = vpow.pop %v8688
  %v8690 = vmul.f32 %v8500, 1.442695
  %v8691 = vpow.pop %v8690
  %v8692 = vmul.f32 %v8501, 1.442695
  %v8693 = vpow.pop %v8692
  %v8694 = vmul.f32 %v8502, 1.442695
  %v8695 = vpow.pop %v8694
  %v8696 = vmul.f32 %v8503, 1.442695
  %v8697 = vpow.pop %v8696
  %v8698 = vmul.f32 %v8504, 1.442695
  %v8699 = vpow.pop %v8698
  %v8700 = vmul.f32 %v8505, 1.442695
  %v8701 = vpow.pop %v8700
  %v8702 = vmul.f32 %v8506, 1.442695
  %v8703 = vpow.pop %v8702
  %v8704 = vmul.f32 %v8507, 1.442695
  %v8705 = vpow.pop %v8704
  %v8706 = vmul.f32 %v8508, 1.442695
  %v8707 = vpow.pop %v8706
  %v8708 = vmul.f32 %v8509, 1.442695
  %v8709 = vpow.pop %v8708
  %v8710 = vmul.f32 %v8510, 1.442695
  %v8711 = vpow.pop %v8710
  %v8712 = vmul.f32 %v8511, 1.442695
  %v8713 = vpow.pop %v8712
  %v8714 = vmul.f32 %v8512, 1.442695
  %v8715 = vpow.pop %v8714
  %v8716 = vmul.f32 %v8513, 1.442695
  %v8717 = vpow.pop %v8716
  %v8718 = vmul.f32 %v8514, 1.442695
  %v8719 = vpow.pop %v8718
  %v8720 = vmul.f32 %v8515, 1.442695
  %v8721 = vpow.pop %v8720
  %v8722 = vmul.f32 %v8516, 1.442695
  %v8723 = vpow.pop %v8722
  %v8724 = vmul.f32 %v8517, 1.442695
  %v8725 = vpow.pop %v8724
  %v8726 = vmul.f32 %v8518, 1.442695
  %v8727 = vpow.pop %v8726
  %v8728 = vmul.f32 %v8519, 1.442695
  %v8729 = vpow.pop %v8728
  %v8730 = vmul.f32 %v8520, 1.442695
  %v8731 = vpow.pop %v8730
  %v8732 = vmul.f32 %v8521, 1.442695
  %v8733 = vpow.pop %v8732
  %v8734 = vmul.f32 %v8522, 1.442695
  %v8735 = vpow.pop %v8734
  %v8736 = vmul.f32 %v8523, 1.442695
  %v8737 = vpow.pop %v8736
  %v8738 = vmul.f32 %v8524, 1.442695
  %v8739 = vpow.pop %v8738
  %v8740 = vmul.f32 %v8525, 1.442695
  %v8741 = vpow.pop %v8740
  %v8742 = vmul.f32 %v8526, 1.442695
  %v8743 = vpow.pop %v8742
  %v8744 = vmul.f32 %v8527, 1.442695
  %v8745 = vpow.pop %v8744
  %v8746 = vmul.f32 %v8528, 1.442695
  %v8747 = vpow.pop %v8746
  %v8748 = vmul.f32 %v8529, 1.442695
  %v8749 = vpow.pop %v8748
  %v8750 = vmul.f32 %v8530, 1.442695
  %v8751 = vpow.pop %v8750
  %v8752 = vmul.f32 %v8531, 1.442695
  %v8753 = vpow.pop %v8752
  %v8754 = vmul.f32 %v8532, 1.442695
  %v8755 = vpow.pop %v8754
  %v8756 = vmul.f32 %v8533, 1.442695
  %v8757 = vpow.pop %v8756
  %v8758 = vmul.f32 %v8534, 1.442695
  %v8759 = vpow.pop %v8758
  %v8760 = vmul.f32 %v8535, 1.442695
  %v8761 = vpow.pop %v8760
  %v8762 = vmul.f32 %v8536, 1.442695
  %v8763 = vpow.pop %v8762
  %v8764 = vmul.f32 %v8537, 1.442695
  %v8765 = vpow.pop %v8764
  %v8766 = vmul.f32 %v8538, 1.442695
  %v8767 = vpow.pop %v8766
  %v8768 = vmul.f32 %v8539, 1.442695
  %v8769 = vpow.pop %v8768
  %v8770 = vmul.f32 %v8540, 1.442695
  %v8771 = vpow.pop %v8770
  %v8772 = vmul.f32 %v8541, 1.442695
  %v8773 = vpow.pop %v8772
  %v8774 = vmul.f32 %v8542, 1.442695
  %v8775 = vpow.pop %v8774
  %v8776 = vmul.f32 %v8543, 1.442695
  %v8777 = vpow.pop %v8776
  %v8778 = vmul.f32 %v8544, 1.442695
  %v8779 = vpow.pop %v8778
  %v8780 = vmul.f32 %v8545, 1.442695
  %v8781 = vpow.pop %v8780
  %v8782 = vmul.f32 %v8546, 1.442695
  %v8783 = vpow.pop %v8782
  %v8784 = vmul.f32 %v8547, 1.442695
  %v8785 = vpow.pop %v8784
  %v8786 = vmul.f32 %v8548, 1.442695
  %v8787 = vpow.pop %v8786
  %v8788 = vmul.f32 %v8549, 1.442695
  %v8789 = vpow.pop %v8788
  %v8790 = vmul.f32 %v8550, 1.442695
  %v8791 = vpow.pop %v8790
  %v8792 = vmul.f32 %v8551, 1.442695
  %v8793 = vpow.pop %v8792
  %v8794 = vmul.f32 %v8552, 1.442695
  %v8795 = vpow.pop %v8794
  %v8796 = vmul.f32 %v8553, 1.442695
  %v8797 = vpow.pop %v8796
  %v8798 = vmul.f32 %v8554, 1.442695
  %v8799 = vpow.pop %v8798
  %v8800 = vmul.f32 %v8555, 1.442695
  %v8801 = vpow.pop %v8800
  %v8802 = vmul.f32 %v8556, 1.442695
  %v8803 = vpow.pop %v8802
  %v8804 = vmul.f32 %v8557, 1.442695
  %v8805 = vpow.pop %v8804
  %v8806 = vmul.f32 %v8558, 1.442695
  %v8807 = vpow.pop %v8806
  %v8808 = vmul.f32 %v8559, 1.442695
  %v8809 = vpow.pop %v8808
  %v8810 = vmul.f32 %v8560, 1.442695
  %v8811 = vpow.pop %v8810
  %v8812 = vmul.f32 %v8561, 1.442695
  %v8813 = vpow.pop %v8812
  %v8814 = vmul.f32 %v8562, 1.442695
  %v8815 = vpow.pop %v8814
  %v8816 = vmul.f32 %v8563, 1.442695
  %v8817 = vpow.pop %v8816
  %v8818 = vmul.f32 %v8564, 1.442695
  %v8819 = vpow.pop %v8818
  %v8820 = vmul.f32 %v8565, 1.442695
  %v8821 = vpow.pop %v8820
  %v8822 = vsub.f32 %v8567, 1.0
  %v8823 = vsub.f32 %v8569, 1.0
  %v8824 = vsub.f32 %v8571, 1.0
  %v8825 = vsub.f32 %v8573, 1.0
  %v8826 = vsub.f32 %v8575, 1.0
  %v8827 = vsub.f32 %v8577, 1.0
  %v8828 = vsub.f32 %v8579, 1.0
  %v8829 = vsub.f32 %v8581, 1.0
  %v8830 = vsub.f32 %v8583, 1.0
  %v8831 = vsub.f32 %v8585, 1.0
  %v8832 = vsub.f32 %v8587, 1.0
  %v8833 = vsub.f32 %v8589, 1.0
  %v8834 = vsub.f32 %v8591, 1.0
  %v8835 = vsub.f32 %v8593, 1.0
  %v8836 = vsub.f32 %v8595, 1.0
  %v8837 = vsub.f32 %v8597, 1.0
  %v8838 = vsub.f32 %v8599, 1.0
  %v8839 = vsub.f32 %v8601, 1.0
  %v8840 = vsub.f32 %v8603, 1.0
  %v8841 = vsub.f32 %v8605, 1.0
  %v8842 = vsub.f32 %v8607, 1.0
  %v8843 = vsub.f32 %v8609, 1.0
  %v8844 = vsub.f32 %v8611, 1.0
  %v8845 = vsub.f32 %v8613, 1.0
  %v8846 = vsub.f32 %v8615, 1.0
  %v8847 = vsub.f32 %v8617, 1.0
  %v8848 = vsub.f32 %v8619, 1.0
  %v8849 = vsub.f32 %v8621, 1.0
  %v8850 = vsub.f32 %v8623, 1.0
  %v8851 = vsub.f32 %v8625, 1.0
  %v8852 = vsub.f32 %v8627, 1.0
  %v8853 = vsub.f32 %v8629, 1.0
  %v8854 = vsub.f32 %v8631, 1.0
  %v8855 = vsub.f32 %v8633, 1.0
  %v8856 = vsub.f32 %v8635, 1.0
  %v8857 = vsub.f32 %v8637, 1.0
  %v8858 = vsub.f32 %v8639, 1.0
  %v8859 = vsub.f32 %v8641, 1.0
  %v8860 = vsub.f32 %v8643, 1.0
  %v8861 = vsub.f32 %v8645, 1.0
  %v8862 = vsub.f32 %v8647, 1.0
  %v8863 = vsub.f32 %v8649, 1.0
  %v8864 = vsub.f32 %v8651, 1.0
  %v8865 = vsub.f32 %v8653, 1.0
  %v8866 = vsub.f32 %v8655, 1.0
  %v8867 = vsub.f32 %v8657, 1.0
  %v8868 = vsub.f32 %v8659, 1.0
  %v8869 = vsub.f32 %v8661, 1.0
  %v8870 = vsub.f32 %v8663, 1.0
  %v8871 = vsub.f32 %v8665, 1.0
  %v8872 = vsub.f32 %v8667, 1.0
  %v8873 = vsub.f32 %v8669, 1.0
  %v8874 = vsub.f32 %v8671, 1.0
  %v8875 = vsub.f32 %v8673, 1.0
  %v8876 = vsub.f32 %v8675, 1.0
  %v8877 = vsub.f32 %v8677, 1.0
  %v8878 = vsub.f32 %v8679, 1.0
  %v8879 = vsub.f32 %v8681, 1.0
  %v8880 = vsub.f32 %v8683, 1.0
  %v8881 = vsub.f32 %v8685, 1.0
  %v8882 = vsub.f32 %v8687, 1.0
  %v8883 = vsub.f32 %v8689, 1.0
  %v8884 = vsub.f32 %v8691, 1.0
  %v8885 = vsub.f32 %v8693, 1.0
  %v8886 = vsub.f32 %v8695, 1.0
  %v8887 = vsub.f32 %v8697, 1.0
  %v8888 = vsub.f32 %v8699, 1.0
  %v8889 = vsub.f32 %v8701, 1.0
  %v8890 = vsub.f32 %v8703, 1.0
  %v8891 = vsub.f32 %v8705, 1.0
  %v8892 = vsub.f32 %v8707, 1.0
  %v8893 = vsub.f32 %v8709, 1.0
  %v8894 = vsub.f32 %v8711, 1.0
  %v8895 = vsub.f32 %v8713, 1.0
  %v8896 = vsub.f32 %v8715, 1.0
  %v8897 = vsub.f32 %v8717, 1.0
  %v8898 = vsub.f32 %v8719, 1.0
  %v8899 = vsub.f32 %v8721, 1.0
  %v8900 = vsub.f32 %v8723, 1.0
  %v8901 = vsub.f32 %v8725, 1.0
  %v8902 = vsub.f32 %v8727, 1.0
  %v8903 = vsub.f32 %v8729, 1.0
  %v8904 = vsub.f32 %v8731, 1.0
  %v8905 = vsub.f32 %v8733, 1.0
  %v8906 = vsub.f32 %v8735, 1.0
  %v8907 = vsub.f32 %v8737, 1.0
  %v8908 = vsub.f32 %v8739, 1.0
  %v8909 = vsub.f32 %v8741, 1.0
  %v8910 = vsub.f32 %v8743, 1.0
  %v8911 = vsub.f32 %v8745, 1.0
  %v8912 = vsub.f32 %v8747, 1.0
  %v8913 = vsub.f32 %v8749, 1.0
  %v8914 = vsub.f32 %v8751, 1.0
  %v8915 = vsub.f32 %v8753, 1.0
  %v8916 = vsub.f32 %v8755, 1.0
  %v8917 = vsub.f32 %v8757, 1.0
  %v8918 = vsub.f32 %v8759, 1.0
  %v8919 = vsub.f32 %v8761, 1.0
  %v8920 = vsub.f32 %v8763, 1.0
  %v8921 = vsub.f32 %v8765, 1.0
  %v8922 = vsub.f32 %v8767, 1.0
  %v8923 = vsub.f32 %v8769, 1.0
  %v8924 = vsub.f32 %v8771, 1.0
  %v8925 = vsub.f32 %v8773, 1.0
  %v8926 = vsub.f32 %v8775, 1.0
  %v8927 = vsub.f32 %v8777, 1.0
  %v8928 = vsub.f32 %v8779, 1.0
  %v8929 = vsub.f32 %v8781, 1.0
  %v8930 = vsub.f32 %v8783, 1.0
  %v8931 = vsub.f32 %v8785, 1.0
  %v8932 = vsub.f32 %v8787, 1.0
  %v8933 = vsub.f32 %v8789, 1.0
  %v8934 = vsub.f32 %v8791, 1.0
  %v8935 = vsub.f32 %v8793, 1.0
  %v8936 = vsub.f32 %v8795, 1.0
  %v8937 = vsub.f32 %v8797, 1.0
  %v8938 = vsub.f32 %v8799, 1.0
  %v8939 = vsub.f32 %v8801, 1.0
  %v8940 = vsub.f32 %v8803, 1.0
  %v8941 = vsub.f32 %v8805, 1.0
  %v8942 = vsub.f32 %v8807, 1.0
  %v8943 = vsub.f32 %v8809, 1.0
  %v8944 = vsub.f32 %v8811, 1.0
  %v8945 = vsub.f32 %v8813, 1.0
  %v8946 = vsub.f32 %v8815, 1.0
  %v8947 = vsub.f32 %v8817, 1.0
  %v8948 = vsub.f32 %v8819, 1.0
  %v8949 = vsub.f32 %v8821, 1.0
  %v8950 = vsel %vm8310, %v8182, %v8822
  %v8951 = vsel %vm8311, %v8183, %v8823
  %v8952 = vsel %vm8312, %v8184, %v8824
  %v8953 = vsel %vm8313, %v8185, %v8825
  %v8954 = vsel %vm8314, %v8186, %v8826
  %v8955 = vsel %vm8315, %v8187, %v8827
  %v8956 = vsel %vm8316, %v8188, %v8828
  %v8957 = vsel %vm8317, %v8189, %v8829
  %v8958 = vsel %vm8318, %v8190, %v8830
  %v8959 = vsel %vm8319, %v8191, %v8831
  %v8960 = vsel %vm8320, %v8192, %v8832
  %v8961 = vsel %vm8321, %v8193, %v8833
  %v8962 = vsel %vm8322, %v8194, %v8834
  %v8963 = vsel %vm8323, %v8195, %v8835
  %v8964 = vsel %vm8324, %v8196, %v8836
  %v8965 = vsel %vm8325, %v8197, %v8837
  %v8966 = vsel %vm8326, %v8198, %v8838
  %v8967 = vsel %vm8327, %v8199, %v8839
  %v8968 = vsel %vm8328, %v8200, %v8840
  %v8969 = vsel %vm8329, %v8201, %v8841
  %v8970 = vsel %vm8330, %v8202, %v8842
  %v8971 = vsel %vm8331, %v8203, %v8843
  %v8972 = vsel %vm8332, %v8204, %v8844
  %v8973 = vsel %vm8333, %v8205, %v8845
  %v8974 = vsel %vm8334, %v8206, %v8846
  %v8975 = vsel %vm8335, %v8207, %v8847
  %v8976 = vsel %vm8336, %v8208, %v8848
  %v8977 = vsel %vm8337, %v8209, %v8849
  %v8978 = vsel %vm8338, %v8210, %v8850
  %v8979 = vsel %vm8339, %v8211, %v8851
  %v8980 = vsel %vm8340, %v8212, %v8852
  %v8981 = vsel %vm8341, %v8213, %v8853
  %v8982 = vsel %vm8342, %v8214, %v8854
  %v8983 = vsel %vm8343, %v8215, %v8855
  %v8984 = vsel %vm8344, %v8216, %v8856
  %v8985 = vsel %vm8345, %v8217, %v8857
  %v8986 = vsel %vm8346, %v8218, %v8858
  %v8987 = vsel %vm8347, %v8219, %v8859
  %v8988 = vsel %vm8348, %v8220, %v8860
  %v8989 = vsel %vm8349, %v8221, %v8861
  %v8990 = vsel %vm8350, %v8222, %v8862
  %v8991 = vsel %vm8351, %v8223, %v8863
  %v8992 = vsel %vm8352, %v8224, %v8864
  %v8993 = vsel %vm8353, %v8225, %v8865
  %v8994 = vsel %vm8354, %v8226, %v8866
  %v8995 = vsel %vm8355, %v8227, %v8867
  %v8996 = vsel %vm8356, %v8228, %v8868
  %v8997 = vsel %vm8357, %v8229, %v8869
  %v8998 = vsel %vm8358, %v8230, %v8870
  %v8999 = vsel %vm8359, %v8231, %v8871
  %v9000 = vsel %vm8360, %v8232, %v8872
  %v9001 = vsel %vm8361, %v8233, %v8873
  %v9002 = vsel %vm8362, %v8234, %v8874
  %v9003 = vsel %vm8363, %v8235, %v8875
  %v9004 = vsel %vm8364, %v8236, %v8876
  %v9005 = vsel %vm8365, %v8237, %v8877
  %v9006 = vsel %vm8366, %v8238, %v8878
  %v9007 = vsel %vm8367, %v8239, %v8879
  %v9008 = vsel %vm8368, %v8240, %v8880
  %v9009 = vsel %vm8369, %v8241, %v8881
  %v9010 = vsel %vm8370, %v8242, %v8882
  %v9011 = vsel %vm8371, %v8243, %v8883
  %v9012 = vsel %vm8372, %v8244, %v8884
  %v9013 = vsel %vm8373, %v8245, %v8885
  %v9014 = vsel %vm8374, %v8246, %v8886
  %v9015 = vsel %vm8375, %v8247, %v8887
  %v9016 = vsel %vm8376, %v8248, %v8888
  %v9017 = vsel %vm8377, %v8249, %v8889
  %v9018 = vsel %vm8378, %v8250, %v8890
  %v9019 = vsel %vm8379, %v8251, %v8891
  %v9020 = vsel %vm8380, %v8252, %v8892
  %v9021 = vsel %vm8381, %v8253, %v8893
  %v9022 = vsel %vm8382, %v8254, %v8894
  %v9023 = vsel %vm8383, %v8255, %v8895
  %v9024 = vsel %vm8384, %v8256, %v8896
  %v9025 = vsel %vm8385, %v8257, %v8897
  %v9026 = vsel %vm8386, %v8258, %v8898
  %v9027 = vsel %vm8387, %v8259, %v8899
  %v9028 = vsel %vm8388, %v8260, %v8900
  %v9029 = vsel %vm8389, %v8261, %v8901
  %v9030 = vsel %vm8390, %v8262, %v8902
  %v9031 = vsel %vm8391, %v8263, %v8903
  %v9032 = vsel %vm8392, %v8264, %v8904
  %v9033 = vsel %vm8393, %v8265, %v8905
  %v9034 = vsel %vm8394, %v8266, %v8906
  %v9035 = vsel %vm8395, %v8267, %v8907
  %v9036 = vsel %vm8396, %v8268, %v8908
  %v9037 = vsel %vm8397, %v8269, %v8909
  %v9038 = vsel %vm8398, %v8270, %v8910
  %v9039 = vsel %vm8399, %v8271, %v8911
  %v9040 = vsel %vm8400, %v8272, %v8912
  %v9041 = vsel %vm8401, %v8273, %v8913
  %v9042 = vsel %vm8402, %v8274, %v8914
  %v9043 = vsel %vm8403, %v8275, %v8915
  %v9044 = vsel %vm8404, %v8276, %v8916
  %v9045 = vsel %vm8405, %v8277, %v8917
  %v9046 = vsel %vm8406, %v8278, %v8918
  %v9047 = vsel %vm8407, %v8279, %v8919
  %v9048 = vsel %vm8408, %v8280, %v8920
  %v9049 = vsel %vm8409, %v8281, %v8921
  %v9050 = vsel %vm8410, %v8282, %v8922
  %v9051 = vsel %vm8411, %v8283, %v8923
  %v9052 = vsel %vm8412, %v8284, %v8924
  %v9053 = vsel %vm8413, %v8285, %v8925
  %v9054 = vsel %vm8414, %v8286, %v8926
  %v9055 = vsel %vm8415, %v8287, %v8927
  %v9056 = vsel %vm8416, %v8288, %v8928
  %v9057 = vsel %vm8417, %v8289, %v8929
  %v9058 = vsel %vm8418, %v8290, %v8930
  %v9059 = vsel %vm8419, %v8291, %v8931
  %v9060 = vsel %vm8420, %v8292, %v8932
  %v9061 = vsel %vm8421, %v8293, %v8933
  %v9062 = vsel %vm8422, %v8294, %v8934
  %v9063 = vsel %vm8423, %v8295, %v8935
  %v9064 = vsel %vm8424, %v8296, %v8936
  %v9065 = vsel %vm8425, %v8297, %v8937
  %v9066 = vsel %vm8426, %v8298, %v8938
  %v9067 = vsel %vm8427, %v8299, %v8939
  %v9068 = vsel %vm8428, %v8300, %v8940
  %v9069 = vsel %vm8429, %v8301, %v8941
  %v9070 = vsel %vm8430, %v8302, %v8942
  %v9071 = vsel %vm8431, %v8303, %v8943
  %v9072 = vsel %vm8432, %v8304, %v8944
  %v9073 = vsel %vm8433, %v8305, %v8945
  %v9074 = vsel %vm8434, %v8306, %v8946
  %v9075 = vsel %vm8435, %v8307, %v8947
  %v9076 = vsel %vm8436, %v8308, %v8948
  %v9077 = vsel %vm8437, %v8309, %v8949
  %v9078 = vpack.c.bf16 %v8952, %v8950
  %v9079 = vpack.c.bf16 %v8953, %v8951
  %v9080 = vpack.c.bf16 %v8956, %v8954
  %v9081 = vpack.c.bf16 %v8957, %v8955
  %v9082 = vpack.c.bf16 %v8960, %v8958
  %v9083 = vpack.c.bf16 %v8961, %v8959
  %v9084 = vpack.c.bf16 %v8964, %v8962
  %v9085 = vpack.c.bf16 %v8965, %v8963
  %v9086 = vpack.c.bf16 %v8968, %v8966
  %v9087 = vpack.c.bf16 %v8969, %v8967
  %v9088 = vpack.c.bf16 %v8972, %v8970
  %v9089 = vpack.c.bf16 %v8973, %v8971
  %v9090 = vpack.c.bf16 %v8976, %v8974
  %v9091 = vpack.c.bf16 %v8977, %v8975
  %v9092 = vpack.c.bf16 %v8980, %v8978
  %v9093 = vpack.c.bf16 %v8981, %v8979
  %v9094 = vpack.c.bf16 %v8984, %v8982
  %v9095 = vpack.c.bf16 %v8985, %v8983
  %v9096 = vpack.c.bf16 %v8988, %v8986
  %v9097 = vpack.c.bf16 %v8989, %v8987
  %v9098 = vpack.c.bf16 %v8992, %v8990
  %v9099 = vpack.c.bf16 %v8993, %v8991
  %v9100 = vpack.c.bf16 %v8996, %v8994
  %v9101 = vpack.c.bf16 %v8997, %v8995
  %v9102 = vpack.c.bf16 %v9000, %v8998
  %v9103 = vpack.c.bf16 %v9001, %v8999
  %v9104 = vpack.c.bf16 %v9004, %v9002
  %v9105 = vpack.c.bf16 %v9005, %v9003
  %v9106 = vpack.c.bf16 %v9008, %v9006
  %v9107 = vpack.c.bf16 %v9009, %v9007
  %v9108 = vpack.c.bf16 %v9012, %v9010
  %v9109 = vpack.c.bf16 %v9013, %v9011
  %v9110 = vpack.c.bf16 %v9016, %v9014
  %v9111 = vpack.c.bf16 %v9017, %v9015
  %v9112 = vpack.c.bf16 %v9020, %v9018
  %v9113 = vpack.c.bf16 %v9021, %v9019
  %v9114 = vpack.c.bf16 %v9024, %v9022
  %v9115 = vpack.c.bf16 %v9025, %v9023
  %v9116 = vpack.c.bf16 %v9028, %v9026
  %v9117 = vpack.c.bf16 %v9029, %v9027
  %v9118 = vpack.c.bf16 %v9032, %v9030
  %v9119 = vpack.c.bf16 %v9033, %v9031
  %v9120 = vpack.c.bf16 %v9036, %v9034
  %v9121 = vpack.c.bf16 %v9037, %v9035
  %v9122 = vpack.c.bf16 %v9040, %v9038
  %v9123 = vpack.c.bf16 %v9041, %v9039
  %v9124 = vpack.c.bf16 %v9044, %v9042
  %v9125 = vpack.c.bf16 %v9045, %v9043
  %v9126 = vpack.c.bf16 %v9048, %v9046
  %v9127 = vpack.c.bf16 %v9049, %v9047
  %v9128 = vpack.c.bf16 %v9052, %v9050
  %v9129 = vpack.c.bf16 %v9053, %v9051
  %v9130 = vpack.c.bf16 %v9056, %v9054
  %v9131 = vpack.c.bf16 %v9057, %v9055
  %v9132 = vpack.c.bf16 %v9060, %v9058
  %v9133 = vpack.c.bf16 %v9061, %v9059
  %v9134 = vpack.c.bf16 %v9064, %v9062
  %v9135 = vpack.c.bf16 %v9065, %v9063
  %v9136 = vpack.c.bf16 %v9068, %v9066
  %v9137 = vpack.c.bf16 %v9069, %v9067
  %v9138 = vpack.c.bf16 %v9072, %v9070
  %v9139 = vpack.c.bf16 %v9073, %v9071
  %v9140 = vpack.c.bf16 %v9076, %v9074
  %v9141 = vpack.c.bf16 %v9077, %v9075
  %s9142 = scalar_lea.vmem %s3, 1280
  %v9143 = vld [vmem:[%s9142] sm:$0xff]
  %v9144 = vld [vmem:[%s9142 + $0x8] sm:$0xff]
  %v9145 = vld [vmem:[%s9142 + $0x10] sm:$0xff]
  %v9146 = vld [vmem:[%s9142 + $0x18] sm:$0xff]
  %v9147 = vld [vmem:[%s9142 + $0x20] sm:$0xff]
  %v9148 = vld [vmem:[%s9142 + $0x28] sm:$0xff]
  %v9149 = vld [vmem:[%s9142 + $0x30] sm:$0xff]
  %v9150 = vld [vmem:[%s9142 + $0x38] sm:$0xff]
  %v9151 = vld [vmem:[%s9142 + $0x40] sm:$0xff]
  %v9152 = vld [vmem:[%s9142 + $0x48] sm:$0xff]
  %v9153 = vld [vmem:[%s9142 + $0x50] sm:$0xff]
  %v9154 = vld [vmem:[%s9142 + $0x58] sm:$0xff]
  %v9155 = vld [vmem:[%s9142 + $0x60] sm:$0xff]
  %v9156 = vld [vmem:[%s9142 + $0x68] sm:$0xff]
  %v9157 = vld [vmem:[%s9142 + $0x70] sm:$0xff]
  %v9158 = vld [vmem:[%s9142 + $0x78] sm:$0xff]
  %v9159 = vld [vmem:[%s9142 + $0x80] sm:$0xff]
  %v9160 = vld [vmem:[%s9142 + $0x88] sm:$0xff]
  %v9161 = vld [vmem:[%s9142 + $0x90] sm:$0xff]
  %v9162 = vld [vmem:[%s9142 + $0x98] sm:$0xff]
  %v9163 = vld [vmem:[%s9142 + $0xa0] sm:$0xff]
  %v9164 = vld [vmem:[%s9142 + $0xa8] sm:$0xff]
  %v9165 = vld [vmem:[%s9142 + $0xb0] sm:$0xff]
  %v9166 = vld [vmem:[%s9142 + $0xb8] sm:$0xff]
  %v9167 = vld [vmem:[%s9142 + $0xc0] sm:$0xff]
  %v9168 = vld [vmem:[%s9142 + $0xc8] sm:$0xff]
  %v9169 = vld [vmem:[%s9142 + $0xd0] sm:$0xff]
  %v9170 = vld [vmem:[%s9142 + $0xd8] sm:$0xff]
  %v9171 = vld [vmem:[%s9142 + $0xe0] sm:$0xff]
  %v9172 = vld [vmem:[%s9142 + $0xe8] sm:$0xff]
  %v9173 = vld [vmem:[%s9142 + $0xf0] sm:$0xff]
  %v9174 = vld [vmem:[%s9142 + $0xf8] sm:$0xff]
  %s9175 = scalar_lea.vmem %s4, 5
  %v9176 = vld [vmem:[%s9175] ss:$8 sm:$0x3]
  %v9178 = vlaneseq
  %v9179 = vshrl.u32 %v9178, 7
  %v9180 = vsub.s32 0, %v9179
  %v9181 = vrot.slane %v9176, %v9180
  %v9182 = vlaneseq
  %v9183 = vshrl.u32 %v9182, 7
  %v9184 = vsub.s32 1, %v9183
  %v9185 = vrot.slane %v9176, %v9184
  %v9220 = vunpack.c.l.b16 %v9143
  %v9221 = vunpack.c.h.b16 %v9143
  %v9222 = vunpack.c.l.b16 %v9144
  %v9223 = vunpack.c.h.b16 %v9144
  %v9224 = vunpack.c.l.b16 %v9145
  %v9225 = vunpack.c.h.b16 %v9145
  %v9226 = vunpack.c.l.b16 %v9146
  %v9227 = vunpack.c.h.b16 %v9146
  %v9228 = vunpack.c.l.b16 %v9147
  %v9229 = vunpack.c.h.b16 %v9147
  %v9230 = vunpack.c.l.b16 %v9148
  %v9231 = vunpack.c.h.b16 %v9148
  %v9232 = vunpack.c.l.b16 %v9149
  %v9233 = vunpack.c.h.b16 %v9149
  %v9234 = vunpack.c.l.b16 %v9150
  %v9235 = vunpack.c.h.b16 %v9150
  %v9236 = vunpack.c.l.b16 %v9151
  %v9237 = vunpack.c.h.b16 %v9151
  %v9238 = vunpack.c.l.b16 %v9152
  %v9239 = vunpack.c.h.b16 %v9152
  %v9240 = vunpack.c.l.b16 %v9153
  %v9241 = vunpack.c.h.b16 %v9153
  %v9242 = vunpack.c.l.b16 %v9154
  %v9243 = vunpack.c.h.b16 %v9154
  %v9244 = vunpack.c.l.b16 %v9155
  %v9245 = vunpack.c.h.b16 %v9155
  %v9246 = vunpack.c.l.b16 %v9156
  %v9247 = vunpack.c.h.b16 %v9156
  %v9248 = vunpack.c.l.b16 %v9157
  %v9249 = vunpack.c.h.b16 %v9157
  %v9250 = vunpack.c.l.b16 %v9158
  %v9251 = vunpack.c.h.b16 %v9158
  %v9252 = vunpack.c.l.b16 %v9159
  %v9253 = vunpack.c.h.b16 %v9159
  %v9254 = vunpack.c.l.b16 %v9160
  %v9255 = vunpack.c.h.b16 %v9160
  %v9256 = vunpack.c.l.b16 %v9161
  %v9257 = vunpack.c.h.b16 %v9161
  %v9258 = vunpack.c.l.b16 %v9162
  %v9259 = vunpack.c.h.b16 %v9162
  %v9260 = vunpack.c.l.b16 %v9163
  %v9261 = vunpack.c.h.b16 %v9163
  %v9262 = vunpack.c.l.b16 %v9164
  %v9263 = vunpack.c.h.b16 %v9164
  %v9264 = vunpack.c.l.b16 %v9165
  %v9265 = vunpack.c.h.b16 %v9165
  %v9266 = vunpack.c.l.b16 %v9166
  %v9267 = vunpack.c.h.b16 %v9166
  %v9268 = vunpack.c.l.b16 %v9167
  %v9269 = vunpack.c.h.b16 %v9167
  %v9270 = vunpack.c.l.b16 %v9168
  %v9271 = vunpack.c.h.b16 %v9168
  %v9272 = vunpack.c.l.b16 %v9169
  %v9273 = vunpack.c.h.b16 %v9169
  %v9274 = vunpack.c.l.b16 %v9170
  %v9275 = vunpack.c.h.b16 %v9170
  %v9276 = vunpack.c.l.b16 %v9171
  %v9277 = vunpack.c.h.b16 %v9171
  %v9278 = vunpack.c.l.b16 %v9172
  %v9279 = vunpack.c.h.b16 %v9172
  %v9280 = vunpack.c.l.b16 %v9173
  %v9281 = vunpack.c.h.b16 %v9173
  %v9282 = vunpack.c.l.b16 %v9174
  %v9283 = vunpack.c.h.b16 %v9174
  %v9284 = vpack.c.b16 %v9222, %v9220
  %v9285 = vpack.c.b16 %v9223, %v9221
  %v9286 = vpack.c.b16 %v9226, %v9224
  %v9287 = vpack.c.b16 %v9227, %v9225
  %v9288 = vpack.c.b16 %v9230, %v9228
  %v9289 = vpack.c.b16 %v9231, %v9229
  %v9290 = vpack.c.b16 %v9234, %v9232
  %v9291 = vpack.c.b16 %v9235, %v9233
  %v9292 = vpack.c.b16 %v9238, %v9236
  %v9293 = vpack.c.b16 %v9239, %v9237
  %v9294 = vpack.c.b16 %v9242, %v9240
  %v9295 = vpack.c.b16 %v9243, %v9241
  %v9296 = vpack.c.b16 %v9246, %v9244
  %v9297 = vpack.c.b16 %v9247, %v9245
  %v9298 = vpack.c.b16 %v9250, %v9248
  %v9299 = vpack.c.b16 %v9251, %v9249
  %v9300 = vpack.c.b16 %v9254, %v9252
  %v9301 = vpack.c.b16 %v9255, %v9253
  %v9302 = vpack.c.b16 %v9258, %v9256
  %v9303 = vpack.c.b16 %v9259, %v9257
  %v9304 = vpack.c.b16 %v9262, %v9260
  %v9305 = vpack.c.b16 %v9263, %v9261
  %v9306 = vpack.c.b16 %v9266, %v9264
  %v9307 = vpack.c.b16 %v9267, %v9265
  %v9308 = vpack.c.b16 %v9270, %v9268
  %v9309 = vpack.c.b16 %v9271, %v9269
  %v9310 = vpack.c.b16 %v9274, %v9272
  %v9311 = vpack.c.b16 %v9275, %v9273
  %v9312 = vpack.c.b16 %v9278, %v9276
  %v9313 = vpack.c.b16 %v9279, %v9277
  %v9314 = vpack.c.b16 %v9282, %v9280
  %v9315 = vpack.c.b16 %v9283, %v9281
  %9348 = vmatprep.subr.bf16.mxu0 %v9299
  %9349 = vmatpush1.bf16.msra.mxu0 %v9298
  %9350 = vmatprep.subr.bf16.mxu0 %v9297
  %9351 = vmatpush1.bf16.msra.mxu0 %v9296
  %9352 = vmatprep.subr.bf16.mxu0 %v9295
  %9353 = vmatpush1.bf16.msra.mxu0 %v9294
  %9354 = vmatprep.subr.bf16.mxu0 %v9293
  %9355 = vmatpush1.bf16.msra.mxu0 %v9292
  %9356 = vmatprep.subr.bf16.mxu0 %v9291
  %9357 = vmatpush1.bf16.msra.mxu0 %v9290
  %9358 = vmatprep.subr.bf16.mxu0 %v9289
  %9359 = vmatpush1.bf16.msra.mxu0 %v9288
  %9360 = vmatprep.subr.bf16.mxu0 %v9287
  %9361 = vmatpush1.bf16.msra.mxu0 %v9286
  %9362 = vmatprep.subr.bf16.mxu0 %v9285
  %9363 = vmatpush1.bf16.msra.mxu0 %v9284
  %9364 = vmatprep.subr.bf16.mxu0 %v9315
  %9365 = vmatpush2.bf16.msra.mxu0 %v9314
  %9366 = vmatprep.subr.bf16.mxu0 %v9313
  %9367 = vmatpush2.bf16.msra.mxu0 %v9312
  %9368 = vmatprep.subr.bf16.mxu0 %v9311
  %9369 = vmatpush2.bf16.msra.mxu0 %v9310
  %9370 = vmatprep.subr.bf16.mxu0 %v9309
  %9371 = vmatpush2.bf16.msra.mxu0 %v9308
  %9372 = vmatprep.subr.bf16.mxu0 %v9307
  %9373 = vmatpush2.bf16.msra.mxu0 %v9306
  %9374 = vmatprep.subr.bf16.mxu0 %v9305
  %9375 = vmatpush2.bf16.msra.mxu0 %v9304
  %9376 = vmatprep.subr.bf16.mxu0 %v9303
  %9377 = vmatpush2.bf16.msra.mxu0 %v9302
  %9378 = vmatprep.subr.bf16.mxu0 %v9301
  %9379 = vmatpush2.bf16.msra.mxu0 %v9300
  %9380 = vmatprep.mubr.bf16.mxu0 %v9079
  %9381 = vmatmul.mubr.bf16.gmra.mxu0 %v9078
  %v9382 = vpop.f32.mrf.mxu0
  %v9383 = vadd.f32 %v9181, %v9382
  %v9384 = vpop.f32.mrf.mxu0
  %v9385 = vadd.f32 %v9185, %v9384
  %v9386 = vpop.f32.mrf.mxu0
  %v9387 = vadd.f32 %v9181, %v9386
  %v9388 = vpop.f32.mrf.mxu0
  %v9389 = vadd.f32 %v9185, %v9388
  %9390 = vmatprep.mubr.bf16.mxu0 %v9081
  %9391 = vmatmul.mubr.bf16.gmra.mxu0 %v9080
  %v9392 = vpop.f32.mrf.mxu0
  %v9393 = vadd.f32 %v9181, %v9392
  %v9394 = vpop.f32.mrf.mxu0
  %v9395 = vadd.f32 %v9185, %v9394
  %v9396 = vpop.f32.mrf.mxu0
  %v9397 = vadd.f32 %v9181, %v9396
  %v9398 = vpop.f32.mrf.mxu0
  %v9399 = vadd.f32 %v9185, %v9398
  %9400 = vmatprep.mubr.bf16.mxu0 %v9083
  %9401 = vmatmul.mubr.bf16.gmra.mxu0 %v9082
  %v9402 = vpop.f32.mrf.mxu0
  %v9403 = vadd.f32 %v9181, %v9402
  %v9404 = vpop.f32.mrf.mxu0
  %v9405 = vadd.f32 %v9185, %v9404
  %v9406 = vpop.f32.mrf.mxu0
  %v9407 = vadd.f32 %v9181, %v9406
  %v9408 = vpop.f32.mrf.mxu0
  %v9409 = vadd.f32 %v9185, %v9408
  %9410 = vmatprep.mubr.bf16.mxu0 %v9085
  %9411 = vmatmul.mubr.bf16.gmra.mxu0 %v9084
  %v9412 = vpop.f32.mrf.mxu0
  %v9413 = vadd.f32 %v9181, %v9412
  %v9414 = vpop.f32.mrf.mxu0
  %v9415 = vadd.f32 %v9185, %v9414
  %v9416 = vpop.f32.mrf.mxu0
  %v9417 = vadd.f32 %v9181, %v9416
  %v9418 = vpop.f32.mrf.mxu0
  %v9419 = vadd.f32 %v9185, %v9418
  %9420 = vmatprep.mubr.bf16.mxu0 %v9087
  %9421 = vmatmul.mubr.bf16.gmra.mxu0 %v9086
  %v9422 = vpop.f32.mrf.mxu0
  %v9423 = vadd.f32 %v9181, %v9422
  %v9424 = vpop.f32.mrf.mxu0
  %v9425 = vadd.f32 %v9185, %v9424
  %v9426 = vpop.f32.mrf.mxu0
  %v9427 = vadd.f32 %v9181, %v9426
  %v9428 = vpop.f32.mrf.mxu0
  %v9429 = vadd.f32 %v9185, %v9428
  %9430 = vmatprep.mubr.bf16.mxu0 %v9089
  %9431 = vmatmul.mubr.bf16.gmra.mxu0 %v9088
  %v9432 = vpop.f32.mrf.mxu0
  %v9433 = vadd.f32 %v9181, %v9432
  %v9434 = vpop.f32.mrf.mxu0
  %v9435 = vadd.f32 %v9185, %v9434
  %v9436 = vpop.f32.mrf.mxu0
  %v9437 = vadd.f32 %v9181, %v9436
  %v9438 = vpop.f32.mrf.mxu0
  %v9439 = vadd.f32 %v9185, %v9438
  %9440 = vmatprep.mubr.bf16.mxu0 %v9091
  %9441 = vmatmul.mubr.bf16.gmra.mxu0 %v9090
  %v9442 = vpop.f32.mrf.mxu0
  %v9443 = vadd.f32 %v9181, %v9442
  %v9444 = vpop.f32.mrf.mxu0
  %v9445 = vadd.f32 %v9185, %v9444
  %v9446 = vpop.f32.mrf.mxu0
  %v9447 = vadd.f32 %v9181, %v9446
  %v9448 = vpop.f32.mrf.mxu0
  %v9449 = vadd.f32 %v9185, %v9448
  %9450 = vmatprep.mubr.bf16.mxu0 %v9093
  %9451 = vmatmul.mubr.bf16.gmra.mxu0 %v9092
  %v9452 = vpop.f32.mrf.mxu0
  %v9453 = vadd.f32 %v9181, %v9452
  %v9454 = vpop.f32.mrf.mxu0
  %v9455 = vadd.f32 %v9185, %v9454
  %v9456 = vpop.f32.mrf.mxu0
  %v9457 = vadd.f32 %v9181, %v9456
  %v9458 = vpop.f32.mrf.mxu0
  %v9459 = vadd.f32 %v9185, %v9458
  %9460 = vmatprep.mubr.bf16.mxu0 %v9095
  %9461 = vmatmul.mubr.bf16.gmra.mxu0 %v9094
  %v9462 = vpop.f32.mrf.mxu0
  %v9463 = vadd.f32 %v9181, %v9462
  %v9464 = vpop.f32.mrf.mxu0
  %v9465 = vadd.f32 %v9185, %v9464
  %v9466 = vpop.f32.mrf.mxu0
  %v9467 = vadd.f32 %v9181, %v9466
  %v9468 = vpop.f32.mrf.mxu0
  %v9469 = vadd.f32 %v9185, %v9468
  %9470 = vmatprep.mubr.bf16.mxu0 %v9097
  %9471 = vmatmul.mubr.bf16.gmra.mxu0 %v9096
  %v9472 = vpop.f32.mrf.mxu0
  %v9473 = vadd.f32 %v9181, %v9472
  %v9474 = vpop.f32.mrf.mxu0
  %v9475 = vadd.f32 %v9185, %v9474
  %v9476 = vpop.f32.mrf.mxu0
  %v9477 = vadd.f32 %v9181, %v9476
  %v9478 = vpop.f32.mrf.mxu0
  %v9479 = vadd.f32 %v9185, %v9478
  %9480 = vmatprep.mubr.bf16.mxu0 %v9099
  %9481 = vmatmul.mubr.bf16.gmra.mxu0 %v9098
  %v9482 = vpop.f32.mrf.mxu0
  %v9483 = vadd.f32 %v9181, %v9482
  %v9484 = vpop.f32.mrf.mxu0
  %v9485 = vadd.f32 %v9185, %v9484
  %v9486 = vpop.f32.mrf.mxu0
  %v9487 = vadd.f32 %v9181, %v9486
  %v9488 = vpop.f32.mrf.mxu0
  %v9489 = vadd.f32 %v9185, %v9488
  %9490 = vmatprep.mubr.bf16.mxu0 %v9101
  %9491 = vmatmul.mubr.bf16.gmra.mxu0 %v9100
  %v9492 = vpop.f32.mrf.mxu0
  %v9493 = vadd.f32 %v9181, %v9492
  %v9494 = vpop.f32.mrf.mxu0
  %v9495 = vadd.f32 %v9185, %v9494
  %v9496 = vpop.f32.mrf.mxu0
  %v9497 = vadd.f32 %v9181, %v9496
  %v9498 = vpop.f32.mrf.mxu0
  %v9499 = vadd.f32 %v9185, %v9498
  %9500 = vmatprep.mubr.bf16.mxu0 %v9103
  %9501 = vmatmul.mubr.bf16.gmra.mxu0 %v9102
  %v9502 = vpop.f32.mrf.mxu0
  %v9503 = vadd.f32 %v9181, %v9502
  %v9504 = vpop.f32.mrf.mxu0
  %v9505 = vadd.f32 %v9185, %v9504
  %v9506 = vpop.f32.mrf.mxu0
  %v9507 = vadd.f32 %v9181, %v9506
  %v9508 = vpop.f32.mrf.mxu0
  %v9509 = vadd.f32 %v9185, %v9508
  %9510 = vmatprep.mubr.bf16.mxu0 %v9105
  %9511 = vmatmul.mubr.bf16.gmra.mxu0 %v9104
  %v9512 = vpop.f32.mrf.mxu0
  %v9513 = vadd.f32 %v9181, %v9512
  %v9514 = vpop.f32.mrf.mxu0
  %v9515 = vadd.f32 %v9185, %v9514
  %v9516 = vpop.f32.mrf.mxu0
  %v9517 = vadd.f32 %v9181, %v9516
  %v9518 = vpop.f32.mrf.mxu0
  %v9519 = vadd.f32 %v9185, %v9518
  %9520 = vmatprep.mubr.bf16.mxu0 %v9107
  %9521 = vmatmul.mubr.bf16.gmra.mxu0 %v9106
  %v9522 = vpop.f32.mrf.mxu0
  %v9523 = vadd.f32 %v9181, %v9522
  %v9524 = vpop.f32.mrf.mxu0
  %v9525 = vadd.f32 %v9185, %v9524
  %v9526 = vpop.f32.mrf.mxu0
  %v9527 = vadd.f32 %v9181, %v9526
  %v9528 = vpop.f32.mrf.mxu0
  %v9529 = vadd.f32 %v9185, %v9528
  %9530 = vmatprep.mubr.bf16.mxu0 %v9109
  %9531 = vmatmul.mubr.bf16.gmra.mxu0 %v9108
  %v9532 = vpop.f32.mrf.mxu0
  %v9533 = vadd.f32 %v9181, %v9532
  %v9534 = vpop.f32.mrf.mxu0
  %v9535 = vadd.f32 %v9185, %v9534
  %v9536 = vpop.f32.mrf.mxu0
  %v9537 = vadd.f32 %v9181, %v9536
  %v9538 = vpop.f32.mrf.mxu0
  %v9539 = vadd.f32 %v9185, %v9538
  %9540 = vmatprep.mubr.bf16.mxu0 %v9111
  %9541 = vmatmul.mubr.bf16.gmra.mxu0 %v9110
  %v9542 = vpop.f32.mrf.mxu0
  %v9543 = vadd.f32 %v9181, %v9542
  %v9544 = vpop.f32.mrf.mxu0
  %v9545 = vadd.f32 %v9185, %v9544
  %v9546 = vpop.f32.mrf.mxu0
  %v9547 = vadd.f32 %v9181, %v9546
  %v9548 = vpop.f32.mrf.mxu0
  %v9549 = vadd.f32 %v9185, %v9548
  %9550 = vmatprep.mubr.bf16.mxu0 %v9113
  %9551 = vmatmul.mubr.bf16.gmra.mxu0 %v9112
  %v9552 = vpop.f32.mrf.mxu0
  %v9553 = vadd.f32 %v9181, %v9552
  %v9554 = vpop.f32.mrf.mxu0
  %v9555 = vadd.f32 %v9185, %v9554
  %v9556 = vpop.f32.mrf.mxu0
  %v9557 = vadd.f32 %v9181, %v9556
  %v9558 = vpop.f32.mrf.mxu0
  %v9559 = vadd.f32 %v9185, %v9558
  %9560 = vmatprep.mubr.bf16.mxu0 %v9115
  %9561 = vmatmul.mubr.bf16.gmra.mxu0 %v9114
  %v9562 = vpop.f32.mrf.mxu0
  %v9563 = vadd.f32 %v9181, %v9562
  %v9564 = vpop.f32.mrf.mxu0
  %v9565 = vadd.f32 %v9185, %v9564
  %v9566 = vpop.f32.mrf.mxu0
  %v9567 = vadd.f32 %v9181, %v9566
  %v9568 = vpop.f32.mrf.mxu0
  %v9569 = vadd.f32 %v9185, %v9568
  %9570 = vmatprep.mubr.bf16.mxu0 %v9117
  %9571 = vmatmul.mubr.bf16.gmra.mxu0 %v9116
  %v9572 = vpop.f32.mrf.mxu0
  %v9573 = vadd.f32 %v9181, %v9572
  %v9574 = vpop.f32.mrf.mxu0
  %v9575 = vadd.f32 %v9185, %v9574
  %v9576 = vpop.f32.mrf.mxu0
  %v9577 = vadd.f32 %v9181, %v9576
  %v9578 = vpop.f32.mrf.mxu0
  %v9579 = vadd.f32 %v9185, %v9578
  %9580 = vmatprep.mubr.bf16.mxu0 %v9119
  %9581 = vmatmul.mubr.bf16.gmra.mxu0 %v9118
  %v9582 = vpop.f32.mrf.mxu0
  %v9583 = vadd.f32 %v9181, %v9582
  %v9584 = vpop.f32.mrf.mxu0
  %v9585 = vadd.f32 %v9185, %v9584
  %v9586 = vpop.f32.mrf.mxu0
  %v9587 = vadd.f32 %v9181, %v9586
  %v9588 = vpop.f32.mrf.mxu0
  %v9589 = vadd.f32 %v9185, %v9588
  %9590 = vmatprep.mubr.bf16.mxu0 %v9121
  %9591 = vmatmul.mubr.bf16.gmra.mxu0 %v9120
  %v9592 = vpop.f32.mrf.mxu0
  %v9593 = vadd.f32 %v9181, %v9592
  %v9594 = vpop.f32.mrf.mxu0
  %v9595 = vadd.f32 %v9185, %v9594
  %v9596 = vpop.f32.mrf.mxu0
  %v9597 = vadd.f32 %v9181, %v9596
  %v9598 = vpop.f32.mrf.mxu0
  %v9599 = vadd.f32 %v9185, %v9598
  %9600 = vmatprep.mubr.bf16.mxu0 %v9123
  %9601 = vmatmul.mubr.bf16.gmra.mxu0 %v9122
  %v9602 = vpop.f32.mrf.mxu0
  %v9603 = vadd.f32 %v9181, %v9602
  %v9604 = vpop.f32.mrf.mxu0
  %v9605 = vadd.f32 %v9185, %v9604
  %v9606 = vpop.f32.mrf.mxu0
  %v9607 = vadd.f32 %v9181, %v9606
  %v9608 = vpop.f32.mrf.mxu0
  %v9609 = vadd.f32 %v9185, %v9608
  %9610 = vmatprep.mubr.bf16.mxu0 %v9125
  %9611 = vmatmul.mubr.bf16.gmra.mxu0 %v9124
  %v9612 = vpop.f32.mrf.mxu0
  %v9613 = vadd.f32 %v9181, %v9612
  %v9614 = vpop.f32.mrf.mxu0
  %v9615 = vadd.f32 %v9185, %v9614
  %v9616 = vpop.f32.mrf.mxu0
  %v9617 = vadd.f32 %v9181, %v9616
  %v9618 = vpop.f32.mrf.mxu0
  %v9619 = vadd.f32 %v9185, %v9618
  %9620 = vmatprep.mubr.bf16.mxu0 %v9127
  %9621 = vmatmul.mubr.bf16.gmra.mxu0 %v9126
  %v9622 = vpop.f32.mrf.mxu0
  %v9623 = vadd.f32 %v9181, %v9622
  %v9624 = vpop.f32.mrf.mxu0
  %v9625 = vadd.f32 %v9185, %v9624
  %v9626 = vpop.f32.mrf.mxu0
  %v9627 = vadd.f32 %v9181, %v9626
  %v9628 = vpop.f32.mrf.mxu0
  %v9629 = vadd.f32 %v9185, %v9628
  %9630 = vmatprep.mubr.bf16.mxu0 %v9129
  %9631 = vmatmul.mubr.bf16.gmra.mxu0 %v9128
  %v9632 = vpop.f32.mrf.mxu0
  %v9633 = vadd.f32 %v9181, %v9632
  %v9634 = vpop.f32.mrf.mxu0
  %v9635 = vadd.f32 %v9185, %v9634
  %v9636 = vpop.f32.mrf.mxu0
  %v9637 = vadd.f32 %v9181, %v9636
  %v9638 = vpop.f32.mrf.mxu0
  %v9639 = vadd.f32 %v9185, %v9638
  %9640 = vmatprep.mubr.bf16.mxu0 %v9131
  %9641 = vmatmul.mubr.bf16.gmra.mxu0 %v9130
  %v9642 = vpop.f32.mrf.mxu0
  %v9643 = vadd.f32 %v9181, %v9642
  %v9644 = vpop.f32.mrf.mxu0
  %v9645 = vadd.f32 %v9185, %v9644
  %v9646 = vpop.f32.mrf.mxu0
  %v9647 = vadd.f32 %v9181, %v9646
  %v9648 = vpop.f32.mrf.mxu0
  %v9649 = vadd.f32 %v9185, %v9648
  %9650 = vmatprep.mubr.bf16.mxu0 %v9133
  %9651 = vmatmul.mubr.bf16.gmra.mxu0 %v9132
  %v9652 = vpop.f32.mrf.mxu0
  %v9653 = vadd.f32 %v9181, %v9652
  %v9654 = vpop.f32.mrf.mxu0
  %v9655 = vadd.f32 %v9185, %v9654
  %v9656 = vpop.f32.mrf.mxu0
  %v9657 = vadd.f32 %v9181, %v9656
  %v9658 = vpop.f32.mrf.mxu0
  %v9659 = vadd.f32 %v9185, %v9658
  %9660 = vmatprep.mubr.bf16.mxu0 %v9135
  %9661 = vmatmul.mubr.bf16.gmra.mxu0 %v9134
  %v9662 = vpop.f32.mrf.mxu0
  %v9663 = vadd.f32 %v9181, %v9662
  %v9664 = vpop.f32.mrf.mxu0
  %v9665 = vadd.f32 %v9185, %v9664
  %v9666 = vpop.f32.mrf.mxu0
  %v9667 = vadd.f32 %v9181, %v9666
  %v9668 = vpop.f32.mrf.mxu0
  %v9669 = vadd.f32 %v9185, %v9668
  %9670 = vmatprep.mubr.bf16.mxu0 %v9137
  %9671 = vmatmul.mubr.bf16.gmra.mxu0 %v9136
  %v9672 = vpop.f32.mrf.mxu0
  %v9673 = vadd.f32 %v9181, %v9672
  %v9674 = vpop.f32.mrf.mxu0
  %v9675 = vadd.f32 %v9185, %v9674
  %v9676 = vpop.f32.mrf.mxu0
  %v9677 = vadd.f32 %v9181, %v9676
  %v9678 = vpop.f32.mrf.mxu0
  %v9679 = vadd.f32 %v9185, %v9678
  %9680 = vmatprep.mubr.bf16.mxu0 %v9139
  %9681 = vmatmul.mubr.bf16.gmra.mxu0 %v9138
  %v9682 = vpop.f32.mrf.mxu0
  %v9683 = vadd.f32 %v9181, %v9682
  %v9684 = vpop.f32.mrf.mxu0
  %v9685 = vadd.f32 %v9185, %v9684
  %v9686 = vpop.f32.mrf.mxu0
  %v9687 = vadd.f32 %v9181, %v9686
  %v9688 = vpop.f32.mrf.mxu0
  %v9689 = vadd.f32 %v9185, %v9688
  %9690 = vmatprep.mubr.bf16.mxu0 %v9141
  %9691 = vmatmul.mubr.bf16.gmra.mxu0 %v9140
  %v9692 = vpop.f32.mrf.mxu0
  %v9693 = vadd.f32 %v9181, %v9692
  %v9694 = vpop.f32.mrf.mxu0
  %v9695 = vadd.f32 %v9185, %v9694
  %v9696 = vpop.f32.mrf.mxu0
  %v9697 = vadd.f32 %v9181, %v9696
  %v9698 = vpop.f32.mrf.mxu0
  %v9699 = vadd.f32 %v9185, %v9698
  %9700 = vdwg.mxu0
  %vm9701 = vcmp.gt.f32.partialorder %v9383, 0.0
  %vm9702 = vcmp.gt.f32.partialorder %v9385, 0.0
  %vm9703 = vcmp.gt.f32.partialorder %v9387, 0.0
  %vm9704 = vcmp.gt.f32.partialorder %v9389, 0.0
  %vm9705 = vcmp.gt.f32.partialorder %v9393, 0.0
  %vm9706 = vcmp.gt.f32.partialorder %v9395, 0.0
  %vm9707 = vcmp.gt.f32.partialorder %v9397, 0.0
  %vm9708 = vcmp.gt.f32.partialorder %v9399, 0.0
  %vm9709 = vcmp.gt.f32.partialorder %v9403, 0.0
  %vm9710 = vcmp.gt.f32.partialorder %v9405, 0.0
  %vm9711 = vcmp.gt.f32.partialorder %v9407, 0.0
  %vm9712 = vcmp.gt.f32.partialorder %v9409, 0.0
  %vm9713 = vcmp.gt.f32.partialorder %v9413, 0.0
  %vm9714 = vcmp.gt.f32.partialorder %v9415, 0.0
  %vm9715 = vcmp.gt.f32.partialorder %v9417, 0.0
  %vm9716 = vcmp.gt.f32.partialorder %v9419, 0.0
  %vm9717 = vcmp.gt.f32.partialorder %v9423, 0.0
  %vm9718 = vcmp.gt.f32.partialorder %v9425, 0.0
  %vm9719 = vcmp.gt.f32.partialorder %v9427, 0.0
  %vm9720 = vcmp.gt.f32.partialorder %v9429, 0.0
  %vm9721 = vcmp.gt.f32.partialorder %v9433, 0.0
  %vm9722 = vcmp.gt.f32.partialorder %v9435, 0.0
  %vm9723 = vcmp.gt.f32.partialorder %v9437, 0.0
  %vm9724 = vcmp.gt.f32.partialorder %v9439, 0.0
  %vm9725 = vcmp.gt.f32.partialorder %v9443, 0.0
  %vm9726 = vcmp.gt.f32.partialorder %v9445, 0.0
  %vm9727 = vcmp.gt.f32.partialorder %v9447, 0.0
  %vm9728 = vcmp.gt.f32.partialorder %v9449, 0.0
  %vm9729 = vcmp.gt.f32.partialorder %v9453, 0.0
  %vm9730 = vcmp.gt.f32.partialorder %v9455, 0.0
  %vm9731 = vcmp.gt.f32.partialorder %v9457, 0.0
  %vm9732 = vcmp.gt.f32.partialorder %v9459, 0.0
  %vm9733 = vcmp.gt.f32.partialorder %v9463, 0.0
  %vm9734 = vcmp.gt.f32.partialorder %v9465, 0.0
  %vm9735 = vcmp.gt.f32.partialorder %v9467, 0.0
  %vm9736 = vcmp.gt.f32.partialorder %v9469, 0.0
  %vm9737 = vcmp.gt.f32.partialorder %v9473, 0.0
  %vm9738 = vcmp.gt.f32.partialorder %v9475, 0.0
  %vm9739 = vcmp.gt.f32.partialorder %v9477, 0.0
  %vm9740 = vcmp.gt.f32.partialorder %v9479, 0.0
  %vm9741 = vcmp.gt.f32.partialorder %v9483, 0.0
  %vm9742 = vcmp.gt.f32.partialorder %v9485, 0.0
  %vm9743 = vcmp.gt.f32.partialorder %v9487, 0.0
  %vm9744 = vcmp.gt.f32.partialorder %v9489, 0.0
  %vm9745 = vcmp.gt.f32.partialorder %v9493, 0.0
  %vm9746 = vcmp.gt.f32.partialorder %v9495, 0.0
  %vm9747 = vcmp.gt.f32.partialorder %v9497, 0.0
  %vm9748 = vcmp.gt.f32.partialorder %v9499, 0.0
  %vm9749 = vcmp.gt.f32.partialorder %v9503, 0.0
  %vm9750 = vcmp.gt.f32.partialorder %v9505, 0.0
  %vm9751 = vcmp.gt.f32.partialorder %v9507, 0.0
  %vm9752 = vcmp.gt.f32.partialorder %v9509, 0.0
  %vm9753 = vcmp.gt.f32.partialorder %v9513, 0.0
  %vm9754 = vcmp.gt.f32.partialorder %v9515, 0.0
  %vm9755 = vcmp.gt.f32.partialorder %v9517, 0.0
  %vm9756 = vcmp.gt.f32.partialorder %v9519, 0.0
  %vm9757 = vcmp.gt.f32.partialorder %v9523, 0.0
  %vm9758 = vcmp.gt.f32.partialorder %v9525, 0.0
  %vm9759 = vcmp.gt.f32.partialorder %v9527, 0.0
  %vm9760 = vcmp.gt.f32.partialorder %v9529, 0.0
  %vm9761 = vcmp.gt.f32.partialorder %v9533, 0.0
  %vm9762 = vcmp.gt.f32.partialorder %v9535, 0.0
  %vm9763 = vcmp.gt.f32.partialorder %v9537, 0.0
  %vm9764 = vcmp.gt.f32.partialorder %v9539, 0.0
  %vm9765 = vcmp.gt.f32.partialorder %v9543, 0.0
  %vm9766 = vcmp.gt.f32.partialorder %v9545, 0.0
  %vm9767 = vcmp.gt.f32.partialorder %v9547, 0.0
  %vm9768 = vcmp.gt.f32.partialorder %v9549, 0.0
  %vm9769 = vcmp.gt.f32.partialorder %v9553, 0.0
  %vm9770 = vcmp.gt.f32.partialorder %v9555, 0.0
  %vm9771 = vcmp.gt.f32.partialorder %v9557, 0.0
  %vm9772 = vcmp.gt.f32.partialorder %v9559, 0.0
  %vm9773 = vcmp.gt.f32.partialorder %v9563, 0.0
  %vm9774 = vcmp.gt.f32.partialorder %v9565, 0.0
  %vm9775 = vcmp.gt.f32.partialorder %v9567, 0.0
  %vm9776 = vcmp.gt.f32.partialorder %v9569, 0.0
  %vm9777 = vcmp.gt.f32.partialorder %v9573, 0.0
  %vm9778 = vcmp.gt.f32.partialorder %v9575, 0.0
  %vm9779 = vcmp.gt.f32.partialorder %v9577, 0.0
  %vm9780 = vcmp.gt.f32.partialorder %v9579, 0.0
  %vm9781 = vcmp.gt.f32.partialorder %v9583, 0.0
  %vm9782 = vcmp.gt.f32.partialorder %v9585, 0.0
  %vm9783 = vcmp.gt.f32.partialorder %v9587, 0.0
  %vm9784 = vcmp.gt.f32.partialorder %v9589, 0.0
  %vm9785 = vcmp.gt.f32.partialorder %v9593, 0.0
  %vm9786 = vcmp.gt.f32.partialorder %v9595, 0.0
  %vm9787 = vcmp.gt.f32.partialorder %v9597, 0.0
  %vm9788 = vcmp.gt.f32.partialorder %v9599, 0.0
  %vm9789 = vcmp.gt.f32.partialorder %v9603, 0.0
  %vm9790 = vcmp.gt.f32.partialorder %v9605, 0.0
  %vm9791 = vcmp.gt.f32.partialorder %v9607, 0.0
  %vm9792 = vcmp.gt.f32.partialorder %v9609, 0.0
  %vm9793 = vcmp.gt.f32.partialorder %v9613, 0.0
  %vm9794 = vcmp.gt.f32.partialorder %v9615, 0.0
  %vm9795 = vcmp.gt.f32.partialorder %v9617, 0.0
  %vm9796 = vcmp.gt.f32.partialorder %v9619, 0.0
  %vm9797 = vcmp.gt.f32.partialorder %v9623, 0.0
  %vm9798 = vcmp.gt.f32.partialorder %v9625, 0.0
  %vm9799 = vcmp.gt.f32.partialorder %v9627, 0.0
  %vm9800 = vcmp.gt.f32.partialorder %v9629, 0.0
  %vm9801 = vcmp.gt.f32.partialorder %v9633, 0.0
  %vm9802 = vcmp.gt.f32.partialorder %v9635, 0.0
  %vm9803 = vcmp.gt.f32.partialorder %v9637, 0.0
  %vm9804 = vcmp.gt.f32.partialorder %v9639, 0.0
  %vm9805 = vcmp.gt.f32.partialorder %v9643, 0.0
  %vm9806 = vcmp.gt.f32.partialorder %v9645, 0.0
  %vm9807 = vcmp.gt.f32.partialorder %v9647, 0.0
  %vm9808 = vcmp.gt.f32.partialorder %v9649, 0.0
  %vm9809 = vcmp.gt.f32.partialorder %v9653, 0.0
  %vm9810 = vcmp.gt.f32.partialorder %v9655, 0.0
  %vm9811 = vcmp.gt.f32.partialorder %v9657, 0.0
  %vm9812 = vcmp.gt.f32.partialorder %v9659, 0.0
  %vm9813 = vcmp.gt.f32.partialorder %v9663, 0.0
  %vm9814 = vcmp.gt.f32.partialorder %v9665, 0.0
  %vm9815 = vcmp.gt.f32.partialorder %v9667, 0.0
  %vm9816 = vcmp.gt.f32.partialorder %v9669, 0.0
  %vm9817 = vcmp.gt.f32.partialorder %v9673, 0.0
  %vm9818 = vcmp.gt.f32.partialorder %v9675, 0.0
  %vm9819 = vcmp.gt.f32.partialorder %v9677, 0.0
  %vm9820 = vcmp.gt.f32.partialorder %v9679, 0.0
  %vm9821 = vcmp.gt.f32.partialorder %v9683, 0.0
  %vm9822 = vcmp.gt.f32.partialorder %v9685, 0.0
  %vm9823 = vcmp.gt.f32.partialorder %v9687, 0.0
  %vm9824 = vcmp.gt.f32.partialorder %v9689, 0.0
  %vm9825 = vcmp.gt.f32.partialorder %v9693, 0.0
  %vm9826 = vcmp.gt.f32.partialorder %v9695, 0.0
  %vm9827 = vcmp.gt.f32.partialorder %v9697, 0.0
  %vm9828 = vcmp.gt.f32.partialorder %v9699, 0.0
  %v9829 = vmin.f32 %v9383, 0.0
  %v9830 = vmin.f32 %v9385, 0.0
  %v9831 = vmin.f32 %v9387, 0.0
  %v9832 = vmin.f32 %v9389, 0.0
  %v9833 = vmin.f32 %v9393, 0.0
  %v9834 = vmin.f32 %v9395, 0.0
  %v9835 = vmin.f32 %v9397, 0.0
  %v9836 = vmin.f32 %v9399, 0.0
  %v9837 = vmin.f32 %v9403, 0.0
  %v9838 = vmin.f32 %v9405, 0.0
  %v9839 = vmin.f32 %v9407, 0.0
  %v9840 = vmin.f32 %v9409, 0.0
  %v9841 = vmin.f32 %v9413, 0.0
  %v9842 = vmin.f32 %v9415, 0.0
  %v9843 = vmin.f32 %v9417, 0.0
  %v9844 = vmin.f32 %v9419, 0.0
  %v9845 = vmin.f32 %v9423, 0.0
  %v9846 = vmin.f32 %v9425, 0.0
  %v9847 = vmin.f32 %v9427, 0.0
  %v9848 = vmin.f32 %v9429, 0.0
  %v9849 = vmin.f32 %v9433, 0.0
  %v9850 = vmin.f32 %v9435, 0.0
  %v9851 = vmin.f32 %v9437, 0.0
  %v9852 = vmin.f32 %v9439, 0.0
  %v9853 = vmin.f32 %v9443, 0.0
  %v9854 = vmin.f32 %v9445, 0.0
  %v9855 = vmin.f32 %v9447, 0.0
  %v9856 = vmin.f32 %v9449, 0.0
  %v9857 = vmin.f32 %v9453, 0.0
  %v9858 = vmin.f32 %v9455, 0.0
  %v9859 = vmin.f32 %v9457, 0.0
  %v9860 = vmin.f32 %v9459, 0.0
  %v9861 = vmin.f32 %v9463, 0.0
  %v9862 = vmin.f32 %v9465, 0.0
  %v9863 = vmin.f32 %v9467, 0.0
  %v9864 = vmin.f32 %v9469, 0.0
  %v9865 = vmin.f32 %v9473, 0.0
  %v9866 = vmin.f32 %v9475, 0.0
  %v9867 = vmin.f32 %v9477, 0.0
  %v9868 = vmin.f32 %v9479, 0.0
  %v9869 = vmin.f32 %v9483, 0.0
  %v9870 = vmin.f32 %v9485, 0.0
  %v9871 = vmin.f32 %v9487, 0.0
  %v9872 = vmin.f32 %v9489, 0.0
  %v9873 = vmin.f32 %v9493, 0.0
  %v9874 = vmin.f32 %v9495, 0.0
  %v9875 = vmin.f32 %v9497, 0.0
  %v9876 = vmin.f32 %v9499, 0.0
  %v9877 = vmin.f32 %v9503, 0.0
  %v9878 = vmin.f32 %v9505, 0.0
  %v9879 = vmin.f32 %v9507, 0.0
  %v9880 = vmin.f32 %v9509, 0.0
  %v9881 = vmin.f32 %v9513, 0.0
  %v9882 = vmin.f32 %v9515, 0.0
  %v9883 = vmin.f32 %v9517, 0.0
  %v9884 = vmin.f32 %v9519, 0.0
  %v9885 = vmin.f32 %v9523, 0.0
  %v9886 = vmin.f32 %v9525, 0.0
  %v9887 = vmin.f32 %v9527, 0.0
  %v9888 = vmin.f32 %v9529, 0.0
  %v9889 = vmin.f32 %v9533, 0.0
  %v9890 = vmin.f32 %v9535, 0.0
  %v9891 = vmin.f32 %v9537, 0.0
  %v9892 = vmin.f32 %v9539, 0.0
  %v9893 = vmin.f32 %v9543, 0.0
  %v9894 = vmin.f32 %v9545, 0.0
  %v9895 = vmin.f32 %v9547, 0.0
  %v9896 = vmin.f32 %v9549, 0.0
  %v9897 = vmin.f32 %v9553, 0.0
  %v9898 = vmin.f32 %v9555, 0.0
  %v9899 = vmin.f32 %v9557, 0.0
  %v9900 = vmin.f32 %v9559, 0.0
  %v9901 = vmin.f32 %v9563, 0.0
  %v9902 = vmin.f32 %v9565, 0.0
  %v9903 = vmin.f32 %v9567, 0.0
  %v9904 = vmin.f32 %v9569, 0.0
  %v9905 = vmin.f32 %v9573, 0.0
  %v9906 = vmin.f32 %v9575, 0.0
  %v9907 = vmin.f32 %v9577, 0.0
  %v9908 = vmin.f32 %v9579, 0.0
  %v9909 = vmin.f32 %v9583, 0.0
  %v9910 = vmin.f32 %v9585, 0.0
  %v9911 = vmin.f32 %v9587, 0.0
  %v9912 = vmin.f32 %v9589, 0.0
  %v9913 = vmin.f32 %v9593, 0.0
  %v9914 = vmin.f32 %v9595, 0.0
  %v9915 = vmin.f32 %v9597, 0.0
  %v9916 = vmin.f32 %v9599, 0.0
  %v9917 = vmin.f32 %v9603, 0.0
  %v9918 = vmin.f32 %v9605, 0.0
  %v9919 = vmin.f32 %v9607, 0.0
  %v9920 = vmin.f32 %v9609, 0.0
  %v9921 = vmin.f32 %v9613, 0.0
  %v9922 = vmin.f32 %v9615, 0.0
  %v9923 = vmin.f32 %v9617, 0.0
  %v9924 = vmin.f32 %v9619, 0.0
  %v9925 = vmin.f32 %v9623, 0.0
  %v9926 = vmin.f32 %v9625, 0.0
  %v9927 = vmin.f32 %v9627, 0.0
  %v9928 = vmin.f32 %v9629, 0.0
  %v9929 = vmin.f32 %v9633, 0.0
  %v9930 = vmin.f32 %v9635, 0.0
  %v9931 = vmin.f32 %v9637, 0.0
  %v9932 = vmin.f32 %v9639, 0.0
  %v9933 = vmin.f32 %v9643, 0.0
  %v9934 = vmin.f32 %v9645, 0.0
  %v9935 = vmin.f32 %v9647, 0.0
  %v9936 = vmin.f32 %v9649, 0.0
  %v9937 = vmin.f32 %v9653, 0.0
  %v9938 = vmin.f32 %v9655, 0.0
  %v9939 = vmin.f32 %v9657, 0.0
  %v9940 = vmin.f32 %v9659, 0.0
  %v9941 = vmin.f32 %v9663, 0.0
  %v9942 = vmin.f32 %v9665, 0.0
  %v9943 = vmin.f32 %v9667, 0.0
  %v9944 = vmin.f32 %v9669, 0.0
  %v9945 = vmin.f32 %v9673, 0.0
  %v9946 = vmin.f32 %v9675, 0.0
  %v9947 = vmin.f32 %v9677, 0.0
  %v9948 = vmin.f32 %v9679, 0.0
  %v9949 = vmin.f32 %v9683, 0.0
  %v9950 = vmin.f32 %v9685, 0.0
  %v9951 = vmin.f32 %v9687, 0.0
  %v9952 = vmin.f32 %v9689, 0.0
  %v9953 = vmin.f32 %v9693, 0.0
  %v9954 = vmin.f32 %v9695, 0.0
  %v9955 = vmin.f32 %v9697, 0.0
  %v9956 = vmin.f32 %v9699, 0.0
  %v9957 = vmul.f32 %v9829, 1.442695
  %v9958 = vpow.pop %v9957
  %v9959 = vmul.f32 %v9830, 1.442695
  %v9960 = vpow.pop %v9959
  %v9961 = vmul.f32 %v9831, 1.442695
  %v9962 = vpow.pop %v9961
  %v9963 = vmul.f32 %v9832, 1.442695
  %v9964 = vpow.pop %v9963
  %v9965 = vmul.f32 %v9833, 1.442695
  %v9966 = vpow.pop %v9965
  %v9967 = vmul.f32 %v9834, 1.442695
  %v9968 = vpow.pop %v9967
  %v9969 = vmul.f32 %v9835, 1.442695
  %v9970 = vpow.pop %v9969
  %v9971 = vmul.f32 %v9836, 1.442695
  %v9972 = vpow.pop %v9971
  %v9973 = vmul.f32 %v9837, 1.442695
  %v9974 = vpow.pop %v9973
  %v9975 = vmul.f32 %v9838, 1.442695
  %v9976 = vpow.pop %v9975
  %v9977 = vmul.f32 %v9839, 1.442695
  %v9978 = vpow.pop %v9977
  %v9979 = vmul.f32 %v9840, 1.442695
  %v9980 = vpow.pop %v9979
  %v9981 = vmul.f32 %v9841, 1.442695
  %v9982 = vpow.pop %v9981
  %v9983 = vmul.f32 %v9842, 1.442695
  %v9984 = vpow.pop %v9983
  %v9985 = vmul.f32 %v9843, 1.442695
  %v9986 = vpow.pop %v9985
  %v9987 = vmul.f32 %v9844, 1.442695
  %v9988 = vpow.pop %v9987
  %v9989 = vmul.f32 %v9845, 1.442695
  %v9990 = vpow.pop %v9989
  %v9991 = vmul.f32 %v9846, 1.442695
  %v9992 = vpow.pop %v9991
  %v9993 = vmul.f32 %v9847, 1.442695
  %v9994 = vpow.pop %v9993
  %v9995 = vmul.f32 %v9848, 1.442695
  %v9996 = vpow.pop %v9995
  %v9997 = vmul.f32 %v9849, 1.442695
  %v9998 = vpow.pop %v9997
  %v9999 = vmul.f32 %v9850, 1.442695
  %v10000 = vpow.pop %v9999
  %v10001 = vmul.f32 %v9851, 1.442695
  %v10002 = vpow.pop %v10001
  %v10003 = vmul.f32 %v9852, 1.442695
  %v10004 = vpow.pop %v10003
  %v10005 = vmul.f32 %v9853, 1.442695
  %v10006 = vpow.pop %v10005
  %v10007 = vmul.f32 %v9854, 1.442695
  %v10008 = vpow.pop %v10007
  %v10009 = vmul.f32 %v9855, 1.442695
  %v10010 = vpow.pop %v10009
  %v10011 = vmul.f32 %v9856, 1.442695
  %v10012 = vpow.pop %v10011
  %v10013 = vmul.f32 %v9857, 1.442695
  %v10014 = vpow.pop %v10013
  %v10015 = vmul.f32 %v9858, 1.442695
  %v10016 = vpow.pop %v10015
  %v10017 = vmul.f32 %v9859, 1.442695
  %v10018 = vpow.pop %v10017
  %v10019 = vmul.f32 %v9860, 1.442695
  %v10020 = vpow.pop %v10019
  %v10021 = vmul.f32 %v9861, 1.442695
  %v10022 = vpow.pop %v10021
  %v10023 = vmul.f32 %v9862, 1.442695
  %v10024 = vpow.pop %v10023
  %v10025 = vmul.f32 %v9863, 1.442695
  %v10026 = vpow.pop %v10025
  %v10027 = vmul.f32 %v9864, 1.442695
  %v10028 = vpow.pop %v10027
  %v10029 = vmul.f32 %v9865, 1.442695
  %v10030 = vpow.pop %v10029
  %v10031 = vmul.f32 %v9866, 1.442695
  %v10032 = vpow.pop %v10031
  %v10033 = vmul.f32 %v9867, 1.442695
  %v10034 = vpow.pop %v10033
  %v10035 = vmul.f32 %v9868, 1.442695
  %v10036 = vpow.pop %v10035
  %v10037 = vmul.f32 %v9869, 1.442695
  %v10038 = vpow.pop %v10037
  %v10039 = vmul.f32 %v9870, 1.442695
  %v10040 = vpow.pop %v10039
  %v10041 = vmul.f32 %v9871, 1.442695
  %v10042 = vpow.pop %v10041
  %v10043 = vmul.f32 %v9872, 1.442695
  %v10044 = vpow.pop %v10043
  %v10045 = vmul.f32 %v9873, 1.442695
  %v10046 = vpow.pop %v10045
  %v10047 = vmul.f32 %v9874, 1.442695
  %v10048 = vpow.pop %v10047
  %v10049 = vmul.f32 %v9875, 1.442695
  %v10050 = vpow.pop %v10049
  %v10051 = vmul.f32 %v9876, 1.442695
  %v10052 = vpow.pop %v10051
  %v10053 = vmul.f32 %v9877, 1.442695
  %v10054 = vpow.pop %v10053
  %v10055 = vmul.f32 %v9878, 1.442695
  %v10056 = vpow.pop %v10055
  %v10057 = vmul.f32 %v9879, 1.442695
  %v10058 = vpow.pop %v10057
  %v10059 = vmul.f32 %v9880, 1.442695
  %v10060 = vpow.pop %v10059
  %v10061 = vmul.f32 %v9881, 1.442695
  %v10062 = vpow.pop %v10061
  %v10063 = vmul.f32 %v9882, 1.442695
  %v10064 = vpow.pop %v10063
  %v10065 = vmul.f32 %v9883, 1.442695
  %v10066 = vpow.pop %v10065
  %v10067 = vmul.f32 %v9884, 1.442695
  %v10068 = vpow.pop %v10067
  %v10069 = vmul.f32 %v9885, 1.442695
  %v10070 = vpow.pop %v10069
  %v10071 = vmul.f32 %v9886, 1.442695
  %v10072 = vpow.pop %v10071
  %v10073 = vmul.f32 %v9887, 1.442695
  %v10074 = vpow.pop %v10073
  %v10075 = vmul.f32 %v9888, 1.442695
  %v10076 = vpow.pop %v10075
  %v10077 = vmul.f32 %v9889, 1.442695
  %v10078 = vpow.pop %v10077
  %v10079 = vmul.f32 %v9890, 1.442695
  %v10080 = vpow.pop %v10079
  %v10081 = vmul.f32 %v9891, 1.442695
  %v10082 = vpow.pop %v10081
  %v10083 = vmul.f32 %v9892, 1.442695
  %v10084 = vpow.pop %v10083
  %v10085 = vmul.f32 %v9893, 1.442695
  %v10086 = vpow.pop %v10085
  %v10087 = vmul.f32 %v9894, 1.442695
  %v10088 = vpow.pop %v10087
  %v10089 = vmul.f32 %v9895, 1.442695
  %v10090 = vpow.pop %v10089
  %v10091 = vmul.f32 %v9896, 1.442695
  %v10092 = vpow.pop %v10091
  %v10093 = vmul.f32 %v9897, 1.442695
  %v10094 = vpow.pop %v10093
  %v10095 = vmul.f32 %v9898, 1.442695
  %v10096 = vpow.pop %v10095
  %v10097 = vmul.f32 %v9899, 1.442695
  %v10098 = vpow.pop %v10097
  %v10099 = vmul.f32 %v9900, 1.442695
  %v10100 = vpow.pop %v10099
  %v10101 = vmul.f32 %v9901, 1.442695
  %v10102 = vpow.pop %v10101
  %v10103 = vmul.f32 %v9902, 1.442695
  %v10104 = vpow.pop %v10103
  %v10105 = vmul.f32 %v9903, 1.442695
  %v10106 = vpow.pop %v10105
  %v10107 = vmul.f32 %v9904, 1.442695
  %v10108 = vpow.pop %v10107
  %v10109 = vmul.f32 %v9905, 1.442695
  %v10110 = vpow.pop %v10109
  %v10111 = vmul.f32 %v9906, 1.442695
  %v10112 = vpow.pop %v10111
  %v10113 = vmul.f32 %v9907, 1.442695
  %v10114 = vpow.pop %v10113
  %v10115 = vmul.f32 %v9908, 1.442695
  %v10116 = vpow.pop %v10115
  %v10117 = vmul.f32 %v9909, 1.442695
  %v10118 = vpow.pop %v10117
  %v10119 = vmul.f32 %v9910, 1.442695
  %v10120 = vpow.pop %v10119
  %v10121 = vmul.f32 %v9911, 1.442695
  %v10122 = vpow.pop %v10121
  %v10123 = vmul.f32 %v9912, 1.442695
  %v10124 = vpow.pop %v10123
  %v10125 = vmul.f32 %v9913, 1.442695
  %v10126 = vpow.pop %v10125
  %v10127 = vmul.f32 %v9914, 1.442695
  %v10128 = vpow.pop %v10127
  %v10129 = vmul.f32 %v9915, 1.442695
  %v10130 = vpow.pop %v10129
  %v10131 = vmul.f32 %v9916, 1.442695
  %v10132 = vpow.pop %v10131
  %v10133 = vmul.f32 %v9917, 1.442695
  %v10134 = vpow.pop %v10133
  %v10135 = vmul.f32 %v9918, 1.442695
  %v10136 = vpow.pop %v10135
  %v10137 = vmul.f32 %v9919, 1.442695
  %v10138 = vpow.pop %v10137
  %v10139 = vmul.f32 %v9920, 1.442695
  %v10140 = vpow.pop %v10139
  %v10141 = vmul.f32 %v9921, 1.442695
  %v10142 = vpow.pop %v10141
  %v10143 = vmul.f32 %v9922, 1.442695
  %v10144 = vpow.pop %v10143
  %v10145 = vmul.f32 %v9923, 1.442695
  %v10146 = vpow.pop %v10145
  %v10147 = vmul.f32 %v9924, 1.442695
  %v10148 = vpow.pop %v10147
  %v10149 = vmul.f32 %v9925, 1.442695
  %v10150 = vpow.pop %v10149
  %v10151 = vmul.f32 %v9926, 1.442695
  %v10152 = vpow.pop %v10151
  %v10153 = vmul.f32 %v9927, 1.442695
  %v10154 = vpow.pop %v10153
  %v10155 = vmul.f32 %v9928, 1.442695
  %v10156 = vpow.pop %v10155
  %v10157 = vmul.f32 %v9929, 1.442695
  %v10158 = vpow.pop %v10157
  %v10159 = vmul.f32 %v9930, 1.442695
  %v10160 = vpow.pop %v10159
  %v10161 = vmul.f32 %v9931, 1.442695
  %v10162 = vpow.pop %v10161
  %v10163 = vmul.f32 %v9932, 1.442695
  %v10164 = vpow.pop %v10163
  %v10165 = vmul.f32 %v9933, 1.442695
  %v10166 = vpow.pop %v10165
  %v10167 = vmul.f32 %v9934, 1.442695
  %v10168 = vpow.pop %v10167
  %v10169 = vmul.f32 %v9935, 1.442695
  %v10170 = vpow.pop %v10169
  %v10171 = vmul.f32 %v9936, 1.442695
  %v10172 = vpow.pop %v10171
  %v10173 = vmul.f32 %v9937, 1.442695
  %v10174 = vpow.pop %v10173
  %v10175 = vmul.f32 %v9938, 1.442695
  %v10176 = vpow.pop %v10175
  %v10177 = vmul.f32 %v9939, 1.442695
  %v10178 = vpow.pop %v10177
  %v10179 = vmul.f32 %v9940, 1.442695
  %v10180 = vpow.pop %v10179
  %v10181 = vmul.f32 %v9941, 1.442695
  %v10182 = vpow.pop %v10181
  %v10183 = vmul.f32 %v9942, 1.442695
  %v10184 = vpow.pop %v10183
  %v10185 = vmul.f32 %v9943, 1.442695
  %v10186 = vpow.pop %v10185
  %v10187 = vmul.f32 %v9944, 1.442695
  %v10188 = vpow.pop %v10187
  %v10189 = vmul.f32 %v9945, 1.442695
  %v10190 = vpow.pop %v10189
  %v10191 = vmul.f32 %v9946, 1.442695
  %v10192 = vpow.pop %v10191
  %v10193 = vmul.f32 %v9947, 1.442695
  %v10194 = vpow.pop %v10193
  %v10195 = vmul.f32 %v9948, 1.442695
  %v10196 = vpow.pop %v10195
  %v10197 = vmul.f32 %v9949, 1.442695
  %v10198 = vpow.pop %v10197
  %v10199 = vmul.f32 %v9950, 1.442695
  %v10200 = vpow.pop %v10199
  %v10201 = vmul.f32 %v9951, 1.442695
  %v10202 = vpow.pop %v10201
  %v10203 = vmul.f32 %v9952, 1.442695
  %v10204 = vpow.pop %v10203
  %v10205 = vmul.f32 %v9953, 1.442695
  %v10206 = vpow.pop %v10205
  %v10207 = vmul.f32 %v9954, 1.442695
  %v10208 = vpow.pop %v10207
  %v10209 = vmul.f32 %v9955, 1.442695
  %v10210 = vpow.pop %v10209
  %v10211 = vmul.f32 %v9956, 1.442695
  %v10212 = vpow.pop %v10211
  %v10213 = vsub.f32 %v9958, 1.0
  %v10214 = vsub.f32 %v9960, 1.0
  %v10215 = vsub.f32 %v9962, 1.0
  %v10216 = vsub.f32 %v9964, 1.0
  %v10217 = vsub.f32 %v9966, 1.0
  %v10218 = vsub.f32 %v9968, 1.0
  %v10219 = vsub.f32 %v9970, 1.0
  %v10220 = vsub.f32 %v9972, 1.0
  %v10221 = vsub.f32 %v9974, 1.0
  %v10222 = vsub.f32 %v9976, 1.0
  %v10223 = vsub.f32 %v9978, 1.0
  %v10224 = vsub.f32 %v9980, 1.0
  %v10225 = vsub.f32 %v9982, 1.0
  %v10226 = vsub.f32 %v9984, 1.0
  %v10227 = vsub.f32 %v9986, 1.0
  %v10228 = vsub.f32 %v9988, 1.0
  %v10229 = vsub.f32 %v9990, 1.0
  %v10230 = vsub.f32 %v9992, 1.0
  %v10231 = vsub.f32 %v9994, 1.0
  %v10232 = vsub.f32 %v9996, 1.0
  %v10233 = vsub.f32 %v9998, 1.0
  %v10234 = vsub.f32 %v10000, 1.0
  %v10235 = vsub.f32 %v10002, 1.0
  %v10236 = vsub.f32 %v10004, 1.0
  %v10237 = vsub.f32 %v10006, 1.0
  %v10238 = vsub.f32 %v10008, 1.0
  %v10239 = vsub.f32 %v10010, 1.0
  %v10240 = vsub.f32 %v10012, 1.0
  %v10241 = vsub.f32 %v10014, 1.0
  %v10242 = vsub.f32 %v10016, 1.0
  %v10243 = vsub.f32 %v10018, 1.0
  %v10244 = vsub.f32 %v10020, 1.0
  %v10245 = vsub.f32 %v10022, 1.0
  %v10246 = vsub.f32 %v10024, 1.0
  %v10247 = vsub.f32 %v10026, 1.0
  %v10248 = vsub.f32 %v10028, 1.0
  %v10249 = vsub.f32 %v10030, 1.0
  %v10250 = vsub.f32 %v10032, 1.0
  %v10251 = vsub.f32 %v10034, 1.0
  %v10252 = vsub.f32 %v10036, 1.0
  %v10253 = vsub.f32 %v10038, 1.0
  %v10254 = vsub.f32 %v10040, 1.0
  %v10255 = vsub.f32 %v10042, 1.0
  %v10256 = vsub.f32 %v10044, 1.0
  %v10257 = vsub.f32 %v10046, 1.0
  %v10258 = vsub.f32 %v10048, 1.0
  %v10259 = vsub.f32 %v10050, 1.0
  %v10260 = vsub.f32 %v10052, 1.0
  %v10261 = vsub.f32 %v10054, 1.0
  %v10262 = vsub.f32 %v10056, 1.0
  %v10263 = vsub.f32 %v10058, 1.0
  %v10264 = vsub.f32 %v10060, 1.0
  %v10265 = vsub.f32 %v10062, 1.0
  %v10266 = vsub.f32 %v10064, 1.0
  %v10267 = vsub.f32 %v10066, 1.0
  %v10268 = vsub.f32 %v10068, 1.0
  %v10269 = vsub.f32 %v10070, 1.0
  %v10270 = vsub.f32 %v10072, 1.0
  %v10271 = vsub.f32 %v10074, 1.0
  %v10272 = vsub.f32 %v10076, 1.0
  %v10273 = vsub.f32 %v10078, 1.0
  %v10274 = vsub.f32 %v10080, 1.0
  %v10275 = vsub.f32 %v10082, 1.0
  %v10276 = vsub.f32 %v10084, 1.0
  %v10277 = vsub.f32 %v10086, 1.0
  %v10278 = vsub.f32 %v10088, 1.0
  %v10279 = vsub.f32 %v10090, 1.0
  %v10280 = vsub.f32 %v10092, 1.0
  %v10281 = vsub.f32 %v10094, 1.0
  %v10282 = vsub.f32 %v10096, 1.0
  %v10283 = vsub.f32 %v10098, 1.0
  %v10284 = vsub.f32 %v10100, 1.0
  %v10285 = vsub.f32 %v10102, 1.0
  %v10286 = vsub.f32 %v10104, 1.0
  %v10287 = vsub.f32 %v10106, 1.0
  %v10288 = vsub.f32 %v10108, 1.0
  %v10289 = vsub.f32 %v10110, 1.0
  %v10290 = vsub.f32 %v10112, 1.0
  %v10291 = vsub.f32 %v10114, 1.0
  %v10292 = vsub.f32 %v10116, 1.0
  %v10293 = vsub.f32 %v10118, 1.0
  %v10294 = vsub.f32 %v10120, 1.0
  %v10295 = vsub.f32 %v10122, 1.0
  %v10296 = vsub.f32 %v10124, 1.0
  %v10297 = vsub.f32 %v10126, 1.0
  %v10298 = vsub.f32 %v10128, 1.0
  %v10299 = vsub.f32 %v10130, 1.0
  %v10300 = vsub.f32 %v10132, 1.0
  %v10301 = vsub.f32 %v10134, 1.0
  %v10302 = vsub.f32 %v10136, 1.0
  %v10303 = vsub.f32 %v10138, 1.0
  %v10304 = vsub.f32 %v10140, 1.0
  %v10305 = vsub.f32 %v10142, 1.0
  %v10306 = vsub.f32 %v10144, 1.0
  %v10307 = vsub.f32 %v10146, 1.0
  %v10308 = vsub.f32 %v10148, 1.0
  %v10309 = vsub.f32 %v10150, 1.0
  %v10310 = vsub.f32 %v10152, 1.0
  %v10311 = vsub.f32 %v10154, 1.0
  %v10312 = vsub.f32 %v10156, 1.0
  %v10313 = vsub.f32 %v10158, 1.0
  %v10314 = vsub.f32 %v10160, 1.0
  %v10315 = vsub.f32 %v10162, 1.0
  %v10316 = vsub.f32 %v10164, 1.0
  %v10317 = vsub.f32 %v10166, 1.0
  %v10318 = vsub.f32 %v10168, 1.0
  %v10319 = vsub.f32 %v10170, 1.0
  %v10320 = vsub.f32 %v10172, 1.0
  %v10321 = vsub.f32 %v10174, 1.0
  %v10322 = vsub.f32 %v10176, 1.0
  %v10323 = vsub.f32 %v10178, 1.0
  %v10324 = vsub.f32 %v10180, 1.0
  %v10325 = vsub.f32 %v10182, 1.0
  %v10326 = vsub.f32 %v10184, 1.0
  %v10327 = vsub.f32 %v10186, 1.0
  %v10328 = vsub.f32 %v10188, 1.0
  %v10329 = vsub.f32 %v10190, 1.0
  %v10330 = vsub.f32 %v10192, 1.0
  %v10331 = vsub.f32 %v10194, 1.0
  %v10332 = vsub.f32 %v10196, 1.0
  %v10333 = vsub.f32 %v10198, 1.0
  %v10334 = vsub.f32 %v10200, 1.0
  %v10335 = vsub.f32 %v10202, 1.0
  %v10336 = vsub.f32 %v10204, 1.0
  %v10337 = vsub.f32 %v10206, 1.0
  %v10338 = vsub.f32 %v10208, 1.0
  %v10339 = vsub.f32 %v10210, 1.0
  %v10340 = vsub.f32 %v10212, 1.0
  %v10341 = vsel %vm9701, %v9383, %v10213
  %v10342 = vsel %vm9702, %v9385, %v10214
  %v10343 = vsel %vm9703, %v9387, %v10215
  %v10344 = vsel %vm9704, %v9389, %v10216
  %v10345 = vsel %vm9705, %v9393, %v10217
  %v10346 = vsel %vm9706, %v9395, %v10218
  %v10347 = vsel %vm9707, %v9397, %v10219
  %v10348 = vsel %vm9708, %v9399, %v10220
  %v10349 = vsel %vm9709, %v9403, %v10221
  %v10350 = vsel %vm9710, %v9405, %v10222
  %v10351 = vsel %vm9711, %v9407, %v10223
  %v10352 = vsel %vm9712, %v9409, %v10224
  %v10353 = vsel %vm9713, %v9413, %v10225
  %v10354 = vsel %vm9714, %v9415, %v10226
  %v10355 = vsel %vm9715, %v9417, %v10227
  %v10356 = vsel %vm9716, %v9419, %v10228
  %v10357 = vsel %vm9717, %v9423, %v10229
  %v10358 = vsel %vm9718, %v9425, %v10230
  %v10359 = vsel %vm9719, %v9427, %v10231
  %v10360 = vsel %vm9720, %v9429, %v10232
  %v10361 = vsel %vm9721, %v9433, %v10233
  %v10362 = vsel %vm9722, %v9435, %v10234
  %v10363 = vsel %vm9723, %v9437, %v10235
  %v10364 = vsel %vm9724, %v9439, %v10236
  %v10365 = vsel %vm9725, %v9443, %v10237
  %v10366 = vsel %vm9726, %v9445, %v10238
  %v10367 = vsel %vm9727, %v9447, %v10239
  %v10368 = vsel %vm9728, %v9449, %v10240
  %v10369 = vsel %vm9729, %v9453, %v10241
  %v10370 = vsel %vm9730, %v9455, %v10242
  %v10371 = vsel %vm9731, %v9457, %v10243
  %v10372 = vsel %vm9732, %v9459, %v10244
  %v10373 = vsel %vm9733, %v9463, %v10245
  %v10374 = vsel %vm9734, %v9465, %v10246
  %v10375 = vsel %vm9735, %v9467, %v10247
  %v10376 = vsel %vm9736, %v9469, %v10248
  %v10377 = vsel %vm9737, %v9473, %v10249
  %v10378 = vsel %vm9738, %v9475, %v10250
  %v10379 = vsel %vm9739, %v9477, %v10251
  %v10380 = vsel %vm9740, %v9479, %v10252
  %v10381 = vsel %vm9741, %v9483, %v10253
  %v10382 = vsel %vm9742, %v9485, %v10254
  %v10383 = vsel %vm9743, %v9487, %v10255
  %v10384 = vsel %vm9744, %v9489, %v10256
  %v10385 = vsel %vm9745, %v9493, %v10257
  %v10386 = vsel %vm9746, %v9495, %v10258
  %v10387 = vsel %vm9747, %v9497, %v10259
  %v10388 = vsel %vm9748, %v9499, %v10260
  %v10389 = vsel %vm9749, %v9503, %v10261
  %v10390 = vsel %vm9750, %v9505, %v10262
  %v10391 = vsel %vm9751, %v9507, %v10263
  %v10392 = vsel %vm9752, %v9509, %v10264
  %v10393 = vsel %vm9753, %v9513, %v10265
  %v10394 = vsel %vm9754, %v9515, %v10266
  %v10395 = vsel %vm9755, %v9517, %v10267
  %v10396 = vsel %vm9756, %v9519, %v10268
  %v10397 = vsel %vm9757, %v9523, %v10269
  %v10398 = vsel %vm9758, %v9525, %v10270
  %v10399 = vsel %vm9759, %v9527, %v10271
  %v10400 = vsel %vm9760, %v9529, %v10272
  %v10401 = vsel %vm9761, %v9533, %v10273
  %v10402 = vsel %vm9762, %v9535, %v10274
  %v10403 = vsel %vm9763, %v9537, %v10275
  %v10404 = vsel %vm9764, %v9539, %v10276
  %v10405 = vsel %vm9765, %v9543, %v10277
  %v10406 = vsel %vm9766, %v9545, %v10278
  %v10407 = vsel %vm9767, %v9547, %v10279
  %v10408 = vsel %vm9768, %v9549, %v10280
  %v10409 = vsel %vm9769, %v9553, %v10281
  %v10410 = vsel %vm9770, %v9555, %v10282
  %v10411 = vsel %vm9771, %v9557, %v10283
  %v10412 = vsel %vm9772, %v9559, %v10284
  %v10413 = vsel %vm9773, %v9563, %v10285
  %v10414 = vsel %vm9774, %v9565, %v10286
  %v10415 = vsel %vm9775, %v9567, %v10287
  %v10416 = vsel %vm9776, %v9569, %v10288
  %v10417 = vsel %vm9777, %v9573, %v10289
  %v10418 = vsel %vm9778, %v9575, %v10290
  %v10419 = vsel %vm9779, %v9577, %v10291
  %v10420 = vsel %vm9780, %v9579, %v10292
  %v10421 = vsel %vm9781, %v9583, %v10293
  %v10422 = vsel %vm9782, %v9585, %v10294
  %v10423 = vsel %vm9783, %v9587, %v10295
  %v10424 = vsel %vm9784, %v9589, %v10296
  %v10425 = vsel %vm9785, %v9593, %v10297
  %v10426 = vsel %vm9786, %v9595, %v10298
  %v10427 = vsel %vm9787, %v9597, %v10299
  %v10428 = vsel %vm9788, %v9599, %v10300
  %v10429 = vsel %vm9789, %v9603, %v10301
  %v10430 = vsel %vm9790, %v9605, %v10302
  %v10431 = vsel %vm9791, %v9607, %v10303
  %v10432 = vsel %vm9792, %v9609, %v10304
  %v10433 = vsel %vm9793, %v9613, %v10305
  %v10434 = vsel %vm9794, %v9615, %v10306
  %v10435 = vsel %vm9795, %v9617, %v10307
  %v10436 = vsel %vm9796, %v9619, %v10308
  %v10437 = vsel %vm9797, %v9623, %v10309
  %v10438 = vsel %vm9798, %v9625, %v10310
  %v10439 = vsel %vm9799, %v9627, %v10311
  %v10440 = vsel %vm9800, %v9629, %v10312
  %v10441 = vsel %vm9801, %v9633, %v10313
  %v10442 = vsel %vm9802, %v9635, %v10314
  %v10443 = vsel %vm9803, %v9637, %v10315
  %v10444 = vsel %vm9804, %v9639, %v10316
  %v10445 = vsel %vm9805, %v9643, %v10317
  %v10446 = vsel %vm9806, %v9645, %v10318
  %v10447 = vsel %vm9807, %v9647, %v10319
  %v10448 = vsel %vm9808, %v9649, %v10320
  %v10449 = vsel %vm9809, %v9653, %v10321
  %v10450 = vsel %vm9810, %v9655, %v10322
  %v10451 = vsel %vm9811, %v9657, %v10323
  %v10452 = vsel %vm9812, %v9659, %v10324
  %v10453 = vsel %vm9813, %v9663, %v10325
  %v10454 = vsel %vm9814, %v9665, %v10326
  %v10455 = vsel %vm9815, %v9667, %v10327
  %v10456 = vsel %vm9816, %v9669, %v10328
  %v10457 = vsel %vm9817, %v9673, %v10329
  %v10458 = vsel %vm9818, %v9675, %v10330
  %v10459 = vsel %vm9819, %v9677, %v10331
  %v10460 = vsel %vm9820, %v9679, %v10332
  %v10461 = vsel %vm9821, %v9683, %v10333
  %v10462 = vsel %vm9822, %v9685, %v10334
  %v10463 = vsel %vm9823, %v9687, %v10335
  %v10464 = vsel %vm9824, %v9689, %v10336
  %v10465 = vsel %vm9825, %v9693, %v10337
  %v10466 = vsel %vm9826, %v9695, %v10338
  %v10467 = vsel %vm9827, %v9697, %v10339
  %v10468 = vsel %vm9828, %v9699, %v10340
  %v10469 = vpack.c.bf16 %v10343, %v10341
  %v10470 = vpack.c.bf16 %v10344, %v10342
  %v10471 = vpack.c.bf16 %v10347, %v10345
  %v10472 = vpack.c.bf16 %v10348, %v10346
  %v10473 = vpack.c.bf16 %v10351, %v10349
  %v10474 = vpack.c.bf16 %v10352, %v10350
  %v10475 = vpack.c.bf16 %v10355, %v10353
  %v10476 = vpack.c.bf16 %v10356, %v10354
  %v10477 = vpack.c.bf16 %v10359, %v10357
  %v10478 = vpack.c.bf16 %v10360, %v10358
  %v10479 = vpack.c.bf16 %v10363, %v10361
  %v10480 = vpack.c.bf16 %v10364, %v10362
  %v10481 = vpack.c.bf16 %v10367, %v10365
  %v10482 = vpack.c.bf16 %v10368, %v10366
  %v10483 = vpack.c.bf16 %v10371, %v10369
  %v10484 = vpack.c.bf16 %v10372, %v10370
  %v10485 = vpack.c.bf16 %v10375, %v10373
  %v10486 = vpack.c.bf16 %v10376, %v10374
  %v10487 = vpack.c.bf16 %v10379, %v10377
  %v10488 = vpack.c.bf16 %v10380, %v10378
  %v10489 = vpack.c.bf16 %v10383, %v10381
  %v10490 = vpack.c.bf16 %v10384, %v10382
  %v10491 = vpack.c.bf16 %v10387, %v10385
  %v10492 = vpack.c.bf16 %v10388, %v10386
  %v10493 = vpack.c.bf16 %v10391, %v10389
  %v10494 = vpack.c.bf16 %v10392, %v10390
  %v10495 = vpack.c.bf16 %v10395, %v10393
  %v10496 = vpack.c.bf16 %v10396, %v10394
  %v10497 = vpack.c.bf16 %v10399, %v10397
  %v10498 = vpack.c.bf16 %v10400, %v10398
  %v10499 = vpack.c.bf16 %v10403, %v10401
  %v10500 = vpack.c.bf16 %v10404, %v10402
  %v10501 = vpack.c.bf16 %v10407, %v10405
  %v10502 = vpack.c.bf16 %v10408, %v10406
  %v10503 = vpack.c.bf16 %v10411, %v10409
  %v10504 = vpack.c.bf16 %v10412, %v10410
  %v10505 = vpack.c.bf16 %v10415, %v10413
  %v10506 = vpack.c.bf16 %v10416, %v10414
  %v10507 = vpack.c.bf16 %v10419, %v10417
  %v10508 = vpack.c.bf16 %v10420, %v10418
  %v10509 = vpack.c.bf16 %v10423, %v10421
  %v10510 = vpack.c.bf16 %v10424, %v10422
  %v10511 = vpack.c.bf16 %v10427, %v10425
  %v10512 = vpack.c.bf16 %v10428, %v10426
  %v10513 = vpack.c.bf16 %v10431, %v10429
  %v10514 = vpack.c.bf16 %v10432, %v10430
  %v10515 = vpack.c.bf16 %v10435, %v10433
  %v10516 = vpack.c.bf16 %v10436, %v10434
  %v10517 = vpack.c.bf16 %v10439, %v10437
  %v10518 = vpack.c.bf16 %v10440, %v10438
  %v10519 = vpack.c.bf16 %v10443, %v10441
  %v10520 = vpack.c.bf16 %v10444, %v10442
  %v10521 = vpack.c.bf16 %v10447, %v10445
  %v10522 = vpack.c.bf16 %v10448, %v10446
  %v10523 = vpack.c.bf16 %v10451, %v10449
  %v10524 = vpack.c.bf16 %v10452, %v10450
  %v10525 = vpack.c.bf16 %v10455, %v10453
  %v10526 = vpack.c.bf16 %v10456, %v10454
  %v10527 = vpack.c.bf16 %v10459, %v10457
  %v10528 = vpack.c.bf16 %v10460, %v10458
  %v10529 = vpack.c.bf16 %v10463, %v10461
  %v10530 = vpack.c.bf16 %v10464, %v10462
  %v10531 = vpack.c.bf16 %v10467, %v10465
  %v10532 = vpack.c.bf16 %v10468, %v10466
  %s10533 = scalar_lea.vmem %s3, 1536
  %v10534 = vld [vmem:[%s10533] sm:$0xff]
  %v10535 = vld [vmem:[%s10533 + $0x8] sm:$0xff]
  %v10536 = vld [vmem:[%s10533 + $0x10] sm:$0xff]
  %v10537 = vld [vmem:[%s10533 + $0x18] sm:$0xff]
  %v10538 = vld [vmem:[%s10533 + $0x20] sm:$0xff]
  %v10539 = vld [vmem:[%s10533 + $0x28] sm:$0xff]
  %v10540 = vld [vmem:[%s10533 + $0x30] sm:$0xff]
  %v10541 = vld [vmem:[%s10533 + $0x38] sm:$0xff]
  %v10542 = vld [vmem:[%s10533 + $0x40] sm:$0xff]
  %v10543 = vld [vmem:[%s10533 + $0x48] sm:$0xff]
  %v10544 = vld [vmem:[%s10533 + $0x50] sm:$0xff]
  %v10545 = vld [vmem:[%s10533 + $0x58] sm:$0xff]
  %v10546 = vld [vmem:[%s10533 + $0x60] sm:$0xff]
  %v10547 = vld [vmem:[%s10533 + $0x68] sm:$0xff]
  %v10548 = vld [vmem:[%s10533 + $0x70] sm:$0xff]
  %v10549 = vld [vmem:[%s10533 + $0x78] sm:$0xff]
  %v10550 = vld [vmem:[%s10533 + $0x80] sm:$0xff]
  %v10551 = vld [vmem:[%s10533 + $0x88] sm:$0xff]
  %v10552 = vld [vmem:[%s10533 + $0x90] sm:$0xff]
  %v10553 = vld [vmem:[%s10533 + $0x98] sm:$0xff]
  %v10554 = vld [vmem:[%s10533 + $0xa0] sm:$0xff]
  %v10555 = vld [vmem:[%s10533 + $0xa8] sm:$0xff]
  %v10556 = vld [vmem:[%s10533 + $0xb0] sm:$0xff]
  %v10557 = vld [vmem:[%s10533 + $0xb8] sm:$0xff]
  %v10558 = vld [vmem:[%s10533 + $0xc0] sm:$0xff]
  %v10559 = vld [vmem:[%s10533 + $0xc8] sm:$0xff]
  %v10560 = vld [vmem:[%s10533 + $0xd0] sm:$0xff]
  %v10561 = vld [vmem:[%s10533 + $0xd8] sm:$0xff]
  %v10562 = vld [vmem:[%s10533 + $0xe0] sm:$0xff]
  %v10563 = vld [vmem:[%s10533 + $0xe8] sm:$0xff]
  %v10564 = vld [vmem:[%s10533 + $0xf0] sm:$0xff]
  %v10565 = vld [vmem:[%s10533 + $0xf8] sm:$0xff]
  %s10566 = scalar_lea.vmem %s4, 6
  %v10567 = vld [vmem:[%s10566] ss:$8 sm:$0x3]
  %v10569 = vlaneseq
  %v10570 = vshrl.u32 %v10569, 7
  %v10571 = vsub.s32 0, %v10570
  %v10572 = vrot.slane %v10567, %v10571
  %v10573 = vlaneseq
  %v10574 = vshrl.u32 %v10573, 7
  %v10575 = vsub.s32 1, %v10574
  %v10576 = vrot.slane %v10567, %v10575
  %v10611 = vunpack.c.l.b16 %v10534
  %v10612 = vunpack.c.h.b16 %v10534
  %v10613 = vunpack.c.l.b16 %v10535
  %v10614 = vunpack.c.h.b16 %v10535
  %v10615 = vunpack.c.l.b16 %v10536
  %v10616 = vunpack.c.h.b16 %v10536
  %v10617 = vunpack.c.l.b16 %v10537
  %v10618 = vunpack.c.h.b16 %v10537
  %v10619 = vunpack.c.l.b16 %v10538
  %v10620 = vunpack.c.h.b16 %v10538
  %v10621 = vunpack.c.l.b16 %v10539
  %v10622 = vunpack.c.h.b16 %v10539
  %v10623 = vunpack.c.l.b16 %v10540
  %v10624 = vunpack.c.h.b16 %v10540
  %v10625 = vunpack.c.l.b16 %v10541
  %v10626 = vunpack.c.h.b16 %v10541
  %v10627 = vunpack.c.l.b16 %v10542
  %v10628 = vunpack.c.h.b16 %v10542
  %v10629 = vunpack.c.l.b16 %v10543
  %v10630 = vunpack.c.h.b16 %v10543
  %v10631 = vunpack.c.l.b16 %v10544
  %v10632 = vunpack.c.h.b16 %v10544
  %v10633 = vunpack.c.l.b16 %v10545
  %v10634 = vunpack.c.h.b16 %v10545
  %v10635 = vunpack.c.l.b16 %v10546
  %v10636 = vunpack.c.h.b16 %v10546
  %v10637 = vunpack.c.l.b16 %v10547
  %v10638 = vunpack.c.h.b16 %v10547
  %v10639 = vunpack.c.l.b16 %v10548
  %v10640 = vunpack.c.h.b16 %v10548
  %v10641 = vunpack.c.l.b16 %v10549
  %v10642 = vunpack.c.h.b16 %v10549
  %v10643 = vunpack.c.l.b16 %v10550
  %v10644 = vunpack.c.h.b16 %v10550
  %v10645 = vunpack.c.l.b16 %v10551
  %v10646 = vunpack.c.h.b16 %v10551
  %v10647 = vunpack.c.l.b16 %v10552
  %v10648 = vunpack.c.h.b16 %v10552
  %v10649 = vunpack.c.l.b16 %v10553
  %v10650 = vunpack.c.h.b16 %v10553
  %v10651 = vunpack.c.l.b16 %v10554
  %v10652 = vunpack.c.h.b16 %v10554
  %v10653 = vunpack.c.l.b16 %v10555
  %v10654 = vunpack.c.h.b16 %v10555
  %v10655 = vunpack.c.l.b16 %v10556
  %v10656 = vunpack.c.h.b16 %v10556
  %v10657 = vunpack.c.l.b16 %v10557
  %v10658 = vunpack.c.h.b16 %v10557
  %v10659 = vunpack.c.l.b16 %v10558
  %v10660 = vunpack.c.h.b16 %v10558
  %v10661 = vunpack.c.l.b16 %v10559
  %v10662 = vunpack.c.h.b16 %v10559
  %v10663 = vunpack.c.l.b16 %v10560
  %v10664 = vunpack.c.h.b16 %v10560
  %v10665 = vunpack.c.l.b16 %v10561
  %v10666 = vunpack.c.h.b16 %v10561
  %v10667 = vunpack.c.l.b16 %v10562
  %v10668 = vunpack.c.h.b16 %v10562
  %v10669 = vunpack.c.l.b16 %v10563
  %v10670 = vunpack.c.h.b16 %v10563
  %v10671 = vunpack.c.l.b16 %v10564
  %v10672 = vunpack.c.h.b16 %v10564
  %v10673 = vunpack.c.l.b16 %v10565
  %v10674 = vunpack.c.h.b16 %v10565
  %v10675 = vpack.c.b16 %v10613, %v10611
  %v10676 = vpack.c.b16 %v10614, %v10612
  %v10677 = vpack.c.b16 %v10617, %v10615
  %v10678 = vpack.c.b16 %v10618, %v10616
  %v10679 = vpack.c.b16 %v10621, %v10619
  %v10680 = vpack.c.b16 %v10622, %v10620
  %v10681 = vpack.c.b16 %v10625, %v10623
  %v10682 = vpack.c.b16 %v10626, %v10624
  %v10683 = vpack.c.b16 %v10629, %v10627
  %v10684 = vpack.c.b16 %v10630, %v10628
  %v10685 = vpack.c.b16 %v10633, %v10631
  %v10686 = vpack.c.b16 %v10634, %v10632
  %v10687 = vpack.c.b16 %v10637, %v10635
  %v10688 = vpack.c.b16 %v10638, %v10636
  %v10689 = vpack.c.b16 %v10641, %v10639
  %v10690 = vpack.c.b16 %v10642, %v10640
  %v10691 = vpack.c.b16 %v10645, %v10643
  %v10692 = vpack.c.b16 %v10646, %v10644
  %v10693 = vpack.c.b16 %v10649, %v10647
  %v10694 = vpack.c.b16 %v10650, %v10648
  %v10695 = vpack.c.b16 %v10653, %v10651
  %v10696 = vpack.c.b16 %v10654, %v10652
  %v10697 = vpack.c.b16 %v10657, %v10655
  %v10698 = vpack.c.b16 %v10658, %v10656
  %v10699 = vpack.c.b16 %v10661, %v10659
  %v10700 = vpack.c.b16 %v10662, %v10660
  %v10701 = vpack.c.b16 %v10665, %v10663
  %v10702 = vpack.c.b16 %v10666, %v10664
  %v10703 = vpack.c.b16 %v10669, %v10667
  %v10704 = vpack.c.b16 %v10670, %v10668
  %v10705 = vpack.c.b16 %v10673, %v10671
  %v10706 = vpack.c.b16 %v10674, %v10672
  %10739 = vmatprep.subr.bf16.mxu0 %v10690
  %10740 = vmatpush1.bf16.msra.mxu0 %v10689
  %10741 = vmatprep.subr.bf16.mxu0 %v10688
  %10742 = vmatpush1.bf16.msra.mxu0 %v10687
  %10743 = vmatprep.subr.bf16.mxu0 %v10686
  %10744 = vmatpush1.bf16.msra.mxu0 %v10685
  %10745 = vmatprep.subr.bf16.mxu0 %v10684
  %10746 = vmatpush1.bf16.msra.mxu0 %v10683
  %10747 = vmatprep.subr.bf16.mxu0 %v10682
  %10748 = vmatpush1.bf16.msra.mxu0 %v10681
  %10749 = vmatprep.subr.bf16.mxu0 %v10680
  %10750 = vmatpush1.bf16.msra.mxu0 %v10679
  %10751 = vmatprep.subr.bf16.mxu0 %v10678
  %10752 = vmatpush1.bf16.msra.mxu0 %v10677
  %10753 = vmatprep.subr.bf16.mxu0 %v10676
  %10754 = vmatpush1.bf16.msra.mxu0 %v10675
  %10755 = vmatprep.subr.bf16.mxu0 %v10706
  %10756 = vmatpush2.bf16.msra.mxu0 %v10705
  %10757 = vmatprep.subr.bf16.mxu0 %v10704
  %10758 = vmatpush2.bf16.msra.mxu0 %v10703
  %10759 = vmatprep.subr.bf16.mxu0 %v10702
  %10760 = vmatpush2.bf16.msra.mxu0 %v10701
  %10761 = vmatprep.subr.bf16.mxu0 %v10700
  %10762 = vmatpush2.bf16.msra.mxu0 %v10699
  %10763 = vmatprep.subr.bf16.mxu0 %v10698
  %10764 = vmatpush2.bf16.msra.mxu0 %v10697
  %10765 = vmatprep.subr.bf16.mxu0 %v10696
  %10766 = vmatpush2.bf16.msra.mxu0 %v10695
  %10767 = vmatprep.subr.bf16.mxu0 %v10694
  %10768 = vmatpush2.bf16.msra.mxu0 %v10693
  %10769 = vmatprep.subr.bf16.mxu0 %v10692
  %10770 = vmatpush2.bf16.msra.mxu0 %v10691
  %10771 = vmatprep.mubr.bf16.mxu0 %v10470
  %10772 = vmatmul.mubr.bf16.gmra.mxu0 %v10469
  %v10773 = vpop.f32.mrf.mxu0
  %v10774 = vadd.f32 %v10572, %v10773
  %v10775 = vpop.f32.mrf.mxu0
  %v10776 = vadd.f32 %v10576, %v10775
  %v10777 = vpop.f32.mrf.mxu0
  %v10778 = vadd.f32 %v10572, %v10777
  %v10779 = vpop.f32.mrf.mxu0
  %v10780 = vadd.f32 %v10576, %v10779
  %10781 = vmatprep.mubr.bf16.mxu0 %v10472
  %10782 = vmatmul.mubr.bf16.gmra.mxu0 %v10471
  %v10783 = vpop.f32.mrf.mxu0
  %v10784 = vadd.f32 %v10572, %v10783
  %v10785 = vpop.f32.mrf.mxu0
  %v10786 = vadd.f32 %v10576, %v10785
  %v10787 = vpop.f32.mrf.mxu0
  %v10788 = vadd.f32 %v10572, %v10787
  %v10789 = vpop.f32.mrf.mxu0
  %v10790 = vadd.f32 %v10576, %v10789
  %10791 = vmatprep.mubr.bf16.mxu0 %v10474
  %10792 = vmatmul.mubr.bf16.gmra.mxu0 %v10473
  %v10793 = vpop.f32.mrf.mxu0
  %v10794 = vadd.f32 %v10572, %v10793
  %v10795 = vpop.f32.mrf.mxu0
  %v10796 = vadd.f32 %v10576, %v10795
  %v10797 = vpop.f32.mrf.mxu0
  %v10798 = vadd.f32 %v10572, %v10797
  %v10799 = vpop.f32.mrf.mxu0
  %v10800 = vadd.f32 %v10576, %v10799
  %10801 = vmatprep.mubr.bf16.mxu0 %v10476
  %10802 = vmatmul.mubr.bf16.gmra.mxu0 %v10475
  %v10803 = vpop.f32.mrf.mxu0
  %v10804 = vadd.f32 %v10572, %v10803
  %v10805 = vpop.f32.mrf.mxu0
  %v10806 = vadd.f32 %v10576, %v10805
  %v10807 = vpop.f32.mrf.mxu0
  %v10808 = vadd.f32 %v10572, %v10807
  %v10809 = vpop.f32.mrf.mxu0
  %v10810 = vadd.f32 %v10576, %v10809
  %10811 = vmatprep.mubr.bf16.mxu0 %v10478
  %10812 = vmatmul.mubr.bf16.gmra.mxu0 %v10477
  %v10813 = vpop.f32.mrf.mxu0
  %v10814 = vadd.f32 %v10572, %v10813
  %v10815 = vpop.f32.mrf.mxu0
  %v10816 = vadd.f32 %v10576, %v10815
  %v10817 = vpop.f32.mrf.mxu0
  %v10818 = vadd.f32 %v10572, %v10817
  %v10819 = vpop.f32.mrf.mxu0
  %v10820 = vadd.f32 %v10576, %v10819
  %10821 = vmatprep.mubr.bf16.mxu0 %v10480
  %10822 = vmatmul.mubr.bf16.gmra.mxu0 %v10479
  %v10823 = vpop.f32.mrf.mxu0
  %v10824 = vadd.f32 %v10572, %v10823
  %v10825 = vpop.f32.mrf.mxu0
  %v10826 = vadd.f32 %v10576, %v10825
  %v10827 = vpop.f32.mrf.mxu0
  %v10828 = vadd.f32 %v10572, %v10827
  %v10829 = vpop.f32.mrf.mxu0
  %v10830 = vadd.f32 %v10576, %v10829
  %10831 = vmatprep.mubr.bf16.mxu0 %v10482
  %10832 = vmatmul.mubr.bf16.gmra.mxu0 %v10481
  %v10833 = vpop.f32.mrf.mxu0
  %v10834 = vadd.f32 %v10572, %v10833
  %v10835 = vpop.f32.mrf.mxu0
  %v10836 = vadd.f32 %v10576, %v10835
  %v10837 = vpop.f32.mrf.mxu0
  %v10838 = vadd.f32 %v10572, %v10837
  %v10839 = vpop.f32.mrf.mxu0
  %v10840 = vadd.f32 %v10576, %v10839
  %10841 = vmatprep.mubr.bf16.mxu0 %v10484
  %10842 = vmatmul.mubr.bf16.gmra.mxu0 %v10483
  %v10843 = vpop.f32.mrf.mxu0
  %v10844 = vadd.f32 %v10572, %v10843
  %v10845 = vpop.f32.mrf.mxu0
  %v10846 = vadd.f32 %v10576, %v10845
  %v10847 = vpop.f32.mrf.mxu0
  %v10848 = vadd.f32 %v10572, %v10847
  %v10849 = vpop.f32.mrf.mxu0
  %v10850 = vadd.f32 %v10576, %v10849
  %10851 = vmatprep.mubr.bf16.mxu0 %v10486
  %10852 = vmatmul.mubr.bf16.gmra.mxu0 %v10485
  %v10853 = vpop.f32.mrf.mxu0
  %v10854 = vadd.f32 %v10572, %v10853
  %v10855 = vpop.f32.mrf.mxu0
  %v10856 = vadd.f32 %v10576, %v10855
  %v10857 = vpop.f32.mrf.mxu0
  %v10858 = vadd.f32 %v10572, %v10857
  %v10859 = vpop.f32.mrf.mxu0
  %v10860 = vadd.f32 %v10576, %v10859
  %10861 = vmatprep.mubr.bf16.mxu0 %v10488
  %10862 = vmatmul.mubr.bf16.gmra.mxu0 %v10487
  %v10863 = vpop.f32.mrf.mxu0
  %v10864 = vadd.f32 %v10572, %v10863
  %v10865 = vpop.f32.mrf.mxu0
  %v10866 = vadd.f32 %v10576, %v10865
  %v10867 = vpop.f32.mrf.mxu0
  %v10868 = vadd.f32 %v10572, %v10867
  %v10869 = vpop.f32.mrf.mxu0
  %v10870 = vadd.f32 %v10576, %v10869
  %10871 = vmatprep.mubr.bf16.mxu0 %v10490
  %10872 = vmatmul.mubr.bf16.gmra.mxu0 %v10489
  %v10873 = vpop.f32.mrf.mxu0
  %v10874 = vadd.f32 %v10572, %v10873
  %v10875 = vpop.f32.mrf.mxu0
  %v10876 = vadd.f32 %v10576, %v10875
  %v10877 = vpop.f32.mrf.mxu0
  %v10878 = vadd.f32 %v10572, %v10877
  %v10879 = vpop.f32.mrf.mxu0
  %v10880 = vadd.f32 %v10576, %v10879
  %10881 = vmatprep.mubr.bf16.mxu0 %v10492
  %10882 = vmatmul.mubr.bf16.gmra.mxu0 %v10491
  %v10883 = vpop.f32.mrf.mxu0
  %v10884 = vadd.f32 %v10572, %v10883
  %v10885 = vpop.f32.mrf.mxu0
  %v10886 = vadd.f32 %v10576, %v10885
  %v10887 = vpop.f32.mrf.mxu0
  %v10888 = vadd.f32 %v10572, %v10887
  %v10889 = vpop.f32.mrf.mxu0
  %v10890 = vadd.f32 %v10576, %v10889
  %10891 = vmatprep.mubr.bf16.mxu0 %v10494
  %10892 = vmatmul.mubr.bf16.gmra.mxu0 %v10493
  %v10893 = vpop.f32.mrf.mxu0
  %v10894 = vadd.f32 %v10572, %v10893
  %v10895 = vpop.f32.mrf.mxu0
  %v10896 = vadd.f32 %v10576, %v10895
  %v10897 = vpop.f32.mrf.mxu0
  %v10898 = vadd.f32 %v10572, %v10897
  %v10899 = vpop.f32.mrf.mxu0
  %v10900 = vadd.f32 %v10576, %v10899
  %10901 = vmatprep.mubr.bf16.mxu0 %v10496
  %10902 = vmatmul.mubr.bf16.gmra.mxu0 %v10495
  %v10903 = vpop.f32.mrf.mxu0
  %v10904 = vadd.f32 %v10572, %v10903
  %v10905 = vpop.f32.mrf.mxu0
  %v10906 = vadd.f32 %v10576, %v10905
  %v10907 = vpop.f32.mrf.mxu0
  %v10908 = vadd.f32 %v10572, %v10907
  %v10909 = vpop.f32.mrf.mxu0
  %v10910 = vadd.f32 %v10576, %v10909
  %10911 = vmatprep.mubr.bf16.mxu0 %v10498
  %10912 = vmatmul.mubr.bf16.gmra.mxu0 %v10497
  %v10913 = vpop.f32.mrf.mxu0
  %v10914 = vadd.f32 %v10572, %v10913
  %v10915 = vpop.f32.mrf.mxu0
  %v10916 = vadd.f32 %v10576, %v10915
  %v10917 = vpop.f32.mrf.mxu0
  %v10918 = vadd.f32 %v10572, %v10917
  %v10919 = vpop.f32.mrf.mxu0
  %v10920 = vadd.f32 %v10576, %v10919
  %10921 = vmatprep.mubr.bf16.mxu0 %v10500
  %10922 = vmatmul.mubr.bf16.gmra.mxu0 %v10499
  %v10923 = vpop.f32.mrf.mxu0
  %v10924 = vadd.f32 %v10572, %v10923
  %v10925 = vpop.f32.mrf.mxu0
  %v10926 = vadd.f32 %v10576, %v10925
  %v10927 = vpop.f32.mrf.mxu0
  %v10928 = vadd.f32 %v10572, %v10927
  %v10929 = vpop.f32.mrf.mxu0
  %v10930 = vadd.f32 %v10576, %v10929
  %10931 = vmatprep.mubr.bf16.mxu0 %v10502
  %10932 = vmatmul.mubr.bf16.gmra.mxu0 %v10501
  %v10933 = vpop.f32.mrf.mxu0
  %v10934 = vadd.f32 %v10572, %v10933
  %v10935 = vpop.f32.mrf.mxu0
  %v10936 = vadd.f32 %v10576, %v10935
  %v10937 = vpop.f32.mrf.mxu0
  %v10938 = vadd.f32 %v10572, %v10937
  %v10939 = vpop.f32.mrf.mxu0
  %v10940 = vadd.f32 %v10576, %v10939
  %10941 = vmatprep.mubr.bf16.mxu0 %v10504
  %10942 = vmatmul.mubr.bf16.gmra.mxu0 %v10503
  %v10943 = vpop.f32.mrf.mxu0
  %v10944 = vadd.f32 %v10572, %v10943
  %v10945 = vpop.f32.mrf.mxu0
  %v10946 = vadd.f32 %v10576, %v10945
  %v10947 = vpop.f32.mrf.mxu0
  %v10948 = vadd.f32 %v10572, %v10947
  %v10949 = vpop.f32.mrf.mxu0
  %v10950 = vadd.f32 %v10576, %v10949
  %10951 = vmatprep.mubr.bf16.mxu0 %v10506
  %10952 = vmatmul.mubr.bf16.gmra.mxu0 %v10505
  %v10953 = vpop.f32.mrf.mxu0
  %v10954 = vadd.f32 %v10572, %v10953
  %v10955 = vpop.f32.mrf.mxu0
  %v10956 = vadd.f32 %v10576, %v10955
  %v10957 = vpop.f32.mrf.mxu0
  %v10958 = vadd.f32 %v10572, %v10957
  %v10959 = vpop.f32.mrf.mxu0
  %v10960 = vadd.f32 %v10576, %v10959
  %10961 = vmatprep.mubr.bf16.mxu0 %v10508
  %10962 = vmatmul.mubr.bf16.gmra.mxu0 %v10507
  %v10963 = vpop.f32.mrf.mxu0
  %v10964 = vadd.f32 %v10572, %v10963
  %v10965 = vpop.f32.mrf.mxu0
  %v10966 = vadd.f32 %v10576, %v10965
  %v10967 = vpop.f32.mrf.mxu0
  %v10968 = vadd.f32 %v10572, %v10967
  %v10969 = vpop.f32.mrf.mxu0
  %v10970 = vadd.f32 %v10576, %v10969
  %10971 = vmatprep.mubr.bf16.mxu0 %v10510
  %10972 = vmatmul.mubr.bf16.gmra.mxu0 %v10509
  %v10973 = vpop.f32.mrf.mxu0
  %v10974 = vadd.f32 %v10572, %v10973
  %v10975 = vpop.f32.mrf.mxu0
  %v10976 = vadd.f32 %v10576, %v10975
  %v10977 = vpop.f32.mrf.mxu0
  %v10978 = vadd.f32 %v10572, %v10977
  %v10979 = vpop.f32.mrf.mxu0
  %v10980 = vadd.f32 %v10576, %v10979
  %10981 = vmatprep.mubr.bf16.mxu0 %v10512
  %10982 = vmatmul.mubr.bf16.gmra.mxu0 %v10511
  %v10983 = vpop.f32.mrf.mxu0
  %v10984 = vadd.f32 %v10572, %v10983
  %v10985 = vpop.f32.mrf.mxu0
  %v10986 = vadd.f32 %v10576, %v10985
  %v10987 = vpop.f32.mrf.mxu0
  %v10988 = vadd.f32 %v10572, %v10987
  %v10989 = vpop.f32.mrf.mxu0
  %v10990 = vadd.f32 %v10576, %v10989
  %10991 = vmatprep.mubr.bf16.mxu0 %v10514
  %10992 = vmatmul.mubr.bf16.gmra.mxu0 %v10513
  %v10993 = vpop.f32.mrf.mxu0
  %v10994 = vadd.f32 %v10572, %v10993
  %v10995 = vpop.f32.mrf.mxu0
  %v10996 = vadd.f32 %v10576, %v10995
  %v10997 = vpop.f32.mrf.mxu0
  %v10998 = vadd.f32 %v10572, %v10997
  %v10999 = vpop.f32.mrf.mxu0
  %v11000 = vadd.f32 %v10576, %v10999
  %11001 = vmatprep.mubr.bf16.mxu0 %v10516
  %11002 = vmatmul.mubr.bf16.gmra.mxu0 %v10515
  %v11003 = vpop.f32.mrf.mxu0
  %v11004 = vadd.f32 %v10572, %v11003
  %v11005 = vpop.f32.mrf.mxu0
  %v11006 = vadd.f32 %v10576, %v11005
  %v11007 = vpop.f32.mrf.mxu0
  %v11008 = vadd.f32 %v10572, %v11007
  %v11009 = vpop.f32.mrf.mxu0
  %v11010 = vadd.f32 %v10576, %v11009
  %11011 = vmatprep.mubr.bf16.mxu0 %v10518
  %11012 = vmatmul.mubr.bf16.gmra.mxu0 %v10517
  %v11013 = vpop.f32.mrf.mxu0
  %v11014 = vadd.f32 %v10572, %v11013
  %v11015 = vpop.f32.mrf.mxu0
  %v11016 = vadd.f32 %v10576, %v11015
  %v11017 = vpop.f32.mrf.mxu0
  %v11018 = vadd.f32 %v10572, %v11017
  %v11019 = vpop.f32.mrf.mxu0
  %v11020 = vadd.f32 %v10576, %v11019
  %11021 = vmatprep.mubr.bf16.mxu0 %v10520
  %11022 = vmatmul.mubr.bf16.gmra.mxu0 %v10519
  %v11023 = vpop.f32.mrf.mxu0
  %v11024 = vadd.f32 %v10572, %v11023
  %v11025 = vpop.f32.mrf.mxu0
  %v11026 = vadd.f32 %v10576, %v11025
  %v11027 = vpop.f32.mrf.mxu0
  %v11028 = vadd.f32 %v10572, %v11027
  %v11029 = vpop.f32.mrf.mxu0
  %v11030 = vadd.f32 %v10576, %v11029
  %11031 = vmatprep.mubr.bf16.mxu0 %v10522
  %11032 = vmatmul.mubr.bf16.gmra.mxu0 %v10521
  %v11033 = vpop.f32.mrf.mxu0
  %v11034 = vadd.f32 %v10572, %v11033
  %v11035 = vpop.f32.mrf.mxu0
  %v11036 = vadd.f32 %v10576, %v11035
  %v11037 = vpop.f32.mrf.mxu0
  %v11038 = vadd.f32 %v10572, %v11037
  %v11039 = vpop.f32.mrf.mxu0
  %v11040 = vadd.f32 %v10576, %v11039
  %11041 = vmatprep.mubr.bf16.mxu0 %v10524
  %11042 = vmatmul.mubr.bf16.gmra.mxu0 %v10523
  %v11043 = vpop.f32.mrf.mxu0
  %v11044 = vadd.f32 %v10572, %v11043
  %v11045 = vpop.f32.mrf.mxu0
  %v11046 = vadd.f32 %v10576, %v11045
  %v11047 = vpop.f32.mrf.mxu0
  %v11048 = vadd.f32 %v10572, %v11047
  %v11049 = vpop.f32.mrf.mxu0
  %v11050 = vadd.f32 %v10576, %v11049
  %11051 = vmatprep.mubr.bf16.mxu0 %v10526
  %11052 = vmatmul.mubr.bf16.gmra.mxu0 %v10525
  %v11053 = vpop.f32.mrf.mxu0
  %v11054 = vadd.f32 %v10572, %v11053
  %v11055 = vpop.f32.mrf.mxu0
  %v11056 = vadd.f32 %v10576, %v11055
  %v11057 = vpop.f32.mrf.mxu0
  %v11058 = vadd.f32 %v10572, %v11057
  %v11059 = vpop.f32.mrf.mxu0
  %v11060 = vadd.f32 %v10576, %v11059
  %11061 = vmatprep.mubr.bf16.mxu0 %v10528
  %11062 = vmatmul.mubr.bf16.gmra.mxu0 %v10527
  %v11063 = vpop.f32.mrf.mxu0
  %v11064 = vadd.f32 %v10572, %v11063
  %v11065 = vpop.f32.mrf.mxu0
  %v11066 = vadd.f32 %v10576, %v11065
  %v11067 = vpop.f32.mrf.mxu0
  %v11068 = vadd.f32 %v10572, %v11067
  %v11069 = vpop.f32.mrf.mxu0
  %v11070 = vadd.f32 %v10576, %v11069
  %11071 = vmatprep.mubr.bf16.mxu0 %v10530
  %11072 = vmatmul.mubr.bf16.gmra.mxu0 %v10529
  %v11073 = vpop.f32.mrf.mxu0
  %v11074 = vadd.f32 %v10572, %v11073
  %v11075 = vpop.f32.mrf.mxu0
  %v11076 = vadd.f32 %v10576, %v11075
  %v11077 = vpop.f32.mrf.mxu0
  %v11078 = vadd.f32 %v10572, %v11077
  %v11079 = vpop.f32.mrf.mxu0
  %v11080 = vadd.f32 %v10576, %v11079
  %11081 = vmatprep.mubr.bf16.mxu0 %v10532
  %11082 = vmatmul.mubr.bf16.gmra.mxu0 %v10531
  %v11083 = vpop.f32.mrf.mxu0
  %v11084 = vadd.f32 %v10572, %v11083
  %v11085 = vpop.f32.mrf.mxu0
  %v11086 = vadd.f32 %v10576, %v11085
  %v11087 = vpop.f32.mrf.mxu0
  %v11088 = vadd.f32 %v10572, %v11087
  %v11089 = vpop.f32.mrf.mxu0
  %v11090 = vadd.f32 %v10576, %v11089
  %11091 = vdwg.mxu0
  %vm11092 = vcmp.gt.f32.partialorder %v10774, 0.0
  %vm11093 = vcmp.gt.f32.partialorder %v10776, 0.0
  %vm11094 = vcmp.gt.f32.partialorder %v10778, 0.0
  %vm11095 = vcmp.gt.f32.partialorder %v10780, 0.0
  %vm11096 = vcmp.gt.f32.partialorder %v10784, 0.0
  %vm11097 = vcmp.gt.f32.partialorder %v10786, 0.0
  %vm11098 = vcmp.gt.f32.partialorder %v10788, 0.0
  %vm11099 = vcmp.gt.f32.partialorder %v10790, 0.0
  %vm11100 = vcmp.gt.f32.partialorder %v10794, 0.0
  %vm11101 = vcmp.gt.f32.partialorder %v10796, 0.0
  %vm11102 = vcmp.gt.f32.partialorder %v10798, 0.0
  %vm11103 = vcmp.gt.f32.partialorder %v10800, 0.0
  %vm11104 = vcmp.gt.f32.partialorder %v10804, 0.0
  %vm11105 = vcmp.gt.f32.partialorder %v10806, 0.0
  %vm11106 = vcmp.gt.f32.partialorder %v10808, 0.0
  %vm11107 = vcmp.gt.f32.partialorder %v10810, 0.0
  %vm11108 = vcmp.gt.f32.partialorder %v10814, 0.0
  %vm11109 = vcmp.gt.f32.partialorder %v10816, 0.0
  %vm11110 = vcmp.gt.f32.partialorder %v10818, 0.0
  %vm11111 = vcmp.gt.f32.partialorder %v10820, 0.0
  %vm11112 = vcmp.gt.f32.partialorder %v10824, 0.0
  %vm11113 = vcmp.gt.f32.partialorder %v10826, 0.0
  %vm11114 = vcmp.gt.f32.partialorder %v10828, 0.0
  %vm11115 = vcmp.gt.f32.partialorder %v10830, 0.0
  %vm11116 = vcmp.gt.f32.partialorder %v10834, 0.0
  %vm11117 = vcmp.gt.f32.partialorder %v10836, 0.0
  %vm11118 = vcmp.gt.f32.partialorder %v10838, 0.0
  %vm11119 = vcmp.gt.f32.partialorder %v10840, 0.0
  %vm11120 = vcmp.gt.f32.partialorder %v10844, 0.0
  %vm11121 = vcmp.gt.f32.partialorder %v10846, 0.0
  %vm11122 = vcmp.gt.f32.partialorder %v10848, 0.0
  %vm11123 = vcmp.gt.f32.partialorder %v10850, 0.0
  %vm11124 = vcmp.gt.f32.partialorder %v10854, 0.0
  %vm11125 = vcmp.gt.f32.partialorder %v10856, 0.0
  %vm11126 = vcmp.gt.f32.partialorder %v10858, 0.0
  %vm11127 = vcmp.gt.f32.partialorder %v10860, 0.0
  %vm11128 = vcmp.gt.f32.partialorder %v10864, 0.0
  %vm11129 = vcmp.gt.f32.partialorder %v10866, 0.0
  %vm11130 = vcmp.gt.f32.partialorder %v10868, 0.0
  %vm11131 = vcmp.gt.f32.partialorder %v10870, 0.0
  %vm11132 = vcmp.gt.f32.partialorder %v10874, 0.0
  %vm11133 = vcmp.gt.f32.partialorder %v10876, 0.0
  %vm11134 = vcmp.gt.f32.partialorder %v10878, 0.0
  %vm11135 = vcmp.gt.f32.partialorder %v10880, 0.0
  %vm11136 = vcmp.gt.f32.partialorder %v10884, 0.0
  %vm11137 = vcmp.gt.f32.partialorder %v10886, 0.0
  %vm11138 = vcmp.gt.f32.partialorder %v10888, 0.0
  %vm11139 = vcmp.gt.f32.partialorder %v10890, 0.0
  %vm11140 = vcmp.gt.f32.partialorder %v10894, 0.0
  %vm11141 = vcmp.gt.f32.partialorder %v10896, 0.0
  %vm11142 = vcmp.gt.f32.partialorder %v10898, 0.0
  %vm11143 = vcmp.gt.f32.partialorder %v10900, 0.0
  %vm11144 = vcmp.gt.f32.partialorder %v10904, 0.0
  %vm11145 = vcmp.gt.f32.partialorder %v10906, 0.0
  %vm11146 = vcmp.gt.f32.partialorder %v10908, 0.0
  %vm11147 = vcmp.gt.f32.partialorder %v10910, 0.0
  %vm11148 = vcmp.gt.f32.partialorder %v10914, 0.0
  %vm11149 = vcmp.gt.f32.partialorder %v10916, 0.0
  %vm11150 = vcmp.gt.f32.partialorder %v10918, 0.0
  %vm11151 = vcmp.gt.f32.partialorder %v10920, 0.0
  %vm11152 = vcmp.gt.f32.partialorder %v10924, 0.0
  %vm11153 = vcmp.gt.f32.partialorder %v10926, 0.0
  %vm11154 = vcmp.gt.f32.partialorder %v10928, 0.0
  %vm11155 = vcmp.gt.f32.partialorder %v10930, 0.0
  %vm11156 = vcmp.gt.f32.partialorder %v10934, 0.0
  %vm11157 = vcmp.gt.f32.partialorder %v10936, 0.0
  %vm11158 = vcmp.gt.f32.partialorder %v10938, 0.0
  %vm11159 = vcmp.gt.f32.partialorder %v10940, 0.0
  %vm11160 = vcmp.gt.f32.partialorder %v10944, 0.0
  %vm11161 = vcmp.gt.f32.partialorder %v10946, 0.0
  %vm11162 = vcmp.gt.f32.partialorder %v10948, 0.0
  %vm11163 = vcmp.gt.f32.partialorder %v10950, 0.0
  %vm11164 = vcmp.gt.f32.partialorder %v10954, 0.0
  %vm11165 = vcmp.gt.f32.partialorder %v10956, 0.0
  %vm11166 = vcmp.gt.f32.partialorder %v10958, 0.0
  %vm11167 = vcmp.gt.f32.partialorder %v10960, 0.0
  %vm11168 = vcmp.gt.f32.partialorder %v10964, 0.0
  %vm11169 = vcmp.gt.f32.partialorder %v10966, 0.0
  %vm11170 = vcmp.gt.f32.partialorder %v10968, 0.0
  %vm11171 = vcmp.gt.f32.partialorder %v10970, 0.0
  %vm11172 = vcmp.gt.f32.partialorder %v10974, 0.0
  %vm11173 = vcmp.gt.f32.partialorder %v10976, 0.0
  %vm11174 = vcmp.gt.f32.partialorder %v10978, 0.0
  %vm11175 = vcmp.gt.f32.partialorder %v10980, 0.0
  %vm11176 = vcmp.gt.f32.partialorder %v10984, 0.0
  %vm11177 = vcmp.gt.f32.partialorder %v10986, 0.0
  %vm11178 = vcmp.gt.f32.partialorder %v10988, 0.0
  %vm11179 = vcmp.gt.f32.partialorder %v10990, 0.0
  %vm11180 = vcmp.gt.f32.partialorder %v10994, 0.0
  %vm11181 = vcmp.gt.f32.partialorder %v10996, 0.0
  %vm11182 = vcmp.gt.f32.partialorder %v10998, 0.0
  %vm11183 = vcmp.gt.f32.partialorder %v11000, 0.0
  %vm11184 = vcmp.gt.f32.partialorder %v11004, 0.0
  %vm11185 = vcmp.gt.f32.partialorder %v11006, 0.0
  %vm11186 = vcmp.gt.f32.partialorder %v11008, 0.0
  %vm11187 = vcmp.gt.f32.partialorder %v11010, 0.0
  %vm11188 = vcmp.gt.f32.partialorder %v11014, 0.0
  %vm11189 = vcmp.gt.f32.partialorder %v11016, 0.0
  %vm11190 = vcmp.gt.f32.partialorder %v11018, 0.0
  %vm11191 = vcmp.gt.f32.partialorder %v11020, 0.0
  %vm11192 = vcmp.gt.f32.partialorder %v11024, 0.0
  %vm11193 = vcmp.gt.f32.partialorder %v11026, 0.0
  %vm11194 = vcmp.gt.f32.partialorder %v11028, 0.0
  %vm11195 = vcmp.gt.f32.partialorder %v11030, 0.0
  %vm11196 = vcmp.gt.f32.partialorder %v11034, 0.0
  %vm11197 = vcmp.gt.f32.partialorder %v11036, 0.0
  %vm11198 = vcmp.gt.f32.partialorder %v11038, 0.0
  %vm11199 = vcmp.gt.f32.partialorder %v11040, 0.0
  %vm11200 = vcmp.gt.f32.partialorder %v11044, 0.0
  %vm11201 = vcmp.gt.f32.partialorder %v11046, 0.0
  %vm11202 = vcmp.gt.f32.partialorder %v11048, 0.0
  %vm11203 = vcmp.gt.f32.partialorder %v11050, 0.0
  %vm11204 = vcmp.gt.f32.partialorder %v11054, 0.0
  %vm11205 = vcmp.gt.f32.partialorder %v11056, 0.0
  %vm11206 = vcmp.gt.f32.partialorder %v11058, 0.0
  %vm11207 = vcmp.gt.f32.partialorder %v11060, 0.0
  %vm11208 = vcmp.gt.f32.partialorder %v11064, 0.0
  %vm11209 = vcmp.gt.f32.partialorder %v11066, 0.0
  %vm11210 = vcmp.gt.f32.partialorder %v11068, 0.0
  %vm11211 = vcmp.gt.f32.partialorder %v11070, 0.0
  %vm11212 = vcmp.gt.f32.partialorder %v11074, 0.0
  %vm11213 = vcmp.gt.f32.partialorder %v11076, 0.0
  %vm11214 = vcmp.gt.f32.partialorder %v11078, 0.0
  %vm11215 = vcmp.gt.f32.partialorder %v11080, 0.0
  %vm11216 = vcmp.gt.f32.partialorder %v11084, 0.0
  %vm11217 = vcmp.gt.f32.partialorder %v11086, 0.0
  %vm11218 = vcmp.gt.f32.partialorder %v11088, 0.0
  %vm11219 = vcmp.gt.f32.partialorder %v11090, 0.0
  %v11220 = vmin.f32 %v10774, 0.0
  %v11221 = vmin.f32 %v10776, 0.0
  %v11222 = vmin.f32 %v10778, 0.0
  %v11223 = vmin.f32 %v10780, 0.0
  %v11224 = vmin.f32 %v10784, 0.0
  %v11225 = vmin.f32 %v10786, 0.0
  %v11226 = vmin.f32 %v10788, 0.0
  %v11227 = vmin.f32 %v10790, 0.0
  %v11228 = vmin.f32 %v10794, 0.0
  %v11229 = vmin.f32 %v10796, 0.0
  %v11230 = vmin.f32 %v10798, 0.0
  %v11231 = vmin.f32 %v10800, 0.0
  %v11232 = vmin.f32 %v10804, 0.0
  %v11233 = vmin.f32 %v10806, 0.0
  %v11234 = vmin.f32 %v10808, 0.0
  %v11235 = vmin.f32 %v10810, 0.0
  %v11236 = vmin.f32 %v10814, 0.0
  %v11237 = vmin.f32 %v10816, 0.0
  %v11238 = vmin.f32 %v10818, 0.0
  %v11239 = vmin.f32 %v10820, 0.0
  %v11240 = vmin.f32 %v10824, 0.0
  %v11241 = vmin.f32 %v10826, 0.0
  %v11242 = vmin.f32 %v10828, 0.0
  %v11243 = vmin.f32 %v10830, 0.0
  %v11244 = vmin.f32 %v10834, 0.0
  %v11245 = vmin.f32 %v10836, 0.0
  %v11246 = vmin.f32 %v10838, 0.0
  %v11247 = vmin.f32 %v10840, 0.0
  %v11248 = vmin.f32 %v10844, 0.0
  %v11249 = vmin.f32 %v10846, 0.0
  %v11250 = vmin.f32 %v10848, 0.0
  %v11251 = vmin.f32 %v10850, 0.0
  %v11252 = vmin.f32 %v10854, 0.0
  %v11253 = vmin.f32 %v10856, 0.0
  %v11254 = vmin.f32 %v10858, 0.0
  %v11255 = vmin.f32 %v10860, 0.0
  %v11256 = vmin.f32 %v10864, 0.0
  %v11257 = vmin.f32 %v10866, 0.0
  %v11258 = vmin.f32 %v10868, 0.0
  %v11259 = vmin.f32 %v10870, 0.0
  %v11260 = vmin.f32 %v10874, 0.0
  %v11261 = vmin.f32 %v10876, 0.0
  %v11262 = vmin.f32 %v10878, 0.0
  %v11263 = vmin.f32 %v10880, 0.0
  %v11264 = vmin.f32 %v10884, 0.0
  %v11265 = vmin.f32 %v10886, 0.0
  %v11266 = vmin.f32 %v10888, 0.0
  %v11267 = vmin.f32 %v10890, 0.0
  %v11268 = vmin.f32 %v10894, 0.0
  %v11269 = vmin.f32 %v10896, 0.0
  %v11270 = vmin.f32 %v10898, 0.0
  %v11271 = vmin.f32 %v10900, 0.0
  %v11272 = vmin.f32 %v10904, 0.0
  %v11273 = vmin.f32 %v10906, 0.0
  %v11274 = vmin.f32 %v10908, 0.0
  %v11275 = vmin.f32 %v10910, 0.0
  %v11276 = vmin.f32 %v10914, 0.0
  %v11277 = vmin.f32 %v10916, 0.0
  %v11278 = vmin.f32 %v10918, 0.0
  %v11279 = vmin.f32 %v10920, 0.0
  %v11280 = vmin.f32 %v10924, 0.0
  %v11281 = vmin.f32 %v10926, 0.0
  %v11282 = vmin.f32 %v10928, 0.0
  %v11283 = vmin.f32 %v10930, 0.0
  %v11284 = vmin.f32 %v10934, 0.0
  %v11285 = vmin.f32 %v10936, 0.0
  %v11286 = vmin.f32 %v10938, 0.0
  %v11287 = vmin.f32 %v10940, 0.0
  %v11288 = vmin.f32 %v10944, 0.0
  %v11289 = vmin.f32 %v10946, 0.0
  %v11290 = vmin.f32 %v10948, 0.0
  %v11291 = vmin.f32 %v10950, 0.0
  %v11292 = vmin.f32 %v10954, 0.0
  %v11293 = vmin.f32 %v10956, 0.0
  %v11294 = vmin.f32 %v10958, 0.0
  %v11295 = vmin.f32 %v10960, 0.0
  %v11296 = vmin.f32 %v10964, 0.0
  %v11297 = vmin.f32 %v10966, 0.0
  %v11298 = vmin.f32 %v10968, 0.0
  %v11299 = vmin.f32 %v10970, 0.0
  %v11300 = vmin.f32 %v10974, 0.0
  %v11301 = vmin.f32 %v10976, 0.0
  %v11302 = vmin.f32 %v10978, 0.0
  %v11303 = vmin.f32 %v10980, 0.0
  %v11304 = vmin.f32 %v10984, 0.0
  %v11305 = vmin.f32 %v10986, 0.0
  %v11306 = vmin.f32 %v10988, 0.0
  %v11307 = vmin.f32 %v10990, 0.0
  %v11308 = vmin.f32 %v10994, 0.0
  %v11309 = vmin.f32 %v10996, 0.0
  %v11310 = vmin.f32 %v10998, 0.0
  %v11311 = vmin.f32 %v11000, 0.0
  %v11312 = vmin.f32 %v11004, 0.0
  %v11313 = vmin.f32 %v11006, 0.0
  %v11314 = vmin.f32 %v11008, 0.0
  %v11315 = vmin.f32 %v11010, 0.0
  %v11316 = vmin.f32 %v11014, 0.0
  %v11317 = vmin.f32 %v11016, 0.0
  %v11318 = vmin.f32 %v11018, 0.0
  %v11319 = vmin.f32 %v11020, 0.0
  %v11320 = vmin.f32 %v11024, 0.0
  %v11321 = vmin.f32 %v11026, 0.0
  %v11322 = vmin.f32 %v11028, 0.0
  %v11323 = vmin.f32 %v11030, 0.0
  %v11324 = vmin.f32 %v11034, 0.0
  %v11325 = vmin.f32 %v11036, 0.0
  %v11326 = vmin.f32 %v11038, 0.0
  %v11327 = vmin.f32 %v11040, 0.0
  %v11328 = vmin.f32 %v11044, 0.0
  %v11329 = vmin.f32 %v11046, 0.0
  %v11330 = vmin.f32 %v11048, 0.0
  %v11331 = vmin.f32 %v11050, 0.0
  %v11332 = vmin.f32 %v11054, 0.0
  %v11333 = vmin.f32 %v11056, 0.0
  %v11334 = vmin.f32 %v11058, 0.0
  %v11335 = vmin.f32 %v11060, 0.0
  %v11336 = vmin.f32 %v11064, 0.0
  %v11337 = vmin.f32 %v11066, 0.0
  %v11338 = vmin.f32 %v11068, 0.0
  %v11339 = vmin.f32 %v11070, 0.0
  %v11340 = vmin.f32 %v11074, 0.0
  %v11341 = vmin.f32 %v11076, 0.0
  %v11342 = vmin.f32 %v11078, 0.0
  %v11343 = vmin.f32 %v11080, 0.0
  %v11344 = vmin.f32 %v11084, 0.0
  %v11345 = vmin.f32 %v11086, 0.0
  %v11346 = vmin.f32 %v11088, 0.0
  %v11347 = vmin.f32 %v11090, 0.0
  %v11348 = vmul.f32 %v11220, 1.442695
  %v11349 = vpow.pop %v11348
  %v11350 = vmul.f32 %v11221, 1.442695
  %v11351 = vpow.pop %v11350
  %v11352 = vmul.f32 %v11222, 1.442695
  %v11353 = vpow.pop %v11352
  %v11354 = vmul.f32 %v11223, 1.442695
  %v11355 = vpow.pop %v11354
  %v11356 = vmul.f32 %v11224, 1.442695
  %v11357 = vpow.pop %v11356
  %v11358 = vmul.f32 %v11225, 1.442695
  %v11359 = vpow.pop %v11358
  %v11360 = vmul.f32 %v11226, 1.442695
  %v11361 = vpow.pop %v11360
  %v11362 = vmul.f32 %v11227, 1.442695
  %v11363 = vpow.pop %v11362
  %v11364 = vmul.f32 %v11228, 1.442695
  %v11365 = vpow.pop %v11364
  %v11366 = vmul.f32 %v11229, 1.442695
  %v11367 = vpow.pop %v11366
  %v11368 = vmul.f32 %v11230, 1.442695
  %v11369 = vpow.pop %v11368
  %v11370 = vmul.f32 %v11231, 1.442695
  %v11371 = vpow.pop %v11370
  %v11372 = vmul.f32 %v11232, 1.442695
  %v11373 = vpow.pop %v11372
  %v11374 = vmul.f32 %v11233, 1.442695
  %v11375 = vpow.pop %v11374
  %v11376 = vmul.f32 %v11234, 1.442695
  %v11377 = vpow.pop %v11376
  %v11378 = vmul.f32 %v11235, 1.442695
  %v11379 = vpow.pop %v11378
  %v11380 = vmul.f32 %v11236, 1.442695
  %v11381 = vpow.pop %v11380
  %v11382 = vmul.f32 %v11237, 1.442695
  %v11383 = vpow.pop %v11382
  %v11384 = vmul.f32 %v11238, 1.442695
  %v11385 = vpow.pop %v11384
  %v11386 = vmul.f32 %v11239, 1.442695
  %v11387 = vpow.pop %v11386
  %v11388 = vmul.f32 %v11240, 1.442695
  %v11389 = vpow.pop %v11388
  %v11390 = vmul.f32 %v11241, 1.442695
  %v11391 = vpow.pop %v11390
  %v11392 = vmul.f32 %v11242, 1.442695
  %v11393 = vpow.pop %v11392
  %v11394 = vmul.f32 %v11243, 1.442695
  %v11395 = vpow.pop %v11394
  %v11396 = vmul.f32 %v11244, 1.442695
  %v11397 = vpow.pop %v11396
  %v11398 = vmul.f32 %v11245, 1.442695
  %v11399 = vpow.pop %v11398
  %v11400 = vmul.f32 %v11246, 1.442695
  %v11401 = vpow.pop %v11400
  %v11402 = vmul.f32 %v11247, 1.442695
  %v11403 = vpow.pop %v11402
  %v11404 = vmul.f32 %v11248, 1.442695
  %v11405 = vpow.pop %v11404
  %v11406 = vmul.f32 %v11249, 1.442695
  %v11407 = vpow.pop %v11406
  %v11408 = vmul.f32 %v11250, 1.442695
  %v11409 = vpow.pop %v11408
  %v11410 = vmul.f32 %v11251, 1.442695
  %v11411 = vpow.pop %v11410
  %v11412 = vmul.f32 %v11252, 1.442695
  %v11413 = vpow.pop %v11412
  %v11414 = vmul.f32 %v11253, 1.442695
  %v11415 = vpow.pop %v11414
  %v11416 = vmul.f32 %v11254, 1.442695
  %v11417 = vpow.pop %v11416
  %v11418 = vmul.f32 %v11255, 1.442695
  %v11419 = vpow.pop %v11418
  %v11420 = vmul.f32 %v11256, 1.442695
  %v11421 = vpow.pop %v11420
  %v11422 = vmul.f32 %v11257, 1.442695
  %v11423 = vpow.pop %v11422
  %v11424 = vmul.f32 %v11258, 1.442695
  %v11425 = vpow.pop %v11424
  %v11426 = vmul.f32 %v11259, 1.442695
  %v11427 = vpow.pop %v11426
  %v11428 = vmul.f32 %v11260, 1.442695
  %v11429 = vpow.pop %v11428
  %v11430 = vmul.f32 %v11261, 1.442695
  %v11431 = vpow.pop %v11430
  %v11432 = vmul.f32 %v11262, 1.442695
  %v11433 = vpow.pop %v11432
  %v11434 = vmul.f32 %v11263, 1.442695
  %v11435 = vpow.pop %v11434
  %v11436 = vmul.f32 %v11264, 1.442695
  %v11437 = vpow.pop %v11436
  %v11438 = vmul.f32 %v11265, 1.442695
  %v11439 = vpow.pop %v11438
  %v11440 = vmul.f32 %v11266, 1.442695
  %v11441 = vpow.pop %v11440
  %v11442 = vmul.f32 %v11267, 1.442695
  %v11443 = vpow.pop %v11442
  %v11444 = vmul.f32 %v11268, 1.442695
  %v11445 = vpow.pop %v11444
  %v11446 = vmul.f32 %v11269, 1.442695
  %v11447 = vpow.pop %v11446
  %v11448 = vmul.f32 %v11270, 1.442695
  %v11449 = vpow.pop %v11448
  %v11450 = vmul.f32 %v11271, 1.442695
  %v11451 = vpow.pop %v11450
  %v11452 = vmul.f32 %v11272, 1.442695
  %v11453 = vpow.pop %v11452
  %v11454 = vmul.f32 %v11273, 1.442695
  %v11455 = vpow.pop %v11454
  %v11456 = vmul.f32 %v11274, 1.442695
  %v11457 = vpow.pop %v11456
  %v11458 = vmul.f32 %v11275, 1.442695
  %v11459 = vpow.pop %v11458
  %v11460 = vmul.f32 %v11276, 1.442695
  %v11461 = vpow.pop %v11460
  %v11462 = vmul.f32 %v11277, 1.442695
  %v11463 = vpow.pop %v11462
  %v11464 = vmul.f32 %v11278, 1.442695
  %v11465 = vpow.pop %v11464
  %v11466 = vmul.f32 %v11279, 1.442695
  %v11467 = vpow.pop %v11466
  %v11468 = vmul.f32 %v11280, 1.442695
  %v11469 = vpow.pop %v11468
  %v11470 = vmul.f32 %v11281, 1.442695
  %v11471 = vpow.pop %v11470
  %v11472 = vmul.f32 %v11282, 1.442695
  %v11473 = vpow.pop %v11472
  %v11474 = vmul.f32 %v11283, 1.442695
  %v11475 = vpow.pop %v11474
  %v11476 = vmul.f32 %v11284, 1.442695
  %v11477 = vpow.pop %v11476
  %v11478 = vmul.f32 %v11285, 1.442695
  %v11479 = vpow.pop %v11478
  %v11480 = vmul.f32 %v11286, 1.442695
  %v11481 = vpow.pop %v11480
  %v11482 = vmul.f32 %v11287, 1.442695
  %v11483 = vpow.pop %v11482
  %v11484 = vmul.f32 %v11288, 1.442695
  %v11485 = vpow.pop %v11484
  %v11486 = vmul.f32 %v11289, 1.442695
  %v11487 = vpow.pop %v11486
  %v11488 = vmul.f32 %v11290, 1.442695
  %v11489 = vpow.pop %v11488
  %v11490 = vmul.f32 %v11291, 1.442695
  %v11491 = vpow.pop %v11490
  %v11492 = vmul.f32 %v11292, 1.442695
  %v11493 = vpow.pop %v11492
  %v11494 = vmul.f32 %v11293, 1.442695
  %v11495 = vpow.pop %v11494
  %v11496 = vmul.f32 %v11294, 1.442695
  %v11497 = vpow.pop %v11496
  %v11498 = vmul.f32 %v11295, 1.442695
  %v11499 = vpow.pop %v11498
  %v11500 = vmul.f32 %v11296, 1.442695
  %v11501 = vpow.pop %v11500
  %v11502 = vmul.f32 %v11297, 1.442695
  %v11503 = vpow.pop %v11502
  %v11504 = vmul.f32 %v11298, 1.442695
  %v11505 = vpow.pop %v11504
  %v11506 = vmul.f32 %v11299, 1.442695
  %v11507 = vpow.pop %v11506
  %v11508 = vmul.f32 %v11300, 1.442695
  %v11509 = vpow.pop %v11508
  %v11510 = vmul.f32 %v11301, 1.442695
  %v11511 = vpow.pop %v11510
  %v11512 = vmul.f32 %v11302, 1.442695
  %v11513 = vpow.pop %v11512
  %v11514 = vmul.f32 %v11303, 1.442695
  %v11515 = vpow.pop %v11514
  %v11516 = vmul.f32 %v11304, 1.442695
  %v11517 = vpow.pop %v11516
  %v11518 = vmul.f32 %v11305, 1.442695
  %v11519 = vpow.pop %v11518
  %v11520 = vmul.f32 %v11306, 1.442695
  %v11521 = vpow.pop %v11520
  %v11522 = vmul.f32 %v11307, 1.442695
  %v11523 = vpow.pop %v11522
  %v11524 = vmul.f32 %v11308, 1.442695
  %v11525 = vpow.pop %v11524
  %v11526 = vmul.f32 %v11309, 1.442695
  %v11527 = vpow.pop %v11526
  %v11528 = vmul.f32 %v11310, 1.442695
  %v11529 = vpow.pop %v11528
  %v11530 = vmul.f32 %v11311, 1.442695
  %v11531 = vpow.pop %v11530
  %v11532 = vmul.f32 %v11312, 1.442695
  %v11533 = vpow.pop %v11532
  %v11534 = vmul.f32 %v11313, 1.442695
  %v11535 = vpow.pop %v11534
  %v11536 = vmul.f32 %v11314, 1.442695
  %v11537 = vpow.pop %v11536
  %v11538 = vmul.f32 %v11315, 1.442695
  %v11539 = vpow.pop %v11538
  %v11540 = vmul.f32 %v11316, 1.442695
  %v11541 = vpow.pop %v11540
  %v11542 = vmul.f32 %v11317, 1.442695
  %v11543 = vpow.pop %v11542
  %v11544 = vmul.f32 %v11318, 1.442695
  %v11545 = vpow.pop %v11544
  %v11546 = vmul.f32 %v11319, 1.442695
  %v11547 = vpow.pop %v11546
  %v11548 = vmul.f32 %v11320, 1.442695
  %v11549 = vpow.pop %v11548
  %v11550 = vmul.f32 %v11321, 1.442695
  %v11551 = vpow.pop %v11550
  %v11552 = vmul.f32 %v11322, 1.442695
  %v11553 = vpow.pop %v11552
  %v11554 = vmul.f32 %v11323, 1.442695
  %v11555 = vpow.pop %v11554
  %v11556 = vmul.f32 %v11324, 1.442695
  %v11557 = vpow.pop %v11556
  %v11558 = vmul.f32 %v11325, 1.442695
  %v11559 = vpow.pop %v11558
  %v11560 = vmul.f32 %v11326, 1.442695
  %v11561 = vpow.pop %v11560
  %v11562 = vmul.f32 %v11327, 1.442695
  %v11563 = vpow.pop %v11562
  %v11564 = vmul.f32 %v11328, 1.442695
  %v11565 = vpow.pop %v11564
  %v11566 = vmul.f32 %v11329, 1.442695
  %v11567 = vpow.pop %v11566
  %v11568 = vmul.f32 %v11330, 1.442695
  %v11569 = vpow.pop %v11568
  %v11570 = vmul.f32 %v11331, 1.442695
  %v11571 = vpow.pop %v11570
  %v11572 = vmul.f32 %v11332, 1.442695
  %v11573 = vpow.pop %v11572
  %v11574 = vmul.f32 %v11333, 1.442695
  %v11575 = vpow.pop %v11574
  %v11576 = vmul.f32 %v11334, 1.442695
  %v11577 = vpow.pop %v11576
  %v11578 = vmul.f32 %v11335, 1.442695
  %v11579 = vpow.pop %v11578
  %v11580 = vmul.f32 %v11336, 1.442695
  %v11581 = vpow.pop %v11580
  %v11582 = vmul.f32 %v11337, 1.442695
  %v11583 = vpow.pop %v11582
  %v11584 = vmul.f32 %v11338, 1.442695
  %v11585 = vpow.pop %v11584
  %v11586 = vmul.f32 %v11339, 1.442695
  %v11587 = vpow.pop %v11586
  %v11588 = vmul.f32 %v11340, 1.442695
  %v11589 = vpow.pop %v11588
  %v11590 = vmul.f32 %v11341, 1.442695
  %v11591 = vpow.pop %v11590
  %v11592 = vmul.f32 %v11342, 1.442695
  %v11593 = vpow.pop %v11592
  %v11594 = vmul.f32 %v11343, 1.442695
  %v11595 = vpow.pop %v11594
  %v11596 = vmul.f32 %v11344, 1.442695
  %v11597 = vpow.pop %v11596
  %v11598 = vmul.f32 %v11345, 1.442695
  %v11599 = vpow.pop %v11598
  %v11600 = vmul.f32 %v11346, 1.442695
  %v11601 = vpow.pop %v11600
  %v11602 = vmul.f32 %v11347, 1.442695
  %v11603 = vpow.pop %v11602
  %v11604 = vsub.f32 %v11349, 1.0
  %v11605 = vsub.f32 %v11351, 1.0
  %v11606 = vsub.f32 %v11353, 1.0
  %v11607 = vsub.f32 %v11355, 1.0
  %v11608 = vsub.f32 %v11357, 1.0
  %v11609 = vsub.f32 %v11359, 1.0
  %v11610 = vsub.f32 %v11361, 1.0
  %v11611 = vsub.f32 %v11363, 1.0
  %v11612 = vsub.f32 %v11365, 1.0
  %v11613 = vsub.f32 %v11367, 1.0
  %v11614 = vsub.f32 %v11369, 1.0
  %v11615 = vsub.f32 %v11371, 1.0
  %v11616 = vsub.f32 %v11373, 1.0
  %v11617 = vsub.f32 %v11375, 1.0
  %v11618 = vsub.f32 %v11377, 1.0
  %v11619 = vsub.f32 %v11379, 1.0
  %v11620 = vsub.f32 %v11381, 1.0
  %v11621 = vsub.f32 %v11383, 1.0
  %v11622 = vsub.f32 %v11385, 1.0
  %v11623 = vsub.f32 %v11387, 1.0
  %v11624 = vsub.f32 %v11389, 1.0
  %v11625 = vsub.f32 %v11391, 1.0
  %v11626 = vsub.f32 %v11393, 1.0
  %v11627 = vsub.f32 %v11395, 1.0
  %v11628 = vsub.f32 %v11397, 1.0
  %v11629 = vsub.f32 %v11399, 1.0
  %v11630 = vsub.f32 %v11401, 1.0
  %v11631 = vsub.f32 %v11403, 1.0
  %v11632 = vsub.f32 %v11405, 1.0
  %v11633 = vsub.f32 %v11407, 1.0
  %v11634 = vsub.f32 %v11409, 1.0
  %v11635 = vsub.f32 %v11411, 1.0
  %v11636 = vsub.f32 %v11413, 1.0
  %v11637 = vsub.f32 %v11415, 1.0
  %v11638 = vsub.f32 %v11417, 1.0
  %v11639 = vsub.f32 %v11419, 1.0
  %v11640 = vsub.f32 %v11421, 1.0
  %v11641 = vsub.f32 %v11423, 1.0
  %v11642 = vsub.f32 %v11425, 1.0
  %v11643 = vsub.f32 %v11427, 1.0
  %v11644 = vsub.f32 %v11429, 1.0
  %v11645 = vsub.f32 %v11431, 1.0
  %v11646 = vsub.f32 %v11433, 1.0
  %v11647 = vsub.f32 %v11435, 1.0
  %v11648 = vsub.f32 %v11437, 1.0
  %v11649 = vsub.f32 %v11439, 1.0
  %v11650 = vsub.f32 %v11441, 1.0
  %v11651 = vsub.f32 %v11443, 1.0
  %v11652 = vsub.f32 %v11445, 1.0
  %v11653 = vsub.f32 %v11447, 1.0
  %v11654 = vsub.f32 %v11449, 1.0
  %v11655 = vsub.f32 %v11451, 1.0
  %v11656 = vsub.f32 %v11453, 1.0
  %v11657 = vsub.f32 %v11455, 1.0
  %v11658 = vsub.f32 %v11457, 1.0
  %v11659 = vsub.f32 %v11459, 1.0
  %v11660 = vsub.f32 %v11461, 1.0
  %v11661 = vsub.f32 %v11463, 1.0
  %v11662 = vsub.f32 %v11465, 1.0
  %v11663 = vsub.f32 %v11467, 1.0
  %v11664 = vsub.f32 %v11469, 1.0
  %v11665 = vsub.f32 %v11471, 1.0
  %v11666 = vsub.f32 %v11473, 1.0
  %v11667 = vsub.f32 %v11475, 1.0
  %v11668 = vsub.f32 %v11477, 1.0
  %v11669 = vsub.f32 %v11479, 1.0
  %v11670 = vsub.f32 %v11481, 1.0
  %v11671 = vsub.f32 %v11483, 1.0
  %v11672 = vsub.f32 %v11485, 1.0
  %v11673 = vsub.f32 %v11487, 1.0
  %v11674 = vsub.f32 %v11489, 1.0
  %v11675 = vsub.f32 %v11491, 1.0
  %v11676 = vsub.f32 %v11493, 1.0
  %v11677 = vsub.f32 %v11495, 1.0
  %v11678 = vsub.f32 %v11497, 1.0
  %v11679 = vsub.f32 %v11499, 1.0
  %v11680 = vsub.f32 %v11501, 1.0
  %v11681 = vsub.f32 %v11503, 1.0
  %v11682 = vsub.f32 %v11505, 1.0
  %v11683 = vsub.f32 %v11507, 1.0
  %v11684 = vsub.f32 %v11509, 1.0
  %v11685 = vsub.f32 %v11511, 1.0
  %v11686 = vsub.f32 %v11513, 1.0
  %v11687 = vsub.f32 %v11515, 1.0
  %v11688 = vsub.f32 %v11517, 1.0
  %v11689 = vsub.f32 %v11519, 1.0
  %v11690 = vsub.f32 %v11521, 1.0
  %v11691 = vsub.f32 %v11523, 1.0
  %v11692 = vsub.f32 %v11525, 1.0
  %v11693 = vsub.f32 %v11527, 1.0
  %v11694 = vsub.f32 %v11529, 1.0
  %v11695 = vsub.f32 %v11531, 1.0
  %v11696 = vsub.f32 %v11533, 1.0
  %v11697 = vsub.f32 %v11535, 1.0
  %v11698 = vsub.f32 %v11537, 1.0
  %v11699 = vsub.f32 %v11539, 1.0
  %v11700 = vsub.f32 %v11541, 1.0
  %v11701 = vsub.f32 %v11543, 1.0
  %v11702 = vsub.f32 %v11545, 1.0
  %v11703 = vsub.f32 %v11547, 1.0
  %v11704 = vsub.f32 %v11549, 1.0
  %v11705 = vsub.f32 %v11551, 1.0
  %v11706 = vsub.f32 %v11553, 1.0
  %v11707 = vsub.f32 %v11555, 1.0
  %v11708 = vsub.f32 %v11557, 1.0
  %v11709 = vsub.f32 %v11559, 1.0
  %v11710 = vsub.f32 %v11561, 1.0
  %v11711 = vsub.f32 %v11563, 1.0
  %v11712 = vsub.f32 %v11565, 1.0
  %v11713 = vsub.f32 %v11567, 1.0
  %v11714 = vsub.f32 %v11569, 1.0
  %v11715 = vsub.f32 %v11571, 1.0
  %v11716 = vsub.f32 %v11573, 1.0
  %v11717 = vsub.f32 %v11575, 1.0
  %v11718 = vsub.f32 %v11577, 1.0
  %v11719 = vsub.f32 %v11579, 1.0
  %v11720 = vsub.f32 %v11581, 1.0
  %v11721 = vsub.f32 %v11583, 1.0
  %v11722 = vsub.f32 %v11585, 1.0
  %v11723 = vsub.f32 %v11587, 1.0
  %v11724 = vsub.f32 %v11589, 1.0
  %v11725 = vsub.f32 %v11591, 1.0
  %v11726 = vsub.f32 %v11593, 1.0
  %v11727 = vsub.f32 %v11595, 1.0
  %v11728 = vsub.f32 %v11597, 1.0
  %v11729 = vsub.f32 %v11599, 1.0
  %v11730 = vsub.f32 %v11601, 1.0
  %v11731 = vsub.f32 %v11603, 1.0
  %v11732 = vsel %vm11092, %v10774, %v11604
  %v11733 = vsel %vm11093, %v10776, %v11605
  %v11734 = vsel %vm11094, %v10778, %v11606
  %v11735 = vsel %vm11095, %v10780, %v11607
  %v11736 = vsel %vm11096, %v10784, %v11608
  %v11737 = vsel %vm11097, %v10786, %v11609
  %v11738 = vsel %vm11098, %v10788, %v11610
  %v11739 = vsel %vm11099, %v10790, %v11611
  %v11740 = vsel %vm11100, %v10794, %v11612
  %v11741 = vsel %vm11101, %v10796, %v11613
  %v11742 = vsel %vm11102, %v10798, %v11614
  %v11743 = vsel %vm11103, %v10800, %v11615
  %v11744 = vsel %vm11104, %v10804, %v11616
  %v11745 = vsel %vm11105, %v10806, %v11617
  %v11746 = vsel %vm11106, %v10808, %v11618
  %v11747 = vsel %vm11107, %v10810, %v11619
  %v11748 = vsel %vm11108, %v10814, %v11620
  %v11749 = vsel %vm11109, %v10816, %v11621
  %v11750 = vsel %vm11110, %v10818, %v11622
  %v11751 = vsel %vm11111, %v10820, %v11623
  %v11752 = vsel %vm11112, %v10824, %v11624
  %v11753 = vsel %vm11113, %v10826, %v11625
  %v11754 = vsel %vm11114, %v10828, %v11626
  %v11755 = vsel %vm11115, %v10830, %v11627
  %v11756 = vsel %vm11116, %v10834, %v11628
  %v11757 = vsel %vm11117, %v10836, %v11629
  %v11758 = vsel %vm11118, %v10838, %v11630
  %v11759 = vsel %vm11119, %v10840, %v11631
  %v11760 = vsel %vm11120, %v10844, %v11632
  %v11761 = vsel %vm11121, %v10846, %v11633
  %v11762 = vsel %vm11122, %v10848, %v11634
  %v11763 = vsel %vm11123, %v10850, %v11635
  %v11764 = vsel %vm11124, %v10854, %v11636
  %v11765 = vsel %vm11125, %v10856, %v11637
  %v11766 = vsel %vm11126, %v10858, %v11638
  %v11767 = vsel %vm11127, %v10860, %v11639
  %v11768 = vsel %vm11128, %v10864, %v11640
  %v11769 = vsel %vm11129, %v10866, %v11641
  %v11770 = vsel %vm11130, %v10868, %v11642
  %v11771 = vsel %vm11131, %v10870, %v11643
  %v11772 = vsel %vm11132, %v10874, %v11644
  %v11773 = vsel %vm11133, %v10876, %v11645
  %v11774 = vsel %vm11134, %v10878, %v11646
  %v11775 = vsel %vm11135, %v10880, %v11647
  %v11776 = vsel %vm11136, %v10884, %v11648
  %v11777 = vsel %vm11137, %v10886, %v11649
  %v11778 = vsel %vm11138, %v10888, %v11650
  %v11779 = vsel %vm11139, %v10890, %v11651
  %v11780 = vsel %vm11140, %v10894, %v11652
  %v11781 = vsel %vm11141, %v10896, %v11653
  %v11782 = vsel %vm11142, %v10898, %v11654
  %v11783 = vsel %vm11143, %v10900, %v11655
  %v11784 = vsel %vm11144, %v10904, %v11656
  %v11785 = vsel %vm11145, %v10906, %v11657
  %v11786 = vsel %vm11146, %v10908, %v11658
  %v11787 = vsel %vm11147, %v10910, %v11659
  %v11788 = vsel %vm11148, %v10914, %v11660
  %v11789 = vsel %vm11149, %v10916, %v11661
  %v11790 = vsel %vm11150, %v10918, %v11662
  %v11791 = vsel %vm11151, %v10920, %v11663
  %v11792 = vsel %vm11152, %v10924, %v11664
  %v11793 = vsel %vm11153, %v10926, %v11665
  %v11794 = vsel %vm11154, %v10928, %v11666
  %v11795 = vsel %vm11155, %v10930, %v11667
  %v11796 = vsel %vm11156, %v10934, %v11668
  %v11797 = vsel %vm11157, %v10936, %v11669
  %v11798 = vsel %vm11158, %v10938, %v11670
  %v11799 = vsel %vm11159, %v10940, %v11671
  %v11800 = vsel %vm11160, %v10944, %v11672
  %v11801 = vsel %vm11161, %v10946, %v11673
  %v11802 = vsel %vm11162, %v10948, %v11674
  %v11803 = vsel %vm11163, %v10950, %v11675
  %v11804 = vsel %vm11164, %v10954, %v11676
  %v11805 = vsel %vm11165, %v10956, %v11677
  %v11806 = vsel %vm11166, %v10958, %v11678
  %v11807 = vsel %vm11167, %v10960, %v11679
  %v11808 = vsel %vm11168, %v10964, %v11680
  %v11809 = vsel %vm11169, %v10966, %v11681
  %v11810 = vsel %vm11170, %v10968, %v11682
  %v11811 = vsel %vm11171, %v10970, %v11683
  %v11812 = vsel %vm11172, %v10974, %v11684
  %v11813 = vsel %vm11173, %v10976, %v11685
  %v11814 = vsel %vm11174, %v10978, %v11686
  %v11815 = vsel %vm11175, %v10980, %v11687
  %v11816 = vsel %vm11176, %v10984, %v11688
  %v11817 = vsel %vm11177, %v10986, %v11689
  %v11818 = vsel %vm11178, %v10988, %v11690
  %v11819 = vsel %vm11179, %v10990, %v11691
  %v11820 = vsel %vm11180, %v10994, %v11692
  %v11821 = vsel %vm11181, %v10996, %v11693
  %v11822 = vsel %vm11182, %v10998, %v11694
  %v11823 = vsel %vm11183, %v11000, %v11695
  %v11824 = vsel %vm11184, %v11004, %v11696
  %v11825 = vsel %vm11185, %v11006, %v11697
  %v11826 = vsel %vm11186, %v11008, %v11698
  %v11827 = vsel %vm11187, %v11010, %v11699
  %v11828 = vsel %vm11188, %v11014, %v11700
  %v11829 = vsel %vm11189, %v11016, %v11701
  %v11830 = vsel %vm11190, %v11018, %v11702
  %v11831 = vsel %vm11191, %v11020, %v11703
  %v11832 = vsel %vm11192, %v11024, %v11704
  %v11833 = vsel %vm11193, %v11026, %v11705
  %v11834 = vsel %vm11194, %v11028, %v11706
  %v11835 = vsel %vm11195, %v11030, %v11707
  %v11836 = vsel %vm11196, %v11034, %v11708
  %v11837 = vsel %vm11197, %v11036, %v11709
  %v11838 = vsel %vm11198, %v11038, %v11710
  %v11839 = vsel %vm11199, %v11040, %v11711
  %v11840 = vsel %vm11200, %v11044, %v11712
  %v11841 = vsel %vm11201, %v11046, %v11713
  %v11842 = vsel %vm11202, %v11048, %v11714
  %v11843 = vsel %vm11203, %v11050, %v11715
  %v11844 = vsel %vm11204, %v11054, %v11716
  %v11845 = vsel %vm11205, %v11056, %v11717
  %v11846 = vsel %vm11206, %v11058, %v11718
  %v11847 = vsel %vm11207, %v11060, %v11719
  %v11848 = vsel %vm11208, %v11064, %v11720
  %v11849 = vsel %vm11209, %v11066, %v11721
  %v11850 = vsel %vm11210, %v11068, %v11722
  %v11851 = vsel %vm11211, %v11070, %v11723
  %v11852 = vsel %vm11212, %v11074, %v11724
  %v11853 = vsel %vm11213, %v11076, %v11725
  %v11854 = vsel %vm11214, %v11078, %v11726
  %v11855 = vsel %vm11215, %v11080, %v11727
  %v11856 = vsel %vm11216, %v11084, %v11728
  %v11857 = vsel %vm11217, %v11086, %v11729
  %v11858 = vsel %vm11218, %v11088, %v11730
  %v11859 = vsel %vm11219, %v11090, %v11731
  %v11860 = vpack.c.bf16 %v11734, %v11732
  %v11861 = vpack.c.bf16 %v11735, %v11733
  %v11862 = vpack.c.bf16 %v11738, %v11736
  %v11863 = vpack.c.bf16 %v11739, %v11737
  %v11864 = vpack.c.bf16 %v11742, %v11740
  %v11865 = vpack.c.bf16 %v11743, %v11741
  %v11866 = vpack.c.bf16 %v11746, %v11744
  %v11867 = vpack.c.bf16 %v11747, %v11745
  %v11868 = vpack.c.bf16 %v11750, %v11748
  %v11869 = vpack.c.bf16 %v11751, %v11749
  %v11870 = vpack.c.bf16 %v11754, %v11752
  %v11871 = vpack.c.bf16 %v11755, %v11753
  %v11872 = vpack.c.bf16 %v11758, %v11756
  %v11873 = vpack.c.bf16 %v11759, %v11757
  %v11874 = vpack.c.bf16 %v11762, %v11760
  %v11875 = vpack.c.bf16 %v11763, %v11761
  %v11876 = vpack.c.bf16 %v11766, %v11764
  %v11877 = vpack.c.bf16 %v11767, %v11765
  %v11878 = vpack.c.bf16 %v11770, %v11768
  %v11879 = vpack.c.bf16 %v11771, %v11769
  %v11880 = vpack.c.bf16 %v11774, %v11772
  %v11881 = vpack.c.bf16 %v11775, %v11773
  %v11882 = vpack.c.bf16 %v11778, %v11776
  %v11883 = vpack.c.bf16 %v11779, %v11777
  %v11884 = vpack.c.bf16 %v11782, %v11780
  %v11885 = vpack.c.bf16 %v11783, %v11781
  %v11886 = vpack.c.bf16 %v11786, %v11784
  %v11887 = vpack.c.bf16 %v11787, %v11785
  %v11888 = vpack.c.bf16 %v11790, %v11788
  %v11889 = vpack.c.bf16 %v11791, %v11789
  %v11890 = vpack.c.bf16 %v11794, %v11792
  %v11891 = vpack.c.bf16 %v11795, %v11793
  %v11892 = vpack.c.bf16 %v11798, %v11796
  %v11893 = vpack.c.bf16 %v11799, %v11797
  %v11894 = vpack.c.bf16 %v11802, %v11800
  %v11895 = vpack.c.bf16 %v11803, %v11801
  %v11896 = vpack.c.bf16 %v11806, %v11804
  %v11897 = vpack.c.bf16 %v11807, %v11805
  %v11898 = vpack.c.bf16 %v11810, %v11808
  %v11899 = vpack.c.bf16 %v11811, %v11809
  %v11900 = vpack.c.bf16 %v11814, %v11812
  %v11901 = vpack.c.bf16 %v11815, %v11813
  %v11902 = vpack.c.bf16 %v11818, %v11816
  %v11903 = vpack.c.bf16 %v11819, %v11817
  %v11904 = vpack.c.bf16 %v11822, %v11820
  %v11905 = vpack.c.bf16 %v11823, %v11821
  %v11906 = vpack.c.bf16 %v11826, %v11824
  %v11907 = vpack.c.bf16 %v11827, %v11825
  %v11908 = vpack.c.bf16 %v11830, %v11828
  %v11909 = vpack.c.bf16 %v11831, %v11829
  %v11910 = vpack.c.bf16 %v11834, %v11832
  %v11911 = vpack.c.bf16 %v11835, %v11833
  %v11912 = vpack.c.bf16 %v11838, %v11836
  %v11913 = vpack.c.bf16 %v11839, %v11837
  %v11914 = vpack.c.bf16 %v11842, %v11840
  %v11915 = vpack.c.bf16 %v11843, %v11841
  %v11916 = vpack.c.bf16 %v11846, %v11844
  %v11917 = vpack.c.bf16 %v11847, %v11845
  %v11918 = vpack.c.bf16 %v11850, %v11848
  %v11919 = vpack.c.bf16 %v11851, %v11849
  %v11920 = vpack.c.bf16 %v11854, %v11852
  %v11921 = vpack.c.bf16 %v11855, %v11853
  %v11922 = vpack.c.bf16 %v11858, %v11856
  %v11923 = vpack.c.bf16 %v11859, %v11857
  %v11924 = vld [vmem:[%s5] sm:$0xf]
  %v11925 = vld [vmem:[%s5 + $0x4] sm:$0xf]
  %v11926 = vld [vmem:[%s5 + $0x8] sm:$0xf]
  %v11927 = vld [vmem:[%s5 + $0xc] sm:$0xf]
  %v11928 = vld [vmem:[%s5 + $0x10] sm:$0xf]
  %v11929 = vld [vmem:[%s5 + $0x14] sm:$0xf]
  %v11930 = vld [vmem:[%s5 + $0x18] sm:$0xf]
  %v11931 = vld [vmem:[%s5 + $0x1c] sm:$0xf]
  %v11932 = vld [vmem:[%s5 + $0x20] sm:$0xf]
  %v11933 = vld [vmem:[%s5 + $0x24] sm:$0xf]
  %v11934 = vld [vmem:[%s5 + $0x28] sm:$0xf]
  %v11935 = vld [vmem:[%s5 + $0x2c] sm:$0xf]
  %v11936 = vld [vmem:[%s5 + $0x30] sm:$0xf]
  %v11937 = vld [vmem:[%s5 + $0x34] sm:$0xf]
  %v11938 = vld [vmem:[%s5 + $0x38] sm:$0xf]
  %v11939 = vld [vmem:[%s5 + $0x3c] sm:$0xf]
  %v11940 = vld [vmem:[%s5 + $0x40] sm:$0xf]
  %v11941 = vld [vmem:[%s5 + $0x44] sm:$0xf]
  %v11942 = vld [vmem:[%s5 + $0x48] sm:$0xf]
  %v11943 = vld [vmem:[%s5 + $0x4c] sm:$0xf]
  %v11944 = vld [vmem:[%s5 + $0x50] sm:$0xf]
  %v11945 = vld [vmem:[%s5 + $0x54] sm:$0xf]
  %v11946 = vld [vmem:[%s5 + $0x58] sm:$0xf]
  %v11947 = vld [vmem:[%s5 + $0x5c] sm:$0xf]
  %v11948 = vld [vmem:[%s5 + $0x60] sm:$0xf]
  %v11949 = vld [vmem:[%s5 + $0x64] sm:$0xf]
  %v11950 = vld [vmem:[%s5 + $0x68] sm:$0xf]
  %v11951 = vld [vmem:[%s5 + $0x6c] sm:$0xf]
  %v11952 = vld [vmem:[%s5 + $0x70] sm:$0xf]
  %v11953 = vld [vmem:[%s5 + $0x74] sm:$0xf]
  %v11954 = vld [vmem:[%s5 + $0x78] sm:$0xf]
  %v11955 = vld [vmem:[%s5 + $0x7c] sm:$0xf]
  %v11956 = vld [vmem:[%s6] sm:$0x1]
  %v11958 = vlaneseq
  %v11959 = vshrl.u32 %v11958, 7
  %v11960 = vsub.s32 0, %v11959
  %v11961 = vrot.slane %v11956, %v11960
  %v11995 = vunpack.c.l.b16 %v11924
  %v11996 = vunpack.c.l.b16 %v11925
  %v11997 = vunpack.c.l.b16 %v11926
  %v11998 = vunpack.c.l.b16 %v11927
  %v11999 = vunpack.c.l.b16 %v11928
  %v12000 = vunpack.c.l.b16 %v11929
  %v12001 = vunpack.c.l.b16 %v11930
  %v12002 = vunpack.c.l.b16 %v11931
  %v12003 = vunpack.c.l.b16 %v11932
  %v12004 = vunpack.c.l.b16 %v11933
  %v12005 = vunpack.c.l.b16 %v11934
  %v12006 = vunpack.c.l.b16 %v11935
  %v12007 = vunpack.c.l.b16 %v11936
  %v12008 = vunpack.c.l.b16 %v11937
  %v12009 = vunpack.c.l.b16 %v11938
  %v12010 = vunpack.c.l.b16 %v11939
  %v12011 = vunpack.c.l.b16 %v11940
  %v12012 = vunpack.c.l.b16 %v11941
  %v12013 = vunpack.c.l.b16 %v11942
  %v12014 = vunpack.c.l.b16 %v11943
  %v12015 = vunpack.c.l.b16 %v11944
  %v12016 = vunpack.c.l.b16 %v11945
  %v12017 = vunpack.c.l.b16 %v11946
  %v12018 = vunpack.c.l.b16 %v11947
  %v12019 = vunpack.c.l.b16 %v11948
  %v12020 = vunpack.c.l.b16 %v11949
  %v12021 = vunpack.c.l.b16 %v11950
  %v12022 = vunpack.c.l.b16 %v11951
  %v12023 = vunpack.c.l.b16 %v11952
  %v12024 = vunpack.c.l.b16 %v11953
  %v12025 = vunpack.c.l.b16 %v11954
  %v12026 = vunpack.c.l.b16 %v11955
  %v12027 = vpack.c.b16 %v11996, %v11995
  %v12028 = vpack.c.b16 %v11998, %v11997
  %v12029 = vpack.c.b16 %v12000, %v11999
  %v12030 = vpack.c.b16 %v12002, %v12001
  %v12031 = vpack.c.b16 %v12004, %v12003
  %v12032 = vpack.c.b16 %v12006, %v12005
  %v12033 = vpack.c.b16 %v12008, %v12007
  %v12034 = vpack.c.b16 %v12010, %v12009
  %v12035 = vpack.c.b16 %v12012, %v12011
  %v12036 = vpack.c.b16 %v12014, %v12013
  %v12037 = vpack.c.b16 %v12016, %v12015
  %v12038 = vpack.c.b16 %v12018, %v12017
  %v12039 = vpack.c.b16 %v12020, %v12019
  %v12040 = vpack.c.b16 %v12022, %v12021
  %v12041 = vpack.c.b16 %v12024, %v12023
  %v12042 = vpack.c.b16 %v12026, %v12025
  %12059 = vmatprep.subr.bf16.mxu0 0
  %12060 = vmatpush1.bf16.msra.mxu0 %v12034
  %12061 = vmatprep.subr.bf16.mxu0 0
  %12062 = vmatpush1.bf16.msra.mxu0 %v12033
  %12063 = vmatprep.subr.bf16.mxu0 0
  %12064 = vmatpush1.bf16.msra.mxu0 %v12032
  %12065 = vmatprep.subr.bf16.mxu0 0
  %12066 = vmatpush1.bf16.msra.mxu0 %v12031
  %12067 = vmatprep.subr.bf16.mxu0 0
  %12068 = vmatpush1.bf16.msra.mxu0 %v12030
  %12069 = vmatprep.subr.bf16.mxu0 0
  %12070 = vmatpush1.bf16.msra.mxu0 %v12029
  %12071 = vmatprep.subr.bf16.mxu0 0
  %12072 = vmatpush1.bf16.msra.mxu0 %v12028
  %12073 = vmatprep.subr.bf16.mxu0 0
  %12074 = vmatpush1.bf16.msra.mxu0 %v12027
  %12075 = vmatprep.subr.bf16.mxu0 0
  %12076 = vmatpush2.bf16.msra.mxu0 %v12042
  %12077 = vmatprep.subr.bf16.mxu0 0
  %12078 = vmatpush2.bf16.msra.mxu0 %v12041
  %12079 = vmatprep.subr.bf16.mxu0 0
  %12080 = vmatpush2.bf16.msra.mxu0 %v12040
  %12081 = vmatprep.subr.bf16.mxu0 0
  %12082 = vmatpush2.bf16.msra.mxu0 %v12039
  %12083 = vmatprep.subr.bf16.mxu0 0
  %12084 = vmatpush2.bf16.msra.mxu0 %v12038
  %12085 = vmatprep.subr.bf16.mxu0 0
  %12086 = vmatpush2.bf16.msra.mxu0 %v12037
  %12087 = vmatprep.subr.bf16.mxu0 0
  %12088 = vmatpush2.bf16.msra.mxu0 %v12036
  %12089 = vmatprep.subr.bf16.mxu0 0
  %12090 = vmatpush2.bf16.msra.mxu0 %v12035
  %12091 = vmatprep.mubr.bf16.mxu0 %v11861
  %12092 = vmatmul.mubr.bf16.gmra.mxu0 %v11860
  %v12093 = vpop.f32.mrf.mxu0
  %v12094 = vadd.f32 %v11961, %v12093
  %v12095 = vpop.f32.mrf.mxu0
  %v12096 = vpop.f32.mrf.mxu0
  %v12097 = vadd.f32 %v11961, %v12096
  %v12098 = vpop.f32.mrf.mxu0
  %12099 = vmatprep.mubr.bf16.mxu0 %v11863
  %12100 = vmatmul.mubr.bf16.gmra.mxu0 %v11862
  %v12101 = vpop.f32.mrf.mxu0
  %v12102 = vadd.f32 %v11961, %v12101
  %v12103 = vpop.f32.mrf.mxu0
  %v12104 = vpop.f32.mrf.mxu0
  %v12105 = vadd.f32 %v11961, %v12104
  %v12106 = vpop.f32.mrf.mxu0
  %12107 = vmatprep.mubr.bf16.mxu0 %v11865
  %12108 = vmatmul.mubr.bf16.gmra.mxu0 %v11864
  %v12109 = vpop.f32.mrf.mxu0
  %v12110 = vadd.f32 %v11961, %v12109
  %v12111 = vpop.f32.mrf.mxu0
  %v12112 = vpop.f32.mrf.mxu0
  %v12113 = vadd.f32 %v11961, %v12112
  %v12114 = vpop.f32.mrf.mxu0
  %12115 = vmatprep.mubr.bf16.mxu0 %v11867
  %12116 = vmatmul.mubr.bf16.gmra.mxu0 %v11866
  %v12117 = vpop.f32.mrf.mxu0
  %v12118 = vadd.f32 %v11961, %v12117
  %v12119 = vpop.f32.mrf.mxu0
  %v12120 = vpop.f32.mrf.mxu0
  %v12121 = vadd.f32 %v11961, %v12120
  %v12122 = vpop.f32.mrf.mxu0
  %12123 = vmatprep.mubr.bf16.mxu0 %v11869
  %12124 = vmatmul.mubr.bf16.gmra.mxu0 %v11868
  %v12125 = vpop.f32.mrf.mxu0
  %v12126 = vadd.f32 %v11961, %v12125
  %v12127 = vpop.f32.mrf.mxu0
  %v12128 = vpop.f32.mrf.mxu0
  %v12129 = vadd.f32 %v11961, %v12128
  %v12130 = vpop.f32.mrf.mxu0
  %12131 = vmatprep.mubr.bf16.mxu0 %v11871
  %12132 = vmatmul.mubr.bf16.gmra.mxu0 %v11870
  %v12133 = vpop.f32.mrf.mxu0
  %v12134 = vadd.f32 %v11961, %v12133
  %v12135 = vpop.f32.mrf.mxu0
  %v12136 = vpop.f32.mrf.mxu0
  %v12137 = vadd.f32 %v11961, %v12136
  %v12138 = vpop.f32.mrf.mxu0
  %12139 = vmatprep.mubr.bf16.mxu0 %v11873
  %12140 = vmatmul.mubr.bf16.gmra.mxu0 %v11872
  %v12141 = vpop.f32.mrf.mxu0
  %v12142 = vadd.f32 %v11961, %v12141
  %v12143 = vpop.f32.mrf.mxu0
  %v12144 = vpop.f32.mrf.mxu0
  %v12145 = vadd.f32 %v11961, %v12144
  %v12146 = vpop.f32.mrf.mxu0
  %12147 = vmatprep.mubr.bf16.mxu0 %v11875
  %12148 = vmatmul.mubr.bf16.gmra.mxu0 %v11874
  %v12149 = vpop.f32.mrf.mxu0
  %v12150 = vadd.f32 %v11961, %v12149
  %v12151 = vpop.f32.mrf.mxu0
  %v12152 = vpop.f32.mrf.mxu0
  %v12153 = vadd.f32 %v11961, %v12152
  %v12154 = vpop.f32.mrf.mxu0
  %12155 = vmatprep.mubr.bf16.mxu0 %v11877
  %12156 = vmatmul.mubr.bf16.gmra.mxu0 %v11876
  %v12157 = vpop.f32.mrf.mxu0
  %v12158 = vadd.f32 %v11961, %v12157
  %v12159 = vpop.f32.mrf.mxu0
  %v12160 = vpop.f32.mrf.mxu0
  %v12161 = vadd.f32 %v11961, %v12160
  %v12162 = vpop.f32.mrf.mxu0
  %12163 = vmatprep.mubr.bf16.mxu0 %v11879
  %12164 = vmatmul.mubr.bf16.gmra.mxu0 %v11878
  %v12165 = vpop.f32.mrf.mxu0
  %v12166 = vadd.f32 %v11961, %v12165
  %v12167 = vpop.f32.mrf.mxu0
  %v12168 = vpop.f32.mrf.mxu0
  %v12169 = vadd.f32 %v11961, %v12168
  %v12170 = vpop.f32.mrf.mxu0
  %12171 = vmatprep.mubr.bf16.mxu0 %v11881
  %12172 = vmatmul.mubr.bf16.gmra.mxu0 %v11880
  %v12173 = vpop.f32.mrf.mxu0
  %v12174 = vadd.f32 %v11961, %v12173
  %v12175 = vpop.f32.mrf.mxu0
  %v12176 = vpop.f32.mrf.mxu0
  %v12177 = vadd.f32 %v11961, %v12176
  %v12178 = vpop.f32.mrf.mxu0
  %12179 = vmatprep.mubr.bf16.mxu0 %v11883
  %12180 = vmatmul.mubr.bf16.gmra.mxu0 %v11882
  %v12181 = vpop.f32.mrf.mxu0
  %v12182 = vadd.f32 %v11961, %v12181
  %v12183 = vpop.f32.mrf.mxu0
  %v12184 = vpop.f32.mrf.mxu0
  %v12185 = vadd.f32 %v11961, %v12184
  %v12186 = vpop.f32.mrf.mxu0
  %12187 = vmatprep.mubr.bf16.mxu0 %v11885
  %12188 = vmatmul.mubr.bf16.gmra.mxu0 %v11884
  %v12189 = vpop.f32.mrf.mxu0
  %v12190 = vadd.f32 %v11961, %v12189
  %v12191 = vpop.f32.mrf.mxu0
  %v12192 = vpop.f32.mrf.mxu0
  %v12193 = vadd.f32 %v11961, %v12192
  %v12194 = vpop.f32.mrf.mxu0
  %12195 = vmatprep.mubr.bf16.mxu0 %v11887
  %12196 = vmatmul.mubr.bf16.gmra.mxu0 %v11886
  %v12197 = vpop.f32.mrf.mxu0
  %v12198 = vadd.f32 %v11961, %v12197
  %v12199 = vpop.f32.mrf.mxu0
  %v12200 = vpop.f32.mrf.mxu0
  %v12201 = vadd.f32 %v11961, %v12200
  %v12202 = vpop.f32.mrf.mxu0
  %12203 = vmatprep.mubr.bf16.mxu0 %v11889
  %12204 = vmatmul.mubr.bf16.gmra.mxu0 %v11888
  %v12205 = vpop.f32.mrf.mxu0
  %v12206 = vadd.f32 %v11961, %v12205
  %v12207 = vpop.f32.mrf.mxu0
  %v12208 = vpop.f32.mrf.mxu0
  %v12209 = vadd.f32 %v11961, %v12208
  %v12210 = vpop.f32.mrf.mxu0
  %12211 = vmatprep.mubr.bf16.mxu0 %v11891
  %12212 = vmatmul.mubr.bf16.gmra.mxu0 %v11890
  %v12213 = vpop.f32.mrf.mxu0
  %v12214 = vadd.f32 %v11961, %v12213
  %v12215 = vpop.f32.mrf.mxu0
  %v12216 = vpop.f32.mrf.mxu0
  %v12217 = vadd.f32 %v11961, %v12216
  %v12218 = vpop.f32.mrf.mxu0
  %12219 = vmatprep.mubr.bf16.mxu0 %v11893
  %12220 = vmatmul.mubr.bf16.gmra.mxu0 %v11892
  %v12221 = vpop.f32.mrf.mxu0
  %v12222 = vadd.f32 %v11961, %v12221
  %v12223 = vpop.f32.mrf.mxu0
  %v12224 = vpop.f32.mrf.mxu0
  %v12225 = vadd.f32 %v11961, %v12224
  %v12226 = vpop.f32.mrf.mxu0
  %12227 = vmatprep.mubr.bf16.mxu0 %v11895
  %12228 = vmatmul.mubr.bf16.gmra.mxu0 %v11894
  %v12229 = vpop.f32.mrf.mxu0
  %v12230 = vadd.f32 %v11961, %v12229
  %v12231 = vpop.f32.mrf.mxu0
  %v12232 = vpop.f32.mrf.mxu0
  %v12233 = vadd.f32 %v11961, %v12232
  %v12234 = vpop.f32.mrf.mxu0
  %12235 = vmatprep.mubr.bf16.mxu0 %v11897
  %12236 = vmatmul.mubr.bf16.gmra.mxu0 %v11896
  %v12237 = vpop.f32.mrf.mxu0
  %v12238 = vadd.f32 %v11961, %v12237
  %v12239 = vpop.f32.mrf.mxu0
  %v12240 = vpop.f32.mrf.mxu0
  %v12241 = vadd.f32 %v11961, %v12240
  %v12242 = vpop.f32.mrf.mxu0
  %12243 = vmatprep.mubr.bf16.mxu0 %v11899
  %12244 = vmatmul.mubr.bf16.gmra.mxu0 %v11898
  %v12245 = vpop.f32.mrf.mxu0
  %v12246 = vadd.f32 %v11961, %v12245
  %v12247 = vpop.f32.mrf.mxu0
  %v12248 = vpop.f32.mrf.mxu0
  %v12249 = vadd.f32 %v11961, %v12248
  %v12250 = vpop.f32.mrf.mxu0
  %12251 = vmatprep.mubr.bf16.mxu0 %v11901
  %12252 = vmatmul.mubr.bf16.gmra.mxu0 %v11900
  %v12253 = vpop.f32.mrf.mxu0
  %v12254 = vadd.f32 %v11961, %v12253
  %v12255 = vpop.f32.mrf.mxu0
  %v12256 = vpop.f32.mrf.mxu0
  %v12257 = vadd.f32 %v11961, %v12256
  %v12258 = vpop.f32.mrf.mxu0
  %12259 = vmatprep.mubr.bf16.mxu0 %v11903
  %12260 = vmatmul.mubr.bf16.gmra.mxu0 %v11902
  %v12261 = vpop.f32.mrf.mxu0
  %v12262 = vadd.f32 %v11961, %v12261
  %v12263 = vpop.f32.mrf.mxu0
  %v12264 = vpop.f32.mrf.mxu0
  %v12265 = vadd.f32 %v11961, %v12264
  %v12266 = vpop.f32.mrf.mxu0
  %12267 = vmatprep.mubr.bf16.mxu0 %v11905
  %12268 = vmatmul.mubr.bf16.gmra.mxu0 %v11904
  %v12269 = vpop.f32.mrf.mxu0
  %v12270 = vadd.f32 %v11961, %v12269
  %v12271 = vpop.f32.mrf.mxu0
  %v12272 = vpop.f32.mrf.mxu0
  %v12273 = vadd.f32 %v11961, %v12272
  %v12274 = vpop.f32.mrf.mxu0
  %12275 = vmatprep.mubr.bf16.mxu0 %v11907
  %12276 = vmatmul.mubr.bf16.gmra.mxu0 %v11906
  %v12277 = vpop.f32.mrf.mxu0
  %v12278 = vadd.f32 %v11961, %v12277
  %v12279 = vpop.f32.mrf.mxu0
  %v12280 = vpop.f32.mrf.mxu0
  %v12281 = vadd.f32 %v11961, %v12280
  %v12282 = vpop.f32.mrf.mxu0
  %12283 = vmatprep.mubr.bf16.mxu0 %v11909
  %12284 = vmatmul.mubr.bf16.gmra.mxu0 %v11908
  %v12285 = vpop.f32.mrf.mxu0
  %v12286 = vadd.f32 %v11961, %v12285
  %v12287 = vpop.f32.mrf.mxu0
  %v12288 = vpop.f32.mrf.mxu0
  %v12289 = vadd.f32 %v11961, %v12288
  %v12290 = vpop.f32.mrf.mxu0
  %12291 = vmatprep.mubr.bf16.mxu0 %v11911
  %12292 = vmatmul.mubr.bf16.gmra.mxu0 %v11910
  %v12293 = vpop.f32.mrf.mxu0
  %v12294 = vadd.f32 %v11961, %v12293
  %v12295 = vpop.f32.mrf.mxu0
  %v12296 = vpop.f32.mrf.mxu0
  %v12297 = vadd.f32 %v11961, %v12296
  %v12298 = vpop.f32.mrf.mxu0
  %12299 = vmatprep.mubr.bf16.mxu0 %v11913
  %12300 = vmatmul.mubr.bf16.gmra.mxu0 %v11912
  %v12301 = vpop.f32.mrf.mxu0
  %v12302 = vadd.f32 %v11961, %v12301
  %v12303 = vpop.f32.mrf.mxu0
  %v12304 = vpop.f32.mrf.mxu0
  %v12305 = vadd.f32 %v11961, %v12304
  %v12306 = vpop.f32.mrf.mxu0
  %12307 = vmatprep.mubr.bf16.mxu0 %v11915
  %12308 = vmatmul.mubr.bf16.gmra.mxu0 %v11914
  %v12309 = vpop.f32.mrf.mxu0
  %v12310 = vadd.f32 %v11961, %v12309
  %v12311 = vpop.f32.mrf.mxu0
  %v12312 = vpop.f32.mrf.mxu0
  %v12313 = vadd.f32 %v11961, %v12312
  %v12314 = vpop.f32.mrf.mxu0
  %12315 = vmatprep.mubr.bf16.mxu0 %v11917
  %12316 = vmatmul.mubr.bf16.gmra.mxu0 %v11916
  %v12317 = vpop.f32.mrf.mxu0
  %v12318 = vadd.f32 %v11961, %v12317
  %v12319 = vpop.f32.mrf.mxu0
  %v12320 = vpop.f32.mrf.mxu0
  %v12321 = vadd.f32 %v11961, %v12320
  %v12322 = vpop.f32.mrf.mxu0
  %12323 = vmatprep.mubr.bf16.mxu0 %v11919
  %12324 = vmatmul.mubr.bf16.gmra.mxu0 %v11918
  %v12325 = vpop.f32.mrf.mxu0
  %v12326 = vadd.f32 %v11961, %v12325
  %v12327 = vpop.f32.mrf.mxu0
  %v12328 = vpop.f32.mrf.mxu0
  %v12329 = vadd.f32 %v11961, %v12328
  %v12330 = vpop.f32.mrf.mxu0
  %12331 = vmatprep.mubr.bf16.mxu0 %v11921
  %12332 = vmatmul.mubr.bf16.gmra.mxu0 %v11920
  %v12333 = vpop.f32.mrf.mxu0
  %v12334 = vadd.f32 %v11961, %v12333
  %v12335 = vpop.f32.mrf.mxu0
  %v12336 = vpop.f32.mrf.mxu0
  %v12337 = vadd.f32 %v11961, %v12336
  %v12338 = vpop.f32.mrf.mxu0
  %12339 = vmatprep.mubr.bf16.mxu0 %v11923
  %12340 = vmatmul.mubr.bf16.gmra.mxu0 %v11922
  %v12341 = vpop.f32.mrf.mxu0
  %v12342 = vadd.f32 %v11961, %v12341
  %v12343 = vpop.f32.mrf.mxu0
  %v12344 = vpop.f32.mrf.mxu0
  %v12345 = vadd.f32 %v11961, %v12344
  %v12346 = vpop.f32.mrf.mxu0
  %12347 = vdwg.mxu0
  %12348 = vst.msk [vmem:[%s7] sm:$0xff] %vm270, %v12094
  %12349 = vst.msk [vmem:[%s7 + $0x8] sm:$0xff] %vm270, %v12097
  %12350 = vst.msk [vmem:[%s7 + $0x10] sm:$0xff] %vm270, %v12102
  %12351 = vst.msk [vmem:[%s7 + $0x18] sm:$0xff] %vm270, %v12105
  %12352 = vst.msk [vmem:[%s7 + $0x20] sm:$0xff] %vm270, %v12110
  %12353 = vst.msk [vmem:[%s7 + $0x28] sm:$0xff] %vm270, %v12113
  %12354 = vst.msk [vmem:[%s7 + $0x30] sm:$0xff] %vm270, %v12118
  %12355 = vst.msk [vmem:[%s7 + $0x38] sm:$0xff] %vm270, %v12121
  %12356 = vst.msk [vmem:[%s7 + $0x40] sm:$0xff] %vm270, %v12126
  %12357 = vst.msk [vmem:[%s7 + $0x48] sm:$0xff] %vm270, %v12129
  %12358 = vst.msk [vmem:[%s7 + $0x50] sm:$0xff] %vm270, %v12134
  %12359 = vst.msk [vmem:[%s7 + $0x58] sm:$0xff] %vm270, %v12137
  %12360 = vst.msk [vmem:[%s7 + $0x60] sm:$0xff] %vm270, %v12142
  %12361 = vst.msk [vmem:[%s7 + $0x68] sm:$0xff] %vm270, %v12145
  %12362 = vst.msk [vmem:[%s7 + $0x70] sm:$0xff] %vm270, %v12150
  %12363 = vst.msk [vmem:[%s7 + $0x78] sm:$0xff] %vm270, %v12153
  %12364 = vst.msk [vmem:[%s7 + $0x80] sm:$0xff] %vm270, %v12158
  %12365 = vst.msk [vmem:[%s7 + $0x88] sm:$0xff] %vm270, %v12161
  %12366 = vst.msk [vmem:[%s7 + $0x90] sm:$0xff] %vm270, %v12166
  %12367 = vst.msk [vmem:[%s7 + $0x98] sm:$0xff] %vm270, %v12169
  %12368 = vst.msk [vmem:[%s7 + $0xa0] sm:$0xff] %vm270, %v12174
  %12369 = vst.msk [vmem:[%s7 + $0xa8] sm:$0xff] %vm270, %v12177
  %12370 = vst.msk [vmem:[%s7 + $0xb0] sm:$0xff] %vm270, %v12182
  %12371 = vst.msk [vmem:[%s7 + $0xb8] sm:$0xff] %vm270, %v12185
  %12372 = vst.msk [vmem:[%s7 + $0xc0] sm:$0xff] %vm270, %v12190
  %12373 = vst.msk [vmem:[%s7 + $0xc8] sm:$0xff] %vm270, %v12193
  %12374 = vst.msk [vmem:[%s7 + $0xd0] sm:$0xff] %vm270, %v12198
  %12375 = vst.msk [vmem:[%s7 + $0xd8] sm:$0xff] %vm270, %v12201
  %12376 = vst.msk [vmem:[%s7 + $0xe0] sm:$0xff] %vm270, %v12206
  %12377 = vst.msk [vmem:[%s7 + $0xe8] sm:$0xff] %vm270, %v12209
  %12378 = vst.msk [vmem:[%s7 + $0xf0] sm:$0xff] %vm270, %v12214
  %12379 = vst.msk [vmem:[%s7 + $0xf8] sm:$0xff] %vm270, %v12217
  %12380 = vst.msk [vmem:[%s7 + $0x100] sm:$0xff] %vm270, %v12222
  %12381 = vst.msk [vmem:[%s7 + $0x108] sm:$0xff] %vm270, %v12225
  %12382 = vst.msk [vmem:[%s7 + $0x110] sm:$0xff] %vm270, %v12230
  %12383 = vst.msk [vmem:[%s7 + $0x118] sm:$0xff] %vm270, %v12233
  %12384 = vst.msk [vmem:[%s7 + $0x120] sm:$0xff] %vm270, %v12238
  %12385 = vst.msk [vmem:[%s7 + $0x128] sm:$0xff] %vm270, %v12241
  %12386 = vst.msk [vmem:[%s7 + $0x130] sm:$0xff] %vm270, %v12246
  %12387 = vst.msk [vmem:[%s7 + $0x138] sm:$0xff] %vm270, %v12249
  %12388 = vst.msk [vmem:[%s7 + $0x140] sm:$0xff] %vm270, %v12254
  %12389 = vst.msk [vmem:[%s7 + $0x148] sm:$0xff] %vm270, %v12257
  %12390 = vst.msk [vmem:[%s7 + $0x150] sm:$0xff] %vm270, %v12262
  %12391 = vst.msk [vmem:[%s7 + $0x158] sm:$0xff] %vm270, %v12265
  %12392 = vst.msk [vmem:[%s7 + $0x160] sm:$0xff] %vm270, %v12270
  %12393 = vst.msk [vmem:[%s7 + $0x168] sm:$0xff] %vm270, %v12273
  %12394 = vst.msk [vmem:[%s7 + $0x170] sm:$0xff] %vm270, %v12278
  %12395 = vst.msk [vmem:[%s7 + $0x178] sm:$0xff] %vm270, %v12281
  %12396 = vst.msk [vmem:[%s7 + $0x180] sm:$0xff] %vm270, %v12286
  %12397 = vst.msk [vmem:[%s7 + $0x188] sm:$0xff] %vm270, %v12289
  %12398 = vst.msk [vmem:[%s7 + $0x190] sm:$0xff] %vm270, %v12294
  %12399 = vst.msk [vmem:[%s7 + $0x198] sm:$0xff] %vm270, %v12297
  %12400 = vst.msk [vmem:[%s7 + $0x1a0] sm:$0xff] %vm270, %v12302
  %12401 = vst.msk [vmem:[%s7 + $0x1a8] sm:$0xff] %vm270, %v12305
  %12402 = vst.msk [vmem:[%s7 + $0x1b0] sm:$0xff] %vm270, %v12310
  %12403 = vst.msk [vmem:[%s7 + $0x1b8] sm:$0xff] %vm270, %v12313
  %12404 = vst.msk [vmem:[%s7 + $0x1c0] sm:$0xff] %vm270, %v12318
  %12405 = vst.msk [vmem:[%s7 + $0x1c8] sm:$0xff] %vm270, %v12321
  %12406 = vst.msk [vmem:[%s7 + $0x1d0] sm:$0xff] %vm270, %v12326
  %12407 = vst.msk [vmem:[%s7 + $0x1d8] sm:$0xff] %vm270, %v12329
  %12408 = vst.msk [vmem:[%s7 + $0x1e0] sm:$0xff] %vm270, %v12334
  %12409 = vst.msk [vmem:[%s7 + $0x1e8] sm:$0xff] %vm270, %v12337
  %12410 = vst.msk [vmem:[%s7 + $0x1f0] sm:$0xff] %vm270, %v12342
  %12411 = vst.msk [vmem:[%s7 + $0x1f8] sm:$0xff] %vm270, %v12345
  // Predicated region
  $region30: #{minmax_ray_netcee_forward.1} parent=0 // pred_check
    _
  $region31: #{minmax_ray_netcee_forward.1} parent=0 // pred_check_branch
    %12413 = sbr.rel (0) target = $region33
  $region32: #{minmax_ray_netcee_forward.1} parent=0 // pred_region
    _
  $region33: #{minmax_ray_netcee_forward.1} parent=0 // pred_fallthru
    _
  // Predicated region
  $region34: #{minmax_ray_netcee_forward.1} parent=0 // pred_check
    _
  $region35: #{minmax_ray_netcee_forward.1} parent=0 // pred_check_branch
    %12415 = sbr.rel (0) target = $region37
  $region36: #{minmax_ray_netcee_forward.1} parent=0 // pred_region
    _
  $region37: #{minmax_ray_netcee_forward.1} parent=0 // pred_fallthru
    _

</llo_original>
